<compile_context>
chip_gen: v5e
topology: v5e:2x2
jax: 0.10.0
libtpu: 0.0.40
codegen_flags: <defaults>
</compile_context>

<pallas_src>
import functools
import math

import jax
import jax.numpy as jnp
from jax import lax
from jax.experimental import pallas as pl
from jax.experimental.pallas import tpu as pltpu  # noqa: F401  (TPU backend)

B, T, N_REGION, HIDDEN = 2, 16, 16, 32
NUM_EIG = 15          # hard-coded `range(15)` in the reference module (needs T >= 15)
BN_EPS = 1e-5
LN_EPS = 1e-5

# Rows of the packed bias/scale table handed to the fused kernel.
(R_EB1, R_EB2, R_LSTMB, R_BQKV, R_BO, R_LN1G, R_LN1B,
 R_BM1, R_BM2, R_LN2G, R_LN2B, R_CB1, R_CW2, R_CB2) = range(14)
BIAS_ROWS, BIAS_LANES = 16, 128


def _layer_norm(x, g, b):
    mu = jnp.mean(x, axis=-1, keepdims=True)
    var = jnp.mean((x - mu) ** 2, axis=-1, keepdims=True)
    return (x - mu) * lax.rsqrt(var + LN_EPS) * g + b


# --------------------------------------------------------------- fused kernel
def _fused_kernel(x_ref, ew1, ew2, wih, whh, wqkv, wo, wm1, wm2, cw1, bias_ref,
                  o_ref):
    """Encoder MLP -> LSTM -> transformer block -> pairwise classifier."""
    H = HIDDEN
    Bb, Tt, Nn = x_ref.shape
    bias = bias_ref[...]                                   # (16, 128)

    def brow(r, width):                                    # (1, width) bias row
        return bias[r:r + 1, :width]

    # ---------------- encoder MLP (BatchNorm folded into Linear; eval mode) --
    x = x_ref[...].astype(jnp.float32).reshape(Bb * Tt, Nn)        # '(b t) c'
    h = jnp.dot(x, ew1[...], preferred_element_type=jnp.float32) + brow(R_EB1, H)
    h = jnp.maximum(h, 0.0)
    h = jnp.dot(h, ew2[...], preferred_element_type=jnp.float32) + brow(R_EB2, H)
    h = jnp.maximum(h, 0.0)                                        # (B*T, H)

    # ---------------- LSTM(hidden, hidden, 1); h0 = c0 = 0 -------------------
    # Input projection hoisted out of the recurrence: one (B*T,H)x(H,4H) matmul
    # instead of T tiny ones.  PyTorch gate order i, f, g, o.
    # NOTE: when porting real weights, bias must be b_ih + b_hh (single fused).
    gx = jnp.dot(h, wih[...], preferred_element_type=jnp.float32) + brow(R_LSTMB, 4 * H)
    gx = gx.reshape(Bb, Tt, 4 * H)
    whh_m = whh[...]
    h_t = jnp.zeros((Bb, H), jnp.float32)
    c_t = jnp.zeros((Bb, H), jnp.float32)
    hs = []
    for t in range(Tt):      # fully unrolled in-kernel loop (T static & tiny)
        gates = gx[:, t, :] + jnp.dot(h_t, whh_m,
                                      preferred_element_type=jnp.float32)
        i_g = jax.nn.sigmoid(gates[:, 0:H])
        f_g = jax.nn.sigmoid(gates[:, H:2 * H])
        g_g = jnp.tanh(gates[:, 2 * H:3 * H])
        o_g = jax.nn.sigmoid(gates[:, 3 * H:4 * H])
        c_t = f_g * c_t + i_g * g_g
        h_t = o_g * jnp.tanh(c_t)
        hs.append(h_t)
    seq = jnp.stack(hs, axis=1)                                    # (B, T, H)

    # ---------------- single-head self-attention + LN/MLP block --------------
    flat = seq.reshape(Bb * Tt, H)
    qkv = jnp.dot(flat, wqkv[...], preferred_element_type=jnp.float32) + brow(R_BQKV, 3 * H)
    q = qkv[:, 0:H].reshape(Bb, Tt, H)
    k = qkv[:, H:2 * H].reshape(Bb, Tt, H)
    v = qkv[:, 2 * H:3 * H].reshape(Bb, Tt, H)
    scale = 1.0 / math.sqrt(H)
    s = jnp.einsum('bqd,bkd->bqk', q * scale, k,
                   preferred_element_type=jnp.float32)             # (B, T, T)
    s = s - jnp.max(s, axis=-1, keepdims=True)
    e = jnp.exp(s)
    attn = e / jnp.sum(e, axis=-1, keepdims=True)
    ctx = jnp.einsum('bqk,bkd->bqd', attn, v,
                     preferred_element_type=jnp.float32)           # (B, T, H)
    a = jnp.dot(ctx.reshape(Bb * Tt, H), wo[...],
                preferred_element_type=jnp.float32) + brow(R_BO, H)
    # LayerNorm1 on attention output only (no input residual); dropout = id.
    y = _layer_norm(a, brow(R_LN1G, H), brow(R_LN1B, H))           # (B*T, H)
    m = jnp.dot(y, wm1[...], preferred_element_type=jnp.float32) + brow(R_BM1, 2 * H)
    m = jnp.maximum(m, 0.0)
    m = jnp.dot(m, wm2[...], preferred_element_type=jnp.float32) + brow(R_BM2, H)
    z = _layer_norm(y + m, brow(R_LN2G, H), brow(R_LN2B, H))       # (B*T, H)

    # ---------------- pairwise element-wise distance + classifier MLP --------
    att = z.reshape(Bb, Tt, H)
    diff = att[:, :, None, :] - att[:, None, :, :]                 # (B,T,T,H)
    dist = jnp.sqrt(diff * diff + 1e-9)                            # element-wise
    h2 = jnp.dot(dist.reshape(Bb * Tt * Tt, H), cw1[...],
                 preferred_element_type=jnp.float32) + brow(R_CB1, H)
    h2 = jnp.maximum(h2, 0.0).reshape(Bb, Tt, Tt, H)
    logit = jnp.sum(h2 * brow(R_CW2, H), axis=-1) + bias[R_CB2:R_CB2 + 1, 0:1]
    o_ref[...] = jax.nn.sigmoid(logit)                             # (B, T, T)


# ----------------------------------------------------------------- fused call
def fused_grouping(X, params):
    b, t, n = X.shape
    enc, lstm_p, tatt, clf = (params['enc'], params['lstm'],
                              params['tatt'], params['clf'])

    # Fold eval-mode BatchNorm scale/shift into the adjacent Linear layers.
    ew1 = enc['w1'] * enc['s1']
    eb1 = enc['b1'] * enc['s1'] + enc['t1']
    ew2 = enc['w2'] * enc['s2']
    eb2 = enc['b2'] * enc['s2'] + enc['t2']
    cw1 = clf['w1'] * clf['s1']
    cb1 = clf['b1'] * clf['s1'] + clf['t1']

    # Stack Q/K/V projections into a single (H, 3H) matmul.
    wqkv = jnp.concatenate([tatt['wq'], tatt['wk'], tatt['wv']], axis=1)
    bqkv = jnp.concatenate([tatt['bq'], tatt['bk'], tatt['bv']], axis=1)

    def row(v):
        v = jnp.asarray(v, jnp.float32).reshape(-1)
        return jnp.pad(v, (0, BIAS_LANES - v.shape[0]))

    rows = [row(eb1), row(eb2), row(lstm_p['bias']), row(bqkv), row(tatt['bo']),
            row(tatt['g1']), row(tatt['be1']), row(tatt['bm1']),
            row(tatt['bm2']), row(tatt['g2']), row(tatt['be2']), row(cb1),
            row(clf['w2']), row(clf['b2'])]
    while len(rows) < BIAS_ROWS:
        rows.append(jnp.zeros((BIAS_LANES,), jnp.float32))
    bias_pack = jnp.stack(rows, axis=0)                            # (16, 128)

    return pl.pallas_call(
        _fused_kernel,
        out_shape=jax.ShapeDtypeStruct((b, t, t), jnp.float32),
    )(X, ew1, ew2, lstm_p['wih'], lstm_p['whh'], wqkv, tatt['wo'],
      tatt['wm1'], tatt['wm2'], cw1, bias_pack)


# --------------------------------------------------------------- full forward
def forward(X, params):
    b, t, n = X.shape
    clf_mat = fused_grouping(X, params)                            # (b, t, t)
    eye = jnp.eye(t, dtype=clf_mat.dtype)
    grouping = clf_mat * (1.0 - eye) + eye                         # diag := 1.0

    # TODO(synk): eigendecomposition has no Pallas equivalent; done in plain JAX.
    vals, vecs = jnp.linalg.eigh(grouping)
    order = jnp.argsort(-vals, axis=1)                             # descending
    vecs_sorted = jnp.take_along_axis(vecs, order[:, None, :], axis=2)
    eig_abs = jnp.abs(vecs_sorted[:, :, :NUM_EIG])                 # (b, t, K)
    # |eigvec| * X broadcast stays in plain JAX: it fuses with the eigh
    # post-processing; a dedicated pallas_call would be pure launch overhead.
    return jnp.transpose(eig_abs, (0, 2, 1))[:, :, :, None] * X[:, None, :, :]


# ----------------------------------------------------------------- parameters
def init_params(key):
    ks = iter(jax.random.split(key, 40))

    def w(shape, scale=0.1):
        return scale * jax.random.normal(next(ks), shape, jnp.float32)

    def bn(h):
        gamma = 1.0 + 0.05 * jax.random.normal(next(ks), (1, h), jnp.float32)
        beta = 0.05 * jax.random.normal(next(ks), (1, h), jnp.float32)
        # eval-mode BatchNorm1d folded to scale/shift (running_mean=0, var=1)
        return gamma / jnp.sqrt(1.0 + BN_EPS), beta

    H, N = HIDDEN, N_REGION
    enc = {'w1': w((N, H)), 'b1': w((1, H))}
    enc['s1'], enc['t1'] = bn(H)
    enc['w2'] = w((H, H)); enc['b2'] = w((1, H))
    enc['s2'], enc['t2'] = bn(H)

    # single fused LSTM bias (b_ih + b_hh of the PyTorch module)
    lstm_p = {'wih': w((H, 4 * H)), 'whh': w((H, 4 * H)), 'bias': w((1, 4 * H))}

    tatt = {
        'wq': w((H, H)), 'wk': w((H, H)), 'wv': w((H, H)),
        'bq': w((1, H)), 'bk': w((1, H)), 'bv': w((1, H)),
        'wo': w((H, H)), 'bo': w((1, H)),
        'g1': jnp.ones((1, H), jnp.float32), 'be1': jnp.zeros((1, H), jnp.float32),
        'wm1': w((H, 2 * H)), 'bm1': w((1, 2 * H)),
        'wm2': w((2 * H, H)), 'bm2': w((1, H)),
        'g2': jnp.ones((1, H), jnp.float32), 'be2': jnp.zeros((1, H), jnp.float32),
    }

    clf = {'w1': w((H, H)), 'b1': w((1, H))}
    clf['s1'], clf['t1'] = bn(H)
    clf['w2'] = w((1, H)); clf['b2'] = w((1, 1))

    return {'enc': enc, 'lstm': lstm_p, 'tatt': tatt, 'clf': clf}


if __name__ == "__main__":
    params = init_params(jax.random.PRNGKey(0))
    X = jax.random.normal(jax.random.PRNGKey(0), (B, T, N_REGION), jnp.float32)

    out = jax.jit(functools.partial(forward, params=params))(X)
    out = jax.block_until_ready(out)

    assert out.shape == (B, NUM_EIG, T, N_REGION), out.shape
    assert bool(jnp.all(jnp.isfinite(out)))
    print("KERNEL_OK")
</pallas_src>

<mosaic_0001>
module attributes {stable_mosaic.version = 11 : i64} {
  func.func @_fused_kernel(%arg0: memref<2x16x16xf32, #tpu.memory_space<vmem>>, %arg1: memref<16x32xf32, #tpu.memory_space<vmem>>, %arg2: memref<32x32xf32, #tpu.memory_space<vmem>>, %arg3: memref<32x128xf32, #tpu.memory_space<vmem>>, %arg4: memref<32x128xf32, #tpu.memory_space<vmem>>, %arg5: memref<32x96xf32, #tpu.memory_space<vmem>>, %arg6: memref<32x32xf32, #tpu.memory_space<vmem>>, %arg7: memref<32x64xf32, #tpu.memory_space<vmem>>, %arg8: memref<64x32xf32, #tpu.memory_space<vmem>>, %arg9: memref<32x32xf32, #tpu.memory_space<vmem>>, %arg10: memref<16x128xf32, #tpu.memory_space<vmem>>, %arg11: memref<2x16x16xf32, #tpu.memory_space<vmem>>) attributes {dimension_semantics = [], scalar_prefetch = 0 : i64, scratch_operands = 0 : i64, tpu.core_type = #tpu.core_type<tc>} {
    %c0 = arith.constant 0 : index
    %c0_0 = arith.constant 0 : index
    %0 = vector.load %arg10[%c0, %c0_0] : memref<16x128xf32, #tpu.memory_space<vmem>>, vector<16x128xf32>
    %c0_1 = arith.constant 0 : index
    %c0_2 = arith.constant 0 : index
    %c0_3 = arith.constant 0 : index
    %1 = vector.load %arg0[%c0_1, %c0_2, %c0_3] : memref<2x16x16xf32, #tpu.memory_space<vmem>>, vector<2x16x16xf32>
    %2 = vector.shape_cast %1 : vector<2x16x16xf32> to vector<32x16xf32>
    %c0_4 = arith.constant 0 : index
    %c0_5 = arith.constant 0 : index
    %3 = vector.load %arg1[%c0_4, %c0_5] : memref<16x32xf32, #tpu.memory_space<vmem>>, vector<16x32xf32>
    %cst = arith.constant dense<0.000000e+00> : vector<32x32xf32>
    %4 = tpu.matmul %2, %3, %cst {dimension_numbers = #tpu.dot_dimension_numbers<[1], [0], [0], [1], [0, 0, 1, 1], [], []>} : vector<32x16xf32>, vector<16x32xf32>, vector<32x32xf32> -> vector<32x32xf32>
    %5 = vector.extract_strided_slice %0 {offsets = [0, 0], sizes = [1, 32], strides = [1, 1]} : vector<16x128xf32> to vector<1x32xf32>
    %6 = vector.broadcast %5 : vector<1x32xf32> to vector<32x32xf32>
    %7 = arith.addf %4, %6 : vector<32x32xf32>
    %cst_6 = arith.constant 0.000000e+00 : f32
    %8 = vector.broadcast %cst_6 : f32 to vector<32x32xf32>
    %9 = arith.maximumf %7, %8 : vector<32x32xf32>
    %c0_7 = arith.constant 0 : index
    %c0_8 = arith.constant 0 : index
    %10 = vector.load %arg2[%c0_7, %c0_8] : memref<32x32xf32, #tpu.memory_space<vmem>>, vector<32x32xf32>
    %cst_9 = arith.constant dense<0.000000e+00> : vector<32x32xf32>
    %11 = tpu.matmul %9, %10, %cst_9 {dimension_numbers = #tpu.dot_dimension_numbers<[1], [0], [0], [1], [0, 0, 1, 1], [], []>} : vector<32x32xf32>, vector<32x32xf32>, vector<32x32xf32> -> vector<32x32xf32>
    %12 = vector.extract_strided_slice %0 {offsets = [1, 0], sizes = [1, 32], strides = [1, 1]} : vector<16x128xf32> to vector<1x32xf32>
    %13 = vector.broadcast %12 : vector<1x32xf32> to vector<32x32xf32>
    %14 = arith.addf %11, %13 : vector<32x32xf32>
    %cst_10 = arith.constant 0.000000e+00 : f32
    %15 = vector.broadcast %cst_10 : f32 to vector<32x32xf32>
    %16 = arith.maximumf %14, %15 : vector<32x32xf32>
    %c0_11 = arith.constant 0 : index
    %c0_12 = arith.constant 0 : index
    %17 = vector.load %arg3[%c0_11, %c0_12] : memref<32x128xf32, #tpu.memory_space<vmem>>, vector<32x128xf32>
    %cst_13 = arith.constant dense<0.000000e+00> : vector<32x128xf32>
    %18 = tpu.matmul %16, %17, %cst_13 {dimension_numbers = #tpu.dot_dimension_numbers<[1], [0], [0], [1], [0, 0, 1, 1], [], []>} : vector<32x32xf32>, vector<32x128xf32>, vector<32x128xf32> -> vector<32x128xf32>
    %19 = vector.extract_strided_slice %0 {offsets = [2, 0], sizes = [1, 128], strides = [1, 1]} : vector<16x128xf32> to vector<1x128xf32>
    %20 = vector.broadcast %19 : vector<1x128xf32> to vector<32x128xf32>
    %21 = arith.addf %18, %20 : vector<32x128xf32>
    %22 = vector.shape_cast %21 : vector<32x128xf32> to vector<2x16x128xf32>
    %c0_14 = arith.constant 0 : index
    %c0_15 = arith.constant 0 : index
    %23 = vector.load %arg4[%c0_14, %c0_15] : memref<32x128xf32, #tpu.memory_space<vmem>>, vector<32x128xf32>
    %cst_16 = arith.constant 0.000000e+00 : f32
    %24 = vector.broadcast %cst_16 : f32 to vector<2x32xf32>
    %cst_17 = arith.constant 0.000000e+00 : f32
    %25 = vector.broadcast %cst_17 : f32 to vector<2x32xf32>
    %26 = vector.extract_strided_slice %22 {offsets = [0, 0, 0], sizes = [2, 1, 128], strides = [1, 1, 1]} : vector<2x16x128xf32> to vector<2x1x128xf32>
    %27 = vector.shape_cast %26 : vector<2x1x128xf32> to vector<2x128xf32>
    %cst_18 = arith.constant dense<0.000000e+00> : vector<2x128xf32>
    %28 = tpu.matmul %24, %23, %cst_18 {dimension_numbers = #tpu.dot_dimension_numbers<[1], [0], [0], [1], [0, 0, 1, 1], [], []>} : vector<2x32xf32>, vector<32x128xf32>, vector<2x128xf32> -> vector<2x128xf32>
    %29 = arith.addf %27, %28 : vector<2x128xf32>
    %30 = vector.extract_strided_slice %29 {offsets = [0, 0], sizes = [2, 32], strides = [1, 1]} : vector<2x128xf32> to vector<2x32xf32>
    %31 = arith.negf %30 : vector<2x32xf32>
    %32 = math.exp %31 : vector<2x32xf32>
    %cst_19 = arith.constant 1.000000e+00 : f32
    %33 = vector.broadcast %cst_19 : f32 to vector<2x32xf32>
    %34 = arith.addf %33, %32 : vector<2x32xf32>
    %35 = arith.divf %33, %34 : vector<2x32xf32>
    %36 = vector.extract_strided_slice %29 {offsets = [0, 32], sizes = [2, 32], strides = [1, 1]} : vector<2x128xf32> to vector<2x32xf32>
    %37 = arith.negf %36 : vector<2x32xf32>
    %38 = math.exp %37 : vector<2x32xf32>
    %cst_20 = arith.constant 1.000000e+00 : f32
    %39 = vector.broadcast %cst_20 : f32 to vector<2x32xf32>
    %40 = arith.addf %39, %38 : vector<2x32xf32>
    %41 = arith.divf %39, %40 : vector<2x32xf32>
    %42 = vector.extract_strided_slice %29 {offsets = [0, 64], sizes = [2, 32], strides = [1, 1]} : vector<2x128xf32> to vector<2x32xf32>
    %43 = math.tanh %42 : vector<2x32xf32>
    %44 = vector.extract_strided_slice %29 {offsets = [0, 96], sizes = [2, 32], strides = [1, 1]} : vector<2x128xf32> to vector<2x32xf32>
    %45 = arith.negf %44 : vector<2x32xf32>
    %46 = math.exp %45 : vector<2x32xf32>
    %cst_21 = arith.constant 1.000000e+00 : f32
    %47 = vector.broadcast %cst_21 : f32 to vector<2x32xf32>
    %48 = arith.addf %47, %46 : vector<2x32xf32>
    %49 = arith.divf %47, %48 : vector<2x32xf32>
    %50 = arith.mulf %41, %25 : vector<2x32xf32>
    %51 = arith.mulf %35, %43 : vector<2x32xf32>
    %52 = arith.addf %50, %51 : vector<2x32xf32>
    %53 = math.tanh %52 : vector<2x32xf32>
    %54 = arith.mulf %49, %53 : vector<2x32xf32>
    %55 = vector.extract_strided_slice %22 {offsets = [0, 1, 0], sizes = [2, 1, 128], strides = [1, 1, 1]} : vector<2x16x128xf32> to vector<2x1x128xf32>
    %56 = vector.shape_cast %55 : vector<2x1x128xf32> to vector<2x128xf32>
    %cst_22 = arith.constant dense<0.000000e+00> : vector<2x128xf32>
    %57 = tpu.matmul %54, %23, %cst_22 {dimension_numbers = #tpu.dot_dimension_numbers<[1], [0], [0], [1], [0, 0, 1, 1], [], []>} : vector<2x32xf32>, vector<32x128xf32>, vector<2x128xf32> -> vector<2x128xf32>
    %58 = arith.addf %56, %57 : vector<2x128xf32>
    %59 = vector.extract_strided_slice %58 {offsets = [0, 0], sizes = [2, 32], strides = [1, 1]} : vector<2x128xf32> to vector<2x32xf32>
    %60 = arith.negf %59 : vector<2x32xf32>
    %61 = math.exp %60 : vector<2x32xf32>
    %cst_23 = arith.constant 1.000000e+00 : f32
    %62 = vector.broadcast %cst_23 : f32 to vector<2x32xf32>
    %63 = arith.addf %62, %61 : vector<2x32xf32>
    %64 = arith.divf %62, %63 : vector<2x32xf32>
    %65 = vector.extract_strided_slice %58 {offsets = [0, 32], sizes = [2, 32], strides = [1, 1]} : vector<2x128xf32> to vector<2x32xf32>
    %66 = arith.negf %65 : vector<2x32xf32>
    %67 = math.exp %66 : vector<2x32xf32>
    %cst_24 = arith.constant 1.000000e+00 : f32
    %68 = vector.broadcast %cst_24 : f32 to vector<2x32xf32>
    %69 = arith.addf %68, %67 : vector<2x32xf32>
    %70 = arith.divf %68, %69 : vector<2x32xf32>
    %71 = vector.extract_strided_slice %58 {offsets = [0, 64], sizes = [2, 32], strides = [1, 1]} : vector<2x128xf32> to vector<2x32xf32>
    %72 = math.tanh %71 : vector<2x32xf32>
    %73 = vector.extract_strided_slice %58 {offsets = [0, 96], sizes = [2, 32], strides = [1, 1]} : vector<2x128xf32> to vector<2x32xf32>
    %74 = arith.negf %73 : vector<2x32xf32>
    %75 = math.exp %74 : vector<2x32xf32>
    %cst_25 = arith.constant 1.000000e+00 : f32
    %76 = vector.broadcast %cst_25 : f32 to vector<2x32xf32>
    %77 = arith.addf %76, %75 : vector<2x32xf32>
    %78 = arith.divf %76, %77 : vector<2x32xf32>
    %79 = arith.mulf %70, %52 : vector<2x32xf32>
    %80 = arith.mulf %64, %72 : vector<2x32xf32>
    %81 = arith.addf %79, %80 : vector<2x32xf32>
    %82 = math.tanh %81 : vector<2x32xf32>
    %83 = arith.mulf %78, %82 : vector<2x32xf32>
    %84 = vector.extract_strided_slice %22 {offsets = [0, 2, 0], sizes = [2, 1, 128], strides = [1, 1, 1]} : vector<2x16x128xf32> to vector<2x1x128xf32>
    %85 = vector.shape_cast %84 : vector<2x1x128xf32> to vector<2x128xf32>
    %cst_26 = arith.constant dense<0.000000e+00> : vector<2x128xf32>
    %86 = tpu.matmul %83, %23, %cst_26 {dimension_numbers = #tpu.dot_dimension_numbers<[1], [0], [0], [1], [0, 0, 1, 1], [], []>} : vector<2x32xf32>, vector<32x128xf32>, vector<2x128xf32> -> vector<2x128xf32>
    %87 = arith.addf %85, %86 : vector<2x128xf32>
    %88 = vector.extract_strided_slice %87 {offsets = [0, 0], sizes = [2, 32], strides = [1, 1]} : vector<2x128xf32> to vector<2x32xf32>
    %89 = arith.negf %88 : vector<2x32xf32>
    %90 = math.exp %89 : vector<2x32xf32>
    %cst_27 = arith.constant 1.000000e+00 : f32
    %91 = vector.broadcast %cst_27 : f32 to vector<2x32xf32>
    %92 = arith.addf %91, %90 : vector<2x32xf32>
    %93 = arith.divf %91, %92 : vector<2x32xf32>
    %94 = vector.extract_strided_slice %87 {offsets = [0, 32], sizes = [2, 32], strides = [1, 1]} : vector<2x128xf32> to vector<2x32xf32>
    %95 = arith.negf %94 : vector<2x32xf32>
    %96 = math.exp %95 : vector<2x32xf32>
    %cst_28 = arith.constant 1.000000e+00 : f32
    %97 = vector.broadcast %cst_28 : f32 to vector<2x32xf32>
    %98 = arith.addf %97, %96 : vector<2x32xf32>
    %99 = arith.divf %97, %98 : vector<2x32xf32>
    %100 = vector.extract_strided_slice %87 {offsets = [0, 64], sizes = [2, 32], strides = [1, 1]} : vector<2x128xf32> to vector<2x32xf32>
    %101 = math.tanh %100 : vector<2x32xf32>
    %102 = vector.extract_strided_slice %87 {offsets = [0, 96], sizes = [2, 32], strides = [1, 1]} : vector<2x128xf32> to vector<2x32xf32>
    %103 = arith.negf %102 : vector<2x32xf32>
    %104 = math.exp %103 : vector<2x32xf32>
    %cst_29 = arith.constant 1.000000e+00 : f32
    %105 = vector.broadcast %cst_29 : f32 to vector<2x32xf32>
    %106 = arith.addf %105, %104 : vector<2x32xf32>
    %107 = arith.divf %105, %106 : vector<2x32xf32>
    %108 = arith.mulf %99, %81 : vector<2x32xf32>
    %109 = arith.mulf %93, %101 : vector<2x32xf32>
    %110 = arith.addf %108, %109 : vector<2x32xf32>
    %111 = math.tanh %110 : vector<2x32xf32>
    %112 = arith.mulf %107, %111 : vector<2x32xf32>
    %113 = vector.extract_strided_slice %22 {offsets = [0, 3, 0], sizes = [2, 1, 128], strides = [1, 1, 1]} : vector<2x16x128xf32> to vector<2x1x128xf32>
    %114 = vector.shape_cast %113 : vector<2x1x128xf32> to vector<2x128xf32>
    %cst_30 = arith.constant dense<0.000000e+00> : vector<2x128xf32>
    %115 = tpu.matmul %112, %23, %cst_30 {dimension_numbers = #tpu.dot_dimension_numbers<[1], [0], [0], [1], [0, 0, 1, 1], [], []>} : vector<2x32xf32>, vector<32x128xf32>, vector<2x128xf32> -> vector<2x128xf32>
    %116 = arith.addf %114, %115 : vector<2x128xf32>
    %117 = vector.extract_strided_slice %116 {offsets = [0, 0], sizes = [2, 32], strides = [1, 1]} : vector<2x128xf32> to vector<2x32xf32>
    %118 = arith.negf %117 : vector<2x32xf32>
    %119 = math.exp %118 : vector<2x32xf32>
    %cst_31 = arith.constant 1.000000e+00 : f32
    %120 = vector.broadcast %cst_31 : f32 to vector<2x32xf32>
    %121 = arith.addf %120, %119 : vector<2x32xf32>
    %122 = arith.divf %120, %121 : vector<2x32xf32>
    %123 = vector.extract_strided_slice %116 {offsets = [0, 32], sizes = [2, 32], strides = [1, 1]} : vector<2x128xf32> to vector<2x32xf32>
    %124 = arith.negf %123 : vector<2x32xf32>
    %125 = math.exp %124 : vector<2x32xf32>
    %cst_32 = arith.constant 1.000000e+00 : f32
    %126 = vector.broadcast %cst_32 : f32 to vector<2x32xf32>
    %127 = arith.addf %126, %125 : vector<2x32xf32>
    %128 = arith.divf %126, %127 : vector<2x32xf32>
    %129 = vector.extract_strided_slice %116 {offsets = [0, 64], sizes = [2, 32], strides = [1, 1]} : vector<2x128xf32> to vector<2x32xf32>
    %130 = math.tanh %129 : vector<2x32xf32>
    %131 = vector.extract_strided_slice %116 {offsets = [0, 96], sizes = [2, 32], strides = [1, 1]} : vector<2x128xf32> to vector<2x32xf32>
    %132 = arith.negf %131 : vector<2x32xf32>
    %133 = math.exp %132 : vector<2x32xf32>
    %cst_33 = arith.constant 1.000000e+00 : f32
    %134 = vector.broadcast %cst_33 : f32 to vector<2x32xf32>
    %135 = arith.addf %134, %133 : vector<2x32xf32>
    %136 = arith.divf %134, %135 : vector<2x32xf32>
    %137 = arith.mulf %128, %110 : vector<2x32xf32>
    %138 = arith.mulf %122, %130 : vector<2x32xf32>
    %139 = arith.addf %137, %138 : vector<2x32xf32>
    %140 = math.tanh %139 : vector<2x32xf32>
    %141 = arith.mulf %136, %140 : vector<2x32xf32>
    %142 = vector.extract_strided_slice %22 {offsets = [0, 4, 0], sizes = [2, 1, 128], strides = [1, 1, 1]} : vector<2x16x128xf32> to vector<2x1x128xf32>
    %143 = vector.shape_cast %142 : vector<2x1x128xf32> to vector<2x128xf32>
    %cst_34 = arith.constant dense<0.000000e+00> : vector<2x128xf32>
    %144 = tpu.matmul %141, %23, %cst_34 {dimension_numbers = #tpu.dot_dimension_numbers<[1], [0], [0], [1], [0, 0, 1, 1], [], []>} : vector<2x32xf32>, vector<32x128xf32>, vector<2x128xf32> -> vector<2x128xf32>
    %145 = arith.addf %143, %144 : vector<2x128xf32>
    %146 = vector.extract_strided_slice %145 {offsets = [0, 0], sizes = [2, 32], strides = [1, 1]} : vector<2x128xf32> to vector<2x32xf32>
    %147 = arith.negf %146 : vector<2x32xf32>
    %148 = math.exp %147 : vector<2x32xf32>
    %cst_35 = arith.constant 1.000000e+00 : f32
    %149 = vector.broadcast %cst_35 : f32 to vector<2x32xf32>
    %150 = arith.addf %149, %148 : vector<2x32xf32>
    %151 = arith.divf %149, %150 : vector<2x32xf32>
    %152 = vector.extract_strided_slice %145 {offsets = [0, 32], sizes = [2, 32], strides = [1, 1]} : vector<2x128xf32> to vector<2x32xf32>
    %153 = arith.negf %152 : vector<2x32xf32>
    %154 = math.exp %153 : vector<2x32xf32>
    %cst_36 = arith.constant 1.000000e+00 : f32
    %155 = vector.broadcast %cst_36 : f32 to vector<2x32xf32>
    %156 = arith.addf %155, %154 : vector<2x32xf32>
    %157 = arith.divf %155, %156 : vector<2x32xf32>
    %158 = vector.extract_strided_slice %145 {offsets = [0, 64], sizes = [2, 32], strides = [1, 1]} : vector<2x128xf32> to vector<2x32xf32>
    %159 = math.tanh %158 : vector<2x32xf32>
    %160 = vector.extract_strided_slice %145 {offsets = [0, 96], sizes = [2, 32], strides = [1, 1]} : vector<2x128xf32> to vector<2x32xf32>
    %161 = arith.negf %160 : vector<2x32xf32>
    %162 = math.exp %161 : vector<2x32xf32>
    %cst_37 = arith.constant 1.000000e+00 : f32
    %163 = vector.broadcast %cst_37 : f32 to vector<2x32xf32>
    %164 = arith.addf %163, %162 : vector<2x32xf32>
    %165 = arith.divf %163, %164 : vector<2x32xf32>
    %166 = arith.mulf %157, %139 : vector<2x32xf32>
    %167 = arith.mulf %151, %159 : vector<2x32xf32>
    %168 = arith.addf %166, %167 : vector<2x32xf32>
    %169 = math.tanh %168 : vector<2x32xf32>
    %170 = arith.mulf %165, %169 : vector<2x32xf32>
    %171 = vector.extract_strided_slice %22 {offsets = [0, 5, 0], sizes = [2, 1, 128], strides = [1, 1, 1]} : vector<2x16x128xf32> to vector<2x1x128xf32>
    %172 = vector.shape_cast %171 : vector<2x1x128xf32> to vector<2x128xf32>
    %cst_38 = arith.constant dense<0.000000e+00> : vector<2x128xf32>
    %173 = tpu.matmul %170, %23, %cst_38 {dimension_numbers = #tpu.dot_dimension_numbers<[1], [0], [0], [1], [0, 0, 1, 1], [], []>} : vector<2x32xf32>, vector<32x128xf32>, vector<2x128xf32> -> vector<2x128xf32>
    %174 = arith.addf %172, %173 : vector<2x128xf32>
    %175 = vector.extract_strided_slice %174 {offsets = [0, 0], sizes = [2, 32], strides = [1, 1]} : vector<2x128xf32> to vector<2x32xf32>
    %176 = arith.negf %175 : vector<2x32xf32>
    %177 = math.exp %176 : vector<2x32xf32>
    %cst_39 = arith.constant 1.000000e+00 : f32
    %178 = vector.broadcast %cst_39 : f32 to vector<2x32xf32>
    %179 = arith.addf %178, %177 : vector<2x32xf32>
    %180 = arith.divf %178, %179 : vector<2x32xf32>
    %181 = vector.extract_strided_slice %174 {offsets = [0, 32], sizes = [2, 32], strides = [1, 1]} : vector<2x128xf32> to vector<2x32xf32>
    %182 = arith.negf %181 : vector<2x32xf32>
    %183 = math.exp %182 : vector<2x32xf32>
    %cst_40 = arith.constant 1.000000e+00 : f32
    %184 = vector.broadcast %cst_40 : f32 to vector<2x32xf32>
    %185 = arith.addf %184, %183 : vector<2x32xf32>
    %186 = arith.divf %184, %185 : vector<2x32xf32>
    %187 = vector.extract_strided_slice %174 {offsets = [0, 64], sizes = [2, 32], strides = [1, 1]} : vector<2x128xf32> to vector<2x32xf32>
    %188 = math.tanh %187 : vector<2x32xf32>
    %189 = vector.extract_strided_slice %174 {offsets = [0, 96], sizes = [2, 32], strides = [1, 1]} : vector<2x128xf32> to vector<2x32xf32>
    %190 = arith.negf %189 : vector<2x32xf32>
    %191 = math.exp %190 : vector<2x32xf32>
    %cst_41 = arith.constant 1.000000e+00 : f32
    %192 = vector.broadcast %cst_41 : f32 to vector<2x32xf32>
    %193 = arith.addf %192, %191 : vector<2x32xf32>
    %194 = arith.divf %192, %193 : vector<2x32xf32>
    %195 = arith.mulf %186, %168 : vector<2x32xf32>
    %196 = arith.mulf %180, %188 : vector<2x32xf32>
    %197 = arith.addf %195, %196 : vector<2x32xf32>
    %198 = math.tanh %197 : vector<2x32xf32>
    %199 = arith.mulf %194, %198 : vector<2x32xf32>
    %200 = vector.extract_strided_slice %22 {offsets = [0, 6, 0], sizes = [2, 1, 128], strides = [1, 1, 1]} : vector<2x16x128xf32> to vector<2x1x128xf32>
    %201 = vector.shape_cast %200 : vector<2x1x128xf32> to vector<2x128xf32>
    %cst_42 = arith.constant dense<0.000000e+00> : vector<2x128xf32>
    %202 = tpu.matmul %199, %23, %cst_42 {dimension_numbers = #tpu.dot_dimension_numbers<[1], [0], [0], [1], [0, 0, 1, 1], [], []>} : vector<2x32xf32>, vector<32x128xf32>, vector<2x128xf32> -> vector<2x128xf32>
    %203 = arith.addf %201, %202 : vector<2x128xf32>
    %204 = vector.extract_strided_slice %203 {offsets = [0, 0], sizes = [2, 32], strides = [1, 1]} : vector<2x128xf32> to vector<2x32xf32>
    %205 = arith.negf %204 : vector<2x32xf32>
    %206 = math.exp %205 : vector<2x32xf32>
    %cst_43 = arith.constant 1.000000e+00 : f32
    %207 = vector.broadcast %cst_43 : f32 to vector<2x32xf32>
    %208 = arith.addf %207, %206 : vector<2x32xf32>
    %209 = arith.divf %207, %208 : vector<2x32xf32>
    %210 = vector.extract_strided_slice %203 {offsets = [0, 32], sizes = [2, 32], strides = [1, 1]} : vector<2x128xf32> to vector<2x32xf32>
    %211 = arith.negf %210 : vector<2x32xf32>
    %212 = math.exp %211 : vector<2x32xf32>
    %cst_44 = arith.constant 1.000000e+00 : f32
    %213 = vector.broadcast %cst_44 : f32 to vector<2x32xf32>
    %214 = arith.addf %213, %212 : vector<2x32xf32>
    %215 = arith.divf %213, %214 : vector<2x32xf32>
    %216 = vector.extract_strided_slice %203 {offsets = [0, 64], sizes = [2, 32], strides = [1, 1]} : vector<2x128xf32> to vector<2x32xf32>
    %217 = math.tanh %216 : vector<2x32xf32>
    %218 = vector.extract_strided_slice %203 {offsets = [0, 96], sizes = [2, 32], strides = [1, 1]} : vector<2x128xf32> to vector<2x32xf32>
    %219 = arith.negf %218 : vector<2x32xf32>
    %220 = math.exp %219 : vector<2x32xf32>
    %cst_45 = arith.constant 1.000000e+00 : f32
    %221 = vector.broadcast %cst_45 : f32 to vector<2x32xf32>
    %222 = arith.addf %221, %220 : vector<2x32xf32>
    %223 = arith.divf %221, %222 : vector<2x32xf32>
    %224 = arith.mulf %215, %197 : vector<2x32xf32>
    %225 = arith.mulf %209, %217 : vector<2x32xf32>
    %226 = arith.addf %224, %225 : vector<2x32xf32>
    %227 = math.tanh %226 : vector<2x32xf32>
    %228 = arith.mulf %223, %227 : vector<2x32xf32>
    %229 = vector.extract_strided_slice %22 {offsets = [0, 7, 0], sizes = [2, 1, 128], strides = [1, 1, 1]} : vector<2x16x128xf32> to vector<2x1x128xf32>
    %230 = vector.shape_cast %229 : vector<2x1x128xf32> to vector<2x128xf32>
    %cst_46 = arith.constant dense<0.000000e+00> : vector<2x128xf32>
    %231 = tpu.matmul %228, %23, %cst_46 {dimension_numbers = #tpu.dot_dimension_numbers<[1], [0], [0], [1], [0, 0, 1, 1], [], []>} : vector<2x32xf32>, vector<32x128xf32>, vector<2x128xf32> -> vector<2x128xf32>
    %232 = arith.addf %230, %231 : vector<2x128xf32>
    %233 = vector.extract_strided_slice %232 {offsets = [0, 0], sizes = [2, 32], strides = [1, 1]} : vector<2x128xf32> to vector<2x32xf32>
    %234 = arith.negf %233 : vector<2x32xf32>
    %235 = math.exp %234 : vector<2x32xf32>
    %cst_47 = arith.constant 1.000000e+00 : f32
    %236 = vector.broadcast %cst_47 : f32 to vector<2x32xf32>
    %237 = arith.addf %236, %235 : vector<2x32xf32>
    %238 = arith.divf %236, %237 : vector<2x32xf32>
    %239 = vector.extract_strided_slice %232 {offsets = [0, 32], sizes = [2, 32], strides = [1, 1]} : vector<2x128xf32> to vector<2x32xf32>
    %240 = arith.negf %239 : vector<2x32xf32>
    %241 = math.exp %240 : vector<2x32xf32>
    %cst_48 = arith.constant 1.000000e+00 : f32
    %242 = vector.broadcast %cst_48 : f32 to vector<2x32xf32>
    %243 = arith.addf %242, %241 : vector<2x32xf32>
    %244 = arith.divf %242, %243 : vector<2x32xf32>
    %245 = vector.extract_strided_slice %232 {offsets = [0, 64], sizes = [2, 32], strides = [1, 1]} : vector<2x128xf32> to vector<2x32xf32>
    %246 = math.tanh %245 : vector<2x32xf32>
    %247 = vector.extract_strided_slice %232 {offsets = [0, 96], sizes = [2, 32], strides = [1, 1]} : vector<2x128xf32> to vector<2x32xf32>
    %248 = arith.negf %247 : vector<2x32xf32>
    %249 = math.exp %248 : vector<2x32xf32>
    %cst_49 = arith.constant 1.000000e+00 : f32
    %250 = vector.broadcast %cst_49 : f32 to vector<2x32xf32>
    %251 = arith.addf %250, %249 : vector<2x32xf32>
    %252 = arith.divf %250, %251 : vector<2x32xf32>
    %253 = arith.mulf %244, %226 : vector<2x32xf32>
    %254 = arith.mulf %238, %246 : vector<2x32xf32>
    %255 = arith.addf %253, %254 : vector<2x32xf32>
    %256 = math.tanh %255 : vector<2x32xf32>
    %257 = arith.mulf %252, %256 : vector<2x32xf32>
    %258 = vector.extract_strided_slice %22 {offsets = [0, 8, 0], sizes = [2, 1, 128], strides = [1, 1, 1]} : vector<2x16x128xf32> to vector<2x1x128xf32>
    %259 = vector.shape_cast %258 : vector<2x1x128xf32> to vector<2x128xf32>
    %cst_50 = arith.constant dense<0.000000e+00> : vector<2x128xf32>
    %260 = tpu.matmul %257, %23, %cst_50 {dimension_numbers = #tpu.dot_dimension_numbers<[1], [0], [0], [1], [0, 0, 1, 1], [], []>} : vector<2x32xf32>, vector<32x128xf32>, vector<2x128xf32> -> vector<2x128xf32>
    %261 = arith.addf %259, %260 : vector<2x128xf32>
    %262 = vector.extract_strided_slice %261 {offsets = [0, 0], sizes = [2, 32], strides = [1, 1]} : vector<2x128xf32> to vector<2x32xf32>
    %263 = arith.negf %262 : vector<2x32xf32>
    %264 = math.exp %263 : vector<2x32xf32>
    %cst_51 = arith.constant 1.000000e+00 : f32
    %265 = vector.broadcast %cst_51 : f32 to vector<2x32xf32>
    %266 = arith.addf %265, %264 : vector<2x32xf32>
    %267 = arith.divf %265, %266 : vector<2x32xf32>
    %268 = vector.extract_strided_slice %261 {offsets = [0, 32], sizes = [2, 32], strides = [1, 1]} : vector<2x128xf32> to vector<2x32xf32>
    %269 = arith.negf %268 : vector<2x32xf32>
    %270 = math.exp %269 : vector<2x32xf32>
    %cst_52 = arith.constant 1.000000e+00 : f32
    %271 = vector.broadcast %cst_52 : f32 to vector<2x32xf32>
    %272 = arith.addf %271, %270 : vector<2x32xf32>
    %273 = arith.divf %271, %272 : vector<2x32xf32>
    %274 = vector.extract_strided_slice %261 {offsets = [0, 64], sizes = [2, 32], strides = [1, 1]} : vector<2x128xf32> to vector<2x32xf32>
    %275 = math.tanh %274 : vector<2x32xf32>
    %276 = vector.extract_strided_slice %261 {offsets = [0, 96], sizes = [2, 32], strides = [1, 1]} : vector<2x128xf32> to vector<2x32xf32>
    %277 = arith.negf %276 : vector<2x32xf32>
    %278 = math.exp %277 : vector<2x32xf32>
    %cst_53 = arith.constant 1.000000e+00 : f32
    %279 = vector.broadcast %cst_53 : f32 to vector<2x32xf32>
    %280 = arith.addf %279, %278 : vector<2x32xf32>
    %281 = arith.divf %279, %280 : vector<2x32xf32>
    %282 = arith.mulf %273, %255 : vector<2x32xf32>
    %283 = arith.mulf %267, %275 : vector<2x32xf32>
    %284 = arith.addf %282, %283 : vector<2x32xf32>
    %285 = math.tanh %284 : vector<2x32xf32>
    %286 = arith.mulf %281, %285 : vector<2x32xf32>
    %287 = vector.extract_strided_slice %22 {offsets = [0, 9, 0], sizes = [2, 1, 128], strides = [1, 1, 1]} : vector<2x16x128xf32> to vector<2x1x128xf32>
    %288 = vector.shape_cast %287 : vector<2x1x128xf32> to vector<2x128xf32>
    %cst_54 = arith.constant dense<0.000000e+00> : vector<2x128xf32>
    %289 = tpu.matmul %286, %23, %cst_54 {dimension_numbers = #tpu.dot_dimension_numbers<[1], [0], [0], [1], [0, 0, 1, 1], [], []>} : vector<2x32xf32>, vector<32x128xf32>, vector<2x128xf32> -> vector<2x128xf32>
    %290 = arith.addf %288, %289 : vector<2x128xf32>
    %291 = vector.extract_strided_slice %290 {offsets = [0, 0], sizes = [2, 32], strides = [1, 1]} : vector<2x128xf32> to vector<2x32xf32>
    %292 = arith.negf %291 : vector<2x32xf32>
    %293 = math.exp %292 : vector<2x32xf32>
    %cst_55 = arith.constant 1.000000e+00 : f32
    %294 = vector.broadcast %cst_55 : f32 to vector<2x32xf32>
    %295 = arith.addf %294, %293 : vector<2x32xf32>
    %296 = arith.divf %294, %295 : vector<2x32xf32>
    %297 = vector.extract_strided_slice %290 {offsets = [0, 32], sizes = [2, 32], strides = [1, 1]} : vector<2x128xf32> to vector<2x32xf32>
    %298 = arith.negf %297 : vector<2x32xf32>
    %299 = math.exp %298 : vector<2x32xf32>
    %cst_56 = arith.constant 1.000000e+00 : f32
    %300 = vector.broadcast %cst_56 : f32 to vector<2x32xf32>
    %301 = arith.addf %300, %299 : vector<2x32xf32>
    %302 = arith.divf %300, %301 : vector<2x32xf32>
    %303 = vector.extract_strided_slice %290 {offsets = [0, 64], sizes = [2, 32], strides = [1, 1]} : vector<2x128xf32> to vector<2x32xf32>
    %304 = math.tanh %303 : vector<2x32xf32>
    %305 = vector.extract_strided_slice %290 {offsets = [0, 96], sizes = [2, 32], strides = [1, 1]} : vector<2x128xf32> to vector<2x32xf32>
    %306 = arith.negf %305 : vector<2x32xf32>
    %307 = math.exp %306 : vector<2x32xf32>
    %cst_57 = arith.constant 1.000000e+00 : f32
    %308 = vector.broadcast %cst_57 : f32 to vector<2x32xf32>
    %309 = arith.addf %308, %307 : vector<2x32xf32>
    %310 = arith.divf %308, %309 : vector<2x32xf32>
    %311 = arith.mulf %302, %284 : vector<2x32xf32>
    %312 = arith.mulf %296, %304 : vector<2x32xf32>
    %313 = arith.addf %311, %312 : vector<2x32xf32>
    %314 = math.tanh %313 : vector<2x32xf32>
    %315 = arith.mulf %310, %314 : vector<2x32xf32>
    %316 = vector.extract_strided_slice %22 {offsets = [0, 10, 0], sizes = [2, 1, 128], strides = [1, 1, 1]} : vector<2x16x128xf32> to vector<2x1x128xf32>
    %317 = vector.shape_cast %316 : vector<2x1x128xf32> to vector<2x128xf32>
    %cst_58 = arith.constant dense<0.000000e+00> : vector<2x128xf32>
    %318 = tpu.matmul %315, %23, %cst_58 {dimension_numbers = #tpu.dot_dimension_numbers<[1], [0], [0], [1], [0, 0, 1, 1], [], []>} : vector<2x32xf32>, vector<32x128xf32>, vector<2x128xf32> -> vector<2x128xf32>
    %319 = arith.addf %317, %318 : vector<2x128xf32>
    %320 = vector.extract_strided_slice %319 {offsets = [0, 0], sizes = [2, 32], strides = [1, 1]} : vector<2x128xf32> to vector<2x32xf32>
    %321 = arith.negf %320 : vector<2x32xf32>
    %322 = math.exp %321 : vector<2x32xf32>
    %cst_59 = arith.constant 1.000000e+00 : f32
    %323 = vector.broadcast %cst_59 : f32 to vector<2x32xf32>
    %324 = arith.addf %323, %322 : vector<2x32xf32>
    %325 = arith.divf %323, %324 : vector<2x32xf32>
    %326 = vector.extract_strided_slice %319 {offsets = [0, 32], sizes = [2, 32], strides = [1, 1]} : vector<2x128xf32> to vector<2x32xf32>
    %327 = arith.negf %326 : vector<2x32xf32>
    %328 = math.exp %327 : vector<2x32xf32>
    %cst_60 = arith.constant 1.000000e+00 : f32
    %329 = vector.broadcast %cst_60 : f32 to vector<2x32xf32>
    %330 = arith.addf %329, %328 : vector<2x32xf32>
    %331 = arith.divf %329, %330 : vector<2x32xf32>
    %332 = vector.extract_strided_slice %319 {offsets = [0, 64], sizes = [2, 32], strides = [1, 1]} : vector<2x128xf32> to vector<2x32xf32>
    %333 = math.tanh %332 : vector<2x32xf32>
    %334 = vector.extract_strided_slice %319 {offsets = [0, 96], sizes = [2, 32], strides = [1, 1]} : vector<2x128xf32> to vector<2x32xf32>
    %335 = arith.negf %334 : vector<2x32xf32>
    %336 = math.exp %335 : vector<2x32xf32>
    %cst_61 = arith.constant 1.000000e+00 : f32
    %337 = vector.broadcast %cst_61 : f32 to vector<2x32xf32>
    %338 = arith.addf %337, %336 : vector<2x32xf32>
    %339 = arith.divf %337, %338 : vector<2x32xf32>
    %340 = arith.mulf %331, %313 : vector<2x32xf32>
    %341 = arith.mulf %325, %333 : vector<2x32xf32>
    %342 = arith.addf %340, %341 : vector<2x32xf32>
    %343 = math.tanh %342 : vector<2x32xf32>
    %344 = arith.mulf %339, %343 : vector<2x32xf32>
    %345 = vector.extract_strided_slice %22 {offsets = [0, 11, 0], sizes = [2, 1, 128], strides = [1, 1, 1]} : vector<2x16x128xf32> to vector<2x1x128xf32>
    %346 = vector.shape_cast %345 : vector<2x1x128xf32> to vector<2x128xf32>
    %cst_62 = arith.constant dense<0.000000e+00> : vector<2x128xf32>
    %347 = tpu.matmul %344, %23, %cst_62 {dimension_numbers = #tpu.dot_dimension_numbers<[1], [0], [0], [1], [0, 0, 1, 1], [], []>} : vector<2x32xf32>, vector<32x128xf32>, vector<2x128xf32> -> vector<2x128xf32>
    %348 = arith.addf %346, %347 : vector<2x128xf32>
    %349 = vector.extract_strided_slice %348 {offsets = [0, 0], sizes = [2, 32], strides = [1, 1]} : vector<2x128xf32> to vector<2x32xf32>
    %350 = arith.negf %349 : vector<2x32xf32>
    %351 = math.exp %350 : vector<2x32xf32>
    %cst_63 = arith.constant 1.000000e+00 : f32
    %352 = vector.broadcast %cst_63 : f32 to vector<2x32xf32>
    %353 = arith.addf %352, %351 : vector<2x32xf32>
    %354 = arith.divf %352, %353 : vector<2x32xf32>
    %355 = vector.extract_strided_slice %348 {offsets = [0, 32], sizes = [2, 32], strides = [1, 1]} : vector<2x128xf32> to vector<2x32xf32>
    %356 = arith.negf %355 : vector<2x32xf32>
    %357 = math.exp %356 : vector<2x32xf32>
    %cst_64 = arith.constant 1.000000e+00 : f32
    %358 = vector.broadcast %cst_64 : f32 to vector<2x32xf32>
    %359 = arith.addf %358, %357 : vector<2x32xf32>
    %360 = arith.divf %358, %359 : vector<2x32xf32>
    %361 = vector.extract_strided_slice %348 {offsets = [0, 64], sizes = [2, 32], strides = [1, 1]} : vector<2x128xf32> to vector<2x32xf32>
    %362 = math.tanh %361 : vector<2x32xf32>
    %363 = vector.extract_strided_slice %348 {offsets = [0, 96], sizes = [2, 32], strides = [1, 1]} : vector<2x128xf32> to vector<2x32xf32>
    %364 = arith.negf %363 : vector<2x32xf32>
    %365 = math.exp %364 : vector<2x32xf32>
    %cst_65 = arith.constant 1.000000e+00 : f32
    %366 = vector.broadcast %cst_65 : f32 to vector<2x32xf32>
    %367 = arith.addf %366, %365 : vector<2x32xf32>
    %368 = arith.divf %366, %367 : vector<2x32xf32>
    %369 = arith.mulf %360, %342 : vector<2x32xf32>
    %370 = arith.mulf %354, %362 : vector<2x32xf32>
    %371 = arith.addf %369, %370 : vector<2x32xf32>
    %372 = math.tanh %371 : vector<2x32xf32>
    %373 = arith.mulf %368, %372 : vector<2x32xf32>
    %374 = vector.extract_strided_slice %22 {offsets = [0, 12, 0], sizes = [2, 1, 128], strides = [1, 1, 1]} : vector<2x16x128xf32> to vector<2x1x128xf32>
    %375 = vector.shape_cast %374 : vector<2x1x128xf32> to vector<2x128xf32>
    %cst_66 = arith.constant dense<0.000000e+00> : vector<2x128xf32>
    %376 = tpu.matmul %373, %23, %cst_66 {dimension_numbers = #tpu.dot_dimension_numbers<[1], [0], [0], [1], [0, 0, 1, 1], [], []>} : vector<2x32xf32>, vector<32x128xf32>, vector<2x128xf32> -> vector<2x128xf32>
    %377 = arith.addf %375, %376 : vector<2x128xf32>
    %378 = vector.extract_strided_slice %377 {offsets = [0, 0], sizes = [2, 32], strides = [1, 1]} : vector<2x128xf32> to vector<2x32xf32>
    %379 = arith.negf %378 : vector<2x32xf32>
    %380 = math.exp %379 : vector<2x32xf32>
    %cst_67 = arith.constant 1.000000e+00 : f32
    %381 = vector.broadcast %cst_67 : f32 to vector<2x32xf32>
    %382 = arith.addf %381, %380 : vector<2x32xf32>
    %383 = arith.divf %381, %382 : vector<2x32xf32>
    %384 = vector.extract_strided_slice %377 {offsets = [0, 32], sizes = [2, 32], strides = [1, 1]} : vector<2x128xf32> to vector<2x32xf32>
    %385 = arith.negf %384 : vector<2x32xf32>
    %386 = math.exp %385 : vector<2x32xf32>
    %cst_68 = arith.constant 1.000000e+00 : f32
    %387 = vector.broadcast %cst_68 : f32 to vector<2x32xf32>
    %388 = arith.addf %387, %386 : vector<2x32xf32>
    %389 = arith.divf %387, %388 : vector<2x32xf32>
    %390 = vector.extract_strided_slice %377 {offsets = [0, 64], sizes = [2, 32], strides = [1, 1]} : vector<2x128xf32> to vector<2x32xf32>
    %391 = math.tanh %390 : vector<2x32xf32>
    %392 = vector.extract_strided_slice %377 {offsets = [0, 96], sizes = [2, 32], strides = [1, 1]} : vector<2x128xf32> to vector<2x32xf32>
    %393 = arith.negf %392 : vector<2x32xf32>
    %394 = math.exp %393 : vector<2x32xf32>
    %cst_69 = arith.constant 1.000000e+00 : f32
    %395 = vector.broadcast %cst_69 : f32 to vector<2x32xf32>
    %396 = arith.addf %395, %394 : vector<2x32xf32>
    %397 = arith.divf %395, %396 : vector<2x32xf32>
    %398 = arith.mulf %389, %371 : vector<2x32xf32>
    %399 = arith.mulf %383, %391 : vector<2x32xf32>
    %400 = arith.addf %398, %399 : vector<2x32xf32>
    %401 = math.tanh %400 : vector<2x32xf32>
    %402 = arith.mulf %397, %401 : vector<2x32xf32>
    %403 = vector.extract_strided_slice %22 {offsets = [0, 13, 0], sizes = [2, 1, 128], strides = [1, 1, 1]} : vector<2x16x128xf32> to vector<2x1x128xf32>
    %404 = vector.shape_cast %403 : vector<2x1x128xf32> to vector<2x128xf32>
    %cst_70 = arith.constant dense<0.000000e+00> : vector<2x128xf32>
    %405 = tpu.matmul %402, %23, %cst_70 {dimension_numbers = #tpu.dot_dimension_numbers<[1], [0], [0], [1], [0, 0, 1, 1], [], []>} : vector<2x32xf32>, vector<32x128xf32>, vector<2x128xf32> -> vector<2x128xf32>
    %406 = arith.addf %404, %405 : vector<2x128xf32>
    %407 = vector.extract_strided_slice %406 {offsets = [0, 0], sizes = [2, 32], strides = [1, 1]} : vector<2x128xf32> to vector<2x32xf32>
    %408 = arith.negf %407 : vector<2x32xf32>
    %409 = math.exp %408 : vector<2x32xf32>
    %cst_71 = arith.constant 1.000000e+00 : f32
    %410 = vector.broadcast %cst_71 : f32 to vector<2x32xf32>
    %411 = arith.addf %410, %409 : vector<2x32xf32>
    %412 = arith.divf %410, %411 : vector<2x32xf32>
    %413 = vector.extract_strided_slice %406 {offsets = [0, 32], sizes = [2, 32], strides = [1, 1]} : vector<2x128xf32> to vector<2x32xf32>
    %414 = arith.negf %413 : vector<2x32xf32>
    %415 = math.exp %414 : vector<2x32xf32>
    %cst_72 = arith.constant 1.000000e+00 : f32
    %416 = vector.broadcast %cst_72 : f32 to vector<2x32xf32>
    %417 = arith.addf %416, %415 : vector<2x32xf32>
    %418 = arith.divf %416, %417 : vector<2x32xf32>
    %419 = vector.extract_strided_slice %406 {offsets = [0, 64], sizes = [2, 32], strides = [1, 1]} : vector<2x128xf32> to vector<2x32xf32>
    %420 = math.tanh %419 : vector<2x32xf32>
    %421 = vector.extract_strided_slice %406 {offsets = [0, 96], sizes = [2, 32], strides = [1, 1]} : vector<2x128xf32> to vector<2x32xf32>
    %422 = arith.negf %421 : vector<2x32xf32>
    %423 = math.exp %422 : vector<2x32xf32>
    %cst_73 = arith.constant 1.000000e+00 : f32
    %424 = vector.broadcast %cst_73 : f32 to vector<2x32xf32>
    %425 = arith.addf %424, %423 : vector<2x32xf32>
    %426 = arith.divf %424, %425 : vector<2x32xf32>
    %427 = arith.mulf %418, %400 : vector<2x32xf32>
    %428 = arith.mulf %412, %420 : vector<2x32xf32>
    %429 = arith.addf %427, %428 : vector<2x32xf32>
    %430 = math.tanh %429 : vector<2x32xf32>
    %431 = arith.mulf %426, %430 : vector<2x32xf32>
    %432 = vector.extract_strided_slice %22 {offsets = [0, 14, 0], sizes = [2, 1, 128], strides = [1, 1, 1]} : vector<2x16x128xf32> to vector<2x1x128xf32>
    %433 = vector.shape_cast %432 : vector<2x1x128xf32> to vector<2x128xf32>
    %cst_74 = arith.constant dense<0.000000e+00> : vector<2x128xf32>
    %434 = tpu.matmul %431, %23, %cst_74 {dimension_numbers = #tpu.dot_dimension_numbers<[1], [0], [0], [1], [0, 0, 1, 1], [], []>} : vector<2x32xf32>, vector<32x128xf32>, vector<2x128xf32> -> vector<2x128xf32>
    %435 = arith.addf %433, %434 : vector<2x128xf32>
    %436 = vector.extract_strided_slice %435 {offsets = [0, 0], sizes = [2, 32], strides = [1, 1]} : vector<2x128xf32> to vector<2x32xf32>
    %437 = arith.negf %436 : vector<2x32xf32>
    %438 = math.exp %437 : vector<2x32xf32>
    %cst_75 = arith.constant 1.000000e+00 : f32
    %439 = vector.broadcast %cst_75 : f32 to vector<2x32xf32>
    %440 = arith.addf %439, %438 : vector<2x32xf32>
    %441 = arith.divf %439, %440 : vector<2x32xf32>
    %442 = vector.extract_strided_slice %435 {offsets = [0, 32], sizes = [2, 32], strides = [1, 1]} : vector<2x128xf32> to vector<2x32xf32>
    %443 = arith.negf %442 : vector<2x32xf32>
    %444 = math.exp %443 : vector<2x32xf32>
    %cst_76 = arith.constant 1.000000e+00 : f32
    %445 = vector.broadcast %cst_76 : f32 to vector<2x32xf32>
    %446 = arith.addf %445, %444 : vector<2x32xf32>
    %447 = arith.divf %445, %446 : vector<2x32xf32>
    %448 = vector.extract_strided_slice %435 {offsets = [0, 64], sizes = [2, 32], strides = [1, 1]} : vector<2x128xf32> to vector<2x32xf32>
    %449 = math.tanh %448 : vector<2x32xf32>
    %450 = vector.extract_strided_slice %435 {offsets = [0, 96], sizes = [2, 32], strides = [1, 1]} : vector<2x128xf32> to vector<2x32xf32>
    %451 = arith.negf %450 : vector<2x32xf32>
    %452 = math.exp %451 : vector<2x32xf32>
    %cst_77 = arith.constant 1.000000e+00 : f32
    %453 = vector.broadcast %cst_77 : f32 to vector<2x32xf32>
    %454 = arith.addf %453, %452 : vector<2x32xf32>
    %455 = arith.divf %453, %454 : vector<2x32xf32>
    %456 = arith.mulf %447, %429 : vector<2x32xf32>
    %457 = arith.mulf %441, %449 : vector<2x32xf32>
    %458 = arith.addf %456, %457 : vector<2x32xf32>
    %459 = math.tanh %458 : vector<2x32xf32>
    %460 = arith.mulf %455, %459 : vector<2x32xf32>
    %461 = vector.extract_strided_slice %22 {offsets = [0, 15, 0], sizes = [2, 1, 128], strides = [1, 1, 1]} : vector<2x16x128xf32> to vector<2x1x128xf32>
    %462 = vector.shape_cast %461 : vector<2x1x128xf32> to vector<2x128xf32>
    %cst_78 = arith.constant dense<0.000000e+00> : vector<2x128xf32>
    %463 = tpu.matmul %460, %23, %cst_78 {dimension_numbers = #tpu.dot_dimension_numbers<[1], [0], [0], [1], [0, 0, 1, 1], [], []>} : vector<2x32xf32>, vector<32x128xf32>, vector<2x128xf32> -> vector<2x128xf32>
    %464 = arith.addf %462, %463 : vector<2x128xf32>
    %465 = vector.extract_strided_slice %464 {offsets = [0, 0], sizes = [2, 32], strides = [1, 1]} : vector<2x128xf32> to vector<2x32xf32>
    %466 = arith.negf %465 : vector<2x32xf32>
    %467 = math.exp %466 : vector<2x32xf32>
    %cst_79 = arith.constant 1.000000e+00 : f32
    %468 = vector.broadcast %cst_79 : f32 to vector<2x32xf32>
    %469 = arith.addf %468, %467 : vector<2x32xf32>
    %470 = arith.divf %468, %469 : vector<2x32xf32>
    %471 = vector.extract_strided_slice %464 {offsets = [0, 32], sizes = [2, 32], strides = [1, 1]} : vector<2x128xf32> to vector<2x32xf32>
    %472 = arith.negf %471 : vector<2x32xf32>
    %473 = math.exp %472 : vector<2x32xf32>
    %cst_80 = arith.constant 1.000000e+00 : f32
    %474 = vector.broadcast %cst_80 : f32 to vector<2x32xf32>
    %475 = arith.addf %474, %473 : vector<2x32xf32>
    %476 = arith.divf %474, %475 : vector<2x32xf32>
    %477 = vector.extract_strided_slice %464 {offsets = [0, 64], sizes = [2, 32], strides = [1, 1]} : vector<2x128xf32> to vector<2x32xf32>
    %478 = math.tanh %477 : vector<2x32xf32>
    %479 = vector.extract_strided_slice %464 {offsets = [0, 96], sizes = [2, 32], strides = [1, 1]} : vector<2x128xf32> to vector<2x32xf32>
    %480 = arith.negf %479 : vector<2x32xf32>
    %481 = math.exp %480 : vector<2x32xf32>
    %cst_81 = arith.constant 1.000000e+00 : f32
    %482 = vector.broadcast %cst_81 : f32 to vector<2x32xf32>
    %483 = arith.addf %482, %481 : vector<2x32xf32>
    %484 = arith.divf %482, %483 : vector<2x32xf32>
    %485 = arith.mulf %476, %458 : vector<2x32xf32>
    %486 = arith.mulf %470, %478 : vector<2x32xf32>
    %487 = arith.addf %485, %486 : vector<2x32xf32>
    %488 = math.tanh %487 : vector<2x32xf32>
    %489 = arith.mulf %484, %488 : vector<2x32xf32>
    %490 = vector.shape_cast %54 : vector<2x32xf32> to vector<2x1x32xf32>
    %491 = vector.shape_cast %83 : vector<2x32xf32> to vector<2x1x32xf32>
    %492 = vector.shape_cast %112 : vector<2x32xf32> to vector<2x1x32xf32>
    %493 = vector.shape_cast %141 : vector<2x32xf32> to vector<2x1x32xf32>
    %494 = vector.shape_cast %170 : vector<2x32xf32> to vector<2x1x32xf32>
    %495 = vector.shape_cast %199 : vector<2x32xf32> to vector<2x1x32xf32>
    %496 = vector.shape_cast %228 : vector<2x32xf32> to vector<2x1x32xf32>
    %497 = vector.shape_cast %257 : vector<2x32xf32> to vector<2x1x32xf32>
    %498 = vector.shape_cast %286 : vector<2x32xf32> to vector<2x1x32xf32>
    %499 = vector.shape_cast %315 : vector<2x32xf32> to vector<2x1x32xf32>
    %500 = vector.shape_cast %344 : vector<2x32xf32> to vector<2x1x32xf32>
    %501 = vector.shape_cast %373 : vector<2x32xf32> to vector<2x1x32xf32>
    %502 = vector.shape_cast %402 : vector<2x32xf32> to vector<2x1x32xf32>
    %503 = vector.shape_cast %431 : vector<2x32xf32> to vector<2x1x32xf32>
    %504 = vector.shape_cast %460 : vector<2x32xf32> to vector<2x1x32xf32>
    %505 = vector.shape_cast %489 : vector<2x32xf32> to vector<2x1x32xf32>
    %506 = tpu.concatenate %490, %491, %492, %493, %494, %495, %496, %497, %498, %499, %500, %501, %502, %503, %504, %505 in 1 : vector<2x1x32xf32>, vector<2x1x32xf32>, vector<2x1x32xf32>, vector<2x1x32xf32>, vector<2x1x32xf32>, vector<2x1x32xf32>, vector<2x1x32xf32>, vector<2x1x32xf32>, vector<2x1x32xf32>, vector<2x1x32xf32>, vector<2x1x32xf32>, vector<2x1x32xf32>, vector<2x1x32xf32>, vector<2x1x32xf32>, vector<2x1x32xf32>, vector<2x1x32xf32> -> vector<2x16x32xf32>
    %507 = vector.shape_cast %506 : vector<2x16x32xf32> to vector<32x32xf32>
    %c0_82 = arith.constant 0 : index
    %c0_83 = arith.constant 0 : index
    %508 = vector.load %arg5[%c0_82, %c0_83] : memref<32x96xf32, #tpu.memory_space<vmem>>, vector<32x96xf32>
    %cst_84 = arith.constant dense<0.000000e+00> : vector<32x96xf32>
    %509 = tpu.matmul %507, %508, %cst_84 {dimension_numbers = #tpu.dot_dimension_numbers<[1], [0], [0], [1], [0, 0, 1, 1], [], []>} : vector<32x32xf32>, vector<32x96xf32>, vector<32x96xf32> -> vector<32x96xf32>
    %510 = vector.extract_strided_slice %0 {offsets = [3, 0], sizes = [1, 96], strides = [1, 1]} : vector<16x128xf32> to vector<1x96xf32>
    %511 = vector.broadcast %510 : vector<1x96xf32> to vector<32x96xf32>
    %512 = arith.addf %509, %511 : vector<32x96xf32>
    %513 = vector.extract_strided_slice %512 {offsets = [0, 0], sizes = [32, 32], strides = [1, 1]} : vector<32x96xf32> to vector<32x32xf32>
    %514 = vector.shape_cast %513 : vector<32x32xf32> to vector<2x16x32xf32>
    %515 = vector.extract_strided_slice %512 {offsets = [0, 32], sizes = [32, 32], strides = [1, 1]} : vector<32x96xf32> to vector<32x32xf32>
    %516 = vector.shape_cast %515 : vector<32x32xf32> to vector<2x16x32xf32>
    %517 = vector.extract_strided_slice %512 {offsets = [0, 64], sizes = [32, 32], strides = [1, 1]} : vector<32x96xf32> to vector<32x32xf32>
    %518 = vector.shape_cast %517 : vector<32x32xf32> to vector<2x16x32xf32>
    %cst_85 = arith.constant 0.176776692 : f32
    %519 = vector.broadcast %cst_85 : f32 to vector<2x16x32xf32>
    %520 = arith.mulf %514, %519 : vector<2x16x32xf32>
    "tpu.trace_start"() <{level = 10 : i32, message = "bqd,bkd->bqk"}> : () -> ()
    %cst_86 = arith.constant dense<0.000000e+00> : vector<2x16x16xf32>
    %521 = tpu.matmul %520, %516, %cst_86 {dimension_numbers = #tpu.dot_dimension_numbers<[2], [2], [1], [1], [0, 0, 0, 1, 1, 1], [0], [0]>} : vector<2x16x32xf32>, vector<2x16x32xf32>, vector<2x16x16xf32> -> vector<2x16x16xf32>
    "tpu.trace_stop"() : () -> ()
    %cst_87 = arith.constant dense<0xFF800000> : vector<2x16xf32>
    %522 = vector.multi_reduction <maximumf>, %521, %cst_87 [2] : vector<2x16x16xf32> to vector<2x16xf32>
    %523 = vector.shape_cast %522 : vector<2x16xf32> to vector<2x16x1xf32>
    %524 = vector.broadcast %523 : vector<2x16x1xf32> to vector<2x16x16xf32>
    %525 = arith.subf %521, %524 : vector<2x16x16xf32>
    %526 = math.exp %525 : vector<2x16x16xf32>
    %cst_88 = arith.constant dense<0.000000e+00> : vector<2x16xf32>
    %527 = vector.multi_reduction <add>, %526, %cst_88 [2] : vector<2x16x16xf32> to vector<2x16xf32>
    %528 = vector.shape_cast %527 : vector<2x16xf32> to vector<2x16x1xf32>
    %529 = vector.broadcast %528 : vector<2x16x1xf32> to vector<2x16x16xf32>
    %530 = arith.divf %526, %529 : vector<2x16x16xf32>
    "tpu.trace_start"() <{level = 10 : i32, message = "bqk,bkd->bqd"}> : () -> ()
    %cst_89 = arith.constant dense<0.000000e+00> : vector<2x16x32xf32>
    %531 = tpu.matmul %530, %518, %cst_89 {dimension_numbers = #tpu.dot_dimension_numbers<[2], [1], [1], [2], [0, 0, 0, 1, 1, 2], [0], [0]>} : vector<2x16x16xf32>, vector<2x16x32xf32>, vector<2x16x32xf32> -> vector<2x16x32xf32>
    "tpu.trace_stop"() : () -> ()
    %532 = vector.shape_cast %531 : vector<2x16x32xf32> to vector<32x32xf32>
    %c0_90 = arith.constant 0 : index
    %c0_91 = arith.constant 0 : index
    %533 = vector.load %arg6[%c0_90, %c0_91] : memref<32x32xf32, #tpu.memory_space<vmem>>, vector<32x32xf32>
    %cst_92 = arith.constant dense<0.000000e+00> : vector<32x32xf32>
    %534 = tpu.matmul %532, %533, %cst_92 {dimension_numbers = #tpu.dot_dimension_numbers<[1], [0], [0], [1], [0, 0, 1, 1], [], []>} : vector<32x32xf32>, vector<32x32xf32>, vector<32x32xf32> -> vector<32x32xf32>
    %535 = vector.extract_strided_slice %0 {offsets = [4, 0], sizes = [1, 32], strides = [1, 1]} : vector<16x128xf32> to vector<1x32xf32>
    %536 = vector.broadcast %535 : vector<1x32xf32> to vector<32x32xf32>
    %537 = arith.addf %534, %536 : vector<32x32xf32>
    %538 = vector.extract_strided_slice %0 {offsets = [5, 0], sizes = [1, 32], strides = [1, 1]} : vector<16x128xf32> to vector<1x32xf32>
    %539 = vector.extract_strided_slice %0 {offsets = [6, 0], sizes = [1, 32], strides = [1, 1]} : vector<16x128xf32> to vector<1x32xf32>
    %cst_93 = arith.constant dense<0.000000e+00> : vector<32xf32>
    %540 = vector.multi_reduction <add>, %537, %cst_93 [1] : vector<32x32xf32> to vector<32xf32>
    %541 = vector.shape_cast %540 : vector<32xf32> to vector<32x1xf32>
    %cst_94 = arith.constant 3.200000e+01 : f32
    %542 = vector.broadcast %cst_94 : f32 to vector<32x1xf32>
    %543 = arith.divf %541, %542 : vector<32x1xf32>
    %544 = vector.broadcast %543 : vector<32x1xf32> to vector<32x32xf32>
    %545 = arith.subf %537, %544 : vector<32x32xf32>
    %546 = arith.mulf %545, %545 : vector<32x32xf32>
    %cst_95 = arith.constant dense<0.000000e+00> : vector<32xf32>
    %547 = vector.multi_reduction <add>, %546, %cst_95 [1] : vector<32x32xf32> to vector<32xf32>
    %548 = vector.shape_cast %547 : vector<32xf32> to vector<32x1xf32>
    %cst_96 = arith.constant 3.200000e+01 : f32
    %549 = vector.broadcast %cst_96 : f32 to vector<32x1xf32>
    %550 = arith.divf %548, %549 : vector<32x1xf32>
    %551 = vector.broadcast %543 : vector<32x1xf32> to vector<32x32xf32>
    %552 = arith.subf %537, %551 : vector<32x32xf32>
    %cst_97 = arith.constant 9.99999974E-6 : f32
    %553 = vector.broadcast %cst_97 : f32 to vector<32x1xf32>
    %554 = arith.addf %550, %553 : vector<32x1xf32>
    %555 = math.rsqrt %554 : vector<32x1xf32>
    %556 = vector.broadcast %555 : vector<32x1xf32> to vector<32x32xf32>
    %557 = arith.mulf %552, %556 : vector<32x32xf32>
    %558 = vector.broadcast %538 : vector<1x32xf32> to vector<32x32xf32>
    %559 = arith.mulf %557, %558 : vector<32x32xf32>
    %560 = vector.broadcast %539 : vector<1x32xf32> to vector<32x32xf32>
    %561 = arith.addf %559, %560 : vector<32x32xf32>
    %c0_98 = arith.constant 0 : index
    %c0_99 = arith.constant 0 : index
    %562 = vector.load %arg7[%c0_98, %c0_99] : memref<32x64xf32, #tpu.memory_space<vmem>>, vector<32x64xf32>
    %cst_100 = arith.constant dense<0.000000e+00> : vector<32x64xf32>
    %563 = tpu.matmul %561, %562, %cst_100 {dimension_numbers = #tpu.dot_dimension_numbers<[1], [0], [0], [1], [0, 0, 1, 1], [], []>} : vector<32x32xf32>, vector<32x64xf32>, vector<32x64xf32> -> vector<32x64xf32>
    %564 = vector.extract_strided_slice %0 {offsets = [7, 0], sizes = [1, 64], strides = [1, 1]} : vector<16x128xf32> to vector<1x64xf32>
    %565 = vector.broadcast %564 : vector<1x64xf32> to vector<32x64xf32>
    %566 = arith.addf %563, %565 : vector<32x64xf32>
    %cst_101 = arith.constant 0.000000e+00 : f32
    %567 = vector.broadcast %cst_101 : f32 to vector<32x64xf32>
    %568 = arith.maximumf %566, %567 : vector<32x64xf32>
    %c0_102 = arith.constant 0 : index
    %c0_103 = arith.constant 0 : index
    %569 = vector.load %arg8[%c0_102, %c0_103] : memref<64x32xf32, #tpu.memory_space<vmem>>, vector<64x32xf32>
    %cst_104 = arith.constant dense<0.000000e+00> : vector<32x32xf32>
    %570 = tpu.matmul %568, %569, %cst_104 {dimension_numbers = #tpu.dot_dimension_numbers<[1], [0], [0], [1], [0, 0, 1, 1], [], []>} : vector<32x64xf32>, vector<64x32xf32>, vector<32x32xf32> -> vector<32x32xf32>
    %571 = vector.extract_strided_slice %0 {offsets = [8, 0], sizes = [1, 32], strides = [1, 1]} : vector<16x128xf32> to vector<1x32xf32>
    %572 = vector.broadcast %571 : vector<1x32xf32> to vector<32x32xf32>
    %573 = arith.addf %570, %572 : vector<32x32xf32>
    %574 = arith.addf %561, %573 : vector<32x32xf32>
    %575 = vector.extract_strided_slice %0 {offsets = [9, 0], sizes = [1, 32], strides = [1, 1]} : vector<16x128xf32> to vector<1x32xf32>
    %576 = vector.extract_strided_slice %0 {offsets = [10, 0], sizes = [1, 32], strides = [1, 1]} : vector<16x128xf32> to vector<1x32xf32>
    %cst_105 = arith.constant dense<0.000000e+00> : vector<32xf32>
    %577 = vector.multi_reduction <add>, %574, %cst_105 [1] : vector<32x32xf32> to vector<32xf32>
    %578 = vector.shape_cast %577 : vector<32xf32> to vector<32x1xf32>
    %cst_106 = arith.constant 3.200000e+01 : f32
    %579 = vector.broadcast %cst_106 : f32 to vector<32x1xf32>
    %580 = arith.divf %578, %579 : vector<32x1xf32>
    %581 = vector.broadcast %580 : vector<32x1xf32> to vector<32x32xf32>
    %582 = arith.subf %574, %581 : vector<32x32xf32>
    %583 = arith.mulf %582, %582 : vector<32x32xf32>
    %cst_107 = arith.constant dense<0.000000e+00> : vector<32xf32>
    %584 = vector.multi_reduction <add>, %583, %cst_107 [1] : vector<32x32xf32> to vector<32xf32>
    %585 = vector.shape_cast %584 : vector<32xf32> to vector<32x1xf32>
    %cst_108 = arith.constant 3.200000e+01 : f32
    %586 = vector.broadcast %cst_108 : f32 to vector<32x1xf32>
    %587 = arith.divf %585, %586 : vector<32x1xf32>
    %588 = vector.broadcast %580 : vector<32x1xf32> to vector<32x32xf32>
    %589 = arith.subf %574, %588 : vector<32x32xf32>
    %cst_109 = arith.constant 9.99999974E-6 : f32
    %590 = vector.broadcast %cst_109 : f32 to vector<32x1xf32>
    %591 = arith.addf %587, %590 : vector<32x1xf32>
    %592 = math.rsqrt %591 : vector<32x1xf32>
    %593 = vector.broadcast %592 : vector<32x1xf32> to vector<32x32xf32>
    %594 = arith.mulf %589, %593 : vector<32x32xf32>
    %595 = vector.broadcast %575 : vector<1x32xf32> to vector<32x32xf32>
    %596 = arith.mulf %594, %595 : vector<32x32xf32>
    %597 = vector.broadcast %576 : vector<1x32xf32> to vector<32x32xf32>
    %598 = arith.addf %596, %597 : vector<32x32xf32>
    %599 = vector.shape_cast %598 : vector<32x32xf32> to vector<2x16x32xf32>
    %600 = vector.shape_cast %599 : vector<2x16x32xf32> to vector<2x16x1x32xf32>
    %601 = vector.shape_cast %599 : vector<2x16x32xf32> to vector<2x1x16x32xf32>
    %602 = vector.broadcast %600 : vector<2x16x1x32xf32> to vector<2x16x16x32xf32>
    %603 = vector.broadcast %601 : vector<2x1x16x32xf32> to vector<2x16x16x32xf32>
    %604 = arith.subf %602, %603 : vector<2x16x16x32xf32>
    %605 = arith.mulf %604, %604 : vector<2x16x16x32xf32>
    %cst_110 = arith.constant 9.99999971E-10 : f32
    %606 = vector.broadcast %cst_110 : f32 to vector<2x16x16x32xf32>
    %607 = arith.addf %605, %606 : vector<2x16x16x32xf32>
    %608 = math.sqrt %607 : vector<2x16x16x32xf32>
    %609 = vector.shape_cast %608 : vector<2x16x16x32xf32> to vector<512x32xf32>
    %c0_111 = arith.constant 0 : index
    %c0_112 = arith.constant 0 : index
    %610 = vector.load %arg9[%c0_111, %c0_112] : memref<32x32xf32, #tpu.memory_space<vmem>>, vector<32x32xf32>
    %cst_113 = arith.constant dense<0.000000e+00> : vector<512x32xf32>
    %611 = tpu.matmul %609, %610, %cst_113 {dimension_numbers = #tpu.dot_dimension_numbers<[1], [0], [0], [1], [0, 0, 1, 1], [], []>} : vector<512x32xf32>, vector<32x32xf32>, vector<512x32xf32> -> vector<512x32xf32>
    %612 = vector.extract_strided_slice %0 {offsets = [11, 0], sizes = [1, 32], strides = [1, 1]} : vector<16x128xf32> to vector<1x32xf32>
    %613 = vector.broadcast %612 : vector<1x32xf32> to vector<512x32xf32>
    %614 = arith.addf %611, %613 : vector<512x32xf32>
    %cst_114 = arith.constant 0.000000e+00 : f32
    %615 = vector.broadcast %cst_114 : f32 to vector<512x32xf32>
    %616 = arith.maximumf %614, %615 : vector<512x32xf32>
    %617 = vector.shape_cast %616 : vector<512x32xf32> to vector<2x16x16x32xf32>
    %618 = vector.extract_strided_slice %0 {offsets = [12, 0], sizes = [1, 32], strides = [1, 1]} : vector<16x128xf32> to vector<1x32xf32>
    %619 = vector.shape_cast %618 : vector<1x32xf32> to vector<1x1x1x32xf32>
    %620 = vector.broadcast %619 : vector<1x1x1x32xf32> to vector<2x16x16x32xf32>
    %621 = arith.mulf %617, %620 : vector<2x16x16x32xf32>
    %cst_115 = arith.constant dense<0.000000e+00> : vector<2x16x16xf32>
    %622 = vector.multi_reduction <add>, %621, %cst_115 [3] : vector<2x16x16x32xf32> to vector<2x16x16xf32>
    %623 = vector.extract_strided_slice %0 {offsets = [13, 0], sizes = [1, 1], strides = [1, 1]} : vector<16x128xf32> to vector<1x1xf32>
    %624 = vector.shape_cast %623 : vector<1x1xf32> to vector<1x1x1xf32>
    %625 = vector.broadcast %624 : vector<1x1x1xf32> to vector<2x16x16xf32>
    %626 = arith.addf %622, %625 : vector<2x16x16xf32>
    %627 = arith.negf %626 : vector<2x16x16xf32>
    %628 = math.exp %627 : vector<2x16x16xf32>
    %cst_116 = arith.constant 1.000000e+00 : f32
    %629 = vector.broadcast %cst_116 : f32 to vector<2x16x16xf32>
    %630 = arith.addf %629, %628 : vector<2x16x16xf32>
    %631 = arith.divf %629, %630 : vector<2x16x16xf32>
    %c0_117 = arith.constant 0 : index
    %c0_118 = arith.constant 0 : index
    %c0_119 = arith.constant 0 : index
    %632 = vector.load %arg11[%c0_117, %c0_118, %c0_119] : memref<2x16x16xf32, #tpu.memory_space<vmem>>, vector<2x16x16xf32>
    tpu.vector_store %arg11[%c0_117, %c0_118, %c0_119], %631 {strides = array<i32>} : memref<2x16x16xf32, #tpu.memory_space<vmem>>, vector<2x16x16xf32>,
    return
  }
}

</mosaic_0001>

<llo_original>
// kernel: custom-call.2
$region0: #{custom-call.2}
  %s0 = inlined_call_operand.vmem [shape: f32[2,8,8], index: 0, kind: input, shape index: {}]
  %s1 = inlined_call_operand.vmem [shape: f32[2,8,8], index: 1, kind: input, shape index: {}]
  %s2 = inlined_call_operand.vmem [shape: f32[2,8,8], index: 2, kind: input, shape index: {}]
  %s3 = inlined_call_operand.vmem [shape: f32[2,8,8], index: 3, kind: input, shape index: {}]
  %s4 = inlined_call_operand.vmem [shape: f32[2,8], index: 4, kind: output, shape index: {0}]
  %s5 = inlined_call_operand.vmem [shape: f32[2,8], index: 5, kind: output, shape index: {1}]
  %s6 = inlined_call_operand.vmem [shape: f32[2,8,8], index: 6, kind: output, shape index: {2}]
  %s7 = inlined_call_operand.vmem [shape: f32[2,8,8], index: 7, kind: output, shape index: {3}]
  %s8 = inlined_call_operand.vmem [shape: f32[2,8,8], index: 8, kind: output, shape index: {4}]
  %s9 = inlined_call_operand.vmem [shape: f32[2,8,8], index: 9, kind: output, shape index: {5}]
  %10 = xla_tuple %s4, %s5, %s6, %s7, %s8, %s9
  $region1: #{custom-call.2} parent=0
    #allocation0 [shape = 'u8[8192]{0}', space=vmem, size = 0x2000, scoped, tag = 'operand span for operand 0']
    #allocation1 [shape = 'u8[8192]{0}', space=vmem, size = 0x2000, scoped, tag = 'operand span for operand 1']
    #allocation2 [shape = 'u8[8192]{0}', space=vmem, size = 0x2000, scoped, tag = 'operand span for operand 2']
    #allocation3 [shape = 'u8[8192]{0}', space=vmem, size = 0x2000, scoped, tag = 'operand span for operand 3']
    #allocation4 [shape = 'u8[4096]{0}', space=vmem, size = 0x1000, scoped, tag = 'operand span for operand 4']
    #allocation5 [shape = 'u8[2048]{0}', space=vmem, size = 0x800, scoped, tag = 'packed  for operand 4']
    #allocation6 [shape = 'u8[4096]{0}', space=vmem, size = 0x1000, scoped, tag = 'operand span for operand 5']
    #allocation7 [shape = 'u8[2048]{0}', space=vmem, size = 0x800, scoped, tag = 'packed  for operand 5']
    #allocation8 [shape = 'u8[8192]{0}', space=vmem, size = 0x2000, scoped, tag = 'operand span for operand 6']
    #allocation9 [shape = 'u8[8192]{0}', space=vmem, size = 0x2000, scoped, tag = 'operand span for operand 7']
    #allocation10 [shape = 'u8[8192]{0}', space=vmem, size = 0x2000, scoped, tag = 'operand span for operand 8']
    #allocation11 [shape = 'u8[8192]{0}', space=vmem, size = 0x2000, scoped, tag = 'operand span for operand 9']
    loop: start=0, step=1, limit=4
    $region2: #{custom-call.2} parent=1 // loop_pre_header
      _
    $region3: #{custom-call.2} parent=1 // loop_header
      %s12 = sphi 0, %s16
      %p13 = scmp.ge.s32.totalorder %s12, 4
      %s24 = sphi 0, %s26
      %s27 = sphi 0, %s24
      %s28 = sphi 0, %s27
      %s44 = sphi 0, %s28
      %s52 = sphi 0, %s54
      %s55 = sphi 0, %s52
      %s56 = sphi 0, %s55
      %s72 = sphi 0, %s56
    $region4: #{custom-call.2} parent=1 // loop_header_branch
      %15 = sbr.rel (%p13) target = $region8
    $region5: #{custom-call.2} parent=1 // loop_body
      %s17 = ssub.s32 %s12, 1
      %s18 = ssub.s32 %s12, 2
      %s19 = sadd.s32 %s12, 1
      %s20 = sshrl.u32 %s12, 3
      %s21 = sshrl.u32 %s19, 3
      %s22 = ssub.s32 %s20, %s21
      %p23 = scmp.eq.s32.totalorder %s22, 0
      %s25 = sadd.s32 %s24, 1
      %s26 = scalar_select %p23, %s24, %s25
      %p29 = pneg %p23
      %p30 = scmp.eq.s32.totalorder %s12, 1
      %p31 = por %p29, %p30
      %p32 = scmp.ne.s32.totalorder %s24, %s27
      %p33 = scmp.eq.s32.totalorder %s12, 0
      %p34 = por %p32, %p33
      %p35 = scmp.ne.s32.totalorder %s24, %s27
      %p36 = scmp.eq.s32.totalorder %s17, 1
      %p37 = por %p35, %p36
      %p38 = scmp.ne.s32.totalorder %s27, %s28
      %p39 = scmp.eq.s32.totalorder %s17, 0
      %p40 = por %p38, %p39
      %p41 = scmp.ne.s32.totalorder %s27, %s28
      %p42 = scmp.eq.s32.totalorder %s18, 1
      %p43 = por %p41, %p42
      %p45 = scmp.ne.s32.totalorder %s28, %s44
      %p46 = scmp.eq.s32.totalorder %s18, 0
      %p47 = por %p45, %p46
      %s48 = sshrl.u32 %s12, 3
      %s49 = sshrl.u32 %s19, 3
      %s50 = ssub.s32 %s48, %s49
      %p51 = scmp.eq.s32.totalorder %s50, 0
      %s53 = sadd.s32 %s52, 1
      %s54 = scalar_select %p51, %s52, %s53
      %p57 = pneg %p51
      %p58 = scmp.eq.s32.totalorder %s12, 1
      %p59 = por %p57, %p58
      %p60 = scmp.ne.s32.totalorder %s52, %s55
      %p61 = scmp.eq.s32.totalorder %s12, 0
      %p62 = por %p60, %p61
      %p63 = scmp.ne.s32.totalorder %s52, %s55
      %p64 = scmp.eq.s32.totalorder %s17, 1
      %p65 = por %p63, %p64
      %p66 = scmp.ne.s32.totalorder %s55, %s56
      %p67 = scmp.eq.s32.totalorder %s17, 0
      %p68 = por %p66, %p67
      %p69 = scmp.ne.s32.totalorder %s55, %s56
      %p70 = scmp.eq.s32.totalorder %s18, 1
      %p71 = por %p69, %p70
      %p73 = scmp.ne.s32.totalorder %s56, %s72
      %p74 = scmp.eq.s32.totalorder %s18, 0
      %p75 = por %p73, %p74
      %p76 = scmp.le.s32.totalorder 1, %s12
      %p77 = scmp.lt.s32.totalorder %s12, 3
      %p78 = pnand %p76, %p77
      %p79 = pneg %p78
      // Predicated region
      $region9: #{custom-call.2} parent=5 // pred_check
        _
      $region10: #{custom-call.2} parent=5 // pred_check_branch
        %81 = sbr.rel (%p78) target = $region12
      $region11: #{custom-call.2} parent=5 // pred_region
        %s82 = ssub.s32 %s12, 1
      $region12: #{custom-call.2} parent=5 // pred_fallthru
        _
      %p83 = scmp.lt.s32.totalorder %s12, 2
      // Predicated region
      $region13: #{custom-call.2} parent=5 // pred_check
        %p84 = pneg %p83
      $region14: #{custom-call.2} parent=5 // pred_check_branch
        %86 = sbr.rel (%p84) target = $region16
      $region15: #{custom-call.2} parent=5 // pred_region
        %s87 = sand.u32 %s12, 1
        %s88 = sand.u32 %s12, 1
        %s89 = smul.addr %s88, 8
        %s90 = scalar_lea.vmem [#allocation0], %s89
        %s91 = smul.addr %s12, 8
        %s92 = scalar_lea.vmem %s0, %s91
        // Predicated region
        $region17: #{custom-call.2} parent=15 // pred_check
          _
        $region18: #{custom-call.2} parent=15 // pred_check_branch
          %94 = sbr.rel (0) target = $region20
        $region19: #{custom-call.2} parent=15 // pred_region
          // Predicated region
          $region21: #{custom-call.2} parent=19 // pred_check
            _
          $region22: #{custom-call.2} parent=19 // pred_check_branch
            %96 = sbr.rel (0) target = $region24
          $region23: #{custom-call.2} parent=19 // pred_region
            // Predicated region
            $region36: #{custom-call.2} parent=23 // pred_check
              _
            $region37: #{custom-call.2} parent=23 // pred_check_branch
              %112 = sbr.rel (0) target = $region39
            $region38: #{custom-call.2} parent=23 // pred_region
              loop: start=0, step=1, limit=1
              $region40: #{custom-call.2} parent=38 // loop_pre_header
                _
              $region41: #{custom-call.2} parent=38 // loop_header
                %s114 = sphi 0, %s118
                %p115 = scmp.ge.s32.totalorder %s114, 1
                %s119 = sphi %s92, %s92
                %s120 = sphi %s90, %s90
              $region42: #{custom-call.2} parent=38 // loop_header_branch
                %117 = sbr.rel (%p115) target = $region46
              $region43: #{custom-call.2} parent=38 // loop_body
                %v121 = vld [vmem:[%s119] sm:$0xff]
                %122 = vst [vmem:[%s120] sm:$0xff] %v121
              $region44: #{custom-call.2} parent=38 // loop_footer
                %s118 = sadd.s32 1, %s114
              $region45: #{custom-call.2} parent=38 // loop_footer_branch
                %113 = sbr.rel target = $region41
              $region46: #{custom-call.2} parent=38 // loop_exit
                _
            $region39: #{custom-call.2} parent=23 // pred_fallthru
              _
            // Predicated region
            $region47: #{custom-call.2} parent=23 // pred_check
              _
            $region48: #{custom-call.2} parent=23 // pred_check_branch
              %124 = sbr.rel target = $region50
            $region49: #{custom-call.2} parent=23 // pred_region
              _
            $region50: #{custom-call.2} parent=23 // pred_fallthru
              _
          $region24: #{custom-call.2} parent=19 // pred_fallthru
            _
          // Predicated region
          $region25: #{custom-call.2} parent=19 // pred_check
            _
          $region26: #{custom-call.2} parent=19 // pred_check_branch
            %98 = sbr.rel target = $region28
          $region27: #{custom-call.2} parent=19 // pred_region
            %s100 = ssub.s32 256, 1
            loop: start=0, step=1, limit=1
            $region29: #{custom-call.2} parent=27 // loop_pre_header
              _
            $region30: #{custom-call.2} parent=27 // loop_header
              %s102 = sphi 0, %s106
              %p103 = scmp.ge.s32.totalorder %s102, 1
              %s107 = sphi %s92, %s92
              %s108 = sphi %s90, %s90
            $region31: #{custom-call.2} parent=27 // loop_header_branch
              %105 = sbr.rel (%p103) target = $region35
            $region32: #{custom-call.2} parent=27 // loop_body
              %v109 = vld [vmem:[%s107] sm:%s100]
              %110 = vst [vmem:[%s108] sm:%s100] %v109
            $region33: #{custom-call.2} parent=27 // loop_footer
              %s106 = sadd.s32 1, %s102
            $region34: #{custom-call.2} parent=27 // loop_footer_branch
              %101 = sbr.rel target = $region30
            $region35: #{custom-call.2} parent=27 // loop_exit
              _
          $region28: #{custom-call.2} parent=19 // pred_fallthru
            _
        $region20: #{custom-call.2} parent=15 // pred_fallthru
          _
        %125 = vnop
        %s126 = sand.u32 %s12, 1
        %s127 = sand.u32 %s12, 1
        %s128 = smul.addr %s127, 8
        %s129 = scalar_lea.vmem [#allocation1], %s128
        %s130 = smul.addr %s12, 8
        %s131 = scalar_lea.vmem %s1, %s130
        // Predicated region
        $region51: #{custom-call.2} parent=15 // pred_check
          _
        $region52: #{custom-call.2} parent=15 // pred_check_branch
          %133 = sbr.rel (0) target = $region54
        $region53: #{custom-call.2} parent=15 // pred_region
          // Predicated region
          $region55: #{custom-call.2} parent=53 // pred_check
            _
          $region56: #{custom-call.2} parent=53 // pred_check_branch
            %135 = sbr.rel (0) target = $region58
          $region57: #{custom-call.2} parent=53 // pred_region
            // Predicated region
            $region70: #{custom-call.2} parent=57 // pred_check
              _
            $region71: #{custom-call.2} parent=57 // pred_check_branch
              %151 = sbr.rel (0) target = $region73
            $region72: #{custom-call.2} parent=57 // pred_region
              loop: start=0, step=1, limit=1
              $region74: #{custom-call.2} parent=72 // loop_pre_header
                _
              $region75: #{custom-call.2} parent=72 // loop_header
                %s153 = sphi 0, %s157
                %p154 = scmp.ge.s32.totalorder %s153, 1
                %s158 = sphi %s131, %s131
                %s159 = sphi %s129, %s129
              $region76: #{custom-call.2} parent=72 // loop_header_branch
                %156 = sbr.rel (%p154) target = $region80
              $region77: #{custom-call.2} parent=72 // loop_body
                %v160 = vld [vmem:[%s158] sm:$0xff]
                %161 = vst [vmem:[%s159] sm:$0xff] %v160
              $region78: #{custom-call.2} parent=72 // loop_footer
                %s157 = sadd.s32 1, %s153
              $region79: #{custom-call.2} parent=72 // loop_footer_branch
                %152 = sbr.rel target = $region75
              $region80: #{custom-call.2} parent=72 // loop_exit
                _
            $region73: #{custom-call.2} parent=57 // pred_fallthru
              _
            // Predicated region
            $region81: #{custom-call.2} parent=57 // pred_check
              _
            $region82: #{custom-call.2} parent=57 // pred_check_branch
              %163 = sbr.rel target = $region84
            $region83: #{custom-call.2} parent=57 // pred_region
              _
            $region84: #{custom-call.2} parent=57 // pred_fallthru
              _
          $region58: #{custom-call.2} parent=53 // pred_fallthru
            _
          // Predicated region
          $region59: #{custom-call.2} parent=53 // pred_check
            _
          $region60: #{custom-call.2} parent=53 // pred_check_branch
            %137 = sbr.rel target = $region62
          $region61: #{custom-call.2} parent=53 // pred_region
            %s139 = ssub.s32 256, 1
            loop: start=0, step=1, limit=1
            $region63: #{custom-call.2} parent=61 // loop_pre_header
              _
            $region64: #{custom-call.2} parent=61 // loop_header
              %s141 = sphi 0, %s145
              %p142 = scmp.ge.s32.totalorder %s141, 1
              %s146 = sphi %s131, %s131
              %s147 = sphi %s129, %s129
            $region65: #{custom-call.2} parent=61 // loop_header_branch
              %144 = sbr.rel (%p142) target = $region69
            $region66: #{custom-call.2} parent=61 // loop_body
              %v148 = vld [vmem:[%s146] sm:%s139]
              %149 = vst [vmem:[%s147] sm:%s139] %v148
            $region67: #{custom-call.2} parent=61 // loop_footer
              %s145 = sadd.s32 1, %s141
            $region68: #{custom-call.2} parent=61 // loop_footer_branch
              %140 = sbr.rel target = $region64
            $region69: #{custom-call.2} parent=61 // loop_exit
              _
          $region62: #{custom-call.2} parent=53 // pred_fallthru
            _
        $region54: #{custom-call.2} parent=15 // pred_fallthru
          _
        %164 = vnop
        %s165 = sand.u32 %s12, 1
        %s166 = sand.u32 %s12, 1
        %s167 = smul.addr %s166, 8
        %s168 = scalar_lea.vmem [#allocation2], %s167
        %s169 = smul.addr %s12, 8
        %s170 = scalar_lea.vmem %s2, %s169
        // Predicated region
        $region85: #{custom-call.2} parent=15 // pred_check
          _
        $region86: #{custom-call.2} parent=15 // pred_check_branch
          %172 = sbr.rel (0) target = $region88
        $region87: #{custom-call.2} parent=15 // pred_region
          // Predicated region
          $region89: #{custom-call.2} parent=87 // pred_check
            _
          $region90: #{custom-call.2} parent=87 // pred_check_branch
            %174 = sbr.rel (0) target = $region92
          $region91: #{custom-call.2} parent=87 // pred_region
            // Predicated region
            $region104: #{custom-call.2} parent=91 // pred_check
              _
            $region105: #{custom-call.2} parent=91 // pred_check_branch
              %190 = sbr.rel (0) target = $region107
            $region106: #{custom-call.2} parent=91 // pred_region
              loop: start=0, step=1, limit=1
              $region108: #{custom-call.2} parent=106 // loop_pre_header
                _
              $region109: #{custom-call.2} parent=106 // loop_header
                %s192 = sphi 0, %s196
                %p193 = scmp.ge.s32.totalorder %s192, 1
                %s197 = sphi %s170, %s170
                %s198 = sphi %s168, %s168
              $region110: #{custom-call.2} parent=106 // loop_header_branch
                %195 = sbr.rel (%p193) target = $region114
              $region111: #{custom-call.2} parent=106 // loop_body
                %v199 = vld [vmem:[%s197] sm:$0xff]
                %200 = vst [vmem:[%s198] sm:$0xff] %v199
              $region112: #{custom-call.2} parent=106 // loop_footer
                %s196 = sadd.s32 1, %s192
              $region113: #{custom-call.2} parent=106 // loop_footer_branch
                %191 = sbr.rel target = $region109
              $region114: #{custom-call.2} parent=106 // loop_exit
                _
            $region107: #{custom-call.2} parent=91 // pred_fallthru
              _
            // Predicated region
            $region115: #{custom-call.2} parent=91 // pred_check
              _
            $region116: #{custom-call.2} parent=91 // pred_check_branch
              %202 = sbr.rel target = $region118
            $region117: #{custom-call.2} parent=91 // pred_region
              _
            $region118: #{custom-call.2} parent=91 // pred_fallthru
              _
          $region92: #{custom-call.2} parent=87 // pred_fallthru
            _
          // Predicated region
          $region93: #{custom-call.2} parent=87 // pred_check
            _
          $region94: #{custom-call.2} parent=87 // pred_check_branch
            %176 = sbr.rel target = $region96
          $region95: #{custom-call.2} parent=87 // pred_region
            %s178 = ssub.s32 256, 1
            loop: start=0, step=1, limit=1
            $region97: #{custom-call.2} parent=95 // loop_pre_header
              _
            $region98: #{custom-call.2} parent=95 // loop_header
              %s180 = sphi 0, %s184
              %p181 = scmp.ge.s32.totalorder %s180, 1
              %s185 = sphi %s170, %s170
              %s186 = sphi %s168, %s168
            $region99: #{custom-call.2} parent=95 // loop_header_branch
              %183 = sbr.rel (%p181) target = $region103
            $region100: #{custom-call.2} parent=95 // loop_body
              %v187 = vld [vmem:[%s185] sm:%s178]
              %188 = vst [vmem:[%s186] sm:%s178] %v187
            $region101: #{custom-call.2} parent=95 // loop_footer
              %s184 = sadd.s32 1, %s180
            $region102: #{custom-call.2} parent=95 // loop_footer_branch
              %179 = sbr.rel target = $region98
            $region103: #{custom-call.2} parent=95 // loop_exit
              _
          $region96: #{custom-call.2} parent=87 // pred_fallthru
            _
        $region88: #{custom-call.2} parent=15 // pred_fallthru
          _
        %203 = vnop
        %s204 = sand.u32 %s12, 1
        %s205 = sand.u32 %s12, 1
        %s206 = smul.addr %s205, 8
        %s207 = scalar_lea.vmem [#allocation3], %s206
        %s208 = smul.addr %s12, 8
        %s209 = scalar_lea.vmem %s3, %s208
        // Predicated region
        $region119: #{custom-call.2} parent=15 // pred_check
          _
        $region120: #{custom-call.2} parent=15 // pred_check_branch
          %211 = sbr.rel (0) target = $region122
        $region121: #{custom-call.2} parent=15 // pred_region
          // Predicated region
          $region123: #{custom-call.2} parent=121 // pred_check
            _
          $region124: #{custom-call.2} parent=121 // pred_check_branch
            %213 = sbr.rel (0) target = $region126
          $region125: #{custom-call.2} parent=121 // pred_region
            // Predicated region
            $region138: #{custom-call.2} parent=125 // pred_check
              _
            $region139: #{custom-call.2} parent=125 // pred_check_branch
              %229 = sbr.rel (0) target = $region141
            $region140: #{custom-call.2} parent=125 // pred_region
              loop: start=0, step=1, limit=1
              $region142: #{custom-call.2} parent=140 // loop_pre_header
                _
              $region143: #{custom-call.2} parent=140 // loop_header
                %s231 = sphi 0, %s235
                %p232 = scmp.ge.s32.totalorder %s231, 1
                %s236 = sphi %s209, %s209
                %s237 = sphi %s207, %s207
              $region144: #{custom-call.2} parent=140 // loop_header_branch
                %234 = sbr.rel (%p232) target = $region148
              $region145: #{custom-call.2} parent=140 // loop_body
                %v238 = vld [vmem:[%s236] sm:$0xff]
                %239 = vst [vmem:[%s237] sm:$0xff] %v238
              $region146: #{custom-call.2} parent=140 // loop_footer
                %s235 = sadd.s32 1, %s231
              $region147: #{custom-call.2} parent=140 // loop_footer_branch
                %230 = sbr.rel target = $region143
              $region148: #{custom-call.2} parent=140 // loop_exit
                _
            $region141: #{custom-call.2} parent=125 // pred_fallthru
              _
            // Predicated region
            $region149: #{custom-call.2} parent=125 // pred_check
              _
            $region150: #{custom-call.2} parent=125 // pred_check_branch
              %241 = sbr.rel target = $region152
            $region151: #{custom-call.2} parent=125 // pred_region
              _
            $region152: #{custom-call.2} parent=125 // pred_fallthru
              _
          $region126: #{custom-call.2} parent=121 // pred_fallthru
            _
          // Predicated region
          $region127: #{custom-call.2} parent=121 // pred_check
            _
          $region128: #{custom-call.2} parent=121 // pred_check_branch
            %215 = sbr.rel target = $region130
          $region129: #{custom-call.2} parent=121 // pred_region
            %s217 = ssub.s32 256, 1
            loop: start=0, step=1, limit=1
            $region131: #{custom-call.2} parent=129 // loop_pre_header
              _
            $region132: #{custom-call.2} parent=129 // loop_header
              %s219 = sphi 0, %s223
              %p220 = scmp.ge.s32.totalorder %s219, 1
              %s224 = sphi %s209, %s209
              %s225 = sphi %s207, %s207
            $region133: #{custom-call.2} parent=129 // loop_header_branch
              %222 = sbr.rel (%p220) target = $region137
            $region134: #{custom-call.2} parent=129 // loop_body
              %v226 = vld [vmem:[%s224] sm:%s217]
              %227 = vst [vmem:[%s225] sm:%s217] %v226
            $region135: #{custom-call.2} parent=129 // loop_footer
              %s223 = sadd.s32 1, %s219
            $region136: #{custom-call.2} parent=129 // loop_footer_branch
              %218 = sbr.rel target = $region132
            $region137: #{custom-call.2} parent=129 // loop_exit
              _
          $region130: #{custom-call.2} parent=121 // pred_fallthru
            _
        $region122: #{custom-call.2} parent=15 // pred_fallthru
          _
        %242 = vnop
      $region16: #{custom-call.2} parent=5 // pred_fallthru
        _
      %p243 = scmp.le.s32.totalorder 1, %s12
      %p244 = scmp.lt.s32.totalorder %s12, 3
      %p245 = pnand %p243, %p244
      %p246 = pneg %p245
      // Predicated region
      $region153: #{custom-call.2} parent=5 // pred_check
        _
      $region154: #{custom-call.2} parent=5 // pred_check_branch
        %248 = sbr.rel (%p245) target = $region156
      $region155: #{custom-call.2} parent=5 // pred_region
        #allocation12 [shape = 'f32[8,8]{1,0}', space=vmem, size = 0x1000, scoped, tag = 'a top-left matrix']
        #allocation13 [shape = 'f32[8,8]{1,0}', space=vmem, size = 0x1000, scoped, tag = 'a top-right matrix']
        #allocation14 [shape = 'f32[8,8]{1,0}', space=vmem, size = 0x1000, scoped, tag = 'a bottom-left matrix']
        #allocation15 [shape = 'f32[8,8]{1,0}', space=vmem, size = 0x1000, scoped, tag = 'a bottom-right matrix']
        %s249 = ssub.s32 %s12, 1
        %s250 = sand.u32 %s17, 1
        %s251 = sand.u32 %s17, 1
        %s252 = smul.addr %s251, 8
        %s253 = scalar_lea.vmem [#allocation0], %s252
        %s254 = sand.u32 %s17, 1
        %s255 = sand.u32 %s17, 1
        %s256 = smul.addr %s255, 8
        %s257 = scalar_lea.vmem [#allocation1], %s256
        %s258 = sand.u32 %s17, 1
        %s259 = sand.u32 %s17, 1
        %s260 = smul.addr %s259, 8
        %s261 = scalar_lea.vmem [#allocation2], %s260
        %s262 = sand.u32 %s17, 1
        %s263 = sand.u32 %s17, 1
        %s264 = smul.addr %s263, 8
        %s265 = scalar_lea.vmem [#allocation3], %s264
        %s266 = sand.u32 %s17, 1
        %s267 = sand.u32 %s17, 1
        %s268 = smul.addr %s267, 8
        %s269 = scalar_lea.vmem [#allocation0], %s268
        %s270 = sand.u32 %s17, 1
        %s271 = sand.u32 %s17, 1
        %s272 = smul.addr %s271, 8
        %s273 = scalar_lea.vmem [#allocation1], %s272
        %s274 = sand.u32 %s17, 1
        %s275 = sand.u32 %s17, 1
        %s276 = smul.addr %s275, 8
        %s277 = scalar_lea.vmem [#allocation2], %s276
        %s278 = sand.u32 %s17, 1
        %s279 = sand.u32 %s17, 1
        %s280 = smul.addr %s279, 8
        %s281 = scalar_lea.vmem [#allocation3], %s280
        %p282 = pneg %p40
        %p283 = pneg %p37
        %s284 = sand.u32 %s27, 1
        %s285 = sand.u32 %s27, 1
        %s286 = smul.addr %s285, 2
        %s287 = scalar_lea.vmem [#allocation5], %s286
        %p288 = pneg %p68
        %p289 = pneg %p65
        %s290 = sand.u32 %s55, 1
        %s291 = sand.u32 %s55, 1
        %s292 = smul.addr %s291, 2
        %s293 = scalar_lea.vmem [#allocation7], %s292
        %s294 = sand.u32 %s17, 1
        %s295 = sand.u32 %s17, 1
        %s296 = smul.addr %s295, 8
        %s297 = scalar_lea.vmem [#allocation8], %s296
        %s298 = sand.u32 %s17, 1
        %s299 = sand.u32 %s17, 1
        %s300 = smul.addr %s299, 8
        %s301 = scalar_lea.vmem [#allocation9], %s300
        %s302 = sand.u32 %s17, 1
        %s303 = sand.u32 %s17, 1
        %s304 = smul.addr %s303, 8
        %s305 = scalar_lea.vmem [#allocation10], %s304
        %s306 = sand.u32 %s17, 1
        %s307 = sand.u32 %s17, 1
        %s308 = smul.addr %s307, 8
        %s309 = scalar_lea.vmem [#allocation11], %s308
        %s310 = sshrl.u32 %s17, 3
        %s311 = sshrl.u32 %s17, 3
        %s312 = smov [#allocation12]
        %v313 = vld [vmem:[%s253] sm:$0xff]
        %314 = vst [vmem:[%s312] sm:$0xff] %v313
        %s315 = smov [#allocation13]
        %v316 = vld [vmem:[%s257] sm:$0xff]
        %317 = vst [vmem:[%s315] sm:$0xff] %v316
        %s318 = smov [#allocation14]
        %v319 = vld [vmem:[%s261] sm:$0xff]
        %320 = vst [vmem:[%s318] sm:$0xff] %v319
        %s321 = smov [#allocation15]
        %v322 = vld [vmem:[%s265] sm:$0xff]
        %323 = vst [vmem:[%s321] sm:$0xff] %v322
        %324 = vst [vmem:[%s297] sm:$0xff] 0.0
        %325 = vst [vmem:[%s301] sm:$0xff] 0.0
        %326 = vst [vmem:[%s305] sm:$0xff] 0.0
        %327 = vst [vmem:[%s309] sm:$0xff] 0.0
        %s328 = smov %s297
        %v329 = vlaneseq
        %v330 = vand.u32 %v329, 127
        %v331 = vmov %v330
        %v332 = vlaneseq
        %v333 = vshrl.u32 %v332, 7
        %v334 = vmov %v333
        %v335 = vld [vmem:[%s328] sm:$0xff]
        %vm338 = vcmp.eq.s32.totalorder %v334, %v331
        %v339 = vsel %vm338, 1.0, %v335
        %340 = vst [vmem:[%s328] sm:$0xff] %v339
        %s341 = smov %s309
        %v342 = vlaneseq
        %v343 = vand.u32 %v342, 127
        %v344 = vmov %v343
        %v345 = vlaneseq
        %v346 = vshrl.u32 %v345, 7
        %v347 = vmov %v346
        %v348 = vld [vmem:[%s341] sm:$0xff]
        %vm351 = vcmp.eq.s32.totalorder %v347, %v344
        %v352 = vsel %vm351, 1.0, %v348
        %353 = vst [vmem:[%s341] sm:$0xff] %v352
        // While loop
        $region157: #{custom-call.2} parent=155 // loop_pre_header
          _
        $region158: #{custom-call.2} parent=155 // loop_header
          %s355 = sphi 0, %s937
          %v356 = vlaneseq
          %v357 = vand.u32 %v356, 127
          %v358 = vmov %v357
          %v359 = vlaneseq
          %v360 = vshrl.u32 %v359, 7
          %v361 = vmov %v360
          %s362 = smov [#allocation12]
          %v363 = vlaneseq
          %v364 = vand.u32 %v363, 127
          %vm365 = vcmp.ge.s32.totalorder %v364, 0
          %vm366 = vcmp.lt.s32.totalorder %v364, 8
          %vm367 = vmand %vm365, %vm366
          %v368 = vld [vmem:[%s362] sm:$0xff]
          %v369 = vsel %vm367, %v368, 0.0
          %v370 = vmul.f32 %v369, %v369
          %vm373 = vcmp.eq.s32.totalorder %v361, %v358
          %v374 = vsel %vm373, 0.0, %v370
          %v375 = vlaneseq
          %v376 = vand.u32 %v375, 127
          %v377 = vmov %v376
          %v378 = vlaneseq
          %v379 = vshrl.u32 %v378, 7
          %v380 = vmov %v379
          %s381 = smov [#allocation13]
          %v382 = vlaneseq
          %v383 = vand.u32 %v382, 127
          %vm384 = vcmp.ge.s32.totalorder %v383, 0
          %vm385 = vcmp.lt.s32.totalorder %v383, 8
          %vm386 = vmand %vm384, %vm385
          %v387 = vld [vmem:[%s381] sm:$0xff]
          %v388 = vsel %vm386, %v387, 0.0
          %v389 = vmul.f32 %v388, %v388
          %v390 = vadd.f32 %v374, %v389
          %v391 = vadd.f32 %v370, %v389
          %v392 = vlaneseq
          %v393 = vand.u32 %v392, 127
          %v394 = vmov %v393
          %v395 = vlaneseq
          %v396 = vshrl.u32 %v395, 7
          %v397 = vmov %v396
          %s398 = smov [#allocation14]
          %v399 = vlaneseq
          %v400 = vand.u32 %v399, 127
          %vm401 = vcmp.ge.s32.totalorder %v400, 0
          %vm402 = vcmp.lt.s32.totalorder %v400, 8
          %vm403 = vmand %vm401, %vm402
          %v404 = vld [vmem:[%s398] sm:$0xff]
          %v405 = vsel %vm403, %v404, 0.0
          %v406 = vmul.f32 %v405, %v405
          %v407 = vadd.f32 %v390, %v406
          %v408 = vadd.f32 %v391, %v406
          %v409 = vlaneseq
          %v410 = vand.u32 %v409, 127
          %v411 = vmov %v410
          %v412 = vlaneseq
          %v413 = vshrl.u32 %v412, 7
          %v414 = vmov %v413
          %s415 = smov [#allocation15]
          %v416 = vlaneseq
          %v417 = vand.u32 %v416, 127
          %vm418 = vcmp.ge.s32.totalorder %v417, 0
          %vm419 = vcmp.lt.s32.totalorder %v417, 8
          %vm420 = vmand %vm418, %vm419
          %v421 = vld [vmem:[%s415] sm:$0xff]
          %v422 = vsel %vm420, %v421, 0.0
          %v423 = vmul.f32 %v422, %v422
          %vm426 = vcmp.eq.s32.totalorder %v414, %v411
          %v427 = vsel %vm426, 0.0, %v423
          %v428 = vadd.f32 %v407, %v427
          %v429 = vadd.f32 %v408, %v423
          %430 = vadd.xlane.f32.xlu0 %v429
          %v431 = vpop.xlane.xlu0 %430
          %v432 = vrot.slane %v431, 4
          %v433 = vadd.f32 %v431, %v432
          %v434 = vrot.slane %v433, 2
          %v435 = vadd.f32 %v433, %v434
          %v436 = vrot.slane %v435, 1
          %v437 = vadd.f32 %v435, %v436
          %438 = vadd.xlane.f32.xlu0 %v428
          %v439 = vpop.xlane.xlu0 %438
          %v440 = vrot.slane %v439, 4
          %v441 = vadd.f32 %v439, %v440
          %v442 = vrot.slane %v441, 2
          %v443 = vadd.f32 %v441, %v442
          %v444 = vrot.slane %v443, 1
          %v445 = vadd.f32 %v443, %v444
          %s446 = vtos %v445
          %s447 = vtos %v437
          %s448 = smul.f32 1e-10, %s447
          %p449 = scmp.le.f32.partialorder %s446, %s448
          %p450 = scmp.ge.s32.totalorder %s355, 15
          %p451 = por %p449, %p450
        $region159: #{custom-call.2} parent=155 // loop_header_branch
          %939 = sbr.rel (%p451) target = $region163
        $region160: #{custom-call.2} parent=155 // loop_body
          loop: start=0, step=1, limit=15
          $region164: #{custom-call.2} parent=160 // loop_pre_header
            _
          $region165: #{custom-call.2} parent=160 // loop_header
            %s453 = sphi 0, %s457
            %p454 = scmp.ge.s32.totalorder %s453, 15
          $region166: #{custom-call.2} parent=160 // loop_header_branch
            %456 = sbr.rel (%p454) target = $region170
          $region167: #{custom-call.2} parent=160 // loop_body
            #allocation16 [shape = 'f32[1024]{0}', space=vmem, size = 0x1000, scoped, tag = 'a_tl_diag vmem']
            #allocation17 [shape = 'f32[1024]{0}', space=vmem, size = 0x1000, scoped, tag = 'a_tr_diag vmem']
            #allocation18 [shape = 'f32[1024]{0}', space=vmem, size = 0x1000, scoped, tag = 'a_br_diag vmem']
            #allocation19 [shape = 'f32[1024]{0}', space=vmem, size = 0x1000, scoped, tag = 'rt1 vmem']
            #allocation20 [shape = 'f32[1024]{0}', space=vmem, size = 0x1000, scoped, tag = 'rt2 vmem']
            #allocation21 [shape = 'f32[1024]{0}', space=vmem, size = 0x1000, scoped, tag = 'c vmem']
            #allocation22 [shape = 'f32[1024]{0}', space=vmem, size = 0x1000, scoped, tag = 's vmem']
            #allocation23 [shape = 'f32[4096]{0}', space=vmem, size = 0x4000, scoped, tag = 'c broadcast']
            #allocation24 [shape = 'f32[4096]{0}', space=vmem, size = 0x4000, scoped, tag = 's broadcast']
            %s458 = smov [#allocation12]
            %s459 = smov [#allocation16]
            %v460 = vlaneseq
            %v461 = vand.u32 %v460, 127
            %v462 = vmov %v461
            %v463 = vlaneseq
            %v464 = vshrl.u32 %v463, 7
            %v465 = vmov %v464
            %v466 = vld [vmem:[%s458] sm:$0xff]
            %vm469 = vcmp.eq.s32.totalorder %v465, %v462
            %v470 = vsel %vm469, %v466, 0.0
            %v471 = vrot.slane %v470, 4
            %v472 = vadd.f32 %v470, %v471
            %v473 = vrot.slane %v472, 2
            %v474 = vadd.f32 %v472, %v473
            %v475 = vrot.slane %v474, 1
            %v476 = vadd.f32 %v474, %v475
            %477 = vst [vmem:[%s459] sm:$0x1] %v476
            %s478 = smov [#allocation13]
            %s479 = smov [#allocation17]
            %v480 = vlaneseq
            %v481 = vand.u32 %v480, 127
            %v482 = vmov %v481
            %v483 = vlaneseq
            %v484 = vshrl.u32 %v483, 7
            %v485 = vmov %v484
            %v486 = vld [vmem:[%s478] sm:$0xff]
            %vm489 = vcmp.eq.s32.totalorder %v485, %v482
            %v490 = vsel %vm489, %v486, 0.0
            %v491 = vrot.slane %v490, 4
            %v492 = vadd.f32 %v490, %v491
            %v493 = vrot.slane %v492, 2
            %v494 = vadd.f32 %v492, %v493
            %v495 = vrot.slane %v494, 1
            %v496 = vadd.f32 %v494, %v495
            %497 = vst [vmem:[%s479] sm:$0x1] %v496
            %s498 = smov [#allocation15]
            %s499 = smov [#allocation18]
            %v500 = vlaneseq
            %v501 = vand.u32 %v500, 127
            %v502 = vmov %v501
            %v503 = vlaneseq
            %v504 = vshrl.u32 %v503, 7
            %v505 = vmov %v504
            %v506 = vld [vmem:[%s498] sm:$0xff]
            %vm509 = vcmp.eq.s32.totalorder %v505, %v502
            %v510 = vsel %vm509, %v506, 0.0
            %v511 = vrot.slane %v510, 4
            %v512 = vadd.f32 %v510, %v511
            %v513 = vrot.slane %v512, 2
            %v514 = vadd.f32 %v512, %v513
            %v515 = vrot.slane %v514, 1
            %v516 = vadd.f32 %v514, %v515
            %517 = vst [vmem:[%s499] sm:$0x1] %v516
            %s518 = smov [#allocation21]
            %s519 = smov [#allocation22]
            %s520 = smov [#allocation16]
            %v521 = vld [vmem:[%s520] sm:$0xff]
            %s522 = smov [#allocation17]
            %v523 = vld [vmem:[%s522] sm:$0xff]
            %s524 = smov [#allocation18]
            %v525 = vld [vmem:[%s524] sm:$0xff]
            %v526 = vsub.f32 %v525, %v521
            %v527 = vmul.f32 2.0, %v523
            %v528 = vrcp.pop %v527
            %v529 = vmul.f32 %v527, %v528
            %v530 = vsub.f32 1.0, %v529
            %v531 = vmul.f32 %v528, %v530
            %v532 = vadd.f32 %v528, %v531
            %vm533 = vweird.f32 %v527
            %vm534 = vweird.f32 %v528
            %vm535 = vmor %vm533, %vm534
            %v536 = vsel %vm535, %v528, %v532
            %v537 = vand.u32 2147483647, %v527
            %vm538 = vcmp.eq.f32.partialorder %v537, 8.507059e+37
            %v539 = vand.u32 %v527, 2147483648
            %v540 = vor.u32 1.1754944e-38, %v539
            %v541 = vsel %vm538, %v540, %v536
            %v542 = vmul.f32 %v526, %v541
            %vm543 = vcmp.ge.f32.partialorder %v542, 0.0
            %v544 = vmul.f32 %v542, %v542
            %v545 = vadd.f32 1.0, %v544
            %v546 = vrsqrt.pop %v545
            %v547 = vmul.f32 %v546, %v545
            %v548 = vmul.f32 %v547, %v546
            %v549 = vmul.f32 0.5, %v548
            %v550 = vsub.f32 1.5, %v549
            %v551 = vmul.f32 %v546, %v550
            %v552 = vmul.f32 %v545, %v551
            %vm553 = vcmp.eq.f32.partialorder %v545, inf
            %v554 = vsel %vm553, %v545, %v552
            %vm555 = vcmp.eq.f32.partialorder %v545, 0.0
            %v556 = vand.u32 %v545, 2147483648
            %v557 = vsel %vm555, %v556, %v554
            %v558 = vxor.u32 %v557, 2147483648
            %v559 = vsel %vm543, %v557, %v558
            %v560 = vadd.f32 %v542, %v559
            %v561 = vrcp.pop %v560
            %v562 = vmul.f32 %v560, %v561
            %v563 = vsub.f32 1.0, %v562
            %v564 = vmul.f32 %v561, %v563
            %v565 = vadd.f32 %v561, %v564
            %vm566 = vweird.f32 %v560
            %vm567 = vweird.f32 %v561
            %vm568 = vmor %vm566, %vm567
            %v569 = vsel %vm568, %v561, %v565
            %v570 = vand.u32 2147483647, %v560
            %vm571 = vcmp.eq.f32.partialorder %v570, 8.507059e+37
            %v572 = vand.u32 %v560, 2147483648
            %v573 = vor.u32 1.1754944e-38, %v572
            %v574 = vsel %vm571, %v573, %v569
            %v575 = vand.u32 2147483647, %v521
            %v576 = vand.u32 2147483647, %v523
            %v577 = vand.u32 2147483647, %v525
            %v578 = vmin.f32 %v575, %v577
            %v579 = vmul.f32 1.1920929e-08, %v578
            %vm580 = vcmp.le.f32.partialorder %v576, %v579
            %v581 = vsel %vm580, 0.0, %v574
            %v582 = vmul.f32 %v581, %v581
            %v583 = vadd.f32 1.0, %v582
            %v584 = vrsqrt.pop %v583
            %v585 = vmul.f32 %v584, %v583
            %v586 = vmul.f32 %v585, %v584
            %v587 = vmul.f32 0.5, %v586
            %v588 = vsub.f32 1.5, %v587
            %v589 = vmul.f32 %v584, %v588
            %vm590 = vweird.f32 %v583
            %vm591 = vweird.f32 %v584
            %vm592 = vmor %vm590, %vm591
            %v593 = vsel %vm592, %v584, %v589
            %v594 = vmul.f32 %v581, %v593
            %v595 = vmul.f32 %v581, %v523
            %v596 = vsub.f32 %v521, %v595
            %v597 = vmul.f32 %v581, %v523
            %v598 = vadd.f32 %v525, %v597
            %s599 = smov [#allocation19]
            %600 = vst [vmem:[%s599] sm:$0xff] %v596
            %s601 = smov [#allocation20]
            %602 = vst [vmem:[%s601] sm:$0xff] %v598
            %s603 = smov %s518
            %604 = vst [vmem:[%s603] sm:$0xff] %v593
            %s605 = smov %s519
            %606 = vst [vmem:[%s605] sm:$0xff] %v594
            %s607 = smov [#allocation21]
            %v608 = vld [vmem:[%s607] ss:$0 sm:$0xff]
            %v609 = vlaneseq
            %v610 = vand.u32 %v609, 127
            %v611 = vmov %v610
            %v612 = vlaneseq
            %v613 = vshrl.u32 %v612, 7
            %v614 = vmov %v613
            %vm616 = vcmp.eq.s32.totalorder %v614, %v611
            %v617 = vsel %vm616, %v608, 0.0
            %618 = vadd.xlane.f32.xlu0 %v617
            %v619 = vpop.xlane.xlu0 %618
            %s620 = smov [#allocation23]
            %621 = vst [vmem:[%s620] sm:$0xff] %v619
            %s622 = smov [#allocation22]
            %v623 = vld [vmem:[%s622] ss:$0 sm:$0xff]
            %v624 = vlaneseq
            %v625 = vand.u32 %v624, 127
            %v626 = vmov %v625
            %v627 = vlaneseq
            %v628 = vshrl.u32 %v627, 7
            %v629 = vmov %v628
            %vm631 = vcmp.eq.s32.totalorder %v629, %v626
            %v632 = vsel %vm631, %v623, 0.0
            %633 = vadd.xlane.f32.xlu0 %v632
            %v634 = vpop.xlane.xlu0 %633
            %s635 = smov [#allocation24]
            %636 = vst [vmem:[%s635] sm:$0xff] %v634
            %s637 = smov [#allocation23]
            %v638 = vld [vmem:[%s637] sm:$0xff]
            %s639 = smov [#allocation24]
            %v640 = vld [vmem:[%s639] sm:$0xff]
            %s641 = smov [#allocation12]
            %s642 = smov [#allocation13]
            %s643 = smov [#allocation14]
            %s644 = smov [#allocation15]
            %v645 = vld [vmem:[%s641] sm:$0xff]
            %v646 = vld [vmem:[%s642] sm:$0xff]
            %v647 = vld [vmem:[%s643] sm:$0xff]
            %v648 = vld [vmem:[%s644] sm:$0xff]
            %v649 = vmul.f32 %v638, %v645
            %v650 = vmul.f32 %v640, %v647
            %v651 = vsub.f32 %v649, %v650
            %v652 = vmul.f32 %v638, %v646
            %v653 = vmul.f32 %v640, %v648
            %v654 = vsub.f32 %v652, %v653
            %v655 = vmul.f32 %v640, %v645
            %v656 = vmul.f32 %v638, %v647
            %v657 = vadd.f32 %v655, %v656
            %v658 = vmul.f32 %v640, %v646
            %v659 = vmul.f32 %v638, %v648
            %v660 = vadd.f32 %v658, %v659
            %661 = vst [vmem:[%s641] sm:$0xff] %v651
            %662 = vst [vmem:[%s642] sm:$0xff] %v654
            %663 = vst [vmem:[%s643] sm:$0xff] %v657
            %664 = vst [vmem:[%s644] sm:$0xff] %v660
            %s665 = smov [#allocation21]
            %v666 = vld [vmem:[%s665] ss:$0 sm:$0xff]
            %s667 = smov [#allocation22]
            %v668 = vld [vmem:[%s667] ss:$0 sm:$0xff]
            %s669 = smov [#allocation12]
            %s670 = smov [#allocation13]
            %s671 = smov [#allocation14]
            %s672 = smov [#allocation15]
            %v673 = vld [vmem:[%s669] sm:$0xff]
            %v674 = vld [vmem:[%s670] sm:$0xff]
            %v675 = vld [vmem:[%s671] sm:$0xff]
            %v676 = vld [vmem:[%s672] sm:$0xff]
            %v677 = vmul.f32 %v666, %v673
            %v678 = vmul.f32 %v668, %v674
            %v679 = vsub.f32 %v677, %v678
            %v680 = vmul.f32 %v668, %v673
            %v681 = vmul.f32 %v666, %v674
            %v682 = vadd.f32 %v680, %v681
            %v683 = vmul.f32 %v666, %v675
            %v684 = vmul.f32 %v668, %v676
            %v685 = vsub.f32 %v683, %v684
            %v686 = vmul.f32 %v668, %v675
            %v687 = vmul.f32 %v666, %v676
            %v688 = vadd.f32 %v686, %v687
            %689 = vst [vmem:[%s669] sm:$0xff] %v679
            %690 = vst [vmem:[%s670] sm:$0xff] %v682
            %691 = vst [vmem:[%s671] sm:$0xff] %v685
            %692 = vst [vmem:[%s672] sm:$0xff] %v688
            %s693 = smov [#allocation12]
            %s694 = smov [#allocation19]
            %v695 = vlaneseq
            %v696 = vand.u32 %v695, 127
            %v697 = vmov %v696
            %v698 = vlaneseq
            %v699 = vshrl.u32 %v698, 7
            %v700 = vmov %v699
            %v701 = vld [vmem:[%s694] ss:$0 sm:$0xff]
            %v702 = vld [vmem:[%s693] sm:$0xff]
            %vm705 = vcmp.eq.s32.totalorder %v700, %v697
            %v706 = vsel %vm705, %v701, %v702
            %707 = vst [vmem:[%s693] sm:$0xff] %v706
            %s708 = smov [#allocation13]
            %v709 = vlaneseq
            %v710 = vand.u32 %v709, 127
            %v711 = vmov %v710
            %v712 = vlaneseq
            %v713 = vshrl.u32 %v712, 7
            %v714 = vmov %v713
            %v715 = vld [vmem:[%s708] sm:$0xff]
            %vm718 = vcmp.eq.s32.totalorder %v714, %v711
            %v719 = vsel %vm718, 0.0, %v715
            %720 = vst [vmem:[%s708] sm:$0xff] %v719
            %s721 = smov [#allocation14]
            %v722 = vlaneseq
            %v723 = vand.u32 %v722, 127
            %v724 = vmov %v723
            %v725 = vlaneseq
            %v726 = vshrl.u32 %v725, 7
            %v727 = vmov %v726
            %v728 = vld [vmem:[%s721] sm:$0xff]
            %vm731 = vcmp.eq.s32.totalorder %v727, %v724
            %v732 = vsel %vm731, 0.0, %v728
            %733 = vst [vmem:[%s721] sm:$0xff] %v732
            %s734 = smov [#allocation15]
            %s735 = smov [#allocation20]
            %v736 = vlaneseq
            %v737 = vand.u32 %v736, 127
            %v738 = vmov %v737
            %v739 = vlaneseq
            %v740 = vshrl.u32 %v739, 7
            %v741 = vmov %v740
            %v742 = vld [vmem:[%s735] ss:$0 sm:$0xff]
            %v743 = vld [vmem:[%s734] sm:$0xff]
            %vm746 = vcmp.eq.s32.totalorder %v741, %v738
            %v747 = vsel %vm746, %v742, %v743
            %748 = vst [vmem:[%s734] sm:$0xff] %v747
            %s749 = smov [#allocation12]
            %s750 = smov [#allocation13]
            %v751 = vld [vmem:[%s750] sm:$0xff]
            %752 = vrot.lane.b32.xlu0 %v751, 1
            %v753 = vpop.permute.xlu0 %752
            %v754 = vld [vmem:[%s749] sm:$0xff]
            %v755 = vld [vmem:[%s749] sm:$0xff]
            %756 = vrot.lane.b32.xlu0 %v755, 1
            %v757 = vpop.permute.xlu0 %756
            %v758 = vlaneseq
            %v759 = vand.u32 %v758, 127
            %vm760 = vcmp.eq.s32.totalorder %v759, 0
            %v761 = vsel %vm760, %v755, %v757
            %v762 = vlaneseq
            %v763 = vand.u32 %v762, 127
            %vm764 = vcmp.eq.s32.totalorder %v763, 1
            %v765 = vsel %vm764, %v753, %v761
            %v766 = vlaneseq
            %v767 = vand.u32 %v766, 127
            %vm768 = vcmp.ge.s32.totalorder %v767, 0
            %vm769 = vcmp.lt.s32.totalorder %v767, 8
            %vm770 = vmand %vm768, %vm769
            %v771 = vsel %vm770, %v765, 0.0
            %v772 = vld [vmem:[%s750] sm:$0xff]
            %773 = vrot.lane.b32.xlu0 %v772, 127
            %v774 = vpop.permute.xlu0 %773
            %v775 = vlaneseq
            %v776 = vand.u32 %v775, 127
            %vm777 = vcmp.eq.s32.totalorder %v776, 7
            %v778 = vsel %vm777, %v754, %v774
            %779 = vst [vmem:[%s749] sm:$0xff] %v771
            %780 = vst [vmem:[%s750] sm:$0xff] %v778
            %s781 = smov [#allocation14]
            %s782 = smov [#allocation15]
            %v783 = vld [vmem:[%s782] sm:$0xff]
            %784 = vrot.lane.b32.xlu0 %v783, 1
            %v785 = vpop.permute.xlu0 %784
            %v786 = vld [vmem:[%s781] sm:$0xff]
            %v787 = vld [vmem:[%s781] sm:$0xff]
            %788 = vrot.lane.b32.xlu0 %v787, 1
            %v789 = vpop.permute.xlu0 %788
            %v790 = vlaneseq
            %v791 = vand.u32 %v790, 127
            %vm792 = vcmp.eq.s32.totalorder %v791, 0
            %v793 = vsel %vm792, %v787, %v789
            %v794 = vlaneseq
            %v795 = vand.u32 %v794, 127
            %vm796 = vcmp.eq.s32.totalorder %v795, 1
            %v797 = vsel %vm796, %v785, %v793
            %v798 = vlaneseq
            %v799 = vand.u32 %v798, 127
            %vm800 = vcmp.ge.s32.totalorder %v799, 0
            %vm801 = vcmp.lt.s32.totalorder %v799, 8
            %vm802 = vmand %vm800, %vm801
            %v803 = vsel %vm802, %v797, 0.0
            %v804 = vld [vmem:[%s782] sm:$0xff]
            %805 = vrot.lane.b32.xlu0 %v804, 127
            %v806 = vpop.permute.xlu0 %805
            %v807 = vlaneseq
            %v808 = vand.u32 %v807, 127
            %vm809 = vcmp.eq.s32.totalorder %v808, 7
            %v810 = vsel %vm809, %v786, %v806
            %811 = vst [vmem:[%s781] sm:$0xff] %v803
            %812 = vst [vmem:[%s782] sm:$0xff] %v810
            %s813 = smov [#allocation12]
            %s814 = smov [#allocation14]
            %v815 = vld [vmem:[%s813] ss:$0 sm:$0xff]
            %s817 = scalar_lea.vmem %s813, 4294967295
            %v818 = vld [vmem:[%s817] sm:$0xfe]
            %v819 = vlaneseq
            %v820 = vshrl.u32 %v819, 7
            %vm821 = vcmp.eq.s32.totalorder %v820, 0
            %v822 = vsel %vm821, %v815, %v818
            %s823 = scalar_lea.vmem %s813, 7
            %v824 = vld [vmem:[%s823] ss:$0 sm:$0xff]
            %825 = vst [vmem:[%s813] sm:$0xff] %v822
            %v826 = vld [vmem:[%s814] ss:$0 sm:$0xff]
            %s827 = scalar_lea.vmem %s813, 1
            %828 = vst [vmem:[%s827] sm:$0x1] %v826
            %s829 = scalar_lea.vmem %s814, 1
            %v830 = vld [vmem:[%s829] sm:$0x7f]
            %v831 = vlaneseq
            %v832 = vshrl.u32 %v831, 7
            %vm833 = vcmp.eq.s32.totalorder %v832, 7
            %v834 = vsel %vm833, %v824, %v830
            %v835 = vld [vmem:[%s814] ss:$0 sm:$0xff]
            %836 = vst [vmem:[%s814] sm:$0xff] %v834
            %s837 = smov [#allocation13]
            %s838 = smov [#allocation15]
            %v839 = vld [vmem:[%s837] ss:$0 sm:$0xff]
            %s841 = scalar_lea.vmem %s837, 4294967295
            %v842 = vld [vmem:[%s841] sm:$0xfe]
            %v843 = vlaneseq
            %v844 = vshrl.u32 %v843, 7
            %vm845 = vcmp.eq.s32.totalorder %v844, 0
            %v846 = vsel %vm845, %v839, %v842
            %s847 = scalar_lea.vmem %s837, 7
            %v848 = vld [vmem:[%s847] ss:$0 sm:$0xff]
            %849 = vst [vmem:[%s837] sm:$0xff] %v846
            %v850 = vld [vmem:[%s838] ss:$0 sm:$0xff]
            %s851 = scalar_lea.vmem %s837, 1
            %852 = vst [vmem:[%s851] sm:$0x1] %v850
            %s853 = scalar_lea.vmem %s838, 1
            %v854 = vld [vmem:[%s853] sm:$0x7f]
            %v855 = vlaneseq
            %v856 = vshrl.u32 %v855, 7
            %vm857 = vcmp.eq.s32.totalorder %v856, 7
            %v858 = vsel %vm857, %v848, %v854
            %v859 = vld [vmem:[%s838] ss:$0 sm:$0xff]
            %860 = vst [vmem:[%s838] sm:$0xff] %v858
            %s861 = smov [#allocation23]
            %v862 = vld [vmem:[%s861] sm:$0xff]
            %s863 = smov [#allocation24]
            %v864 = vld [vmem:[%s863] sm:$0xff]
            %s865 = smov %s297
            %s866 = smov %s301
            %s867 = smov %s305
            %s868 = smov %s309
            %v869 = vld [vmem:[%s865] sm:$0xff]
            %v870 = vld [vmem:[%s866] sm:$0xff]
            %v871 = vld [vmem:[%s867] sm:$0xff]
            %v872 = vld [vmem:[%s868] sm:$0xff]
            %v873 = vmul.f32 %v862, %v869
            %v874 = vmul.f32 %v864, %v871
            %v875 = vsub.f32 %v873, %v874
            %v876 = vmul.f32 %v862, %v870
            %v877 = vmul.f32 %v864, %v872
            %v878 = vsub.f32 %v876, %v877
            %v879 = vmul.f32 %v864, %v869
            %v880 = vmul.f32 %v862, %v871
            %v881 = vadd.f32 %v879, %v880
            %v882 = vmul.f32 %v864, %v870
            %v883 = vmul.f32 %v862, %v872
            %v884 = vadd.f32 %v882, %v883
            %885 = vst [vmem:[%s865] sm:$0xff] %v875
            %886 = vst [vmem:[%s866] sm:$0xff] %v878
            %887 = vst [vmem:[%s867] sm:$0xff] %v881
            %888 = vst [vmem:[%s868] sm:$0xff] %v884
            %s889 = smov %s297
            %s890 = smov %s305
            %v891 = vld [vmem:[%s889] ss:$0 sm:$0xff]
            %s893 = scalar_lea.vmem %s889, 4294967295
            %v894 = vld [vmem:[%s893] sm:$0xfe]
            %v895 = vlaneseq
            %v896 = vshrl.u32 %v895, 7
            %vm897 = vcmp.eq.s32.totalorder %v896, 0
            %v898 = vsel %vm897, %v891, %v894
            %s899 = scalar_lea.vmem %s889, 7
            %v900 = vld [vmem:[%s899] ss:$0 sm:$0xff]
            %901 = vst [vmem:[%s889] sm:$0xff] %v898
            %v902 = vld [vmem:[%s890] ss:$0 sm:$0xff]
            %s903 = scalar_lea.vmem %s889, 1
            %904 = vst [vmem:[%s903] sm:$0x1] %v902
            %s905 = scalar_lea.vmem %s890, 1
            %v906 = vld [vmem:[%s905] sm:$0x7f]
            %v907 = vlaneseq
            %v908 = vshrl.u32 %v907, 7
            %vm909 = vcmp.eq.s32.totalorder %v908, 7
            %v910 = vsel %vm909, %v900, %v906
            %v911 = vld [vmem:[%s890] ss:$0 sm:$0xff]
            %912 = vst [vmem:[%s890] sm:$0xff] %v910
            %s913 = smov %s301
            %s914 = smov %s309
            %v915 = vld [vmem:[%s913] ss:$0 sm:$0xff]
            %s917 = scalar_lea.vmem %s913, 4294967295
            %v918 = vld [vmem:[%s917] sm:$0xfe]
            %v919 = vlaneseq
            %v920 = vshrl.u32 %v919, 7
            %vm921 = vcmp.eq.s32.totalorder %v920, 0
            %v922 = vsel %vm921, %v915, %v918
            %s923 = scalar_lea.vmem %s913, 7
            %v924 = vld [vmem:[%s923] ss:$0 sm:$0xff]
            %925 = vst [vmem:[%s913] sm:$0xff] %v922
            %v926 = vld [vmem:[%s914] ss:$0 sm:$0xff]
            %s927 = scalar_lea.vmem %s913, 1
            %928 = vst [vmem:[%s927] sm:$0x1] %v926
            %s929 = scalar_lea.vmem %s914, 1
            %v930 = vld [vmem:[%s929] sm:$0x7f]
            %v931 = vlaneseq
            %v932 = vshrl.u32 %v931, 7
            %vm933 = vcmp.eq.s32.totalorder %v932, 7
            %v934 = vsel %vm933, %v924, %v930
            %v935 = vld [vmem:[%s914] ss:$0 sm:$0xff]
            %936 = vst [vmem:[%s914] sm:$0xff] %v934
          $region168: #{custom-call.2} parent=160 // loop_footer
            %s457 = sadd.s32 1, %s453
          $region169: #{custom-call.2} parent=160 // loop_footer_branch
            %452 = sbr.rel target = $region165
          $region170: #{custom-call.2} parent=160 // loop_exit
            _
          %s937 = sadd.s32 %s355, 1
        $region161: #{custom-call.2} parent=155 // loop_footer
          _
        $region162: #{custom-call.2} parent=155 // loop_footer_branch
          %354 = sbr.rel target = $region158
        $region163: #{custom-call.2} parent=155 // loop_exit
          _
        %s940 = sand.u32 %s17, 7
        %s941 = scalar_lea.vmem [#allocation4], %s940
        %s942 = sand.u32 %s17, 7
        %s943 = scalar_lea.vmem [#allocation6], %s942
        %s944 = smov [#allocation12]
        %s945 = smov %s941
        %v946 = vlaneseq
        %v947 = vand.u32 %v946, 127
        %v948 = vmov %v947
        %v949 = vlaneseq
        %v950 = vshrl.u32 %v949, 7
        %v951 = vmov %v950
        %v952 = vld [vmem:[%s944] sm:$0xff]
        %vm955 = vcmp.eq.s32.totalorder %v951, %v948
        %v956 = vsel %vm955, %v952, 0.0
        %v957 = vrot.slane %v956, 4
        %v958 = vadd.f32 %v956, %v957
        %v959 = vrot.slane %v958, 2
        %v960 = vadd.f32 %v958, %v959
        %v961 = vrot.slane %v960, 1
        %v962 = vadd.f32 %v960, %v961
        %963 = vst [vmem:[%s945] sm:$0x1] %v962
        %s964 = smov [#allocation15]
        %s965 = smov %s943
        %v966 = vlaneseq
        %v967 = vand.u32 %v966, 127
        %v968 = vmov %v967
        %v969 = vlaneseq
        %v970 = vshrl.u32 %v969, 7
        %v971 = vmov %v970
        %v972 = vld [vmem:[%s964] sm:$0xff]
        %vm975 = vcmp.eq.s32.totalorder %v971, %v968
        %v976 = vsel %vm975, %v972, 0.0
        %v977 = vrot.slane %v976, 4
        %v978 = vadd.f32 %v976, %v977
        %v979 = vrot.slane %v978, 2
        %v980 = vadd.f32 %v978, %v979
        %v981 = vrot.slane %v980, 1
        %v982 = vadd.f32 %v980, %v981
        %983 = vst [vmem:[%s965] sm:$0x1] %v982
        %s985 = ssub.s32 4, 1
        %v986 = vld [vmem:[#allocation4] sm:%s985]
        %s988 = ssub.s32 4, 1
        %989 = vst [vmem:[%s287] sm:%s988] %v986
        %s991 = ssub.s32 4, 1
        %v992 = vld [vmem:[#allocation6] sm:%s991]
        %s994 = ssub.s32 4, 1
        %995 = vst [vmem:[%s293] sm:%s994] %v992
        %s996 = sand.u32 %s27, 1
        %s997 = sand.u32 %s27, 1
        %s998 = smul.addr %s997, 2
        %s999 = scalar_lea.vmem [#allocation5], %s998
        %s1000 = sand.u32 %s55, 1
        %s1001 = sand.u32 %s55, 1
        %s1002 = smul.addr %s1001, 2
        %s1003 = scalar_lea.vmem [#allocation7], %s1002
        %s1004 = sand.u32 %s17, 1
        %s1005 = sand.u32 %s17, 1
        %s1006 = smul.addr %s1005, 8
        %s1007 = scalar_lea.vmem [#allocation8], %s1006
        %s1008 = sand.u32 %s17, 1
        %s1009 = sand.u32 %s17, 1
        %s1010 = smul.addr %s1009, 8
        %s1011 = scalar_lea.vmem [#allocation9], %s1010
        %s1012 = sand.u32 %s17, 1
        %s1013 = sand.u32 %s17, 1
        %s1014 = smul.addr %s1013, 8
        %s1015 = scalar_lea.vmem [#allocation10], %s1014
        %s1016 = sand.u32 %s17, 1
        %s1017 = sand.u32 %s17, 1
        %s1018 = smul.addr %s1017, 8
        %s1019 = scalar_lea.vmem [#allocation11], %s1018
        // Predicated region
        $region171: #{custom-call.2} parent=155 // pred_check
          %p1020 = pneg %p37
        $region172: #{custom-call.2} parent=155 // pred_check_branch
          %1022 = sbr.rel (%p1020) target = $region174
        $region173: #{custom-call.2} parent=155 // pred_region
          %s1023 = sshrl.u32 %s17, 3
          %s1024 = smul.addr %s1023, 2
          %s1025 = scalar_lea.vmem %s4, %s1024
          // Predicated region
          $region175: #{custom-call.2} parent=173 // pred_check
            _
          $region176: #{custom-call.2} parent=173 // pred_check_branch
            %1027 = sbr.rel (0) target = $region178
          $region177: #{custom-call.2} parent=173 // pred_region
            // Predicated region
            $region179: #{custom-call.2} parent=177 // pred_check
              _
            $region180: #{custom-call.2} parent=177 // pred_check_branch
              %1029 = sbr.rel target = $region182
            $region181: #{custom-call.2} parent=177 // pred_region
              // Predicated region
              $region194: #{custom-call.2} parent=181 // pred_check
                _
              $region195: #{custom-call.2} parent=181 // pred_check_branch
                %1045 = sbr.rel (0) target = $region197
              $region196: #{custom-call.2} parent=181 // pred_region
                %s1047 = ssub.s32 4, 1
                loop: start=0, step=1, limit=1
                $region198: #{custom-call.2} parent=196 // loop_pre_header
                  _
                $region199: #{custom-call.2} parent=196 // loop_header
                  %s1049 = sphi 0, %s1053
                  %p1050 = scmp.ge.s32.totalorder %s1049, 1
                  %s1054 = sphi %s999, %s999
                  %s1055 = sphi %s1025, %s1025
                $region200: #{custom-call.2} parent=196 // loop_header_branch
                  %1052 = sbr.rel (%p1050) target = $region204
                $region201: #{custom-call.2} parent=196 // loop_body
                  %v1056 = vld [vmem:[%s1054] sm:%s1047]
                  %1057 = vst [vmem:[%s1055] sm:%s1047] %v1056
                $region202: #{custom-call.2} parent=196 // loop_footer
                  %s1053 = sadd.s32 1, %s1049
                $region203: #{custom-call.2} parent=196 // loop_footer_branch
                  %1048 = sbr.rel target = $region199
                $region204: #{custom-call.2} parent=196 // loop_exit
                  _
              $region197: #{custom-call.2} parent=181 // pred_fallthru
                _
            $region182: #{custom-call.2} parent=177 // pred_fallthru
              _
            // Predicated region
            $region183: #{custom-call.2} parent=177 // pred_check
              _
            $region184: #{custom-call.2} parent=177 // pred_check_branch
              %1031 = sbr.rel (0) target = $region186
            $region185: #{custom-call.2} parent=177 // pred_region
              %s1033 = ssub.s32 4, 1
              loop: start=0, step=1, limit=1
              $region187: #{custom-call.2} parent=185 // loop_pre_header
                _
              $region188: #{custom-call.2} parent=185 // loop_header
                %s1035 = sphi 0, %s1039
                %p1036 = scmp.ge.s32.totalorder %s1035, 1
                %s1040 = sphi %s999, %s999
                %s1041 = sphi %s1025, %s1025
              $region189: #{custom-call.2} parent=185 // loop_header_branch
                %1038 = sbr.rel (%p1036) target = $region193
              $region190: #{custom-call.2} parent=185 // loop_body
                %v1042 = vld [vmem:[%s1040] sm:%s1033]
                %1043 = vst [vmem:[%s1041] sm:%s1033] %v1042
              $region191: #{custom-call.2} parent=185 // loop_footer
                %s1039 = sadd.s32 1, %s1035
              $region192: #{custom-call.2} parent=185 // loop_footer_branch
                %1034 = sbr.rel target = $region188
              $region193: #{custom-call.2} parent=185 // loop_exit
                _
            $region186: #{custom-call.2} parent=177 // pred_fallthru
              _
          $region178: #{custom-call.2} parent=173 // pred_fallthru
            _
          %1058 = vnop
        $region174: #{custom-call.2} parent=155 // pred_fallthru
          _
        // Predicated region
        $region205: #{custom-call.2} parent=155 // pred_check
          %p1059 = pneg %p65
        $region206: #{custom-call.2} parent=155 // pred_check_branch
          %1061 = sbr.rel (%p1059) target = $region208
        $region207: #{custom-call.2} parent=155 // pred_region
          %s1062 = sshrl.u32 %s17, 3
          %s1063 = smul.addr %s1062, 2
          %s1064 = scalar_lea.vmem %s5, %s1063
          // Predicated region
          $region209: #{custom-call.2} parent=207 // pred_check
            _
          $region210: #{custom-call.2} parent=207 // pred_check_branch
            %1066 = sbr.rel (0) target = $region212
          $region211: #{custom-call.2} parent=207 // pred_region
            // Predicated region
            $region213: #{custom-call.2} parent=211 // pred_check
              _
            $region214: #{custom-call.2} parent=211 // pred_check_branch
              %1068 = sbr.rel target = $region216
            $region215: #{custom-call.2} parent=211 // pred_region
              // Predicated region
              $region228: #{custom-call.2} parent=215 // pred_check
                _
              $region229: #{custom-call.2} parent=215 // pred_check_branch
                %1084 = sbr.rel (0) target = $region231
              $region230: #{custom-call.2} parent=215 // pred_region
                %s1086 = ssub.s32 4, 1
                loop: start=0, step=1, limit=1
                $region232: #{custom-call.2} parent=230 // loop_pre_header
                  _
                $region233: #{custom-call.2} parent=230 // loop_header
                  %s1088 = sphi 0, %s1092
                  %p1089 = scmp.ge.s32.totalorder %s1088, 1
                  %s1093 = sphi %s1003, %s1003
                  %s1094 = sphi %s1064, %s1064
                $region234: #{custom-call.2} parent=230 // loop_header_branch
                  %1091 = sbr.rel (%p1089) target = $region238
                $region235: #{custom-call.2} parent=230 // loop_body
                  %v1095 = vld [vmem:[%s1093] sm:%s1086]
                  %1096 = vst [vmem:[%s1094] sm:%s1086] %v1095
                $region236: #{custom-call.2} parent=230 // loop_footer
                  %s1092 = sadd.s32 1, %s1088
                $region237: #{custom-call.2} parent=230 // loop_footer_branch
                  %1087 = sbr.rel target = $region233
                $region238: #{custom-call.2} parent=230 // loop_exit
                  _
              $region231: #{custom-call.2} parent=215 // pred_fallthru
                _
            $region216: #{custom-call.2} parent=211 // pred_fallthru
              _
            // Predicated region
            $region217: #{custom-call.2} parent=211 // pred_check
              _
            $region218: #{custom-call.2} parent=211 // pred_check_branch
              %1070 = sbr.rel (0) target = $region220
            $region219: #{custom-call.2} parent=211 // pred_region
              %s1072 = ssub.s32 4, 1
              loop: start=0, step=1, limit=1
              $region221: #{custom-call.2} parent=219 // loop_pre_header
                _
              $region222: #{custom-call.2} parent=219 // loop_header
                %s1074 = sphi 0, %s1078
                %p1075 = scmp.ge.s32.totalorder %s1074, 1
                %s1079 = sphi %s1003, %s1003
                %s1080 = sphi %s1064, %s1064
              $region223: #{custom-call.2} parent=219 // loop_header_branch
                %1077 = sbr.rel (%p1075) target = $region227
              $region224: #{custom-call.2} parent=219 // loop_body
                %v1081 = vld [vmem:[%s1079] sm:%s1072]
                %1082 = vst [vmem:[%s1080] sm:%s1072] %v1081
              $region225: #{custom-call.2} parent=219 // loop_footer
                %s1078 = sadd.s32 1, %s1074
              $region226: #{custom-call.2} parent=219 // loop_footer_branch
                %1073 = sbr.rel target = $region222
              $region227: #{custom-call.2} parent=219 // loop_exit
                _
            $region220: #{custom-call.2} parent=211 // pred_fallthru
              _
          $region212: #{custom-call.2} parent=207 // pred_fallthru
            _
          %1097 = vnop
        $region208: #{custom-call.2} parent=155 // pred_fallthru
          _
        %s1098 = smul.addr %s17, 8
        %s1099 = scalar_lea.vmem %s6, %s1098
        // Predicated region
        $region239: #{custom-call.2} parent=155 // pred_check
          _
        $region240: #{custom-call.2} parent=155 // pred_check_branch
          %1101 = sbr.rel (0) target = $region242
        $region241: #{custom-call.2} parent=155 // pred_region
          // Predicated region
          $region243: #{custom-call.2} parent=241 // pred_check
            _
          $region244: #{custom-call.2} parent=241 // pred_check_branch
            %1103 = sbr.rel (0) target = $region246
          $region245: #{custom-call.2} parent=241 // pred_region
            // Predicated region
            $region258: #{custom-call.2} parent=245 // pred_check
              _
            $region259: #{custom-call.2} parent=245 // pred_check_branch
              %1119 = sbr.rel (0) target = $region261
            $region260: #{custom-call.2} parent=245 // pred_region
              loop: start=0, step=1, limit=1
              $region262: #{custom-call.2} parent=260 // loop_pre_header
                _
              $region263: #{custom-call.2} parent=260 // loop_header
                %s1121 = sphi 0, %s1125
                %p1122 = scmp.ge.s32.totalorder %s1121, 1
                %s1126 = sphi %s1007, %s1007
                %s1127 = sphi %s1099, %s1099
              $region264: #{custom-call.2} parent=260 // loop_header_branch
                %1124 = sbr.rel (%p1122) target = $region268
              $region265: #{custom-call.2} parent=260 // loop_body
                %v1128 = vld [vmem:[%s1126] sm:$0xff]
                %1129 = vst [vmem:[%s1127] sm:$0xff] %v1128
              $region266: #{custom-call.2} parent=260 // loop_footer
                %s1125 = sadd.s32 1, %s1121
              $region267: #{custom-call.2} parent=260 // loop_footer_branch
                %1120 = sbr.rel target = $region263
              $region268: #{custom-call.2} parent=260 // loop_exit
                _
            $region261: #{custom-call.2} parent=245 // pred_fallthru
              _
            // Predicated region
            $region269: #{custom-call.2} parent=245 // pred_check
              _
            $region270: #{custom-call.2} parent=245 // pred_check_branch
              %1131 = sbr.rel target = $region272
            $region271: #{custom-call.2} parent=245 // pred_region
              _
            $region272: #{custom-call.2} parent=245 // pred_fallthru
              _
          $region246: #{custom-call.2} parent=241 // pred_fallthru
            _
          // Predicated region
          $region247: #{custom-call.2} parent=241 // pred_check
            _
          $region248: #{custom-call.2} parent=241 // pred_check_branch
            %1105 = sbr.rel target = $region250
          $region249: #{custom-call.2} parent=241 // pred_region
            %s1107 = ssub.s32 256, 1
            loop: start=0, step=1, limit=1
            $region251: #{custom-call.2} parent=249 // loop_pre_header
              _
            $region252: #{custom-call.2} parent=249 // loop_header
              %s1109 = sphi 0, %s1113
              %p1110 = scmp.ge.s32.totalorder %s1109, 1
              %s1114 = sphi %s1007, %s1007
              %s1115 = sphi %s1099, %s1099
            $region253: #{custom-call.2} parent=249 // loop_header_branch
              %1112 = sbr.rel (%p1110) target = $region257
            $region254: #{custom-call.2} parent=249 // loop_body
              %v1116 = vld [vmem:[%s1114] sm:%s1107]
              %1117 = vst [vmem:[%s1115] sm:%s1107] %v1116
            $region255: #{custom-call.2} parent=249 // loop_footer
              %s1113 = sadd.s32 1, %s1109
            $region256: #{custom-call.2} parent=249 // loop_footer_branch
              %1108 = sbr.rel target = $region252
            $region257: #{custom-call.2} parent=249 // loop_exit
              _
          $region250: #{custom-call.2} parent=241 // pred_fallthru
            _
        $region242: #{custom-call.2} parent=155 // pred_fallthru
          _
        %1132 = vnop
        %s1133 = smul.addr %s17, 8
        %s1134 = scalar_lea.vmem %s7, %s1133
        // Predicated region
        $region273: #{custom-call.2} parent=155 // pred_check
          _
        $region274: #{custom-call.2} parent=155 // pred_check_branch
          %1136 = sbr.rel (0) target = $region276
        $region275: #{custom-call.2} parent=155 // pred_region
          // Predicated region
          $region277: #{custom-call.2} parent=275 // pred_check
            _
          $region278: #{custom-call.2} parent=275 // pred_check_branch
            %1138 = sbr.rel (0) target = $region280
          $region279: #{custom-call.2} parent=275 // pred_region
            // Predicated region
            $region292: #{custom-call.2} parent=279 // pred_check
              _
            $region293: #{custom-call.2} parent=279 // pred_check_branch
              %1154 = sbr.rel (0) target = $region295
            $region294: #{custom-call.2} parent=279 // pred_region
              loop: start=0, step=1, limit=1
              $region296: #{custom-call.2} parent=294 // loop_pre_header
                _
              $region297: #{custom-call.2} parent=294 // loop_header
                %s1156 = sphi 0, %s1160
                %p1157 = scmp.ge.s32.totalorder %s1156, 1
                %s1161 = sphi %s1011, %s1011
                %s1162 = sphi %s1134, %s1134
              $region298: #{custom-call.2} parent=294 // loop_header_branch
                %1159 = sbr.rel (%p1157) target = $region302
              $region299: #{custom-call.2} parent=294 // loop_body
                %v1163 = vld [vmem:[%s1161] sm:$0xff]
                %1164 = vst [vmem:[%s1162] sm:$0xff] %v1163
              $region300: #{custom-call.2} parent=294 // loop_footer
                %s1160 = sadd.s32 1, %s1156
              $region301: #{custom-call.2} parent=294 // loop_footer_branch
                %1155 = sbr.rel target = $region297
              $region302: #{custom-call.2} parent=294 // loop_exit
                _
            $region295: #{custom-call.2} parent=279 // pred_fallthru
              _
            // Predicated region
            $region303: #{custom-call.2} parent=279 // pred_check
              _
            $region304: #{custom-call.2} parent=279 // pred_check_branch
              %1166 = sbr.rel target = $region306
            $region305: #{custom-call.2} parent=279 // pred_region
              _
            $region306: #{custom-call.2} parent=279 // pred_fallthru
              _
          $region280: #{custom-call.2} parent=275 // pred_fallthru
            _
          // Predicated region
          $region281: #{custom-call.2} parent=275 // pred_check
            _
          $region282: #{custom-call.2} parent=275 // pred_check_branch
            %1140 = sbr.rel target = $region284
          $region283: #{custom-call.2} parent=275 // pred_region
            %s1142 = ssub.s32 256, 1
            loop: start=0, step=1, limit=1
            $region285: #{custom-call.2} parent=283 // loop_pre_header
              _
            $region286: #{custom-call.2} parent=283 // loop_header
              %s1144 = sphi 0, %s1148
              %p1145 = scmp.ge.s32.totalorder %s1144, 1
              %s1149 = sphi %s1011, %s1011
              %s1150 = sphi %s1134, %s1134
            $region287: #{custom-call.2} parent=283 // loop_header_branch
              %1147 = sbr.rel (%p1145) target = $region291
            $region288: #{custom-call.2} parent=283 // loop_body
              %v1151 = vld [vmem:[%s1149] sm:%s1142]
              %1152 = vst [vmem:[%s1150] sm:%s1142] %v1151
            $region289: #{custom-call.2} parent=283 // loop_footer
              %s1148 = sadd.s32 1, %s1144
            $region290: #{custom-call.2} parent=283 // loop_footer_branch
              %1143 = sbr.rel target = $region286
            $region291: #{custom-call.2} parent=283 // loop_exit
              _
          $region284: #{custom-call.2} parent=275 // pred_fallthru
            _
        $region276: #{custom-call.2} parent=155 // pred_fallthru
          _
        %1167 = vnop
        %s1168 = smul.addr %s17, 8
        %s1169 = scalar_lea.vmem %s8, %s1168
        // Predicated region
        $region307: #{custom-call.2} parent=155 // pred_check
          _
        $region308: #{custom-call.2} parent=155 // pred_check_branch
          %1171 = sbr.rel (0) target = $region310
        $region309: #{custom-call.2} parent=155 // pred_region
          // Predicated region
          $region311: #{custom-call.2} parent=309 // pred_check
            _
          $region312: #{custom-call.2} parent=309 // pred_check_branch
            %1173 = sbr.rel (0) target = $region314
          $region313: #{custom-call.2} parent=309 // pred_region
            // Predicated region
            $region326: #{custom-call.2} parent=313 // pred_check
              _
            $region327: #{custom-call.2} parent=313 // pred_check_branch
              %1189 = sbr.rel (0) target = $region329
            $region328: #{custom-call.2} parent=313 // pred_region
              loop: start=0, step=1, limit=1
              $region330: #{custom-call.2} parent=328 // loop_pre_header
                _
              $region331: #{custom-call.2} parent=328 // loop_header
                %s1191 = sphi 0, %s1195
                %p1192 = scmp.ge.s32.totalorder %s1191, 1
                %s1196 = sphi %s1015, %s1015
                %s1197 = sphi %s1169, %s1169
              $region332: #{custom-call.2} parent=328 // loop_header_branch
                %1194 = sbr.rel (%p1192) target = $region336
              $region333: #{custom-call.2} parent=328 // loop_body
                %v1198 = vld [vmem:[%s1196] sm:$0xff]
                %1199 = vst [vmem:[%s1197] sm:$0xff] %v1198
              $region334: #{custom-call.2} parent=328 // loop_footer
                %s1195 = sadd.s32 1, %s1191
              $region335: #{custom-call.2} parent=328 // loop_footer_branch
                %1190 = sbr.rel target = $region331
              $region336: #{custom-call.2} parent=328 // loop_exit
                _
            $region329: #{custom-call.2} parent=313 // pred_fallthru
              _
            // Predicated region
            $region337: #{custom-call.2} parent=313 // pred_check
              _
            $region338: #{custom-call.2} parent=313 // pred_check_branch
              %1201 = sbr.rel target = $region340
            $region339: #{custom-call.2} parent=313 // pred_region
              _
            $region340: #{custom-call.2} parent=313 // pred_fallthru
              _
          $region314: #{custom-call.2} parent=309 // pred_fallthru
            _
          // Predicated region
          $region315: #{custom-call.2} parent=309 // pred_check
            _
          $region316: #{custom-call.2} parent=309 // pred_check_branch
            %1175 = sbr.rel target = $region318
          $region317: #{custom-call.2} parent=309 // pred_region
            %s1177 = ssub.s32 256, 1
            loop: start=0, step=1, limit=1
            $region319: #{custom-call.2} parent=317 // loop_pre_header
              _
            $region320: #{custom-call.2} parent=317 // loop_header
              %s1179 = sphi 0, %s1183
              %p1180 = scmp.ge.s32.totalorder %s1179, 1
              %s1184 = sphi %s1015, %s1015
              %s1185 = sphi %s1169, %s1169
            $region321: #{custom-call.2} parent=317 // loop_header_branch
              %1182 = sbr.rel (%p1180) target = $region325
            $region322: #{custom-call.2} parent=317 // loop_body
              %v1186 = vld [vmem:[%s1184] sm:%s1177]
              %1187 = vst [vmem:[%s1185] sm:%s1177] %v1186
            $region323: #{custom-call.2} parent=317 // loop_footer
              %s1183 = sadd.s32 1, %s1179
            $region324: #{custom-call.2} parent=317 // loop_footer_branch
              %1178 = sbr.rel target = $region320
            $region325: #{custom-call.2} parent=317 // loop_exit
              _
          $region318: #{custom-call.2} parent=309 // pred_fallthru
            _
        $region310: #{custom-call.2} parent=155 // pred_fallthru
          _
        %1202 = vnop
        %s1203 = smul.addr %s17, 8
        %s1204 = scalar_lea.vmem %s9, %s1203
        // Predicated region
        $region341: #{custom-call.2} parent=155 // pred_check
          _
        $region342: #{custom-call.2} parent=155 // pred_check_branch
          %1206 = sbr.rel (0) target = $region344
        $region343: #{custom-call.2} parent=155 // pred_region
          // Predicated region
          $region345: #{custom-call.2} parent=343 // pred_check
            _
          $region346: #{custom-call.2} parent=343 // pred_check_branch
            %1208 = sbr.rel (0) target = $region348
          $region347: #{custom-call.2} parent=343 // pred_region
            // Predicated region
            $region360: #{custom-call.2} parent=347 // pred_check
              _
            $region361: #{custom-call.2} parent=347 // pred_check_branch
              %1224 = sbr.rel (0) target = $region363
            $region362: #{custom-call.2} parent=347 // pred_region
              loop: start=0, step=1, limit=1
              $region364: #{custom-call.2} parent=362 // loop_pre_header
                _
              $region365: #{custom-call.2} parent=362 // loop_header
                %s1226 = sphi 0, %s1230
                %p1227 = scmp.ge.s32.totalorder %s1226, 1
                %s1231 = sphi %s1019, %s1019
                %s1232 = sphi %s1204, %s1204
              $region366: #{custom-call.2} parent=362 // loop_header_branch
                %1229 = sbr.rel (%p1227) target = $region370
              $region367: #{custom-call.2} parent=362 // loop_body
                %v1233 = vld [vmem:[%s1231] sm:$0xff]
                %1234 = vst [vmem:[%s1232] sm:$0xff] %v1233
              $region368: #{custom-call.2} parent=362 // loop_footer
                %s1230 = sadd.s32 1, %s1226
              $region369: #{custom-call.2} parent=362 // loop_footer_branch
                %1225 = sbr.rel target = $region365
              $region370: #{custom-call.2} parent=362 // loop_exit
                _
            $region363: #{custom-call.2} parent=347 // pred_fallthru
              _
            // Predicated region
            $region371: #{custom-call.2} parent=347 // pred_check
              _
            $region372: #{custom-call.2} parent=347 // pred_check_branch
              %1236 = sbr.rel target = $region374
            $region373: #{custom-call.2} parent=347 // pred_region
              _
            $region374: #{custom-call.2} parent=347 // pred_fallthru
              _
          $region348: #{custom-call.2} parent=343 // pred_fallthru
            _
          // Predicated region
          $region349: #{custom-call.2} parent=343 // pred_check
            _
          $region350: #{custom-call.2} parent=343 // pred_check_branch
            %1210 = sbr.rel target = $region352
          $region351: #{custom-call.2} parent=343 // pred_region
            %s1212 = ssub.s32 256, 1
            loop: start=0, step=1, limit=1
            $region353: #{custom-call.2} parent=351 // loop_pre_header
              _
            $region354: #{custom-call.2} parent=351 // loop_header
              %s1214 = sphi 0, %s1218
              %p1215 = scmp.ge.s32.totalorder %s1214, 1
              %s1219 = sphi %s1019, %s1019
              %s1220 = sphi %s1204, %s1204
            $region355: #{custom-call.2} parent=351 // loop_header_branch
              %1217 = sbr.rel (%p1215) target = $region359
            $region356: #{custom-call.2} parent=351 // loop_body
              %v1221 = vld [vmem:[%s1219] sm:%s1212]
              %1222 = vst [vmem:[%s1220] sm:%s1212] %v1221
            $region357: #{custom-call.2} parent=351 // loop_footer
              %s1218 = sadd.s32 1, %s1214
            $region358: #{custom-call.2} parent=351 // loop_footer_branch
              %1213 = sbr.rel target = $region354
            $region359: #{custom-call.2} parent=351 // loop_exit
              _
          $region352: #{custom-call.2} parent=343 // pred_fallthru
            _
        $region344: #{custom-call.2} parent=155 // pred_fallthru
          _
        %1237 = vnop
      $region156: #{custom-call.2} parent=5 // pred_fallthru
        _
      %p1238 = scmp.le.s32.totalorder 2, %s12
      // Predicated region
      $region375: #{custom-call.2} parent=5 // pred_check
        %p1239 = pneg %p1238
      $region376: #{custom-call.2} parent=5 // pred_check_branch
        %1241 = sbr.rel (%p1239) target = $region378
      $region377: #{custom-call.2} parent=5 // pred_region
        %s1242 = ssub.s32 %s12, 2
        // Predicated region
        $region379: #{custom-call.2} parent=377 // pred_check
          %p1243 = pneg %p43
        $region380: #{custom-call.2} parent=377 // pred_check_branch
          %1245 = sbr.rel (%p1243) target = $region382
        $region381: #{custom-call.2} parent=377 // pred_region
          %s1246 = sand.u32 %s28, 1
          %s1247 = sand.u32 %s28, 1
          %s1248 = smul.addr %s1247, 2
          %s1249 = scalar_lea.vmem [#allocation5], %s1248
        $region382: #{custom-call.2} parent=377 // pred_fallthru
          _
        // Predicated region
        $region383: #{custom-call.2} parent=377 // pred_check
          %p1250 = pneg %p71
        $region384: #{custom-call.2} parent=377 // pred_check_branch
          %1252 = sbr.rel (%p1250) target = $region386
        $region385: #{custom-call.2} parent=377 // pred_region
          %s1253 = sand.u32 %s56, 1
          %s1254 = sand.u32 %s56, 1
          %s1255 = smul.addr %s1254, 2
          %s1256 = scalar_lea.vmem [#allocation7], %s1255
        $region386: #{custom-call.2} parent=377 // pred_fallthru
          _
        %s1257 = sand.u32 %s18, 1
        %s1258 = sand.u32 %s18, 1
        %s1259 = smul.addr %s1258, 8
        %s1260 = scalar_lea.vmem [#allocation8], %s1259
        %s1261 = sand.u32 %s18, 1
        %s1262 = sand.u32 %s18, 1
        %s1263 = smul.addr %s1262, 8
        %s1264 = scalar_lea.vmem [#allocation9], %s1263
        %s1265 = sand.u32 %s18, 1
        %s1266 = sand.u32 %s18, 1
        %s1267 = smul.addr %s1266, 8
        %s1268 = scalar_lea.vmem [#allocation10], %s1267
        %s1269 = sand.u32 %s18, 1
        %s1270 = sand.u32 %s18, 1
        %s1271 = smul.addr %s1270, 8
        %s1272 = scalar_lea.vmem [#allocation11], %s1271
      $region378: #{custom-call.2} parent=5 // pred_fallthru
        _
    $region6: #{custom-call.2} parent=1 // loop_footer
      %s16 = sadd.s32 1, %s12
    $region7: #{custom-call.2} parent=1 // loop_footer_branch
      %11 = sbr.rel target = $region3
    $region8: #{custom-call.2} parent=1 // loop_exit
      _

// kernel: neg.1
$region0: #{neg.1}
  #allocation0 [shape = 's32[1]{0}', space=sflag, size = 0x4, scoped, tag = 'scoped memory for neg.1']
  %s0 = inlined_call_operand.vmem [shape: f32[2,16], index: 0, kind: input, shape index: {}]
  %s1 = inlined_call_operand.vmem [shape: f32[2,16], index: 1, kind: output, shape index: {}]
  %v2 = vld [vmem:[%s0] sm:$0x3]
  %3 = xla_tuple %v2
  %4 = xla_tuple %3
  %v5 = vxor.u32 %v2, 2147483648
  %6 = xla_tuple %v5
  %7 = vst [vmem:[%s1] sm:$0x3] %v5

// kernel: forward.1
$region0: #{forward.1}
  #allocation0 [shape = 'u32[]', space=smem, size = 0x4, offset = 0x4, fixed_abs, tag = 'smem constant byte address 0x4 - core index']
  #allocation1 [shape = 'u32[72,128]{1,0:T(1,128)}', space=vmem, size = 0x9000, scoped, tag = 'internal scratch']
  %s0 = inlined_call_operand.vmem [shape: f32[2,16,16], index: 0, kind: input, shape index: {}]
  %s1 = inlined_call_operand.vmem [shape: f32[16,32], index: 1, kind: input, shape index: {}]
  %s2 = inlined_call_operand.hbm [shape: f32[32,32], index: 2, kind: input, shape index: {}]
  %s3 = inlined_call_operand.hbm [shape: f32[32,128], index: 3, kind: input, shape index: {}]
  %s4 = inlined_call_operand.hbm [shape: f32[32,128], index: 4, kind: input, shape index: {}]
  %s5 = inlined_call_operand.hbm [shape: f32[32,96], index: 5, kind: input, shape index: {}]
  %s6 = inlined_call_operand.hbm [shape: f32[32,32], index: 6, kind: input, shape index: {}]
  %s7 = inlined_call_operand.hbm [shape: f32[32,64], index: 7, kind: input, shape index: {}]
  %s8 = inlined_call_operand.hbm [shape: f32[64,32], index: 8, kind: input, shape index: {}]
  %s9 = inlined_call_operand.hbm [shape: f32[32,32], index: 9, kind: input, shape index: {}]
  %s10 = inlined_call_operand.vmem [shape: f32[16,128], index: 10, kind: input, shape index: {}]
  %s11 = inlined_call_operand.vmem [shape: f32[2,16,16], index: 11, kind: output, shape index: {}]
  %s12 = sld [smem:[#allocation0]]
  $region86: #{forward.1} parent=0
    _
  %s14 = ssub.s32 1, %s12
  %s15 = scalar_select 0, %s14, %s12
  $region1: #{forward.1} parent=0
    #allocation2 [shape = 'u8[16384]{0}', space=vmem, size = 0x4000, scoped, tag = 'input window, operand 2, single buffered']
    #allocation3 [shape = 's32[1]{0}', space=sflag, size = 0x4, scoped, tag = 'scoped memory for forward.1']
    #allocation4 [shape = 'u8[16384]{0}', space=vmem, size = 0x4000, scoped, tag = 'input window, operand 3, single buffered']
    #allocation5 [shape = 's32[1]{0}', space=sflag, size = 0x4, scoped, tag = 'scoped memory for forward.1']
    #allocation6 [shape = 'u8[16384]{0}', space=vmem, size = 0x4000, scoped, tag = 'input window, operand 4, single buffered']
    #allocation7 [shape = 'u8[16384]{0}', space=vmem, size = 0x4000, scoped, tag = 'input window, operand 5, single buffered']
    #allocation8 [shape = 's32[1]{0}', space=sflag, size = 0x4, scoped, tag = 'scoped memory for forward.1']
    #allocation9 [shape = 'u8[16384]{0}', space=vmem, size = 0x4000, scoped, tag = 'input window, operand 6, single buffered']
    #allocation10 [shape = 'u8[16384]{0}', space=vmem, size = 0x4000, scoped, tag = 'input window, operand 7, single buffered']
    #allocation11 [shape = 's32[1]{0}', space=sflag, size = 0x4, scoped, tag = 'scoped memory for forward.1']
    #allocation12 [shape = 'u8[32768]{0}', space=vmem, size = 0x8000, scoped, tag = 'input window, operand 8, single buffered']
    #allocation13 [shape = 'u8[16384]{0}', space=vmem, size = 0x4000, scoped, tag = 'input window, operand 9, single buffered']
    #allocation14 [shape = 's32[1]{0}', space=sflag, size = 0x4, scoped, tag = 'scoped memory for forward.1']
    %16 = vsyncpa [#allocation3], 0
    %17 = vsyncpa [#allocation5], 0
    %18 = vsyncpa [#allocation8], 0
    %19 = vsyncpa [#allocation11], 0
    %20 = vsyncpa [#allocation14], 0
    // Predicated region
    $region2: #{forward.1} parent=1 // pred_check
      _
    $region3: #{forward.1} parent=1 // pred_check_branch
      %22 = sbr.rel (0) target = $region5
    $region4: #{forward.1} parent=1 // pred_region
      _
    $region5: #{forward.1} parent=1 // pred_fallthru
      _
    // Predicated region
    $region6: #{forward.1} parent=1 // pred_check
      _
    $region7: #{forward.1} parent=1 // pred_check_branch
      %24 = sbr.rel (0) target = $region9
    $region8: #{forward.1} parent=1 // pred_region
      _
    $region9: #{forward.1} parent=1 // pred_fallthru
      _
    // Predicated region
    $region10: #{forward.1} parent=1 // pred_check
      _
    $region11: #{forward.1} parent=1 // pred_check_branch
      %26 = sbr.rel (0) target = $region13
    $region12: #{forward.1} parent=1 // pred_region
      %28 = vsyncadd [#allocation3], 0
      %s29 = sshll.u32 %s2, 4
      %s30 = int_to_ptr.hbm [resolvable:$true] %s29
      %s31 = sshll.u32 [#allocation2], 4
      %s32 = int_to_ptr.vmem [resolvable:$true] %s31
      %37 = dma.hbm_to_vmem [thread:$0]  %s30, 512, %s32, [#allocation3], 128, 128, 8
    $region13: #{forward.1} parent=1 // pred_fallthru
      _
    // Predicated region
    $region14: #{forward.1} parent=1 // pred_check
      _
    $region15: #{forward.1} parent=1 // pred_check_branch
      %39 = sbr.rel (0) target = $region17
    $region16: #{forward.1} parent=1 // pred_region
      %41 = vsyncadd [#allocation5], 0
      %s42 = sshll.u32 %s3, 4
      %s43 = int_to_ptr.hbm [resolvable:$true] %s42
      %s44 = sshll.u32 [#allocation4], 4
      %s45 = int_to_ptr.vmem [resolvable:$true] %s44
      %50 = dma.hbm_to_vmem [thread:$0]  %s43, 512, %s45, [#allocation5], 128, 128, 8
    $region17: #{forward.1} parent=1 // pred_fallthru
      _
    // Predicated region
    $region18: #{forward.1} parent=1 // pred_check
      _
    $region19: #{forward.1} parent=1 // pred_check_branch
      %52 = sbr.rel (0) target = $region21
    $region20: #{forward.1} parent=1 // pred_region
      %54 = vsyncadd [#allocation5], 0
      %s55 = sshll.u32 %s4, 4
      %s56 = int_to_ptr.hbm [resolvable:$true] %s55
      %s57 = sshll.u32 [#allocation6], 4
      %s58 = int_to_ptr.vmem [resolvable:$true] %s57
      %63 = dma.hbm_to_vmem [thread:$0]  %s56, 512, %s58, [#allocation5], 128, 128, 8
    $region21: #{forward.1} parent=1 // pred_fallthru
      _
    // Predicated region
    $region22: #{forward.1} parent=1 // pred_check
      _
    $region23: #{forward.1} parent=1 // pred_check_branch
      %65 = sbr.rel (0) target = $region25
    $region24: #{forward.1} parent=1 // pred_region
      %67 = vsyncadd [#allocation8], 0
      %s68 = sshll.u32 %s5, 4
      %s69 = int_to_ptr.hbm [resolvable:$true] %s68
      %s70 = sshll.u32 [#allocation7], 4
      %s71 = int_to_ptr.vmem [resolvable:$true] %s70
      %76 = dma.hbm_to_vmem [thread:$0]  %s69, 512, %s71, [#allocation8], 128, 128, 8
    $region25: #{forward.1} parent=1 // pred_fallthru
      _
    // Predicated region
    $region26: #{forward.1} parent=1 // pred_check
      _
    $region27: #{forward.1} parent=1 // pred_check_branch
      %78 = sbr.rel (0) target = $region29
    $region28: #{forward.1} parent=1 // pred_region
      %80 = vsyncadd [#allocation8], 0
      %s81 = sshll.u32 %s6, 4
      %s82 = int_to_ptr.hbm [resolvable:$true] %s81
      %s83 = sshll.u32 [#allocation9], 4
      %s84 = int_to_ptr.vmem [resolvable:$true] %s83
      %89 = dma.hbm_to_vmem [thread:$0]  %s82, 512, %s84, [#allocation8], 128, 128, 8
    $region29: #{forward.1} parent=1 // pred_fallthru
      _
    // Predicated region
    $region30: #{forward.1} parent=1 // pred_check
      _
    $region31: #{forward.1} parent=1 // pred_check_branch
      %91 = sbr.rel (0) target = $region33
    $region32: #{forward.1} parent=1 // pred_region
      %93 = vsyncadd [#allocation11], 0
      %s94 = sshll.u32 %s7, 4
      %s95 = int_to_ptr.hbm [resolvable:$true] %s94
      %s96 = sshll.u32 [#allocation10], 4
      %s97 = int_to_ptr.vmem [resolvable:$true] %s96
      %102 = dma.hbm_to_vmem [thread:$0]  %s95, 512, %s97, [#allocation11], 128, 128, 8
    $region33: #{forward.1} parent=1 // pred_fallthru
      _
    // Predicated region
    $region34: #{forward.1} parent=1 // pred_check
      _
    $region35: #{forward.1} parent=1 // pred_check_branch
      %104 = sbr.rel (0) target = $region37
    $region36: #{forward.1} parent=1 // pred_region
      %106 = vsyncadd [#allocation11], 0
      %s107 = sshll.u32 %s8, 4
      %s108 = int_to_ptr.hbm [resolvable:$true] %s107
      %s109 = sshll.u32 [#allocation12], 4
      %s110 = int_to_ptr.vmem [resolvable:$true] %s109
      %115 = dma.hbm_to_vmem [thread:$0]  %s108, 1024, %s110, [#allocation11], 128, 128, 8
    $region37: #{forward.1} parent=1 // pred_fallthru
      _
    // Predicated region
    $region38: #{forward.1} parent=1 // pred_check
      _
    $region39: #{forward.1} parent=1 // pred_check_branch
      %117 = sbr.rel (0) target = $region41
    $region40: #{forward.1} parent=1 // pred_region
      %119 = vsyncadd [#allocation14], 0
      %s120 = sshll.u32 %s9, 4
      %s121 = int_to_ptr.hbm [resolvable:$true] %s120
      %s122 = sshll.u32 [#allocation13], 4
      %s123 = int_to_ptr.vmem [resolvable:$true] %s122
      %128 = dma.hbm_to_vmem [thread:$0]  %s121, 512, %s123, [#allocation14], 128, 128, 8
    $region41: #{forward.1} parent=1 // pred_fallthru
      _
    // Predicated region
    $region42: #{forward.1} parent=1 // pred_check
      _
    $region43: #{forward.1} parent=1 // pred_check_branch
      %130 = sbr.rel (0) target = $region45
    $region44: #{forward.1} parent=1 // pred_region
      _
    $region45: #{forward.1} parent=1 // pred_fallthru
      _
    // Predicated region
    $region46: #{forward.1} parent=1 // pred_check
      _
    $region47: #{forward.1} parent=1 // pred_check_branch
      %132 = sbr.rel (0) target = $region49
    $region48: #{forward.1} parent=1 // pred_region
      %134 = dma.done [#allocation3], 512
    $region49: #{forward.1} parent=1 // pred_fallthru
      _
    // Predicated region
    $region50: #{forward.1} parent=1 // pred_check
      _
    $region51: #{forward.1} parent=1 // pred_check_branch
      %136 = sbr.rel (0) target = $region53
    $region52: #{forward.1} parent=1 // pred_region
      %138 = dma.done [#allocation5], 512
    $region53: #{forward.1} parent=1 // pred_fallthru
      _
    // Predicated region
    $region54: #{forward.1} parent=1 // pred_check
      _
    $region55: #{forward.1} parent=1 // pred_check_branch
      %140 = sbr.rel (0) target = $region57
    $region56: #{forward.1} parent=1 // pred_region
      %142 = dma.done [#allocation5], 512
    $region57: #{forward.1} parent=1 // pred_fallthru
      _
    // Predicated region
    $region58: #{forward.1} parent=1 // pred_check
      _
    $region59: #{forward.1} parent=1 // pred_check_branch
      %144 = sbr.rel (0) target = $region61
    $region60: #{forward.1} parent=1 // pred_region
      %146 = dma.done [#allocation8], 512
    $region61: #{forward.1} parent=1 // pred_fallthru
      _
    // Predicated region
    $region62: #{forward.1} parent=1 // pred_check
      _
    $region63: #{forward.1} parent=1 // pred_check_branch
      %148 = sbr.rel (0) target = $region65
    $region64: #{forward.1} parent=1 // pred_region
      %150 = dma.done [#allocation8], 512
    $region65: #{forward.1} parent=1 // pred_fallthru
      _
    // Predicated region
    $region66: #{forward.1} parent=1 // pred_check
      _
    $region67: #{forward.1} parent=1 // pred_check_branch
      %152 = sbr.rel (0) target = $region69
    $region68: #{forward.1} parent=1 // pred_region
      %154 = dma.done [#allocation11], 512
    $region69: #{forward.1} parent=1 // pred_fallthru
      _
    // Predicated region
    $region70: #{forward.1} parent=1 // pred_check
      _
    $region71: #{forward.1} parent=1 // pred_check_branch
      %156 = sbr.rel (0) target = $region73
    $region72: #{forward.1} parent=1 // pred_region
      %158 = dma.done [#allocation11], 1024
    $region73: #{forward.1} parent=1 // pred_fallthru
      _
    // Predicated region
    $region74: #{forward.1} parent=1 // pred_check
      _
    $region75: #{forward.1} parent=1 // pred_check_branch
      %160 = sbr.rel (0) target = $region77
    $region76: #{forward.1} parent=1 // pred_region
      %162 = dma.done [#allocation14], 512
    $region77: #{forward.1} parent=1 // pred_fallthru
      _
    %v163 = vld [vmem:[%s10] sm:$0xff]
    %v164 = vld [vmem:[%s10 + $0x8] sm:$0xff]
    %v165 = vld [vmem:[%s0] sm:$0xff]
    %v166 = vld [vmem:[%s0 + $0x8] sm:$0xff]
    %v167 = vld [vmem:[%s0 + $0x10] sm:$0xff]
    %v168 = vld [vmem:[%s0 + $0x18] sm:$0xff]
    %v169 = vld [vmem:[%s1] sm:$0xff]
    %v170 = vld [vmem:[%s1 + $0x8] sm:$0xff]
    %v171 = vperm.slane %v163, 0
    %vm172 = vcmask 130048
    %v174 = vsel %vm172, %v165, 0
    %v177 = vsel %vm172, %v166, 0
    %v180 = vsel %vm172, %v167, 0
    %v183 = vsel %vm172, %v168, 0
    %185 = vmatpush.msra.mxu0 0.0
    %186 = vmatpush.msra.mxu0 0.0
    %187 = vmatpush.msra.mxu0 0.0
    %188 = vmatpush.msra.mxu0 0.0
    %189 = vmatpush.msra.mxu0 0.0
    %190 = vmatpush.msra.mxu0 0.0
    %191 = vmatpush.msra.mxu0 0.0
    %192 = vmatpush.msra.mxu0 0.0
    %193 = vmatpush.msra.mxu0 0.0
    %194 = vmatpush.msra.mxu0 0.0
    %195 = vmatpush.msra.mxu0 0.0
    %196 = vmatpush.msra.mxu0 0.0
    %197 = vmatpush.msra.mxu0 0.0
    %198 = vmatpush.msra.mxu0 0.0
    %199 = vmatpush.msra.mxu0 %v170
    %200 = vmatpush.msra.mxu0 %v169
    %201 = vmatmul.f32.gmra.mxu0 %v174
    %v202 = vpop.f32.mrf.mxu0
    %v203 = vadd.f32 %v171, %v202
    %204 = vmatmul.f32.gmra.mxu0 %v177
    %v205 = vpop.f32.mrf.mxu0
    %v206 = vadd.f32 %v171, %v205
    %207 = vmatmul.f32.gmra.mxu0 %v180
    %v208 = vpop.f32.mrf.mxu0
    %v209 = vadd.f32 %v171, %v208
    %210 = vmatmul.f32.gmra.mxu0 %v183
    %v211 = vpop.f32.mrf.mxu0
    %v212 = vadd.f32 %v171, %v211
    %213 = vdwg.mxu0
    %v214 = vmax.f32 %v203, 0.0
    %v215 = vmax.f32 %v206, 0.0
    %v216 = vmax.f32 %v209, 0.0
    %v217 = vmax.f32 %v212, 0.0
    %v218 = vld [vmem:[#allocation2] sm:$0xff]
    %v219 = vld [vmem:[#allocation2 + $0x8] sm:$0xff]
    %v220 = vld [vmem:[#allocation2 + $0x10] sm:$0xff]
    %v221 = vld [vmem:[#allocation2 + $0x18] sm:$0xff]
    %v222 = vperm.slane %v163, 1
    %vm223 = vcmask 261120
    %v225 = vsel %vm223, %v214, 0
    %v228 = vsel %vm223, %v215, 0
    %v231 = vsel %vm223, %v216, 0
    %v234 = vsel %vm223, %v217, 0
    %236 = vmatpush.msra.mxu0 0.0
    %237 = vmatpush.msra.mxu0 0.0
    %238 = vmatpush.msra.mxu0 0.0
    %239 = vmatpush.msra.mxu0 0.0
    %240 = vmatpush.msra.mxu0 0.0
    %241 = vmatpush.msra.mxu0 0.0
    %242 = vmatpush.msra.mxu0 0.0
    %243 = vmatpush.msra.mxu0 0.0
    %244 = vmatpush.msra.mxu0 0.0
    %245 = vmatpush.msra.mxu0 0.0
    %246 = vmatpush.msra.mxu0 0.0
    %247 = vmatpush.msra.mxu0 0.0
    %248 = vmatpush.msra.mxu0 %v221
    %249 = vmatpush.msra.mxu0 %v220
    %250 = vmatpush.msra.mxu0 %v219
    %251 = vmatpush.msra.mxu0 %v218
    %252 = vmatmul.f32.gmra.mxu0 %v225
    %v253 = vpop.f32.mrf.mxu0
    %v254 = vadd.f32 %v222, %v253
    %255 = vmatmul.f32.gmra.mxu0 %v228
    %v256 = vpop.f32.mrf.mxu0
    %v257 = vadd.f32 %v222, %v256
    %258 = vmatmul.f32.gmra.mxu0 %v231
    %v259 = vpop.f32.mrf.mxu0
    %v260 = vadd.f32 %v222, %v259
    %261 = vmatmul.f32.gmra.mxu0 %v234
    %v262 = vpop.f32.mrf.mxu0
    %v263 = vadd.f32 %v222, %v262
    %264 = vdwg.mxu0
    %v265 = vmax.f32 %v254, 0.0
    %v266 = vmax.f32 %v257, 0.0
    %v267 = vmax.f32 %v260, 0.0
    %v268 = vmax.f32 %v263, 0.0
    %v269 = vld [vmem:[#allocation4] sm:$0xff]
    %v270 = vld [vmem:[#allocation4 + $0x8] sm:$0xff]
    %v271 = vld [vmem:[#allocation4 + $0x10] sm:$0xff]
    %v272 = vld [vmem:[#allocation4 + $0x18] sm:$0xff]
    %v273 = vperm.slane %v163, 2
    %v275 = vsel %vm223, %v265, 0
    %v278 = vsel %vm223, %v266, 0
    %v281 = vsel %vm223, %v267, 0
    %v284 = vsel %vm223, %v268, 0
    %286 = vmatpush.msra.mxu0 0.0
    %287 = vmatpush.msra.mxu0 0.0
    %288 = vmatpush.msra.mxu0 0.0
    %289 = vmatpush.msra.mxu0 0.0
    %290 = vmatpush.msra.mxu0 0.0
    %291 = vmatpush.msra.mxu0 0.0
    %292 = vmatpush.msra.mxu0 0.0
    %293 = vmatpush.msra.mxu0 0.0
    %294 = vmatpush.msra.mxu0 0.0
    %295 = vmatpush.msra.mxu0 0.0
    %296 = vmatpush.msra.mxu0 0.0
    %297 = vmatpush.msra.mxu0 0.0
    %298 = vmatpush.msra.mxu0 %v272
    %299 = vmatpush.msra.mxu0 %v271
    %300 = vmatpush.msra.mxu0 %v270
    %301 = vmatpush.msra.mxu0 %v269
    %302 = vmatmul.f32.gmra.mxu0 %v275
    %v303 = vpop.f32.mrf.mxu0
    %v304 = vadd.f32 %v273, %v303
    %305 = vmatmul.f32.gmra.mxu0 %v278
    %v306 = vpop.f32.mrf.mxu0
    %v307 = vadd.f32 %v273, %v306
    %308 = vmatmul.f32.gmra.mxu0 %v281
    %v309 = vpop.f32.mrf.mxu0
    %v310 = vadd.f32 %v273, %v309
    %311 = vmatmul.f32.gmra.mxu0 %v284
    %v312 = vpop.f32.mrf.mxu0
    %v313 = vadd.f32 %v273, %v312
    %314 = vdwg.mxu0
    %v315 = vld [vmem:[#allocation6] sm:$0xff]
    %v316 = vld [vmem:[#allocation6 + $0x8] sm:$0xff]
    %v317 = vld [vmem:[#allocation6 + $0x10] sm:$0xff]
    %v318 = vld [vmem:[#allocation6 + $0x18] sm:$0xff]
    %v320 = vsel %vm223, 0.0, 0
    %322 = vmatpush.msra.mxu0 0.0
    %323 = vmatpush.msra.mxu0 0.0
    %324 = vmatpush.msra.mxu0 0.0
    %325 = vmatpush.msra.mxu0 0.0
    %326 = vmatpush.msra.mxu0 0.0
    %327 = vmatpush.msra.mxu0 0.0
    %328 = vmatpush.msra.mxu0 0.0
    %329 = vmatpush.msra.mxu0 0.0
    %330 = vmatpush.msra.mxu0 0.0
    %331 = vmatpush.msra.mxu0 0.0
    %332 = vmatpush.msra.mxu0 0.0
    %333 = vmatpush.msra.mxu0 0.0
    %334 = vmatpush.msra.mxu0 %v318
    %335 = vmatpush.msra.mxu0 %v317
    %336 = vmatpush.msra.mxu0 %v316
    %337 = vmatpush.msra.mxu0 %v315
    %338 = vmatmul.f32.gmra.mxu0 %v320
    %v339 = vpop.f32.mrf.mxu0
    %v340 = vadd.f32 0.0, %v339
    %341 = vdwg.mxu0
    %v343 = vrot.slane %v340, 1
    %v346 = vadd.f32 %v304, %v340
    %v347 = vadd.f32 %v310, %v343
    %v348 = vxor.u32 %v346, 2147483648
    %v349 = vxor.u32 %v347, 2147483648
    %v350 = vmul.f32 %v348, 1.442695
    %v351 = vpow.pop %v350
    %v352 = vmul.f32 %v349, 1.442695
    %v353 = vpow.pop %v352
    %v354 = vadd.f32 %v351, 1.0
    %v355 = vadd.f32 %v353, 1.0
    %v356 = vrcp.pop %v354
    %v357 = vmul.f32 %v354, %v356
    %v358 = vsub.f32 1.0, %v357
    %v359 = vmul.f32 %v356, %v358
    %v360 = vadd.f32 %v356, %v359
    %vm361 = vweird.f32 %v354
    %vm362 = vweird.f32 %v356
    %vm363 = vmor %vm361, %vm362
    %v364 = vsel %vm363, %v356, %v360
    %v365 = vand.u32 2147483647, %v354
    %vm366 = vcmp.eq.f32.partialorder %v365, 8.507059e+37
    %v367 = vand.u32 %v354, 2147483648
    %v368 = vor.u32 1.1754944e-38, %v367
    %v369 = vsel %vm366, %v368, %v364
    %v370 = vmul.f32 1.0, %v369
    %v371 = vrcp.pop %v355
    %v372 = vmul.f32 %v355, %v371
    %v373 = vsub.f32 1.0, %v372
    %v374 = vmul.f32 %v371, %v373
    %v375 = vadd.f32 %v371, %v374
    %vm376 = vweird.f32 %v355
    %vm377 = vweird.f32 %v371
    %vm378 = vmor %vm376, %vm377
    %v379 = vsel %vm378, %v371, %v375
    %v380 = vand.u32 2147483647, %v355
    %vm381 = vcmp.eq.f32.partialorder %v380, 8.507059e+37
    %v382 = vand.u32 %v355, 2147483648
    %v383 = vor.u32 1.1754944e-38, %v382
    %v384 = vsel %vm381, %v383, %v379
    %v385 = vmul.f32 1.0, %v384
    %v386 = vtanh.pop %v346
    %v387 = vtanh.pop %v347
    %v388 = vmul.f32 %v370, 0.0
    %v389 = vmul.f32 %v385, 0.0
    %392 = vrot.lane.b32.xlu0 %v386, 64
    %v393 = vpop.permute.xlu0 %392
    %394 = vrot.lane.b32.xlu0 %v387, 64
    %v395 = vpop.permute.xlu0 %394
    %v398 = vmul.f32 %v370, %v393
    %v399 = vmul.f32 %v385, %v395
    %402 = vrot.lane.b32.xlu0 %v398, 32
    %v403 = vpop.permute.xlu0 %402
    %404 = vrot.lane.b32.xlu0 %v399, 32
    %v405 = vpop.permute.xlu0 %404
    %v408 = vadd.f32 %v388, %v403
    %v409 = vadd.f32 %v389, %v405
    %v410 = vtanh.pop %v408
    %v411 = vtanh.pop %v409
    %414 = vrot.lane.b32.xlu0 %v410, 64
    %v415 = vpop.permute.xlu0 %414
    %416 = vrot.lane.b32.xlu0 %v411, 64
    %v417 = vpop.permute.xlu0 %416
    %v420 = vmul.f32 %v370, %v415
    %v421 = vmul.f32 %v385, %v417
    %v424 = vrot.slane %v421, 7
    %vm425 = vcmask 1041409
    %v426 = vsel %vm425, %v424, %v420
    %427 = vrot.lane.b32.xlu0 %v426, 32
    %v428 = vpop.permute.xlu0 %427
    %v429 = vsel %vm223, %v428, 0
    %431 = vmatpush.msra.mxu0 0.0
    %432 = vmatpush.msra.mxu0 0.0
    %433 = vmatpush.msra.mxu0 0.0
    %434 = vmatpush.msra.mxu0 0.0
    %435 = vmatpush.msra.mxu0 0.0
    %436 = vmatpush.msra.mxu0 0.0
    %437 = vmatpush.msra.mxu0 0.0
    %438 = vmatpush.msra.mxu0 0.0
    %439 = vmatpush.msra.mxu0 0.0
    %440 = vmatpush.msra.mxu0 0.0
    %441 = vmatpush.msra.mxu0 0.0
    %442 = vmatpush.msra.mxu0 0.0
    %443 = vmatpush.msra.mxu0 %v318
    %444 = vmatpush.msra.mxu0 %v317
    %445 = vmatpush.msra.mxu0 %v316
    %446 = vmatpush.msra.mxu0 %v315
    %447 = vmatmul.f32.gmra.mxu0 %v429
    %v448 = vpop.f32.mrf.mxu0
    %v449 = vadd.f32 0.0, %v448
    %450 = vdwg.mxu0
    %v452 = vrot.slane %v449, 7
    %v455 = vadd.f32 %v304, %v452
    %v456 = vadd.f32 %v310, %v449
    %v457 = vxor.u32 %v455, 2147483648
    %v458 = vxor.u32 %v456, 2147483648
    %v459 = vmul.f32 %v457, 1.442695
    %v460 = vpow.pop %v459
    %v461 = vmul.f32 %v458, 1.442695
    %v462 = vpow.pop %v461
    %v463 = vadd.f32 %v460, 1.0
    %v464 = vadd.f32 %v462, 1.0
    %v465 = vrcp.pop %v463
    %v466 = vmul.f32 %v463, %v465
    %v467 = vsub.f32 1.0, %v466
    %v468 = vmul.f32 %v465, %v467
    %v469 = vadd.f32 %v465, %v468
    %vm470 = vweird.f32 %v463
    %vm471 = vweird.f32 %v465
    %vm472 = vmor %vm470, %vm471
    %v473 = vsel %vm472, %v465, %v469
    %v474 = vand.u32 2147483647, %v463
    %vm475 = vcmp.eq.f32.partialorder %v474, 8.507059e+37
    %v476 = vand.u32 %v463, 2147483648
    %v477 = vor.u32 1.1754944e-38, %v476
    %v478 = vsel %vm475, %v477, %v473
    %v479 = vmul.f32 1.0, %v478
    %v480 = vrcp.pop %v464
    %v481 = vmul.f32 %v464, %v480
    %v482 = vsub.f32 1.0, %v481
    %v483 = vmul.f32 %v480, %v482
    %v484 = vadd.f32 %v480, %v483
    %vm485 = vweird.f32 %v464
    %vm486 = vweird.f32 %v480
    %vm487 = vmor %vm485, %vm486
    %v488 = vsel %vm487, %v480, %v484
    %v489 = vand.u32 2147483647, %v464
    %vm490 = vcmp.eq.f32.partialorder %v489, 8.507059e+37
    %v491 = vand.u32 %v464, 2147483648
    %v492 = vor.u32 1.1754944e-38, %v491
    %v493 = vsel %vm490, %v492, %v488
    %v494 = vmul.f32 1.0, %v493
    %v495 = vtanh.pop %v455
    %v496 = vtanh.pop %v456
    %v499 = vrot.slane %v408, 7
    %v500 = vrot.slane %v409, 7
    %v503 = vmul.f32 %v479, %v499
    %v504 = vmul.f32 %v494, %v500
    %507 = vrot.lane.b32.xlu0 %v495, 64
    %v508 = vpop.permute.xlu0 %507
    %509 = vrot.lane.b32.xlu0 %v496, 64
    %v510 = vpop.permute.xlu0 %509
    %v513 = vmul.f32 %v479, %v508
    %v514 = vmul.f32 %v494, %v510
    %517 = vrot.lane.b32.xlu0 %v513, 32
    %v518 = vpop.permute.xlu0 %517
    %519 = vrot.lane.b32.xlu0 %v514, 32
    %v520 = vpop.permute.xlu0 %519
    %v523 = vadd.f32 %v503, %v518
    %v524 = vadd.f32 %v504, %v520
    %v525 = vtanh.pop %v523
    %v526 = vtanh.pop %v524
    %529 = vrot.lane.b32.xlu0 %v525, 64
    %v530 = vpop.permute.xlu0 %529
    %531 = vrot.lane.b32.xlu0 %v526, 64
    %v532 = vpop.permute.xlu0 %531
    %v535 = vmul.f32 %v479, %v530
    %v536 = vmul.f32 %v494, %v532
    %v539 = vrot.slane %v535, 1
    %v540 = vsel %vm425, %v536, %v539
    %541 = vrot.lane.b32.xlu0 %v540, 32
    %v542 = vpop.permute.xlu0 %541
    %v543 = vsel %vm223, %v542, 0
    %545 = vmatpush.msra.mxu0 0.0
    %546 = vmatpush.msra.mxu0 0.0
    %547 = vmatpush.msra.mxu0 0.0
    %548 = vmatpush.msra.mxu0 0.0
    %549 = vmatpush.msra.mxu0 0.0
    %550 = vmatpush.msra.mxu0 0.0
    %551 = vmatpush.msra.mxu0 0.0
    %552 = vmatpush.msra.mxu0 0.0
    %553 = vmatpush.msra.mxu0 0.0
    %554 = vmatpush.msra.mxu0 0.0
    %555 = vmatpush.msra.mxu0 0.0
    %556 = vmatpush.msra.mxu0 0.0
    %557 = vmatpush.msra.mxu0 %v318
    %558 = vmatpush.msra.mxu0 %v317
    %559 = vmatpush.msra.mxu0 %v316
    %560 = vmatpush.msra.mxu0 %v315
    %561 = vmatmul.f32.gmra.mxu0 %v543
    %v562 = vpop.f32.mrf.mxu0
    %v563 = vadd.f32 0.0, %v562
    %564 = vdwg.mxu0
    %v566 = vrot.slane %v563, 6
    %v567 = vrot.slane %v563, 7
    %v570 = vadd.f32 %v304, %v566
    %v571 = vadd.f32 %v310, %v567
    %v572 = vxor.u32 %v570, 2147483648
    %v573 = vxor.u32 %v571, 2147483648
    %v574 = vmul.f32 %v572, 1.442695
    %v575 = vpow.pop %v574
    %v576 = vmul.f32 %v573, 1.442695
    %v577 = vpow.pop %v576
    %v578 = vadd.f32 %v575, 1.0
    %v579 = vadd.f32 %v577, 1.0
    %v580 = vrcp.pop %v578
    %v581 = vmul.f32 %v578, %v580
    %v582 = vsub.f32 1.0, %v581
    %v583 = vmul.f32 %v580, %v582
    %v584 = vadd.f32 %v580, %v583
    %vm585 = vweird.f32 %v578
    %vm586 = vweird.f32 %v580
    %vm587 = vmor %vm585, %vm586
    %v588 = vsel %vm587, %v580, %v584
    %v589 = vand.u32 2147483647, %v578
    %vm590 = vcmp.eq.f32.partialorder %v589, 8.507059e+37
    %v591 = vand.u32 %v578, 2147483648
    %v592 = vor.u32 1.1754944e-38, %v591
    %v593 = vsel %vm590, %v592, %v588
    %v594 = vmul.f32 1.0, %v593
    %v595 = vrcp.pop %v579
    %v596 = vmul.f32 %v579, %v595
    %v597 = vsub.f32 1.0, %v596
    %v598 = vmul.f32 %v595, %v597
    %v599 = vadd.f32 %v595, %v598
    %vm600 = vweird.f32 %v579
    %vm601 = vweird.f32 %v595
    %vm602 = vmor %vm600, %vm601
    %v603 = vsel %vm602, %v595, %v599
    %v604 = vand.u32 2147483647, %v579
    %vm605 = vcmp.eq.f32.partialorder %v604, 8.507059e+37
    %v606 = vand.u32 %v579, 2147483648
    %v607 = vor.u32 1.1754944e-38, %v606
    %v608 = vsel %vm605, %v607, %v603
    %v609 = vmul.f32 1.0, %v608
    %v610 = vtanh.pop %v570
    %v611 = vtanh.pop %v571
    %v614 = vrot.slane %v523, 7
    %v615 = vrot.slane %v524, 7
    %v618 = vmul.f32 %v594, %v614
    %v619 = vmul.f32 %v609, %v615
    %622 = vrot.lane.b32.xlu0 %v610, 64
    %v623 = vpop.permute.xlu0 %622
    %624 = vrot.lane.b32.xlu0 %v611, 64
    %v625 = vpop.permute.xlu0 %624
    %v628 = vmul.f32 %v594, %v623
    %v629 = vmul.f32 %v609, %v625
    %632 = vrot.lane.b32.xlu0 %v628, 32
    %v633 = vpop.permute.xlu0 %632
    %634 = vrot.lane.b32.xlu0 %v629, 32
    %v635 = vpop.permute.xlu0 %634
    %v638 = vadd.f32 %v618, %v633
    %v639 = vadd.f32 %v619, %v635
    %v640 = vtanh.pop %v638
    %v641 = vtanh.pop %v639
    %644 = vrot.lane.b32.xlu0 %v640, 64
    %v645 = vpop.permute.xlu0 %644
    %646 = vrot.lane.b32.xlu0 %v641, 64
    %v647 = vpop.permute.xlu0 %646
    %v650 = vmul.f32 %v594, %v645
    %v651 = vmul.f32 %v609, %v647
    %v654 = vrot.slane %v650, 2
    %v655 = vrot.slane %v651, 1
    %v656 = vsel %vm425, %v655, %v654
    %657 = vrot.lane.b32.xlu0 %v656, 32
    %v658 = vpop.permute.xlu0 %657
    %v659 = vsel %vm223, %v658, 0
    %661 = vmatpush.msra.mxu0 0.0
    %662 = vmatpush.msra.mxu0 0.0
    %663 = vmatpush.msra.mxu0 0.0
    %664 = vmatpush.msra.mxu0 0.0
    %665 = vmatpush.msra.mxu0 0.0
    %666 = vmatpush.msra.mxu0 0.0
    %667 = vmatpush.msra.mxu0 0.0
    %668 = vmatpush.msra.mxu0 0.0
    %669 = vmatpush.msra.mxu0 0.0
    %670 = vmatpush.msra.mxu0 0.0
    %671 = vmatpush.msra.mxu0 0.0
    %672 = vmatpush.msra.mxu0 0.0
    %673 = vmatpush.msra.mxu0 %v318
    %674 = vmatpush.msra.mxu0 %v317
    %675 = vmatpush.msra.mxu0 %v316
    %676 = vmatpush.msra.mxu0 %v315
    %677 = vmatmul.f32.gmra.mxu0 %v659
    %v678 = vpop.f32.mrf.mxu0
    %v679 = vadd.f32 0.0, %v678
    %680 = vdwg.mxu0
    %v682 = vrot.slane %v679, 5
    %v683 = vrot.slane %v679, 6
    %v686 = vadd.f32 %v304, %v682
    %v687 = vadd.f32 %v310, %v683
    %v688 = vxor.u32 %v686, 2147483648
    %v689 = vxor.u32 %v687, 2147483648
    %v690 = vmul.f32 %v688, 1.442695
    %v691 = vpow.pop %v690
    %v692 = vmul.f32 %v689, 1.442695
    %v693 = vpow.pop %v692
    %v694 = vadd.f32 %v691, 1.0
    %v695 = vadd.f32 %v693, 1.0
    %v696 = vrcp.pop %v694
    %v697 = vmul.f32 %v694, %v696
    %v698 = vsub.f32 1.0, %v697
    %v699 = vmul.f32 %v696, %v698
    %v700 = vadd.f32 %v696, %v699
    %vm701 = vweird.f32 %v694
    %vm702 = vweird.f32 %v696
    %vm703 = vmor %vm701, %vm702
    %v704 = vsel %vm703, %v696, %v700
    %v705 = vand.u32 2147483647, %v694
    %vm706 = vcmp.eq.f32.partialorder %v705, 8.507059e+37
    %v707 = vand.u32 %v694, 2147483648
    %v708 = vor.u32 1.1754944e-38, %v707
    %v709 = vsel %vm706, %v708, %v704
    %v710 = vmul.f32 1.0, %v709
    %v711 = vrcp.pop %v695
    %v712 = vmul.f32 %v695, %v711
    %v713 = vsub.f32 1.0, %v712
    %v714 = vmul.f32 %v711, %v713
    %v715 = vadd.f32 %v711, %v714
    %vm716 = vweird.f32 %v695
    %vm717 = vweird.f32 %v711
    %vm718 = vmor %vm716, %vm717
    %v719 = vsel %vm718, %v711, %v715
    %v720 = vand.u32 2147483647, %v695
    %vm721 = vcmp.eq.f32.partialorder %v720, 8.507059e+37
    %v722 = vand.u32 %v695, 2147483648
    %v723 = vor.u32 1.1754944e-38, %v722
    %v724 = vsel %vm721, %v723, %v719
    %v725 = vmul.f32 1.0, %v724
    %v726 = vtanh.pop %v686
    %v727 = vtanh.pop %v687
    %v730 = vrot.slane %v638, 7
    %v731 = vrot.slane %v639, 7
    %v734 = vmul.f32 %v710, %v730
    %v735 = vmul.f32 %v725, %v731
    %738 = vrot.lane.b32.xlu0 %v726, 64
    %v739 = vpop.permute.xlu0 %738
    %740 = vrot.lane.b32.xlu0 %v727, 64
    %v741 = vpop.permute.xlu0 %740
    %v744 = vmul.f32 %v710, %v739
    %v745 = vmul.f32 %v725, %v741
    %748 = vrot.lane.b32.xlu0 %v744, 32
    %v749 = vpop.permute.xlu0 %748
    %750 = vrot.lane.b32.xlu0 %v745, 32
    %v751 = vpop.permute.xlu0 %750
    %v754 = vadd.f32 %v734, %v749
    %v755 = vadd.f32 %v735, %v751
    %v756 = vtanh.pop %v754
    %v757 = vtanh.pop %v755
    %760 = vrot.lane.b32.xlu0 %v756, 64
    %v761 = vpop.permute.xlu0 %760
    %762 = vrot.lane.b32.xlu0 %v757, 64
    %v763 = vpop.permute.xlu0 %762
    %v766 = vmul.f32 %v710, %v761
    %v767 = vmul.f32 %v725, %v763
    %v770 = vrot.slane %v766, 3
    %v771 = vrot.slane %v767, 2
    %v772 = vsel %vm425, %v771, %v770
    %773 = vrot.lane.b32.xlu0 %v772, 32
    %v774 = vpop.permute.xlu0 %773
    %v775 = vsel %vm223, %v774, 0
    %777 = vmatpush.msra.mxu0 0.0
    %778 = vmatpush.msra.mxu0 0.0
    %779 = vmatpush.msra.mxu0 0.0
    %780 = vmatpush.msra.mxu0 0.0
    %781 = vmatpush.msra.mxu0 0.0
    %782 = vmatpush.msra.mxu0 0.0
    %783 = vmatpush.msra.mxu0 0.0
    %784 = vmatpush.msra.mxu0 0.0
    %785 = vmatpush.msra.mxu0 0.0
    %786 = vmatpush.msra.mxu0 0.0
    %787 = vmatpush.msra.mxu0 0.0
    %788 = vmatpush.msra.mxu0 0.0
    %789 = vmatpush.msra.mxu0 %v318
    %790 = vmatpush.msra.mxu0 %v317
    %791 = vmatpush.msra.mxu0 %v316
    %792 = vmatpush.msra.mxu0 %v315
    %793 = vmatmul.f32.gmra.mxu0 %v775
    %v794 = vpop.f32.mrf.mxu0
    %v795 = vadd.f32 0.0, %v794
    %796 = vdwg.mxu0
    %v798 = vrot.slane %v795, 4
    %v799 = vrot.slane %v795, 5
    %v802 = vadd.f32 %v304, %v798
    %v803 = vadd.f32 %v310, %v799
    %v804 = vxor.u32 %v802, 2147483648
    %v805 = vxor.u32 %v803, 2147483648
    %v806 = vmul.f32 %v804, 1.442695
    %v807 = vpow.pop %v806
    %v808 = vmul.f32 %v805, 1.442695
    %v809 = vpow.pop %v808
    %v810 = vadd.f32 %v807, 1.0
    %v811 = vadd.f32 %v809, 1.0
    %v812 = vrcp.pop %v810
    %v813 = vmul.f32 %v810, %v812
    %v814 = vsub.f32 1.0, %v813
    %v815 = vmul.f32 %v812, %v814
    %v816 = vadd.f32 %v812, %v815
    %vm817 = vweird.f32 %v810
    %vm818 = vweird.f32 %v812
    %vm819 = vmor %vm817, %vm818
    %v820 = vsel %vm819, %v812, %v816
    %v821 = vand.u32 2147483647, %v810
    %vm822 = vcmp.eq.f32.partialorder %v821, 8.507059e+37
    %v823 = vand.u32 %v810, 2147483648
    %v824 = vor.u32 1.1754944e-38, %v823
    %v825 = vsel %vm822, %v824, %v820
    %v826 = vmul.f32 1.0, %v825
    %v827 = vrcp.pop %v811
    %v828 = vmul.f32 %v811, %v827
    %v829 = vsub.f32 1.0, %v828
    %v830 = vmul.f32 %v827, %v829
    %v831 = vadd.f32 %v827, %v830
    %vm832 = vweird.f32 %v811
    %vm833 = vweird.f32 %v827
    %vm834 = vmor %vm832, %vm833
    %v835 = vsel %vm834, %v827, %v831
    %v836 = vand.u32 2147483647, %v811
    %vm837 = vcmp.eq.f32.partialorder %v836, 8.507059e+37
    %v838 = vand.u32 %v811, 2147483648
    %v839 = vor.u32 1.1754944e-38, %v838
    %v840 = vsel %vm837, %v839, %v835
    %v841 = vmul.f32 1.0, %v840
    %v842 = vtanh.pop %v802
    %v843 = vtanh.pop %v803
    %v846 = vrot.slane %v754, 7
    %v847 = vrot.slane %v755, 7
    %v850 = vmul.f32 %v826, %v846
    %v851 = vmul.f32 %v841, %v847
    %854 = vrot.lane.b32.xlu0 %v842, 64
    %v855 = vpop.permute.xlu0 %854
    %856 = vrot.lane.b32.xlu0 %v843, 64
    %v857 = vpop.permute.xlu0 %856
    %v860 = vmul.f32 %v826, %v855
    %v861 = vmul.f32 %v841, %v857
    %864 = vrot.lane.b32.xlu0 %v860, 32
    %v865 = vpop.permute.xlu0 %864
    %866 = vrot.lane.b32.xlu0 %v861, 32
    %v867 = vpop.permute.xlu0 %866
    %v870 = vadd.f32 %v850, %v865
    %v871 = vadd.f32 %v851, %v867
    %v872 = vtanh.pop %v870
    %v873 = vtanh.pop %v871
    %876 = vrot.lane.b32.xlu0 %v872, 64
    %v877 = vpop.permute.xlu0 %876
    %878 = vrot.lane.b32.xlu0 %v873, 64
    %v879 = vpop.permute.xlu0 %878
    %v882 = vmul.f32 %v826, %v877
    %v883 = vmul.f32 %v841, %v879
    %v886 = vrot.slane %v882, 4
    %v887 = vrot.slane %v883, 3
    %v888 = vsel %vm425, %v887, %v886
    %889 = vrot.lane.b32.xlu0 %v888, 32
    %v890 = vpop.permute.xlu0 %889
    %v891 = vsel %vm223, %v890, 0
    %893 = vmatpush.msra.mxu0 0.0
    %894 = vmatpush.msra.mxu0 0.0
    %895 = vmatpush.msra.mxu0 0.0
    %896 = vmatpush.msra.mxu0 0.0
    %897 = vmatpush.msra.mxu0 0.0
    %898 = vmatpush.msra.mxu0 0.0
    %899 = vmatpush.msra.mxu0 0.0
    %900 = vmatpush.msra.mxu0 0.0
    %901 = vmatpush.msra.mxu0 0.0
    %902 = vmatpush.msra.mxu0 0.0
    %903 = vmatpush.msra.mxu0 0.0
    %904 = vmatpush.msra.mxu0 0.0
    %905 = vmatpush.msra.mxu0 %v318
    %906 = vmatpush.msra.mxu0 %v317
    %907 = vmatpush.msra.mxu0 %v316
    %908 = vmatpush.msra.mxu0 %v315
    %909 = vmatmul.f32.gmra.mxu0 %v891
    %v910 = vpop.f32.mrf.mxu0
    %v911 = vadd.f32 0.0, %v910
    %912 = vdwg.mxu0
    %v914 = vrot.slane %v911, 3
    %v915 = vrot.slane %v911, 4
    %v918 = vadd.f32 %v304, %v914
    %v919 = vadd.f32 %v310, %v915
    %v920 = vxor.u32 %v918, 2147483648
    %v921 = vxor.u32 %v919, 2147483648
    %v922 = vmul.f32 %v920, 1.442695
    %v923 = vpow.pop %v922
    %v924 = vmul.f32 %v921, 1.442695
    %v925 = vpow.pop %v924
    %v926 = vadd.f32 %v923, 1.0
    %v927 = vadd.f32 %v925, 1.0
    %v928 = vrcp.pop %v926
    %v929 = vmul.f32 %v926, %v928
    %v930 = vsub.f32 1.0, %v929
    %v931 = vmul.f32 %v928, %v930
    %v932 = vadd.f32 %v928, %v931
    %vm933 = vweird.f32 %v926
    %vm934 = vweird.f32 %v928
    %vm935 = vmor %vm933, %vm934
    %v936 = vsel %vm935, %v928, %v932
    %v937 = vand.u32 2147483647, %v926
    %vm938 = vcmp.eq.f32.partialorder %v937, 8.507059e+37
    %v939 = vand.u32 %v926, 2147483648
    %v940 = vor.u32 1.1754944e-38, %v939
    %v941 = vsel %vm938, %v940, %v936
    %v942 = vmul.f32 1.0, %v941
    %v943 = vrcp.pop %v927
    %v944 = vmul.f32 %v927, %v943
    %v945 = vsub.f32 1.0, %v944
    %v946 = vmul.f32 %v943, %v945
    %v947 = vadd.f32 %v943, %v946
    %vm948 = vweird.f32 %v927
    %vm949 = vweird.f32 %v943
    %vm950 = vmor %vm948, %vm949
    %v951 = vsel %vm950, %v943, %v947
    %v952 = vand.u32 2147483647, %v927
    %vm953 = vcmp.eq.f32.partialorder %v952, 8.507059e+37
    %v954 = vand.u32 %v927, 2147483648
    %v955 = vor.u32 1.1754944e-38, %v954
    %v956 = vsel %vm953, %v955, %v951
    %v957 = vmul.f32 1.0, %v956
    %v958 = vtanh.pop %v918
    %v959 = vtanh.pop %v919
    %v962 = vrot.slane %v870, 7
    %v963 = vrot.slane %v871, 7
    %v966 = vmul.f32 %v942, %v962
    %v967 = vmul.f32 %v957, %v963
    %970 = vrot.lane.b32.xlu0 %v958, 64
    %v971 = vpop.permute.xlu0 %970
    %972 = vrot.lane.b32.xlu0 %v959, 64
    %v973 = vpop.permute.xlu0 %972
    %v976 = vmul.f32 %v942, %v971
    %v977 = vmul.f32 %v957, %v973
    %980 = vrot.lane.b32.xlu0 %v976, 32
    %v981 = vpop.permute.xlu0 %980
    %982 = vrot.lane.b32.xlu0 %v977, 32
    %v983 = vpop.permute.xlu0 %982
    %v986 = vadd.f32 %v966, %v981
    %v987 = vadd.f32 %v967, %v983
    %v988 = vtanh.pop %v986
    %v989 = vtanh.pop %v987
    %992 = vrot.lane.b32.xlu0 %v988, 64
    %v993 = vpop.permute.xlu0 %992
    %994 = vrot.lane.b32.xlu0 %v989, 64
    %v995 = vpop.permute.xlu0 %994
    %v998 = vmul.f32 %v942, %v993
    %v999 = vmul.f32 %v957, %v995
    %v1002 = vrot.slane %v998, 5
    %v1003 = vrot.slane %v999, 4
    %v1004 = vsel %vm425, %v1003, %v1002
    %1005 = vrot.lane.b32.xlu0 %v1004, 32
    %v1006 = vpop.permute.xlu0 %1005
    %v1007 = vsel %vm223, %v1006, 0
    %1009 = vmatpush.msra.mxu0 0.0
    %1010 = vmatpush.msra.mxu0 0.0
    %1011 = vmatpush.msra.mxu0 0.0
    %1012 = vmatpush.msra.mxu0 0.0
    %1013 = vmatpush.msra.mxu0 0.0
    %1014 = vmatpush.msra.mxu0 0.0
    %1015 = vmatpush.msra.mxu0 0.0
    %1016 = vmatpush.msra.mxu0 0.0
    %1017 = vmatpush.msra.mxu0 0.0
    %1018 = vmatpush.msra.mxu0 0.0
    %1019 = vmatpush.msra.mxu0 0.0
    %1020 = vmatpush.msra.mxu0 0.0
    %1021 = vmatpush.msra.mxu0 %v318
    %1022 = vmatpush.msra.mxu0 %v317
    %1023 = vmatpush.msra.mxu0 %v316
    %1024 = vmatpush.msra.mxu0 %v315
    %1025 = vmatmul.f32.gmra.mxu0 %v1007
    %v1026 = vpop.f32.mrf.mxu0
    %v1027 = vadd.f32 0.0, %v1026
    %1028 = vdwg.mxu0
    %v1030 = vrot.slane %v1027, 2
    %v1031 = vrot.slane %v1027, 3
    %v1034 = vadd.f32 %v304, %v1030
    %v1035 = vadd.f32 %v310, %v1031
    %v1036 = vxor.u32 %v1034, 2147483648
    %v1037 = vxor.u32 %v1035, 2147483648
    %v1038 = vmul.f32 %v1036, 1.442695
    %v1039 = vpow.pop %v1038
    %v1040 = vmul.f32 %v1037, 1.442695
    %v1041 = vpow.pop %v1040
    %v1042 = vadd.f32 %v1039, 1.0
    %v1043 = vadd.f32 %v1041, 1.0
    %v1044 = vrcp.pop %v1042
    %v1045 = vmul.f32 %v1042, %v1044
    %v1046 = vsub.f32 1.0, %v1045
    %v1047 = vmul.f32 %v1044, %v1046
    %v1048 = vadd.f32 %v1044, %v1047
    %vm1049 = vweird.f32 %v1042
    %vm1050 = vweird.f32 %v1044
    %vm1051 = vmor %vm1049, %vm1050
    %v1052 = vsel %vm1051, %v1044, %v1048
    %v1053 = vand.u32 2147483647, %v1042
    %vm1054 = vcmp.eq.f32.partialorder %v1053, 8.507059e+37
    %v1055 = vand.u32 %v1042, 2147483648
    %v1056 = vor.u32 1.1754944e-38, %v1055
    %v1057 = vsel %vm1054, %v1056, %v1052
    %v1058 = vmul.f32 1.0, %v1057
    %v1059 = vrcp.pop %v1043
    %v1060 = vmul.f32 %v1043, %v1059
    %v1061 = vsub.f32 1.0, %v1060
    %v1062 = vmul.f32 %v1059, %v1061
    %v1063 = vadd.f32 %v1059, %v1062
    %vm1064 = vweird.f32 %v1043
    %vm1065 = vweird.f32 %v1059
    %vm1066 = vmor %vm1064, %vm1065
    %v1067 = vsel %vm1066, %v1059, %v1063
    %v1068 = vand.u32 2147483647, %v1043
    %vm1069 = vcmp.eq.f32.partialorder %v1068, 8.507059e+37
    %v1070 = vand.u32 %v1043, 2147483648
    %v1071 = vor.u32 1.1754944e-38, %v1070
    %v1072 = vsel %vm1069, %v1071, %v1067
    %v1073 = vmul.f32 1.0, %v1072
    %v1074 = vtanh.pop %v1034
    %v1075 = vtanh.pop %v1035
    %v1078 = vrot.slane %v986, 7
    %v1079 = vrot.slane %v987, 7
    %v1082 = vmul.f32 %v1058, %v1078
    %v1083 = vmul.f32 %v1073, %v1079
    %1086 = vrot.lane.b32.xlu0 %v1074, 64
    %v1087 = vpop.permute.xlu0 %1086
    %1088 = vrot.lane.b32.xlu0 %v1075, 64
    %v1089 = vpop.permute.xlu0 %1088
    %v1092 = vmul.f32 %v1058, %v1087
    %v1093 = vmul.f32 %v1073, %v1089
    %1096 = vrot.lane.b32.xlu0 %v1092, 32
    %v1097 = vpop.permute.xlu0 %1096
    %1098 = vrot.lane.b32.xlu0 %v1093, 32
    %v1099 = vpop.permute.xlu0 %1098
    %v1102 = vadd.f32 %v1082, %v1097
    %v1103 = vadd.f32 %v1083, %v1099
    %v1104 = vtanh.pop %v1102
    %v1105 = vtanh.pop %v1103
    %1108 = vrot.lane.b32.xlu0 %v1104, 64
    %v1109 = vpop.permute.xlu0 %1108
    %1110 = vrot.lane.b32.xlu0 %v1105, 64
    %v1111 = vpop.permute.xlu0 %1110
    %v1114 = vmul.f32 %v1058, %v1109
    %v1115 = vmul.f32 %v1073, %v1111
    %v1118 = vrot.slane %v1114, 6
    %v1119 = vrot.slane %v1115, 5
    %v1120 = vsel %vm425, %v1119, %v1118
    %1121 = vrot.lane.b32.xlu0 %v1120, 32
    %v1122 = vpop.permute.xlu0 %1121
    %v1123 = vsel %vm223, %v1122, 0
    %1125 = vmatpush.msra.mxu0 0.0
    %1126 = vmatpush.msra.mxu0 0.0
    %1127 = vmatpush.msra.mxu0 0.0
    %1128 = vmatpush.msra.mxu0 0.0
    %1129 = vmatpush.msra.mxu0 0.0
    %1130 = vmatpush.msra.mxu0 0.0
    %1131 = vmatpush.msra.mxu0 0.0
    %1132 = vmatpush.msra.mxu0 0.0
    %1133 = vmatpush.msra.mxu0 0.0
    %1134 = vmatpush.msra.mxu0 0.0
    %1135 = vmatpush.msra.mxu0 0.0
    %1136 = vmatpush.msra.mxu0 0.0
    %1137 = vmatpush.msra.mxu0 %v318
    %1138 = vmatpush.msra.mxu0 %v317
    %1139 = vmatpush.msra.mxu0 %v316
    %1140 = vmatpush.msra.mxu0 %v315
    %1141 = vmatmul.f32.gmra.mxu0 %v1123
    %v1142 = vpop.f32.mrf.mxu0
    %v1143 = vadd.f32 0.0, %v1142
    %1144 = vdwg.mxu0
    %v1146 = vrot.slane %v1143, 1
    %v1147 = vrot.slane %v1143, 2
    %v1150 = vadd.f32 %v304, %v1146
    %v1151 = vadd.f32 %v310, %v1147
    %v1152 = vxor.u32 %v1150, 2147483648
    %v1153 = vxor.u32 %v1151, 2147483648
    %v1154 = vmul.f32 %v1152, 1.442695
    %v1155 = vpow.pop %v1154
    %v1156 = vmul.f32 %v1153, 1.442695
    %v1157 = vpow.pop %v1156
    %v1158 = vadd.f32 %v1155, 1.0
    %v1159 = vadd.f32 %v1157, 1.0
    %v1160 = vrcp.pop %v1158
    %v1161 = vmul.f32 %v1158, %v1160
    %v1162 = vsub.f32 1.0, %v1161
    %v1163 = vmul.f32 %v1160, %v1162
    %v1164 = vadd.f32 %v1160, %v1163
    %vm1165 = vweird.f32 %v1158
    %vm1166 = vweird.f32 %v1160
    %vm1167 = vmor %vm1165, %vm1166
    %v1168 = vsel %vm1167, %v1160, %v1164
    %v1169 = vand.u32 2147483647, %v1158
    %vm1170 = vcmp.eq.f32.partialorder %v1169, 8.507059e+37
    %v1171 = vand.u32 %v1158, 2147483648
    %v1172 = vor.u32 1.1754944e-38, %v1171
    %v1173 = vsel %vm1170, %v1172, %v1168
    %v1174 = vmul.f32 1.0, %v1173
    %v1175 = vrcp.pop %v1159
    %v1176 = vmul.f32 %v1159, %v1175
    %v1177 = vsub.f32 1.0, %v1176
    %v1178 = vmul.f32 %v1175, %v1177
    %v1179 = vadd.f32 %v1175, %v1178
    %vm1180 = vweird.f32 %v1159
    %vm1181 = vweird.f32 %v1175
    %vm1182 = vmor %vm1180, %vm1181
    %v1183 = vsel %vm1182, %v1175, %v1179
    %v1184 = vand.u32 2147483647, %v1159
    %vm1185 = vcmp.eq.f32.partialorder %v1184, 8.507059e+37
    %v1186 = vand.u32 %v1159, 2147483648
    %v1187 = vor.u32 1.1754944e-38, %v1186
    %v1188 = vsel %vm1185, %v1187, %v1183
    %v1189 = vmul.f32 1.0, %v1188
    %v1190 = vtanh.pop %v1150
    %v1191 = vtanh.pop %v1151
    %v1194 = vrot.slane %v1102, 7
    %v1195 = vrot.slane %v1103, 7
    %v1198 = vmul.f32 %v1174, %v1194
    %v1199 = vmul.f32 %v1189, %v1195
    %1202 = vrot.lane.b32.xlu0 %v1190, 64
    %v1203 = vpop.permute.xlu0 %1202
    %1204 = vrot.lane.b32.xlu0 %v1191, 64
    %v1205 = vpop.permute.xlu0 %1204
    %v1208 = vmul.f32 %v1174, %v1203
    %v1209 = vmul.f32 %v1189, %v1205
    %1212 = vrot.lane.b32.xlu0 %v1208, 32
    %v1213 = vpop.permute.xlu0 %1212
    %1214 = vrot.lane.b32.xlu0 %v1209, 32
    %v1215 = vpop.permute.xlu0 %1214
    %v1218 = vadd.f32 %v1198, %v1213
    %v1219 = vadd.f32 %v1199, %v1215
    %v1220 = vtanh.pop %v1218
    %v1221 = vtanh.pop %v1219
    %1224 = vrot.lane.b32.xlu0 %v1220, 64
    %v1225 = vpop.permute.xlu0 %1224
    %1226 = vrot.lane.b32.xlu0 %v1221, 64
    %v1227 = vpop.permute.xlu0 %1226
    %v1230 = vmul.f32 %v1174, %v1225
    %v1231 = vmul.f32 %v1189, %v1227
    %v1234 = vrot.slane %v1230, 7
    %v1235 = vrot.slane %v1231, 6
    %v1236 = vsel %vm425, %v1235, %v1234
    %1237 = vrot.lane.b32.xlu0 %v1236, 32
    %v1238 = vpop.permute.xlu0 %1237
    %v1239 = vsel %vm223, %v1238, 0
    %1241 = vmatpush.msra.mxu0 0.0
    %1242 = vmatpush.msra.mxu0 0.0
    %1243 = vmatpush.msra.mxu0 0.0
    %1244 = vmatpush.msra.mxu0 0.0
    %1245 = vmatpush.msra.mxu0 0.0
    %1246 = vmatpush.msra.mxu0 0.0
    %1247 = vmatpush.msra.mxu0 0.0
    %1248 = vmatpush.msra.mxu0 0.0
    %1249 = vmatpush.msra.mxu0 0.0
    %1250 = vmatpush.msra.mxu0 0.0
    %1251 = vmatpush.msra.mxu0 0.0
    %1252 = vmatpush.msra.mxu0 0.0
    %1253 = vmatpush.msra.mxu0 %v318
    %1254 = vmatpush.msra.mxu0 %v317
    %1255 = vmatpush.msra.mxu0 %v316
    %1256 = vmatpush.msra.mxu0 %v315
    %1257 = vmatmul.f32.gmra.mxu0 %v1239
    %v1258 = vpop.f32.mrf.mxu0
    %v1259 = vadd.f32 0.0, %v1258
    %1260 = vdwg.mxu0
    %v1262 = vrot.slane %v1259, 1
    %v1265 = vadd.f32 %v307, %v1259
    %v1266 = vadd.f32 %v313, %v1262
    %v1267 = vxor.u32 %v1265, 2147483648
    %v1268 = vxor.u32 %v1266, 2147483648
    %v1269 = vmul.f32 %v1267, 1.442695
    %v1270 = vpow.pop %v1269
    %v1271 = vmul.f32 %v1268, 1.442695
    %v1272 = vpow.pop %v1271
    %v1273 = vadd.f32 %v1270, 1.0
    %v1274 = vadd.f32 %v1272, 1.0
    %v1275 = vrcp.pop %v1273
    %v1276 = vmul.f32 %v1273, %v1275
    %v1277 = vsub.f32 1.0, %v1276
    %v1278 = vmul.f32 %v1275, %v1277
    %v1279 = vadd.f32 %v1275, %v1278
    %vm1280 = vweird.f32 %v1273
    %vm1281 = vweird.f32 %v1275
    %vm1282 = vmor %vm1280, %vm1281
    %v1283 = vsel %vm1282, %v1275, %v1279
    %v1284 = vand.u32 2147483647, %v1273
    %vm1285 = vcmp.eq.f32.partialorder %v1284, 8.507059e+37
    %v1286 = vand.u32 %v1273, 2147483648
    %v1287 = vor.u32 1.1754944e-38, %v1286
    %v1288 = vsel %vm1285, %v1287, %v1283
    %v1289 = vmul.f32 1.0, %v1288
    %v1290 = vrcp.pop %v1274
    %v1291 = vmul.f32 %v1274, %v1290
    %v1292 = vsub.f32 1.0, %v1291
    %v1293 = vmul.f32 %v1290, %v1292
    %v1294 = vadd.f32 %v1290, %v1293
    %vm1295 = vweird.f32 %v1274
    %vm1296 = vweird.f32 %v1290
    %vm1297 = vmor %vm1295, %vm1296
    %v1298 = vsel %vm1297, %v1290, %v1294
    %v1299 = vand.u32 2147483647, %v1274
    %vm1300 = vcmp.eq.f32.partialorder %v1299, 8.507059e+37
    %v1301 = vand.u32 %v1274, 2147483648
    %v1302 = vor.u32 1.1754944e-38, %v1301
    %v1303 = vsel %vm1300, %v1302, %v1298
    %v1304 = vmul.f32 1.0, %v1303
    %v1305 = vtanh.pop %v1265
    %v1306 = vtanh.pop %v1266
    %v1309 = vrot.slane %v1218, 7
    %v1310 = vrot.slane %v1219, 7
    %v1313 = vmul.f32 %v1289, %v1309
    %v1314 = vmul.f32 %v1304, %v1310
    %1317 = vrot.lane.b32.xlu0 %v1305, 64
    %v1318 = vpop.permute.xlu0 %1317
    %1319 = vrot.lane.b32.xlu0 %v1306, 64
    %v1320 = vpop.permute.xlu0 %1319
    %v1323 = vmul.f32 %v1289, %v1318
    %v1324 = vmul.f32 %v1304, %v1320
    %1327 = vrot.lane.b32.xlu0 %v1323, 32
    %v1328 = vpop.permute.xlu0 %1327
    %1329 = vrot.lane.b32.xlu0 %v1324, 32
    %v1330 = vpop.permute.xlu0 %1329
    %v1333 = vadd.f32 %v1313, %v1328
    %v1334 = vadd.f32 %v1314, %v1330
    %v1335 = vtanh.pop %v1333
    %v1336 = vtanh.pop %v1334
    %1339 = vrot.lane.b32.xlu0 %v1335, 64
    %v1340 = vpop.permute.xlu0 %1339
    %1341 = vrot.lane.b32.xlu0 %v1336, 64
    %v1342 = vpop.permute.xlu0 %1341
    %v1345 = vmul.f32 %v1289, %v1340
    %v1346 = vmul.f32 %v1304, %v1342
    %v1349 = vrot.slane %v1346, 7
    %v1350 = vsel %vm425, %v1349, %v1345
    %1351 = vrot.lane.b32.xlu0 %v1350, 32
    %v1352 = vpop.permute.xlu0 %1351
    %v1353 = vsel %vm223, %v1352, 0
    %1355 = vmatpush.msra.mxu0 0.0
    %1356 = vmatpush.msra.mxu0 0.0
    %1357 = vmatpush.msra.mxu0 0.0
    %1358 = vmatpush.msra.mxu0 0.0
    %1359 = vmatpush.msra.mxu0 0.0
    %1360 = vmatpush.msra.mxu0 0.0
    %1361 = vmatpush.msra.mxu0 0.0
    %1362 = vmatpush.msra.mxu0 0.0
    %1363 = vmatpush.msra.mxu0 0.0
    %1364 = vmatpush.msra.mxu0 0.0
    %1365 = vmatpush.msra.mxu0 0.0
    %1366 = vmatpush.msra.mxu0 0.0
    %1367 = vmatpush.msra.mxu0 %v318
    %1368 = vmatpush.msra.mxu0 %v317
    %1369 = vmatpush.msra.mxu0 %v316
    %1370 = vmatpush.msra.mxu0 %v315
    %1371 = vmatmul.f32.gmra.mxu0 %v1353
    %v1372 = vpop.f32.mrf.mxu0
    %v1373 = vadd.f32 0.0, %v1372
    %1374 = vdwg.mxu0
    %v1376 = vrot.slane %v1373, 7
    %v1379 = vadd.f32 %v307, %v1376
    %v1380 = vadd.f32 %v313, %v1373
    %v1381 = vxor.u32 %v1379, 2147483648
    %v1382 = vxor.u32 %v1380, 2147483648
    %v1383 = vmul.f32 %v1381, 1.442695
    %v1384 = vpow.pop %v1383
    %v1385 = vmul.f32 %v1382, 1.442695
    %v1386 = vpow.pop %v1385
    %v1387 = vadd.f32 %v1384, 1.0
    %v1388 = vadd.f32 %v1386, 1.0
    %v1389 = vrcp.pop %v1387
    %v1390 = vmul.f32 %v1387, %v1389
    %v1391 = vsub.f32 1.0, %v1390
    %v1392 = vmul.f32 %v1389, %v1391
    %v1393 = vadd.f32 %v1389, %v1392
    %vm1394 = vweird.f32 %v1387
    %vm1395 = vweird.f32 %v1389
    %vm1396 = vmor %vm1394, %vm1395
    %v1397 = vsel %vm1396, %v1389, %v1393
    %v1398 = vand.u32 2147483647, %v1387
    %vm1399 = vcmp.eq.f32.partialorder %v1398, 8.507059e+37
    %v1400 = vand.u32 %v1387, 2147483648
    %v1401 = vor.u32 1.1754944e-38, %v1400
    %v1402 = vsel %vm1399, %v1401, %v1397
    %v1403 = vmul.f32 1.0, %v1402
    %v1404 = vrcp.pop %v1388
    %v1405 = vmul.f32 %v1388, %v1404
    %v1406 = vsub.f32 1.0, %v1405
    %v1407 = vmul.f32 %v1404, %v1406
    %v1408 = vadd.f32 %v1404, %v1407
    %vm1409 = vweird.f32 %v1388
    %vm1410 = vweird.f32 %v1404
    %vm1411 = vmor %vm1409, %vm1410
    %v1412 = vsel %vm1411, %v1404, %v1408
    %v1413 = vand.u32 2147483647, %v1388
    %vm1414 = vcmp.eq.f32.partialorder %v1413, 8.507059e+37
    %v1415 = vand.u32 %v1388, 2147483648
    %v1416 = vor.u32 1.1754944e-38, %v1415
    %v1417 = vsel %vm1414, %v1416, %v1412
    %v1418 = vmul.f32 1.0, %v1417
    %v1419 = vtanh.pop %v1379
    %v1420 = vtanh.pop %v1380
    %v1423 = vrot.slane %v1333, 7
    %v1424 = vrot.slane %v1334, 7
    %v1427 = vmul.f32 %v1403, %v1423
    %v1428 = vmul.f32 %v1418, %v1424
    %1431 = vrot.lane.b32.xlu0 %v1419, 64
    %v1432 = vpop.permute.xlu0 %1431
    %1433 = vrot.lane.b32.xlu0 %v1420, 64
    %v1434 = vpop.permute.xlu0 %1433
    %v1437 = vmul.f32 %v1403, %v1432
    %v1438 = vmul.f32 %v1418, %v1434
    %1441 = vrot.lane.b32.xlu0 %v1437, 32
    %v1442 = vpop.permute.xlu0 %1441
    %1443 = vrot.lane.b32.xlu0 %v1438, 32
    %v1444 = vpop.permute.xlu0 %1443
    %v1447 = vadd.f32 %v1427, %v1442
    %v1448 = vadd.f32 %v1428, %v1444
    %v1449 = vtanh.pop %v1447
    %v1450 = vtanh.pop %v1448
    %1453 = vrot.lane.b32.xlu0 %v1449, 64
    %v1454 = vpop.permute.xlu0 %1453
    %1455 = vrot.lane.b32.xlu0 %v1450, 64
    %v1456 = vpop.permute.xlu0 %1455
    %v1459 = vmul.f32 %v1403, %v1454
    %v1460 = vmul.f32 %v1418, %v1456
    %v1463 = vrot.slane %v1459, 1
    %v1464 = vsel %vm425, %v1460, %v1463
    %1465 = vrot.lane.b32.xlu0 %v1464, 32
    %v1466 = vpop.permute.xlu0 %1465
    %v1467 = vsel %vm223, %v1466, 0
    %1469 = vmatpush.msra.mxu0 0.0
    %1470 = vmatpush.msra.mxu0 0.0
    %1471 = vmatpush.msra.mxu0 0.0
    %1472 = vmatpush.msra.mxu0 0.0
    %1473 = vmatpush.msra.mxu0 0.0
    %1474 = vmatpush.msra.mxu0 0.0
    %1475 = vmatpush.msra.mxu0 0.0
    %1476 = vmatpush.msra.mxu0 0.0
    %1477 = vmatpush.msra.mxu0 0.0
    %1478 = vmatpush.msra.mxu0 0.0
    %1479 = vmatpush.msra.mxu0 0.0
    %1480 = vmatpush.msra.mxu0 0.0
    %1481 = vmatpush.msra.mxu0 %v318
    %1482 = vmatpush.msra.mxu0 %v317
    %1483 = vmatpush.msra.mxu0 %v316
    %1484 = vmatpush.msra.mxu0 %v315
    %1485 = vmatmul.f32.gmra.mxu0 %v1467
    %v1486 = vpop.f32.mrf.mxu0
    %v1487 = vadd.f32 0.0, %v1486
    %1488 = vdwg.mxu0
    %v1490 = vrot.slane %v1487, 6
    %v1491 = vrot.slane %v1487, 7
    %v1494 = vadd.f32 %v307, %v1490
    %v1495 = vadd.f32 %v313, %v1491
    %v1496 = vxor.u32 %v1494, 2147483648
    %v1497 = vxor.u32 %v1495, 2147483648
    %v1498 = vmul.f32 %v1496, 1.442695
    %v1499 = vpow.pop %v1498
    %v1500 = vmul.f32 %v1497, 1.442695
    %v1501 = vpow.pop %v1500
    %v1502 = vadd.f32 %v1499, 1.0
    %v1503 = vadd.f32 %v1501, 1.0
    %v1504 = vrcp.pop %v1502
    %v1505 = vmul.f32 %v1502, %v1504
    %v1506 = vsub.f32 1.0, %v1505
    %v1507 = vmul.f32 %v1504, %v1506
    %v1508 = vadd.f32 %v1504, %v1507
    %vm1509 = vweird.f32 %v1502
    %vm1510 = vweird.f32 %v1504
    %vm1511 = vmor %vm1509, %vm1510
    %v1512 = vsel %vm1511, %v1504, %v1508
    %v1513 = vand.u32 2147483647, %v1502
    %vm1514 = vcmp.eq.f32.partialorder %v1513, 8.507059e+37
    %v1515 = vand.u32 %v1502, 2147483648
    %v1516 = vor.u32 1.1754944e-38, %v1515
    %v1517 = vsel %vm1514, %v1516, %v1512
    %v1518 = vmul.f32 1.0, %v1517
    %v1519 = vrcp.pop %v1503
    %v1520 = vmul.f32 %v1503, %v1519
    %v1521 = vsub.f32 1.0, %v1520
    %v1522 = vmul.f32 %v1519, %v1521
    %v1523 = vadd.f32 %v1519, %v1522
    %vm1524 = vweird.f32 %v1503
    %vm1525 = vweird.f32 %v1519
    %vm1526 = vmor %vm1524, %vm1525
    %v1527 = vsel %vm1526, %v1519, %v1523
    %v1528 = vand.u32 2147483647, %v1503
    %vm1529 = vcmp.eq.f32.partialorder %v1528, 8.507059e+37
    %v1530 = vand.u32 %v1503, 2147483648
    %v1531 = vor.u32 1.1754944e-38, %v1530
    %v1532 = vsel %vm1529, %v1531, %v1527
    %v1533 = vmul.f32 1.0, %v1532
    %v1534 = vtanh.pop %v1494
    %v1535 = vtanh.pop %v1495
    %v1538 = vrot.slane %v1447, 7
    %v1539 = vrot.slane %v1448, 7
    %v1542 = vmul.f32 %v1518, %v1538
    %v1543 = vmul.f32 %v1533, %v1539
    %1546 = vrot.lane.b32.xlu0 %v1534, 64
    %v1547 = vpop.permute.xlu0 %1546
    %1548 = vrot.lane.b32.xlu0 %v1535, 64
    %v1549 = vpop.permute.xlu0 %1548
    %v1552 = vmul.f32 %v1518, %v1547
    %v1553 = vmul.f32 %v1533, %v1549
    %1556 = vrot.lane.b32.xlu0 %v1552, 32
    %v1557 = vpop.permute.xlu0 %1556
    %1558 = vrot.lane.b32.xlu0 %v1553, 32
    %v1559 = vpop.permute.xlu0 %1558
    %v1562 = vadd.f32 %v1542, %v1557
    %v1563 = vadd.f32 %v1543, %v1559
    %v1564 = vtanh.pop %v1562
    %v1565 = vtanh.pop %v1563
    %1568 = vrot.lane.b32.xlu0 %v1564, 64
    %v1569 = vpop.permute.xlu0 %1568
    %1570 = vrot.lane.b32.xlu0 %v1565, 64
    %v1571 = vpop.permute.xlu0 %1570
    %v1574 = vmul.f32 %v1518, %v1569
    %v1575 = vmul.f32 %v1533, %v1571
    %v1578 = vrot.slane %v1574, 2
    %v1579 = vrot.slane %v1575, 1
    %v1580 = vsel %vm425, %v1579, %v1578
    %1581 = vrot.lane.b32.xlu0 %v1580, 32
    %v1582 = vpop.permute.xlu0 %1581
    %v1583 = vsel %vm223, %v1582, 0
    %1585 = vmatpush.msra.mxu0 0.0
    %1586 = vmatpush.msra.mxu0 0.0
    %1587 = vmatpush.msra.mxu0 0.0
    %1588 = vmatpush.msra.mxu0 0.0
    %1589 = vmatpush.msra.mxu0 0.0
    %1590 = vmatpush.msra.mxu0 0.0
    %1591 = vmatpush.msra.mxu0 0.0
    %1592 = vmatpush.msra.mxu0 0.0
    %1593 = vmatpush.msra.mxu0 0.0
    %1594 = vmatpush.msra.mxu0 0.0
    %1595 = vmatpush.msra.mxu0 0.0
    %1596 = vmatpush.msra.mxu0 0.0
    %1597 = vmatpush.msra.mxu0 %v318
    %1598 = vmatpush.msra.mxu0 %v317
    %1599 = vmatpush.msra.mxu0 %v316
    %1600 = vmatpush.msra.mxu0 %v315
    %1601 = vmatmul.f32.gmra.mxu0 %v1583
    %v1602 = vpop.f32.mrf.mxu0
    %v1603 = vadd.f32 0.0, %v1602
    %1604 = vdwg.mxu0
    %v1606 = vrot.slane %v1603, 5
    %v1607 = vrot.slane %v1603, 6
    %v1610 = vadd.f32 %v307, %v1606
    %v1611 = vadd.f32 %v313, %v1607
    %v1612 = vxor.u32 %v1610, 2147483648
    %v1613 = vxor.u32 %v1611, 2147483648
    %v1614 = vmul.f32 %v1612, 1.442695
    %v1615 = vpow.pop %v1614
    %v1616 = vmul.f32 %v1613, 1.442695
    %v1617 = vpow.pop %v1616
    %v1618 = vadd.f32 %v1615, 1.0
    %v1619 = vadd.f32 %v1617, 1.0
    %v1620 = vrcp.pop %v1618
    %v1621 = vmul.f32 %v1618, %v1620
    %v1622 = vsub.f32 1.0, %v1621
    %v1623 = vmul.f32 %v1620, %v1622
    %v1624 = vadd.f32 %v1620, %v1623
    %vm1625 = vweird.f32 %v1618
    %vm1626 = vweird.f32 %v1620
    %vm1627 = vmor %vm1625, %vm1626
    %v1628 = vsel %vm1627, %v1620, %v1624
    %v1629 = vand.u32 2147483647, %v1618
    %vm1630 = vcmp.eq.f32.partialorder %v1629, 8.507059e+37
    %v1631 = vand.u32 %v1618, 2147483648
    %v1632 = vor.u32 1.1754944e-38, %v1631
    %v1633 = vsel %vm1630, %v1632, %v1628
    %v1634 = vmul.f32 1.0, %v1633
    %v1635 = vrcp.pop %v1619
    %v1636 = vmul.f32 %v1619, %v1635
    %v1637 = vsub.f32 1.0, %v1636
    %v1638 = vmul.f32 %v1635, %v1637
    %v1639 = vadd.f32 %v1635, %v1638
    %vm1640 = vweird.f32 %v1619
    %vm1641 = vweird.f32 %v1635
    %vm1642 = vmor %vm1640, %vm1641
    %v1643 = vsel %vm1642, %v1635, %v1639
    %v1644 = vand.u32 2147483647, %v1619
    %vm1645 = vcmp.eq.f32.partialorder %v1644, 8.507059e+37
    %v1646 = vand.u32 %v1619, 2147483648
    %v1647 = vor.u32 1.1754944e-38, %v1646
    %v1648 = vsel %vm1645, %v1647, %v1643
    %v1649 = vmul.f32 1.0, %v1648
    %v1650 = vtanh.pop %v1610
    %v1651 = vtanh.pop %v1611
    %v1654 = vrot.slane %v1562, 7
    %v1655 = vrot.slane %v1563, 7
    %v1658 = vmul.f32 %v1634, %v1654
    %v1659 = vmul.f32 %v1649, %v1655
    %1662 = vrot.lane.b32.xlu0 %v1650, 64
    %v1663 = vpop.permute.xlu0 %1662
    %1664 = vrot.lane.b32.xlu0 %v1651, 64
    %v1665 = vpop.permute.xlu0 %1664
    %v1668 = vmul.f32 %v1634, %v1663
    %v1669 = vmul.f32 %v1649, %v1665
    %1672 = vrot.lane.b32.xlu0 %v1668, 32
    %v1673 = vpop.permute.xlu0 %1672
    %1674 = vrot.lane.b32.xlu0 %v1669, 32
    %v1675 = vpop.permute.xlu0 %1674
    %v1678 = vadd.f32 %v1658, %v1673
    %v1679 = vadd.f32 %v1659, %v1675
    %v1680 = vtanh.pop %v1678
    %v1681 = vtanh.pop %v1679
    %1684 = vrot.lane.b32.xlu0 %v1680, 64
    %v1685 = vpop.permute.xlu0 %1684
    %1686 = vrot.lane.b32.xlu0 %v1681, 64
    %v1687 = vpop.permute.xlu0 %1686
    %v1690 = vmul.f32 %v1634, %v1685
    %v1691 = vmul.f32 %v1649, %v1687
    %v1694 = vrot.slane %v1690, 3
    %v1695 = vrot.slane %v1691, 2
    %v1696 = vsel %vm425, %v1695, %v1694
    %1697 = vrot.lane.b32.xlu0 %v1696, 32
    %v1698 = vpop.permute.xlu0 %1697
    %v1699 = vsel %vm223, %v1698, 0
    %1701 = vmatpush.msra.mxu0 0.0
    %1702 = vmatpush.msra.mxu0 0.0
    %1703 = vmatpush.msra.mxu0 0.0
    %1704 = vmatpush.msra.mxu0 0.0
    %1705 = vmatpush.msra.mxu0 0.0
    %1706 = vmatpush.msra.mxu0 0.0
    %1707 = vmatpush.msra.mxu0 0.0
    %1708 = vmatpush.msra.mxu0 0.0
    %1709 = vmatpush.msra.mxu0 0.0
    %1710 = vmatpush.msra.mxu0 0.0
    %1711 = vmatpush.msra.mxu0 0.0
    %1712 = vmatpush.msra.mxu0 0.0
    %1713 = vmatpush.msra.mxu0 %v318
    %1714 = vmatpush.msra.mxu0 %v317
    %1715 = vmatpush.msra.mxu0 %v316
    %1716 = vmatpush.msra.mxu0 %v315
    %1717 = vmatmul.f32.gmra.mxu0 %v1699
    %v1718 = vpop.f32.mrf.mxu0
    %v1719 = vadd.f32 0.0, %v1718
    %1720 = vdwg.mxu0
    %v1722 = vrot.slane %v1719, 4
    %v1723 = vrot.slane %v1719, 5
    %v1726 = vadd.f32 %v307, %v1722
    %v1727 = vadd.f32 %v313, %v1723
    %v1728 = vxor.u32 %v1726, 2147483648
    %v1729 = vxor.u32 %v1727, 2147483648
    %v1730 = vmul.f32 %v1728, 1.442695
    %v1731 = vpow.pop %v1730
    %v1732 = vmul.f32 %v1729, 1.442695
    %v1733 = vpow.pop %v1732
    %v1734 = vadd.f32 %v1731, 1.0
    %v1735 = vadd.f32 %v1733, 1.0
    %v1736 = vrcp.pop %v1734
    %v1737 = vmul.f32 %v1734, %v1736
    %v1738 = vsub.f32 1.0, %v1737
    %v1739 = vmul.f32 %v1736, %v1738
    %v1740 = vadd.f32 %v1736, %v1739
    %vm1741 = vweird.f32 %v1734
    %vm1742 = vweird.f32 %v1736
    %vm1743 = vmor %vm1741, %vm1742
    %v1744 = vsel %vm1743, %v1736, %v1740
    %v1745 = vand.u32 2147483647, %v1734
    %vm1746 = vcmp.eq.f32.partialorder %v1745, 8.507059e+37
    %v1747 = vand.u32 %v1734, 2147483648
    %v1748 = vor.u32 1.1754944e-38, %v1747
    %v1749 = vsel %vm1746, %v1748, %v1744
    %v1750 = vmul.f32 1.0, %v1749
    %v1751 = vrcp.pop %v1735
    %v1752 = vmul.f32 %v1735, %v1751
    %v1753 = vsub.f32 1.0, %v1752
    %v1754 = vmul.f32 %v1751, %v1753
    %v1755 = vadd.f32 %v1751, %v1754
    %vm1756 = vweird.f32 %v1735
    %vm1757 = vweird.f32 %v1751
    %vm1758 = vmor %vm1756, %vm1757
    %v1759 = vsel %vm1758, %v1751, %v1755
    %v1760 = vand.u32 2147483647, %v1735
    %vm1761 = vcmp.eq.f32.partialorder %v1760, 8.507059e+37
    %v1762 = vand.u32 %v1735, 2147483648
    %v1763 = vor.u32 1.1754944e-38, %v1762
    %v1764 = vsel %vm1761, %v1763, %v1759
    %v1765 = vmul.f32 1.0, %v1764
    %v1766 = vtanh.pop %v1726
    %v1767 = vtanh.pop %v1727
    %v1770 = vrot.slane %v1678, 7
    %v1771 = vrot.slane %v1679, 7
    %v1774 = vmul.f32 %v1750, %v1770
    %v1775 = vmul.f32 %v1765, %v1771
    %1778 = vrot.lane.b32.xlu0 %v1766, 64
    %v1779 = vpop.permute.xlu0 %1778
    %1780 = vrot.lane.b32.xlu0 %v1767, 64
    %v1781 = vpop.permute.xlu0 %1780
    %v1784 = vmul.f32 %v1750, %v1779
    %v1785 = vmul.f32 %v1765, %v1781
    %1788 = vrot.lane.b32.xlu0 %v1784, 32
    %v1789 = vpop.permute.xlu0 %1788
    %1790 = vrot.lane.b32.xlu0 %v1785, 32
    %v1791 = vpop.permute.xlu0 %1790
    %v1794 = vadd.f32 %v1774, %v1789
    %v1795 = vadd.f32 %v1775, %v1791
    %v1796 = vtanh.pop %v1794
    %v1797 = vtanh.pop %v1795
    %1800 = vrot.lane.b32.xlu0 %v1796, 64
    %v1801 = vpop.permute.xlu0 %1800
    %1802 = vrot.lane.b32.xlu0 %v1797, 64
    %v1803 = vpop.permute.xlu0 %1802
    %v1806 = vmul.f32 %v1750, %v1801
    %v1807 = vmul.f32 %v1765, %v1803
    %v1810 = vrot.slane %v1806, 4
    %v1811 = vrot.slane %v1807, 3
    %v1812 = vsel %vm425, %v1811, %v1810
    %1813 = vrot.lane.b32.xlu0 %v1812, 32
    %v1814 = vpop.permute.xlu0 %1813
    %v1815 = vsel %vm223, %v1814, 0
    %1817 = vmatpush.msra.mxu0 0.0
    %1818 = vmatpush.msra.mxu0 0.0
    %1819 = vmatpush.msra.mxu0 0.0
    %1820 = vmatpush.msra.mxu0 0.0
    %1821 = vmatpush.msra.mxu0 0.0
    %1822 = vmatpush.msra.mxu0 0.0
    %1823 = vmatpush.msra.mxu0 0.0
    %1824 = vmatpush.msra.mxu0 0.0
    %1825 = vmatpush.msra.mxu0 0.0
    %1826 = vmatpush.msra.mxu0 0.0
    %1827 = vmatpush.msra.mxu0 0.0
    %1828 = vmatpush.msra.mxu0 0.0
    %1829 = vmatpush.msra.mxu0 %v318
    %1830 = vmatpush.msra.mxu0 %v317
    %1831 = vmatpush.msra.mxu0 %v316
    %1832 = vmatpush.msra.mxu0 %v315
    %1833 = vmatmul.f32.gmra.mxu0 %v1815
    %v1834 = vpop.f32.mrf.mxu0
    %v1835 = vadd.f32 0.0, %v1834
    %1836 = vdwg.mxu0
    %v1838 = vrot.slane %v1835, 3
    %v1839 = vrot.slane %v1835, 4
    %v1842 = vadd.f32 %v307, %v1838
    %v1843 = vadd.f32 %v313, %v1839
    %v1844 = vxor.u32 %v1842, 2147483648
    %v1845 = vxor.u32 %v1843, 2147483648
    %v1846 = vmul.f32 %v1844, 1.442695
    %v1847 = vpow.pop %v1846
    %v1848 = vmul.f32 %v1845, 1.442695
    %v1849 = vpow.pop %v1848
    %v1850 = vadd.f32 %v1847, 1.0
    %v1851 = vadd.f32 %v1849, 1.0
    %v1852 = vrcp.pop %v1850
    %v1853 = vmul.f32 %v1850, %v1852
    %v1854 = vsub.f32 1.0, %v1853
    %v1855 = vmul.f32 %v1852, %v1854
    %v1856 = vadd.f32 %v1852, %v1855
    %vm1857 = vweird.f32 %v1850
    %vm1858 = vweird.f32 %v1852
    %vm1859 = vmor %vm1857, %vm1858
    %v1860 = vsel %vm1859, %v1852, %v1856
    %v1861 = vand.u32 2147483647, %v1850
    %vm1862 = vcmp.eq.f32.partialorder %v1861, 8.507059e+37
    %v1863 = vand.u32 %v1850, 2147483648
    %v1864 = vor.u32 1.1754944e-38, %v1863
    %v1865 = vsel %vm1862, %v1864, %v1860
    %v1866 = vmul.f32 1.0, %v1865
    %v1867 = vrcp.pop %v1851
    %v1868 = vmul.f32 %v1851, %v1867
    %v1869 = vsub.f32 1.0, %v1868
    %v1870 = vmul.f32 %v1867, %v1869
    %v1871 = vadd.f32 %v1867, %v1870
    %vm1872 = vweird.f32 %v1851
    %vm1873 = vweird.f32 %v1867
    %vm1874 = vmor %vm1872, %vm1873
    %v1875 = vsel %vm1874, %v1867, %v1871
    %v1876 = vand.u32 2147483647, %v1851
    %vm1877 = vcmp.eq.f32.partialorder %v1876, 8.507059e+37
    %v1878 = vand.u32 %v1851, 2147483648
    %v1879 = vor.u32 1.1754944e-38, %v1878
    %v1880 = vsel %vm1877, %v1879, %v1875
    %v1881 = vmul.f32 1.0, %v1880
    %v1882 = vtanh.pop %v1842
    %v1883 = vtanh.pop %v1843
    %v1886 = vrot.slane %v1794, 7
    %v1887 = vrot.slane %v1795, 7
    %v1890 = vmul.f32 %v1866, %v1886
    %v1891 = vmul.f32 %v1881, %v1887
    %1894 = vrot.lane.b32.xlu0 %v1882, 64
    %v1895 = vpop.permute.xlu0 %1894
    %1896 = vrot.lane.b32.xlu0 %v1883, 64
    %v1897 = vpop.permute.xlu0 %1896
    %v1900 = vmul.f32 %v1866, %v1895
    %v1901 = vmul.f32 %v1881, %v1897
    %1904 = vrot.lane.b32.xlu0 %v1900, 32
    %v1905 = vpop.permute.xlu0 %1904
    %1906 = vrot.lane.b32.xlu0 %v1901, 32
    %v1907 = vpop.permute.xlu0 %1906
    %v1910 = vadd.f32 %v1890, %v1905
    %v1911 = vadd.f32 %v1891, %v1907
    %v1912 = vtanh.pop %v1910
    %v1913 = vtanh.pop %v1911
    %1916 = vrot.lane.b32.xlu0 %v1912, 64
    %v1917 = vpop.permute.xlu0 %1916
    %1918 = vrot.lane.b32.xlu0 %v1913, 64
    %v1919 = vpop.permute.xlu0 %1918
    %v1922 = vmul.f32 %v1866, %v1917
    %v1923 = vmul.f32 %v1881, %v1919
    %v1926 = vrot.slane %v1922, 5
    %v1927 = vrot.slane %v1923, 4
    %v1928 = vsel %vm425, %v1927, %v1926
    %1929 = vrot.lane.b32.xlu0 %v1928, 32
    %v1930 = vpop.permute.xlu0 %1929
    %v1931 = vsel %vm223, %v1930, 0
    %1933 = vmatpush.msra.mxu0 0.0
    %1934 = vmatpush.msra.mxu0 0.0
    %1935 = vmatpush.msra.mxu0 0.0
    %1936 = vmatpush.msra.mxu0 0.0
    %1937 = vmatpush.msra.mxu0 0.0
    %1938 = vmatpush.msra.mxu0 0.0
    %1939 = vmatpush.msra.mxu0 0.0
    %1940 = vmatpush.msra.mxu0 0.0
    %1941 = vmatpush.msra.mxu0 0.0
    %1942 = vmatpush.msra.mxu0 0.0
    %1943 = vmatpush.msra.mxu0 0.0
    %1944 = vmatpush.msra.mxu0 0.0
    %1945 = vmatpush.msra.mxu0 %v318
    %1946 = vmatpush.msra.mxu0 %v317
    %1947 = vmatpush.msra.mxu0 %v316
    %1948 = vmatpush.msra.mxu0 %v315
    %1949 = vmatmul.f32.gmra.mxu0 %v1931
    %v1950 = vpop.f32.mrf.mxu0
    %v1951 = vadd.f32 0.0, %v1950
    %1952 = vdwg.mxu0
    %v1954 = vrot.slane %v1951, 2
    %v1955 = vrot.slane %v1951, 3
    %v1958 = vadd.f32 %v307, %v1954
    %v1959 = vadd.f32 %v313, %v1955
    %v1960 = vxor.u32 %v1958, 2147483648
    %v1961 = vxor.u32 %v1959, 2147483648
    %v1962 = vmul.f32 %v1960, 1.442695
    %v1963 = vpow.pop %v1962
    %v1964 = vmul.f32 %v1961, 1.442695
    %v1965 = vpow.pop %v1964
    %v1966 = vadd.f32 %v1963, 1.0
    %v1967 = vadd.f32 %v1965, 1.0
    %v1968 = vrcp.pop %v1966
    %v1969 = vmul.f32 %v1966, %v1968
    %v1970 = vsub.f32 1.0, %v1969
    %v1971 = vmul.f32 %v1968, %v1970
    %v1972 = vadd.f32 %v1968, %v1971
    %vm1973 = vweird.f32 %v1966
    %vm1974 = vweird.f32 %v1968
    %vm1975 = vmor %vm1973, %vm1974
    %v1976 = vsel %vm1975, %v1968, %v1972
    %v1977 = vand.u32 2147483647, %v1966
    %vm1978 = vcmp.eq.f32.partialorder %v1977, 8.507059e+37
    %v1979 = vand.u32 %v1966, 2147483648
    %v1980 = vor.u32 1.1754944e-38, %v1979
    %v1981 = vsel %vm1978, %v1980, %v1976
    %v1982 = vmul.f32 1.0, %v1981
    %v1983 = vrcp.pop %v1967
    %v1984 = vmul.f32 %v1967, %v1983
    %v1985 = vsub.f32 1.0, %v1984
    %v1986 = vmul.f32 %v1983, %v1985
    %v1987 = vadd.f32 %v1983, %v1986
    %vm1988 = vweird.f32 %v1967
    %vm1989 = vweird.f32 %v1983
    %vm1990 = vmor %vm1988, %vm1989
    %v1991 = vsel %vm1990, %v1983, %v1987
    %v1992 = vand.u32 2147483647, %v1967
    %vm1993 = vcmp.eq.f32.partialorder %v1992, 8.507059e+37
    %v1994 = vand.u32 %v1967, 2147483648
    %v1995 = vor.u32 1.1754944e-38, %v1994
    %v1996 = vsel %vm1993, %v1995, %v1991
    %v1997 = vmul.f32 1.0, %v1996
    %v1998 = vtanh.pop %v1958
    %v1999 = vtanh.pop %v1959
    %v2002 = vrot.slane %v1910, 7
    %v2003 = vrot.slane %v1911, 7
    %v2006 = vmul.f32 %v1982, %v2002
    %v2007 = vmul.f32 %v1997, %v2003
    %2010 = vrot.lane.b32.xlu0 %v1998, 64
    %v2011 = vpop.permute.xlu0 %2010
    %2012 = vrot.lane.b32.xlu0 %v1999, 64
    %v2013 = vpop.permute.xlu0 %2012
    %v2016 = vmul.f32 %v1982, %v2011
    %v2017 = vmul.f32 %v1997, %v2013
    %2020 = vrot.lane.b32.xlu0 %v2016, 32
    %v2021 = vpop.permute.xlu0 %2020
    %2022 = vrot.lane.b32.xlu0 %v2017, 32
    %v2023 = vpop.permute.xlu0 %2022
    %v2026 = vadd.f32 %v2006, %v2021
    %v2027 = vadd.f32 %v2007, %v2023
    %v2028 = vtanh.pop %v2026
    %v2029 = vtanh.pop %v2027
    %2032 = vrot.lane.b32.xlu0 %v2028, 64
    %v2033 = vpop.permute.xlu0 %2032
    %2034 = vrot.lane.b32.xlu0 %v2029, 64
    %v2035 = vpop.permute.xlu0 %2034
    %v2038 = vmul.f32 %v1982, %v2033
    %v2039 = vmul.f32 %v1997, %v2035
    %v2042 = vrot.slane %v2038, 6
    %v2043 = vrot.slane %v2039, 5
    %v2044 = vsel %vm425, %v2043, %v2042
    %2045 = vrot.lane.b32.xlu0 %v2044, 32
    %v2046 = vpop.permute.xlu0 %2045
    %v2047 = vsel %vm223, %v2046, 0
    %2049 = vmatpush.msra.mxu0 0.0
    %2050 = vmatpush.msra.mxu0 0.0
    %2051 = vmatpush.msra.mxu0 0.0
    %2052 = vmatpush.msra.mxu0 0.0
    %2053 = vmatpush.msra.mxu0 0.0
    %2054 = vmatpush.msra.mxu0 0.0
    %2055 = vmatpush.msra.mxu0 0.0
    %2056 = vmatpush.msra.mxu0 0.0
    %2057 = vmatpush.msra.mxu0 0.0
    %2058 = vmatpush.msra.mxu0 0.0
    %2059 = vmatpush.msra.mxu0 0.0
    %2060 = vmatpush.msra.mxu0 0.0
    %2061 = vmatpush.msra.mxu0 %v318
    %2062 = vmatpush.msra.mxu0 %v317
    %2063 = vmatpush.msra.mxu0 %v316
    %2064 = vmatpush.msra.mxu0 %v315
    %2065 = vmatmul.f32.gmra.mxu0 %v2047
    %v2066 = vpop.f32.mrf.mxu0
    %v2067 = vadd.f32 0.0, %v2066
    %2068 = vdwg.mxu0
    %v2070 = vrot.slane %v2067, 1
    %v2071 = vrot.slane %v2067, 2
    %v2074 = vadd.f32 %v307, %v2070
    %v2075 = vadd.f32 %v313, %v2071
    %v2076 = vxor.u32 %v2074, 2147483648
    %v2077 = vxor.u32 %v2075, 2147483648
    %v2078 = vmul.f32 %v2076, 1.442695
    %v2079 = vpow.pop %v2078
    %v2080 = vmul.f32 %v2077, 1.442695
    %v2081 = vpow.pop %v2080
    %v2082 = vadd.f32 %v2079, 1.0
    %v2083 = vadd.f32 %v2081, 1.0
    %v2084 = vrcp.pop %v2082
    %v2085 = vmul.f32 %v2082, %v2084
    %v2086 = vsub.f32 1.0, %v2085
    %v2087 = vmul.f32 %v2084, %v2086
    %v2088 = vadd.f32 %v2084, %v2087
    %vm2089 = vweird.f32 %v2082
    %vm2090 = vweird.f32 %v2084
    %vm2091 = vmor %vm2089, %vm2090
    %v2092 = vsel %vm2091, %v2084, %v2088
    %v2093 = vand.u32 2147483647, %v2082
    %vm2094 = vcmp.eq.f32.partialorder %v2093, 8.507059e+37
    %v2095 = vand.u32 %v2082, 2147483648
    %v2096 = vor.u32 1.1754944e-38, %v2095
    %v2097 = vsel %vm2094, %v2096, %v2092
    %v2098 = vmul.f32 1.0, %v2097
    %v2099 = vrcp.pop %v2083
    %v2100 = vmul.f32 %v2083, %v2099
    %v2101 = vsub.f32 1.0, %v2100
    %v2102 = vmul.f32 %v2099, %v2101
    %v2103 = vadd.f32 %v2099, %v2102
    %vm2104 = vweird.f32 %v2083
    %vm2105 = vweird.f32 %v2099
    %vm2106 = vmor %vm2104, %vm2105
    %v2107 = vsel %vm2106, %v2099, %v2103
    %v2108 = vand.u32 2147483647, %v2083
    %vm2109 = vcmp.eq.f32.partialorder %v2108, 8.507059e+37
    %v2110 = vand.u32 %v2083, 2147483648
    %v2111 = vor.u32 1.1754944e-38, %v2110
    %v2112 = vsel %vm2109, %v2111, %v2107
    %v2113 = vmul.f32 1.0, %v2112
    %v2114 = vtanh.pop %v2074
    %v2115 = vtanh.pop %v2075
    %v2118 = vrot.slane %v2026, 7
    %v2119 = vrot.slane %v2027, 7
    %v2122 = vmul.f32 %v2098, %v2118
    %v2123 = vmul.f32 %v2113, %v2119
    %2126 = vrot.lane.b32.xlu0 %v2114, 64
    %v2127 = vpop.permute.xlu0 %2126
    %2128 = vrot.lane.b32.xlu0 %v2115, 64
    %v2129 = vpop.permute.xlu0 %2128
    %v2132 = vmul.f32 %v2098, %v2127
    %v2133 = vmul.f32 %v2113, %v2129
    %2136 = vrot.lane.b32.xlu0 %v2132, 32
    %v2137 = vpop.permute.xlu0 %2136
    %2138 = vrot.lane.b32.xlu0 %v2133, 32
    %v2139 = vpop.permute.xlu0 %2138
    %v2142 = vadd.f32 %v2122, %v2137
    %v2143 = vadd.f32 %v2123, %v2139
    %v2144 = vtanh.pop %v2142
    %v2145 = vtanh.pop %v2143
    %2148 = vrot.lane.b32.xlu0 %v2144, 64
    %v2149 = vpop.permute.xlu0 %2148
    %2150 = vrot.lane.b32.xlu0 %v2145, 64
    %v2151 = vpop.permute.xlu0 %2150
    %v2154 = vmul.f32 %v2098, %v2149
    %v2155 = vmul.f32 %v2113, %v2151
    %vm2156 = vcmask 1040384
    %v2157 = vsel %vm2156, %v420, %v535
    %v2158 = vsel %vm2156, %v421, %v536
    %vm2159 = vcmask 1041408
    %v2160 = vsel %vm2159, %v2157, %v650
    %v2161 = vsel %vm2159, %v2158, %v651
    %vm2162 = vcmask 1042432
    %v2163 = vsel %vm2162, %v2160, %v766
    %v2164 = vsel %vm2162, %v2161, %v767
    %vm2165 = vcmask 1043456
    %v2166 = vsel %vm2165, %v2163, %v882
    %v2167 = vsel %vm2165, %v2164, %v883
    %vm2168 = vcmask 1044480
    %v2169 = vsel %vm2168, %v2166, %v998
    %v2170 = vsel %vm2168, %v2167, %v999
    %vm2171 = vcmask 1045504
    %v2172 = vsel %vm2171, %v2169, %v1114
    %v2173 = vsel %vm2171, %v2170, %v1115
    %vm2174 = vcmask 1046528
    %v2175 = vsel %vm2174, %v2172, %v1230
    %v2176 = vsel %vm2174, %v2173, %v1231
    %v2177 = vsel %vm2156, %v1345, %v1459
    %v2178 = vsel %vm2156, %v1346, %v1460
    %v2179 = vsel %vm2159, %v2177, %v1574
    %v2180 = vsel %vm2159, %v2178, %v1575
    %v2181 = vsel %vm2162, %v2179, %v1690
    %v2182 = vsel %vm2162, %v2180, %v1691
    %v2183 = vsel %vm2165, %v2181, %v1806
    %v2184 = vsel %vm2165, %v2182, %v1807
    %v2185 = vsel %vm2168, %v2183, %v1922
    %v2186 = vsel %vm2168, %v2184, %v1923
    %v2187 = vsel %vm2171, %v2185, %v2038
    %v2188 = vsel %vm2171, %v2186, %v2039
    %v2189 = vsel %vm2174, %v2187, %v2154
    %v2190 = vsel %vm2174, %v2188, %v2155
    %v2191 = vld [vmem:[#allocation7] sm:$0xff]
    %v2192 = vld [vmem:[#allocation7 + $0x8] sm:$0xff]
    %v2193 = vld [vmem:[#allocation7 + $0x10] sm:$0xff]
    %v2194 = vld [vmem:[#allocation7 + $0x18] sm:$0xff]
    %v2195 = vperm.slane %v163, 3
    %2200 = vrot.lane.b32.xlu0 %v2175, 32
    %v2201 = vpop.permute.xlu0 %2200
    %2202 = vrot.lane.b32.xlu0 %v2189, 32
    %v2203 = vpop.permute.xlu0 %2202
    %2204 = vrot.lane.b32.xlu0 %v2176, 32
    %v2205 = vpop.permute.xlu0 %2204
    %2206 = vrot.lane.b32.xlu0 %v2190, 32
    %v2207 = vpop.permute.xlu0 %2206
    %v2208 = vsel %vm223, %v2201, 0
    %v2210 = vsel %vm223, %v2203, 0
    %v2212 = vsel %vm223, %v2205, 0
    %v2214 = vsel %vm223, %v2207, 0
    %2216 = vmatpush.msra.mxu0 0.0
    %2217 = vmatpush.msra.mxu0 0.0
    %2218 = vmatpush.msra.mxu0 0.0
    %2219 = vmatpush.msra.mxu0 0.0
    %2220 = vmatpush.msra.mxu0 0.0
    %2221 = vmatpush.msra.mxu0 0.0
    %2222 = vmatpush.msra.mxu0 0.0
    %2223 = vmatpush.msra.mxu0 0.0
    %2224 = vmatpush.msra.mxu0 0.0
    %2225 = vmatpush.msra.mxu0 0.0
    %2226 = vmatpush.msra.mxu0 0.0
    %2227 = vmatpush.msra.mxu0 0.0
    %2228 = vmatpush.msra.mxu0 %v2194
    %2229 = vmatpush.msra.mxu0 %v2193
    %2230 = vmatpush.msra.mxu0 %v2192
    %2231 = vmatpush.msra.mxu0 %v2191
    %2232 = vmatmul.f32.gmra.mxu0 %v2208
    %v2233 = vpop.f32.mrf.mxu0
    %v2234 = vadd.f32 %v2195, %v2233
    %2235 = vmatmul.f32.gmra.mxu0 %v2210
    %v2236 = vpop.f32.mrf.mxu0
    %v2237 = vadd.f32 %v2195, %v2236
    %2238 = vmatmul.f32.gmra.mxu0 %v2212
    %v2239 = vpop.f32.mrf.mxu0
    %v2240 = vadd.f32 %v2195, %v2239
    %2241 = vmatmul.f32.gmra.mxu0 %v2214
    %v2242 = vpop.f32.mrf.mxu0
    %v2243 = vadd.f32 %v2195, %v2242
    %2244 = vdwg.mxu0
    %v2245 = vmul.f32 %v2234, 0.17677669
    %v2246 = vmul.f32 %v2237, 0.17677669
    %v2247 = vmul.f32 %v2240, 0.17677669
    %v2248 = vmul.f32 %v2243, 0.17677669
    %2251 = vrot.lane.b32.xlu0 %v2234, 96
    %v2252 = vpop.permute.xlu0 %2251
    %2253 = vrot.lane.b32.xlu0 %v2237, 96
    %v2254 = vpop.permute.xlu0 %2253
    %v2256 = vsel %vm223, %v2245, 0
    %v2259 = vsel %vm223, %v2246, 0
    %v2261 = vsel %vm223, %v2252, 0
    %v2263 = vsel %vm223, %v2254, 0
    %2265 = vmatpush.xpose.msra.mxu0 0.0
    %2266 = vmatpush.xpose.msra.mxu0 0.0
    %2267 = vmatpush.xpose.msra.mxu0 0.0
    %2268 = vmatpush.xpose.msra.mxu0 0.0
    %2269 = vmatpush.xpose.msra.mxu0 0.0
    %2270 = vmatpush.xpose.msra.mxu0 0.0
    %2271 = vmatpush.xpose.msra.mxu0 0.0
    %2272 = vmatpush.xpose.msra.mxu0 0.0
    %2273 = vmatpush.xpose.msra.mxu0 0.0
    %2274 = vmatpush.xpose.msra.mxu0 0.0
    %2275 = vmatpush.xpose.msra.mxu0 0.0
    %2276 = vmatpush.xpose.msra.mxu0 0.0
    %2277 = vmatpush.xpose.msra.mxu0 0.0
    %2278 = vmatpush.xpose.msra.mxu0 0.0
    %2279 = vmatpush.xpose.msra.mxu0 %v2263
    %2280 = vmatpush.xpose.msra.mxu0 %v2261
    %2281 = vmatmul.f32.gmra.mxu0 %v2256
    %v2282 = vpop.f32.mrf.mxu0
    %v2283 = vadd.f32 0.0, %v2282
    %2284 = vmatmul.f32.gmra.mxu0 %v2259
    %v2285 = vpop.f32.mrf.mxu0
    %v2286 = vadd.f32 0.0, %v2285
    %2287 = vdwg.mxu0
    %2290 = vrot.lane.b32.xlu0 %v2240, 96
    %v2291 = vpop.permute.xlu0 %2290
    %2292 = vrot.lane.b32.xlu0 %v2243, 96
    %v2293 = vpop.permute.xlu0 %2292
    %v2295 = vsel %vm223, %v2247, 0
    %v2298 = vsel %vm223, %v2248, 0
    %v2300 = vsel %vm223, %v2291, 0
    %v2302 = vsel %vm223, %v2293, 0
    %2304 = vmatpush.xpose.msra.mxu0 0.0
    %2305 = vmatpush.xpose.msra.mxu0 0.0
    %2306 = vmatpush.xpose.msra.mxu0 0.0
    %2307 = vmatpush.xpose.msra.mxu0 0.0
    %2308 = vmatpush.xpose.msra.mxu0 0.0
    %2309 = vmatpush.xpose.msra.mxu0 0.0
    %2310 = vmatpush.xpose.msra.mxu0 0.0
    %2311 = vmatpush.xpose.msra.mxu0 0.0
    %2312 = vmatpush.xpose.msra.mxu0 0.0
    %2313 = vmatpush.xpose.msra.mxu0 0.0
    %2314 = vmatpush.xpose.msra.mxu0 0.0
    %2315 = vmatpush.xpose.msra.mxu0 0.0
    %2316 = vmatpush.xpose.msra.mxu0 0.0
    %2317 = vmatpush.xpose.msra.mxu0 0.0
    %2318 = vmatpush.xpose.msra.mxu0 %v2302
    %2319 = vmatpush.xpose.msra.mxu0 %v2300
    %2320 = vmatmul.f32.gmra.mxu0 %v2295
    %v2321 = vpop.f32.mrf.mxu0
    %v2322 = vadd.f32 0.0, %v2321
    %2323 = vmatmul.f32.gmra.mxu0 %v2298
    %v2324 = vpop.f32.mrf.mxu0
    %v2325 = vadd.f32 0.0, %v2324
    %2326 = vdwg.mxu0
    %v2327 = vsel %vm172, %v2283, -inf
    %2328 = vmax.xlane.f32.xlu0 %v2327
    %v2329 = vpop.xlane.xlu0 %2328
    %v2330 = vsel %vm172, %v2286, -inf
    %2331 = vmax.xlane.f32.xlu0 %v2330
    %v2332 = vpop.xlane.xlu0 %2331
    %v2333 = vsel %vm172, %v2322, -inf
    %2334 = vmax.xlane.f32.xlu0 %v2333
    %v2335 = vpop.xlane.xlu0 %2334
    %v2336 = vsel %vm172, %v2325, -inf
    %2337 = vmax.xlane.f32.xlu0 %v2336
    %v2338 = vpop.xlane.xlu0 %2337
    %v2339 = vsub.f32 %v2283, %v2329
    %v2340 = vsub.f32 %v2286, %v2332
    %v2341 = vsub.f32 %v2322, %v2335
    %v2342 = vsub.f32 %v2325, %v2338
    %v2343 = vmul.f32 %v2339, 1.442695
    %v2344 = vpow.pop %v2343
    %v2345 = vmul.f32 %v2340, 1.442695
    %v2346 = vpow.pop %v2345
    %v2347 = vmul.f32 %v2341, 1.442695
    %v2348 = vpow.pop %v2347
    %v2349 = vmul.f32 %v2342, 1.442695
    %v2350 = vpow.pop %v2349
    %v2351 = vsel %vm172, %v2344, 0.0
    %2352 = vadd.xlane.f32.xlu0 %v2351
    %v2353 = vpop.xlane.xlu0 %2352
    %v2354 = vsel %vm172, %v2346, 0.0
    %2355 = vadd.xlane.f32.xlu0 %v2354
    %v2356 = vpop.xlane.xlu0 %2355
    %v2357 = vsel %vm172, %v2348, 0.0
    %2358 = vadd.xlane.f32.xlu0 %v2357
    %v2359 = vpop.xlane.xlu0 %2358
    %v2360 = vsel %vm172, %v2350, 0.0
    %2361 = vadd.xlane.f32.xlu0 %v2360
    %v2362 = vpop.xlane.xlu0 %2361
    %v2363 = vrcp.pop %v2353
    %v2364 = vmul.f32 %v2353, %v2363
    %v2365 = vsub.f32 1.0, %v2364
    %v2366 = vmul.f32 %v2363, %v2365
    %v2367 = vadd.f32 %v2363, %v2366
    %vm2368 = vweird.f32 %v2353
    %vm2369 = vweird.f32 %v2363
    %vm2370 = vmor %vm2368, %vm2369
    %v2371 = vsel %vm2370, %v2363, %v2367
    %v2372 = vand.u32 2147483647, %v2353
    %vm2373 = vcmp.eq.f32.partialorder %v2372, 8.507059e+37
    %v2374 = vand.u32 %v2353, 2147483648
    %v2375 = vor.u32 1.1754944e-38, %v2374
    %v2376 = vsel %vm2373, %v2375, %v2371
    %v2377 = vmul.f32 %v2344, %v2376
    %v2378 = vrcp.pop %v2356
    %v2379 = vmul.f32 %v2356, %v2378
    %v2380 = vsub.f32 1.0, %v2379
    %v2381 = vmul.f32 %v2378, %v2380
    %v2382 = vadd.f32 %v2378, %v2381
    %vm2383 = vweird.f32 %v2356
    %vm2384 = vweird.f32 %v2378
    %vm2385 = vmor %vm2383, %vm2384
    %v2386 = vsel %vm2385, %v2378, %v2382
    %v2387 = vand.u32 2147483647, %v2356
    %vm2388 = vcmp.eq.f32.partialorder %v2387, 8.507059e+37
    %v2389 = vand.u32 %v2356, 2147483648
    %v2390 = vor.u32 1.1754944e-38, %v2389
    %v2391 = vsel %vm2388, %v2390, %v2386
    %v2392 = vmul.f32 %v2346, %v2391
    %v2393 = vrcp.pop %v2359
    %v2394 = vmul.f32 %v2359, %v2393
    %v2395 = vsub.f32 1.0, %v2394
    %v2396 = vmul.f32 %v2393, %v2395
    %v2397 = vadd.f32 %v2393, %v2396
    %vm2398 = vweird.f32 %v2359
    %vm2399 = vweird.f32 %v2393
    %vm2400 = vmor %vm2398, %vm2399
    %v2401 = vsel %vm2400, %v2393, %v2397
    %v2402 = vand.u32 2147483647, %v2359
    %vm2403 = vcmp.eq.f32.partialorder %v2402, 8.507059e+37
    %v2404 = vand.u32 %v2359, 2147483648
    %v2405 = vor.u32 1.1754944e-38, %v2404
    %v2406 = vsel %vm2403, %v2405, %v2401
    %v2407 = vmul.f32 %v2348, %v2406
    %v2408 = vrcp.pop %v2362
    %v2409 = vmul.f32 %v2362, %v2408
    %v2410 = vsub.f32 1.0, %v2409
    %v2411 = vmul.f32 %v2408, %v2410
    %v2412 = vadd.f32 %v2408, %v2411
    %vm2413 = vweird.f32 %v2362
    %vm2414 = vweird.f32 %v2408
    %vm2415 = vmor %vm2413, %vm2414
    %v2416 = vsel %vm2415, %v2408, %v2412
    %v2417 = vand.u32 2147483647, %v2362
    %vm2418 = vcmp.eq.f32.partialorder %v2417, 8.507059e+37
    %v2419 = vand.u32 %v2362, 2147483648
    %v2420 = vor.u32 1.1754944e-38, %v2419
    %v2421 = vsel %vm2418, %v2420, %v2416
    %v2422 = vmul.f32 %v2350, %v2421
    %2423 = vrot.lane.b32.xlu0 %v2234, 64
    %v2424 = vpop.permute.xlu0 %2423
    %2425 = vrot.lane.b32.xlu0 %v2237, 64
    %v2426 = vpop.permute.xlu0 %2425
    %v2430 = vsel %vm172, %v2377, 0
    %v2433 = vsel %vm172, %v2392, 0
    %2435 = vmatpush.msra.mxu0 0.0
    %2436 = vmatpush.msra.mxu0 0.0
    %2437 = vmatpush.msra.mxu0 0.0
    %2438 = vmatpush.msra.mxu0 0.0
    %2439 = vmatpush.msra.mxu0 0.0
    %2440 = vmatpush.msra.mxu0 0.0
    %2441 = vmatpush.msra.mxu0 0.0
    %2442 = vmatpush.msra.mxu0 0.0
    %2443 = vmatpush.msra.mxu0 0.0
    %2444 = vmatpush.msra.mxu0 0.0
    %2445 = vmatpush.msra.mxu0 0.0
    %2446 = vmatpush.msra.mxu0 0.0
    %2447 = vmatpush.msra.mxu0 0.0
    %2448 = vmatpush.msra.mxu0 0.0
    %2449 = vmatpush.msra.mxu0 %v2426
    %2450 = vmatpush.msra.mxu0 %v2424
    %2451 = vmatmul.f32.gmra.mxu0 %v2430
    %v2452 = vpop.f32.mrf.mxu0
    %v2453 = vadd.f32 0.0, %v2452
    %2454 = vmatmul.f32.gmra.mxu0 %v2433
    %v2455 = vpop.f32.mrf.mxu0
    %v2456 = vadd.f32 0.0, %v2455
    %2457 = vdwg.mxu0
    %2458 = vrot.lane.b32.xlu0 %v2240, 64
    %v2459 = vpop.permute.xlu0 %2458
    %2460 = vrot.lane.b32.xlu0 %v2243, 64
    %v2461 = vpop.permute.xlu0 %2460
    %v2465 = vsel %vm172, %v2407, 0
    %v2468 = vsel %vm172, %v2422, 0
    %2470 = vmatpush.msra.mxu0 0.0
    %2471 = vmatpush.msra.mxu0 0.0
    %2472 = vmatpush.msra.mxu0 0.0
    %2473 = vmatpush.msra.mxu0 0.0
    %2474 = vmatpush.msra.mxu0 0.0
    %2475 = vmatpush.msra.mxu0 0.0
    %2476 = vmatpush.msra.mxu0 0.0
    %2477 = vmatpush.msra.mxu0 0.0
    %2478 = vmatpush.msra.mxu0 0.0
    %2479 = vmatpush.msra.mxu0 0.0
    %2480 = vmatpush.msra.mxu0 0.0
    %2481 = vmatpush.msra.mxu0 0.0
    %2482 = vmatpush.msra.mxu0 0.0
    %2483 = vmatpush.msra.mxu0 0.0
    %2484 = vmatpush.msra.mxu0 %v2461
    %2485 = vmatpush.msra.mxu0 %v2459
    %2486 = vmatmul.f32.gmra.mxu0 %v2465
    %v2487 = vpop.f32.mrf.mxu0
    %v2488 = vadd.f32 0.0, %v2487
    %2489 = vmatmul.f32.gmra.mxu0 %v2468
    %v2490 = vpop.f32.mrf.mxu0
    %v2491 = vadd.f32 0.0, %v2490
    %2492 = vdwg.mxu0
    %v2493 = vld [vmem:[#allocation9] sm:$0xff]
    %v2494 = vld [vmem:[#allocation9 + $0x8] sm:$0xff]
    %v2495 = vld [vmem:[#allocation9 + $0x10] sm:$0xff]
    %v2496 = vld [vmem:[#allocation9 + $0x18] sm:$0xff]
    %v2497 = vperm.slane %v163, 4
    %v2499 = vsel %vm223, %v2453, 0
    %v2502 = vsel %vm223, %v2456, 0
    %v2505 = vsel %vm223, %v2488, 0
    %v2508 = vsel %vm223, %v2491, 0
    %2510 = vmatpush.msra.mxu0 0.0
    %2511 = vmatpush.msra.mxu0 0.0
    %2512 = vmatpush.msra.mxu0 0.0
    %2513 = vmatpush.msra.mxu0 0.0
    %2514 = vmatpush.msra.mxu0 0.0
    %2515 = vmatpush.msra.mxu0 0.0
    %2516 = vmatpush.msra.mxu0 0.0
    %2517 = vmatpush.msra.mxu0 0.0
    %2518 = vmatpush.msra.mxu0 0.0
    %2519 = vmatpush.msra.mxu0 0.0
    %2520 = vmatpush.msra.mxu0 0.0
    %2521 = vmatpush.msra.mxu0 0.0
    %2522 = vmatpush.msra.mxu0 %v2496
    %2523 = vmatpush.msra.mxu0 %v2495
    %2524 = vmatpush.msra.mxu0 %v2494
    %2525 = vmatpush.msra.mxu0 %v2493
    %2526 = vmatmul.f32.gmra.mxu0 %v2499
    %v2527 = vpop.f32.mrf.mxu0
    %v2528 = vadd.f32 %v2497, %v2527
    %2529 = vmatmul.f32.gmra.mxu0 %v2502
    %v2530 = vpop.f32.mrf.mxu0
    %v2531 = vadd.f32 %v2497, %v2530
    %2532 = vmatmul.f32.gmra.mxu0 %v2505
    %v2533 = vpop.f32.mrf.mxu0
    %v2534 = vadd.f32 %v2497, %v2533
    %2535 = vmatmul.f32.gmra.mxu0 %v2508
    %v2536 = vpop.f32.mrf.mxu0
    %v2537 = vadd.f32 %v2497, %v2536
    %2538 = vdwg.mxu0
    %v2539 = vsel %vm223, %v2528, 0.0
    %2540 = vadd.xlane.f32.xlu0 %v2539
    %v2541 = vpop.xlane.xlu0 %2540
    %v2542 = vsel %vm223, %v2531, 0.0
    %2543 = vadd.xlane.f32.xlu0 %v2542
    %v2544 = vpop.xlane.xlu0 %2543
    %v2545 = vsel %vm223, %v2534, 0.0
    %2546 = vadd.xlane.f32.xlu0 %v2545
    %v2547 = vpop.xlane.xlu0 %2546
    %v2548 = vsel %vm223, %v2537, 0.0
    %2549 = vadd.xlane.f32.xlu0 %v2548
    %v2550 = vpop.xlane.xlu0 %2549
    %v2551 = vrcp.pop 32.0
    %v2552 = vmul.f32 32.0, %v2551
    %v2553 = vsub.f32 1.0, %v2552
    %v2554 = vmul.f32 %v2551, %v2553
    %v2555 = vadd.f32 %v2551, %v2554
    %vm2556 = vweird.f32 %v2551
    %v2557 = vsel %vm2556, %v2551, %v2555
    %v2558 = vmul.f32 %v2541, %v2557
    %v2559 = vmul.f32 %v2544, %v2557
    %v2560 = vmul.f32 %v2547, %v2557
    %v2561 = vmul.f32 %v2550, %v2557
    %v2562 = vsub.f32 %v2528, %v2558
    %v2563 = vsub.f32 %v2531, %v2559
    %v2564 = vsub.f32 %v2534, %v2560
    %v2565 = vsub.f32 %v2537, %v2561
    %v2566 = vmul.f32 %v2562, %v2562
    %v2567 = vmul.f32 %v2563, %v2563
    %v2568 = vmul.f32 %v2564, %v2564
    %v2569 = vmul.f32 %v2565, %v2565
    %v2570 = vsel %vm223, %v2566, 0.0
    %2571 = vadd.xlane.f32.xlu0 %v2570
    %v2572 = vpop.xlane.xlu0 %2571
    %v2573 = vsel %vm223, %v2567, 0.0
    %2574 = vadd.xlane.f32.xlu0 %v2573
    %v2575 = vpop.xlane.xlu0 %2574
    %v2576 = vsel %vm223, %v2568, 0.0
    %2577 = vadd.xlane.f32.xlu0 %v2576
    %v2578 = vpop.xlane.xlu0 %2577
    %v2579 = vsel %vm223, %v2569, 0.0
    %2580 = vadd.xlane.f32.xlu0 %v2579
    %v2581 = vpop.xlane.xlu0 %2580
    %v2582 = vmul.f32 %v2572, %v2557
    %v2583 = vmul.f32 %v2575, %v2557
    %v2584 = vmul.f32 %v2578, %v2557
    %v2585 = vmul.f32 %v2581, %v2557
    %v2586 = vadd.f32 %v2582, 1e-05
    %v2587 = vadd.f32 %v2583, 1e-05
    %v2588 = vadd.f32 %v2584, 1e-05
    %v2589 = vadd.f32 %v2585, 1e-05
    %v2590 = vrsqrt.pop %v2586
    %v2591 = vmul.f32 %v2590, %v2586
    %v2592 = vmul.f32 %v2591, %v2590
    %v2593 = vmul.f32 0.5, %v2592
    %v2594 = vsub.f32 1.5, %v2593
    %v2595 = vmul.f32 %v2590, %v2594
    %vm2596 = vweird.f32 %v2586
    %vm2597 = vweird.f32 %v2590
    %vm2598 = vmor %vm2596, %vm2597
    %v2599 = vsel %vm2598, %v2590, %v2595
    %v2600 = vrsqrt.pop %v2587
    %v2601 = vmul.f32 %v2600, %v2587
    %v2602 = vmul.f32 %v2601, %v2600
    %v2603 = vmul.f32 0.5, %v2602
    %v2604 = vsub.f32 1.5, %v2603
    %v2605 = vmul.f32 %v2600, %v2604
    %vm2606 = vweird.f32 %v2587
    %vm2607 = vweird.f32 %v2600
    %vm2608 = vmor %vm2606, %vm2607
    %v2609 = vsel %vm2608, %v2600, %v2605
    %v2610 = vrsqrt.pop %v2588
    %v2611 = vmul.f32 %v2610, %v2588
    %v2612 = vmul.f32 %v2611, %v2610
    %v2613 = vmul.f32 0.5, %v2612
    %v2614 = vsub.f32 1.5, %v2613
    %v2615 = vmul.f32 %v2610, %v2614
    %vm2616 = vweird.f32 %v2588
    %vm2617 = vweird.f32 %v2610
    %vm2618 = vmor %vm2616, %vm2617
    %v2619 = vsel %vm2618, %v2610, %v2615
    %v2620 = vrsqrt.pop %v2589
    %v2621 = vmul.f32 %v2620, %v2589
    %v2622 = vmul.f32 %v2621, %v2620
    %v2623 = vmul.f32 0.5, %v2622
    %v2624 = vsub.f32 1.5, %v2623
    %v2625 = vmul.f32 %v2620, %v2624
    %vm2626 = vweird.f32 %v2589
    %vm2627 = vweird.f32 %v2620
    %vm2628 = vmor %vm2626, %vm2627
    %v2629 = vsel %vm2628, %v2620, %v2625
    %v2630 = vmul.f32 %v2562, %v2599
    %v2631 = vmul.f32 %v2563, %v2609
    %v2632 = vmul.f32 %v2564, %v2619
    %v2633 = vmul.f32 %v2565, %v2629
    %v2634 = vperm.slane %v163, 5
    %v2635 = vmul.f32 %v2630, %v2634
    %v2636 = vmul.f32 %v2631, %v2634
    %v2637 = vmul.f32 %v2632, %v2634
    %v2638 = vmul.f32 %v2633, %v2634
    %v2639 = vperm.slane %v163, 6
    %v2640 = vadd.f32 %v2635, %v2639
    %v2641 = vadd.f32 %v2636, %v2639
    %v2642 = vadd.f32 %v2637, %v2639
    %v2643 = vadd.f32 %v2638, %v2639
    %v2644 = vld [vmem:[#allocation10] sm:$0xff]
    %v2645 = vld [vmem:[#allocation10 + $0x8] sm:$0xff]
    %v2646 = vld [vmem:[#allocation10 + $0x10] sm:$0xff]
    %v2647 = vld [vmem:[#allocation10 + $0x18] sm:$0xff]
    %v2648 = vperm.slane %v163, 7
    %v2650 = vsel %vm223, %v2640, 0
    %v2653 = vsel %vm223, %v2641, 0
    %v2656 = vsel %vm223, %v2642, 0
    %v2659 = vsel %vm223, %v2643, 0
    %2661 = vmatpush.msra.mxu0 0.0
    %2662 = vmatpush.msra.mxu0 0.0
    %2663 = vmatpush.msra.mxu0 0.0
    %2664 = vmatpush.msra.mxu0 0.0
    %2665 = vmatpush.msra.mxu0 0.0
    %2666 = vmatpush.msra.mxu0 0.0
    %2667 = vmatpush.msra.mxu0 0.0
    %2668 = vmatpush.msra.mxu0 0.0
    %2669 = vmatpush.msra.mxu0 0.0
    %2670 = vmatpush.msra.mxu0 0.0
    %2671 = vmatpush.msra.mxu0 0.0
    %2672 = vmatpush.msra.mxu0 0.0
    %2673 = vmatpush.msra.mxu0 %v2647
    %2674 = vmatpush.msra.mxu0 %v2646
    %2675 = vmatpush.msra.mxu0 %v2645
    %2676 = vmatpush.msra.mxu0 %v2644
    %2677 = vmatmul.f32.gmra.mxu0 %v2650
    %v2678 = vpop.f32.mrf.mxu0
    %v2679 = vadd.f32 %v2648, %v2678
    %2680 = vmatmul.f32.gmra.mxu0 %v2653
    %v2681 = vpop.f32.mrf.mxu0
    %v2682 = vadd.f32 %v2648, %v2681
    %2683 = vmatmul.f32.gmra.mxu0 %v2656
    %v2684 = vpop.f32.mrf.mxu0
    %v2685 = vadd.f32 %v2648, %v2684
    %2686 = vmatmul.f32.gmra.mxu0 %v2659
    %v2687 = vpop.f32.mrf.mxu0
    %v2688 = vadd.f32 %v2648, %v2687
    %2689 = vdwg.mxu0
    %v2690 = vmax.f32 %v2679, 0.0
    %v2691 = vmax.f32 %v2682, 0.0
    %v2692 = vmax.f32 %v2685, 0.0
    %v2693 = vmax.f32 %v2688, 0.0
    %v2694 = vld [vmem:[#allocation12] sm:$0xff]
    %v2695 = vld [vmem:[#allocation12 + $0x8] sm:$0xff]
    %v2696 = vld [vmem:[#allocation12 + $0x10] sm:$0xff]
    %v2697 = vld [vmem:[#allocation12 + $0x18] sm:$0xff]
    %v2698 = vld [vmem:[#allocation12 + $0x20] sm:$0xff]
    %v2699 = vld [vmem:[#allocation12 + $0x28] sm:$0xff]
    %v2700 = vld [vmem:[#allocation12 + $0x30] sm:$0xff]
    %v2701 = vld [vmem:[#allocation12 + $0x38] sm:$0xff]
    %v2702 = vperm.slane %v164, 0
    %vm2703 = vcmask 523264
    %v2705 = vsel %vm2703, %v2690, 0
    %v2708 = vsel %vm2703, %v2691, 0
    %v2711 = vsel %vm2703, %v2692, 0
    %v2714 = vsel %vm2703, %v2693, 0
    %2716 = vmatpush.msra.mxu0 0.0
    %2717 = vmatpush.msra.mxu0 0.0
    %2718 = vmatpush.msra.mxu0 0.0
    %2719 = vmatpush.msra.mxu0 0.0
    %2720 = vmatpush.msra.mxu0 0.0
    %2721 = vmatpush.msra.mxu0 0.0
    %2722 = vmatpush.msra.mxu0 0.0
    %2723 = vmatpush.msra.mxu0 0.0
    %2724 = vmatpush.msra.mxu0 %v2701
    %2725 = vmatpush.msra.mxu0 %v2700
    %2726 = vmatpush.msra.mxu0 %v2699
    %2727 = vmatpush.msra.mxu0 %v2698
    %2728 = vmatpush.msra.mxu0 %v2697
    %2729 = vmatpush.msra.mxu0 %v2696
    %2730 = vmatpush.msra.mxu0 %v2695
    %2731 = vmatpush.msra.mxu0 %v2694
    %2732 = vmatmul.f32.gmra.mxu0 %v2705
    %v2733 = vpop.f32.mrf.mxu0
    %v2734 = vadd.f32 %v2702, %v2733
    %2735 = vmatmul.f32.gmra.mxu0 %v2708
    %v2736 = vpop.f32.mrf.mxu0
    %v2737 = vadd.f32 %v2702, %v2736
    %2738 = vmatmul.f32.gmra.mxu0 %v2711
    %v2739 = vpop.f32.mrf.mxu0
    %v2740 = vadd.f32 %v2702, %v2739
    %2741 = vmatmul.f32.gmra.mxu0 %v2714
    %v2742 = vpop.f32.mrf.mxu0
    %v2743 = vadd.f32 %v2702, %v2742
    %2744 = vdwg.mxu0
    %v2745 = vadd.f32 %v2640, %v2734
    %v2746 = vadd.f32 %v2641, %v2737
    %v2747 = vadd.f32 %v2642, %v2740
    %v2748 = vadd.f32 %v2643, %v2743
    %v2749 = vsel %vm223, %v2745, 0.0
    %2750 = vadd.xlane.f32.xlu0 %v2749
    %v2751 = vpop.xlane.xlu0 %2750
    %v2752 = vsel %vm223, %v2746, 0.0
    %2753 = vadd.xlane.f32.xlu0 %v2752
    %v2754 = vpop.xlane.xlu0 %2753
    %v2755 = vsel %vm223, %v2747, 0.0
    %2756 = vadd.xlane.f32.xlu0 %v2755
    %v2757 = vpop.xlane.xlu0 %2756
    %v2758 = vsel %vm223, %v2748, 0.0
    %2759 = vadd.xlane.f32.xlu0 %v2758
    %v2760 = vpop.xlane.xlu0 %2759
    %v2761 = vmul.f32 %v2751, %v2557
    %v2762 = vmul.f32 %v2754, %v2557
    %v2763 = vmul.f32 %v2757, %v2557
    %v2764 = vmul.f32 %v2760, %v2557
    %v2765 = vsub.f32 %v2745, %v2761
    %v2766 = vsub.f32 %v2746, %v2762
    %v2767 = vsub.f32 %v2747, %v2763
    %v2768 = vsub.f32 %v2748, %v2764
    %v2769 = vmul.f32 %v2765, %v2765
    %v2770 = vmul.f32 %v2766, %v2766
    %v2771 = vmul.f32 %v2767, %v2767
    %v2772 = vmul.f32 %v2768, %v2768
    %v2773 = vsel %vm223, %v2769, 0.0
    %2774 = vadd.xlane.f32.xlu0 %v2773
    %v2775 = vpop.xlane.xlu0 %2774
    %v2776 = vsel %vm223, %v2770, 0.0
    %2777 = vadd.xlane.f32.xlu0 %v2776
    %v2778 = vpop.xlane.xlu0 %2777
    %v2779 = vsel %vm223, %v2771, 0.0
    %2780 = vadd.xlane.f32.xlu0 %v2779
    %v2781 = vpop.xlane.xlu0 %2780
    %v2782 = vsel %vm223, %v2772, 0.0
    %2783 = vadd.xlane.f32.xlu0 %v2782
    %v2784 = vpop.xlane.xlu0 %2783
    %v2785 = vmul.f32 %v2775, %v2557
    %v2786 = vmul.f32 %v2778, %v2557
    %v2787 = vmul.f32 %v2781, %v2557
    %v2788 = vmul.f32 %v2784, %v2557
    %v2789 = vadd.f32 %v2785, 1e-05
    %v2790 = vadd.f32 %v2786, 1e-05
    %v2791 = vadd.f32 %v2787, 1e-05
    %v2792 = vadd.f32 %v2788, 1e-05
    %v2793 = vrsqrt.pop %v2789
    %v2794 = vmul.f32 %v2793, %v2789
    %v2795 = vmul.f32 %v2794, %v2793
    %v2796 = vmul.f32 0.5, %v2795
    %v2797 = vsub.f32 1.5, %v2796
    %v2798 = vmul.f32 %v2793, %v2797
    %vm2799 = vweird.f32 %v2789
    %vm2800 = vweird.f32 %v2793
    %vm2801 = vmor %vm2799, %vm2800
    %v2802 = vsel %vm2801, %v2793, %v2798
    %v2803 = vrsqrt.pop %v2790
    %v2804 = vmul.f32 %v2803, %v2790
    %v2805 = vmul.f32 %v2804, %v2803
    %v2806 = vmul.f32 0.5, %v2805
    %v2807 = vsub.f32 1.5, %v2806
    %v2808 = vmul.f32 %v2803, %v2807
    %vm2809 = vweird.f32 %v2790
    %vm2810 = vweird.f32 %v2803
    %vm2811 = vmor %vm2809, %vm2810
    %v2812 = vsel %vm2811, %v2803, %v2808
    %v2813 = vrsqrt.pop %v2791
    %v2814 = vmul.f32 %v2813, %v2791
    %v2815 = vmul.f32 %v2814, %v2813
    %v2816 = vmul.f32 0.5, %v2815
    %v2817 = vsub.f32 1.5, %v2816
    %v2818 = vmul.f32 %v2813, %v2817
    %vm2819 = vweird.f32 %v2791
    %vm2820 = vweird.f32 %v2813
    %vm2821 = vmor %vm2819, %vm2820
    %v2822 = vsel %vm2821, %v2813, %v2818
    %v2823 = vrsqrt.pop %v2792
    %v2824 = vmul.f32 %v2823, %v2792
    %v2825 = vmul.f32 %v2824, %v2823
    %v2826 = vmul.f32 0.5, %v2825
    %v2827 = vsub.f32 1.5, %v2826
    %v2828 = vmul.f32 %v2823, %v2827
    %vm2829 = vweird.f32 %v2792
    %vm2830 = vweird.f32 %v2823
    %vm2831 = vmor %vm2829, %vm2830
    %v2832 = vsel %vm2831, %v2823, %v2828
    %v2833 = vmul.f32 %v2765, %v2802
    %v2834 = vmul.f32 %v2766, %v2812
    %v2835 = vmul.f32 %v2767, %v2822
    %v2836 = vmul.f32 %v2768, %v2832
    %v2837 = vperm.slane %v164, 1
    %v2838 = vmul.f32 %v2833, %v2837
    %v2839 = vmul.f32 %v2834, %v2837
    %v2840 = vmul.f32 %v2835, %v2837
    %v2841 = vmul.f32 %v2836, %v2837
    %v2842 = vperm.slane %v164, 2
    %v2843 = vadd.f32 %v2838, %v2842
    %v2844 = vadd.f32 %v2839, %v2842
    %v2845 = vadd.f32 %v2840, %v2842
    %v2846 = vadd.f32 %v2841, %v2842
    %v2851 = vrot.slane %v2843, 1
    %v2852 = vrot.slane %v2843, 2
    %v2853 = vrot.slane %v2843, 3
    %v2854 = vrot.slane %v2843, 4
    %v2855 = vrot.slane %v2843, 5
    %v2856 = vrot.slane %v2843, 6
    %v2857 = vrot.slane %v2843, 7
    %v2858 = vrot.slane %v2844, 1
    %v2859 = vrot.slane %v2844, 2
    %v2860 = vrot.slane %v2844, 3
    %v2861 = vrot.slane %v2844, 4
    %v2862 = vrot.slane %v2844, 5
    %v2863 = vrot.slane %v2844, 6
    %v2864 = vrot.slane %v2844, 7
    %v2865 = vrot.slane %v2845, 1
    %v2866 = vrot.slane %v2845, 2
    %v2867 = vrot.slane %v2845, 3
    %v2868 = vrot.slane %v2845, 4
    %v2869 = vrot.slane %v2845, 5
    %v2870 = vrot.slane %v2845, 6
    %v2871 = vrot.slane %v2845, 7
    %v2872 = vrot.slane %v2846, 1
    %v2873 = vrot.slane %v2846, 2
    %v2874 = vrot.slane %v2846, 3
    %v2875 = vrot.slane %v2846, 4
    %v2876 = vrot.slane %v2846, 5
    %v2877 = vrot.slane %v2846, 6
    %v2878 = vrot.slane %v2846, 7
    %v2879 = vperm.slane %v2843, 0
    %v2880 = vperm.slane %v2851, 0
    %v2881 = vperm.slane %v2852, 0
    %v2882 = vperm.slane %v2853, 0
    %v2883 = vperm.slane %v2854, 0
    %v2884 = vperm.slane %v2855, 0
    %v2885 = vperm.slane %v2856, 0
    %v2886 = vperm.slane %v2857, 0
    %v2887 = vperm.slane %v2844, 0
    %v2888 = vperm.slane %v2858, 0
    %v2889 = vperm.slane %v2859, 0
    %v2890 = vperm.slane %v2860, 0
    %v2891 = vperm.slane %v2861, 0
    %v2892 = vperm.slane %v2862, 0
    %v2893 = vperm.slane %v2863, 0
    %v2894 = vperm.slane %v2864, 0
    %v2895 = vperm.slane %v2845, 0
    %v2896 = vperm.slane %v2865, 0
    %v2897 = vperm.slane %v2866, 0
    %v2898 = vperm.slane %v2867, 0
    %v2899 = vperm.slane %v2868, 0
    %v2900 = vperm.slane %v2869, 0
    %v2901 = vperm.slane %v2870, 0
    %v2902 = vperm.slane %v2871, 0
    %v2903 = vperm.slane %v2846, 0
    %v2904 = vperm.slane %v2872, 0
    %v2905 = vperm.slane %v2873, 0
    %v2906 = vperm.slane %v2874, 0
    %v2907 = vperm.slane %v2875, 0
    %v2908 = vperm.slane %v2876, 0
    %v2909 = vperm.slane %v2877, 0
    %v2910 = vperm.slane %v2878, 0
    %v2943 = vsub.f32 %v2879, %v2843
    %v2944 = vsub.f32 %v2879, %v2844
    %v2945 = vsub.f32 %v2880, %v2843
    %v2946 = vsub.f32 %v2880, %v2844
    %v2947 = vsub.f32 %v2881, %v2843
    %v2948 = vsub.f32 %v2881, %v2844
    %v2949 = vsub.f32 %v2882, %v2843
    %v2950 = vsub.f32 %v2882, %v2844
    %v2951 = vsub.f32 %v2883, %v2843
    %v2952 = vsub.f32 %v2883, %v2844
    %v2953 = vsub.f32 %v2884, %v2843
    %v2954 = vsub.f32 %v2884, %v2844
    %v2955 = vsub.f32 %v2885, %v2843
    %v2956 = vsub.f32 %v2885, %v2844
    %v2957 = vsub.f32 %v2886, %v2843
    %v2958 = vsub.f32 %v2886, %v2844
    %v2959 = vsub.f32 %v2887, %v2843
    %v2960 = vsub.f32 %v2887, %v2844
    %v2961 = vsub.f32 %v2888, %v2843
    %v2962 = vsub.f32 %v2888, %v2844
    %v2963 = vsub.f32 %v2889, %v2843
    %v2964 = vsub.f32 %v2889, %v2844
    %v2965 = vsub.f32 %v2890, %v2843
    %v2966 = vsub.f32 %v2890, %v2844
    %v2967 = vsub.f32 %v2891, %v2843
    %v2968 = vsub.f32 %v2891, %v2844
    %v2969 = vsub.f32 %v2892, %v2843
    %v2970 = vsub.f32 %v2892, %v2844
    %v2971 = vsub.f32 %v2893, %v2843
    %v2972 = vsub.f32 %v2893, %v2844
    %v2973 = vsub.f32 %v2894, %v2843
    %v2974 = vsub.f32 %v2894, %v2844
    %v2975 = vsub.f32 %v2895, %v2845
    %v2976 = vsub.f32 %v2895, %v2846
    %v2977 = vsub.f32 %v2896, %v2845
    %v2978 = vsub.f32 %v2896, %v2846
    %v2979 = vsub.f32 %v2897, %v2845
    %v2980 = vsub.f32 %v2897, %v2846
    %v2981 = vsub.f32 %v2898, %v2845
    %v2982 = vsub.f32 %v2898, %v2846
    %v2983 = vsub.f32 %v2899, %v2845
    %v2984 = vsub.f32 %v2899, %v2846
    %v2985 = vsub.f32 %v2900, %v2845
    %v2986 = vsub.f32 %v2900, %v2846
    %v2987 = vsub.f32 %v2901, %v2845
    %v2988 = vsub.f32 %v2901, %v2846
    %v2989 = vsub.f32 %v2902, %v2845
    %v2990 = vsub.f32 %v2902, %v2846
    %v2991 = vsub.f32 %v2903, %v2845
    %v2992 = vsub.f32 %v2903, %v2846
    %v2993 = vsub.f32 %v2904, %v2845
    %v2994 = vsub.f32 %v2904, %v2846
    %v2995 = vsub.f32 %v2905, %v2845
    %v2996 = vsub.f32 %v2905, %v2846
    %v2997 = vsub.f32 %v2906, %v2845
    %v2998 = vsub.f32 %v2906, %v2846
    %v2999 = vsub.f32 %v2907, %v2845
    %v3000 = vsub.f32 %v2907, %v2846
    %v3001 = vsub.f32 %v2908, %v2845
    %v3002 = vsub.f32 %v2908, %v2846
    %v3003 = vsub.f32 %v2909, %v2845
    %v3004 = vsub.f32 %v2909, %v2846
    %v3005 = vsub.f32 %v2910, %v2845
    %v3006 = vsub.f32 %v2910, %v2846
    %v3007 = vmul.f32 %v2943, %v2943
    %v3008 = vmul.f32 %v2944, %v2944
    %v3009 = vmul.f32 %v2945, %v2945
    %v3010 = vmul.f32 %v2946, %v2946
    %v3011 = vmul.f32 %v2947, %v2947
    %v3012 = vmul.f32 %v2948, %v2948
    %v3013 = vmul.f32 %v2949, %v2949
    %v3014 = vmul.f32 %v2950, %v2950
    %v3015 = vmul.f32 %v2951, %v2951
    %v3016 = vmul.f32 %v2952, %v2952
    %v3017 = vmul.f32 %v2953, %v2953
    %v3018 = vmul.f32 %v2954, %v2954
    %v3019 = vmul.f32 %v2955, %v2955
    %v3020 = vmul.f32 %v2956, %v2956
    %v3021 = vmul.f32 %v2957, %v2957
    %v3022 = vmul.f32 %v2958, %v2958
    %v3023 = vmul.f32 %v2959, %v2959
    %v3024 = vmul.f32 %v2960, %v2960
    %v3025 = vmul.f32 %v2961, %v2961
    %v3026 = vmul.f32 %v2962, %v2962
    %v3027 = vmul.f32 %v2963, %v2963
    %v3028 = vmul.f32 %v2964, %v2964
    %v3029 = vmul.f32 %v2965, %v2965
    %v3030 = vmul.f32 %v2966, %v2966
    %v3031 = vmul.f32 %v2967, %v2967
    %v3032 = vmul.f32 %v2968, %v2968
    %v3033 = vmul.f32 %v2969, %v2969
    %v3034 = vmul.f32 %v2970, %v2970
    %v3035 = vmul.f32 %v2971, %v2971
    %v3036 = vmul.f32 %v2972, %v2972
    %v3037 = vmul.f32 %v2973, %v2973
    %v3038 = vmul.f32 %v2974, %v2974
    %v3039 = vmul.f32 %v2975, %v2975
    %v3040 = vmul.f32 %v2976, %v2976
    %v3041 = vmul.f32 %v2977, %v2977
    %v3042 = vmul.f32 %v2978, %v2978
    %v3043 = vmul.f32 %v2979, %v2979
    %v3044 = vmul.f32 %v2980, %v2980
    %v3045 = vmul.f32 %v2981, %v2981
    %v3046 = vmul.f32 %v2982, %v2982
    %v3047 = vmul.f32 %v2983, %v2983
    %v3048 = vmul.f32 %v2984, %v2984
    %v3049 = vmul.f32 %v2985, %v2985
    %v3050 = vmul.f32 %v2986, %v2986
    %v3051 = vmul.f32 %v2987, %v2987
    %v3052 = vmul.f32 %v2988, %v2988
    %v3053 = vmul.f32 %v2989, %v2989
    %v3054 = vmul.f32 %v2990, %v2990
    %v3055 = vmul.f32 %v2991, %v2991
    %v3056 = vmul.f32 %v2992, %v2992
    %v3057 = vmul.f32 %v2993, %v2993
    %v3058 = vmul.f32 %v2994, %v2994
    %v3059 = vmul.f32 %v2995, %v2995
    %v3060 = vmul.f32 %v2996, %v2996
    %v3061 = vmul.f32 %v2997, %v2997
    %v3062 = vmul.f32 %v2998, %v2998
    %v3063 = vmul.f32 %v2999, %v2999
    %v3064 = vmul.f32 %v3000, %v3000
    %v3065 = vmul.f32 %v3001, %v3001
    %v3066 = vmul.f32 %v3002, %v3002
    %v3067 = vmul.f32 %v3003, %v3003
    %v3068 = vmul.f32 %v3004, %v3004
    %v3069 = vmul.f32 %v3005, %v3005
    %v3070 = vmul.f32 %v3006, %v3006
    %v3071 = vadd.f32 %v3007, 1e-09
    %v3072 = vadd.f32 %v3008, 1e-09
    %v3073 = vadd.f32 %v3009, 1e-09
    %v3074 = vadd.f32 %v3010, 1e-09
    %v3075 = vadd.f32 %v3011, 1e-09
    %v3076 = vadd.f32 %v3012, 1e-09
    %v3077 = vadd.f32 %v3013, 1e-09
    %v3078 = vadd.f32 %v3014, 1e-09
    %v3079 = vadd.f32 %v3015, 1e-09
    %v3080 = vadd.f32 %v3016, 1e-09
    %v3081 = vadd.f32 %v3017, 1e-09
    %v3082 = vadd.f32 %v3018, 1e-09
    %v3083 = vadd.f32 %v3019, 1e-09
    %v3084 = vadd.f32 %v3020, 1e-09
    %v3085 = vadd.f32 %v3021, 1e-09
    %v3086 = vadd.f32 %v3022, 1e-09
    %v3087 = vadd.f32 %v3023, 1e-09
    %v3088 = vadd.f32 %v3024, 1e-09
    %v3089 = vadd.f32 %v3025, 1e-09
    %v3090 = vadd.f32 %v3026, 1e-09
    %v3091 = vadd.f32 %v3027, 1e-09
    %v3092 = vadd.f32 %v3028, 1e-09
    %v3093 = vadd.f32 %v3029, 1e-09
    %v3094 = vadd.f32 %v3030, 1e-09
    %v3095 = vadd.f32 %v3031, 1e-09
    %v3096 = vadd.f32 %v3032, 1e-09
    %v3097 = vadd.f32 %v3033, 1e-09
    %v3098 = vadd.f32 %v3034, 1e-09
    %v3099 = vadd.f32 %v3035, 1e-09
    %v3100 = vadd.f32 %v3036, 1e-09
    %v3101 = vadd.f32 %v3037, 1e-09
    %v3102 = vadd.f32 %v3038, 1e-09
    %v3103 = vadd.f32 %v3039, 1e-09
    %v3104 = vadd.f32 %v3040, 1e-09
    %v3105 = vadd.f32 %v3041, 1e-09
    %v3106 = vadd.f32 %v3042, 1e-09
    %v3107 = vadd.f32 %v3043, 1e-09
    %v3108 = vadd.f32 %v3044, 1e-09
    %v3109 = vadd.f32 %v3045, 1e-09
    %v3110 = vadd.f32 %v3046, 1e-09
    %v3111 = vadd.f32 %v3047, 1e-09
    %v3112 = vadd.f32 %v3048, 1e-09
    %v3113 = vadd.f32 %v3049, 1e-09
    %v3114 = vadd.f32 %v3050, 1e-09
    %v3115 = vadd.f32 %v3051, 1e-09
    %v3116 = vadd.f32 %v3052, 1e-09
    %v3117 = vadd.f32 %v3053, 1e-09
    %v3118 = vadd.f32 %v3054, 1e-09
    %v3119 = vadd.f32 %v3055, 1e-09
    %v3120 = vadd.f32 %v3056, 1e-09
    %v3121 = vadd.f32 %v3057, 1e-09
    %v3122 = vadd.f32 %v3058, 1e-09
    %v3123 = vadd.f32 %v3059, 1e-09
    %v3124 = vadd.f32 %v3060, 1e-09
    %v3125 = vadd.f32 %v3061, 1e-09
    %v3126 = vadd.f32 %v3062, 1e-09
    %v3127 = vadd.f32 %v3063, 1e-09
    %v3128 = vadd.f32 %v3064, 1e-09
    %v3129 = vadd.f32 %v3065, 1e-09
    %v3130 = vadd.f32 %v3066, 1e-09
    %v3131 = vadd.f32 %v3067, 1e-09
    %v3132 = vadd.f32 %v3068, 1e-09
    %v3133 = vadd.f32 %v3069, 1e-09
    %v3134 = vadd.f32 %v3070, 1e-09
    %v3135 = vrsqrt.pop %v3071
    %v3136 = vmul.f32 %v3135, %v3071
    %v3137 = vmul.f32 %v3136, %v3135
    %v3138 = vmul.f32 0.5, %v3137
    %v3139 = vsub.f32 1.5, %v3138
    %v3140 = vmul.f32 %v3135, %v3139
    %v3141 = vmul.f32 %v3071, %v3140
    %vm3142 = vcmp.eq.f32.partialorder %v3071, inf
    %v3143 = vsel %vm3142, %v3071, %v3141
    %vm3144 = vcmp.eq.f32.partialorder %v3071, 0.0
    %v3145 = vand.u32 %v3071, 2147483648
    %v3146 = vsel %vm3144, %v3145, %v3143
    %v3147 = vrsqrt.pop %v3072
    %v3148 = vmul.f32 %v3147, %v3072
    %v3149 = vmul.f32 %v3148, %v3147
    %v3150 = vmul.f32 0.5, %v3149
    %v3151 = vsub.f32 1.5, %v3150
    %v3152 = vmul.f32 %v3147, %v3151
    %v3153 = vmul.f32 %v3072, %v3152
    %vm3154 = vcmp.eq.f32.partialorder %v3072, inf
    %v3155 = vsel %vm3154, %v3072, %v3153
    %vm3156 = vcmp.eq.f32.partialorder %v3072, 0.0
    %v3157 = vand.u32 %v3072, 2147483648
    %v3158 = vsel %vm3156, %v3157, %v3155
    %v3159 = vrsqrt.pop %v3073
    %v3160 = vmul.f32 %v3159, %v3073
    %v3161 = vmul.f32 %v3160, %v3159
    %v3162 = vmul.f32 0.5, %v3161
    %v3163 = vsub.f32 1.5, %v3162
    %v3164 = vmul.f32 %v3159, %v3163
    %v3165 = vmul.f32 %v3073, %v3164
    %vm3166 = vcmp.eq.f32.partialorder %v3073, inf
    %v3167 = vsel %vm3166, %v3073, %v3165
    %vm3168 = vcmp.eq.f32.partialorder %v3073, 0.0
    %v3169 = vand.u32 %v3073, 2147483648
    %v3170 = vsel %vm3168, %v3169, %v3167
    %v3171 = vrsqrt.pop %v3074
    %v3172 = vmul.f32 %v3171, %v3074
    %v3173 = vmul.f32 %v3172, %v3171
    %v3174 = vmul.f32 0.5, %v3173
    %v3175 = vsub.f32 1.5, %v3174
    %v3176 = vmul.f32 %v3171, %v3175
    %v3177 = vmul.f32 %v3074, %v3176
    %vm3178 = vcmp.eq.f32.partialorder %v3074, inf
    %v3179 = vsel %vm3178, %v3074, %v3177
    %vm3180 = vcmp.eq.f32.partialorder %v3074, 0.0
    %v3181 = vand.u32 %v3074, 2147483648
    %v3182 = vsel %vm3180, %v3181, %v3179
    %v3183 = vrsqrt.pop %v3075
    %v3184 = vmul.f32 %v3183, %v3075
    %v3185 = vmul.f32 %v3184, %v3183
    %v3186 = vmul.f32 0.5, %v3185
    %v3187 = vsub.f32 1.5, %v3186
    %v3188 = vmul.f32 %v3183, %v3187
    %v3189 = vmul.f32 %v3075, %v3188
    %vm3190 = vcmp.eq.f32.partialorder %v3075, inf
    %v3191 = vsel %vm3190, %v3075, %v3189
    %vm3192 = vcmp.eq.f32.partialorder %v3075, 0.0
    %v3193 = vand.u32 %v3075, 2147483648
    %v3194 = vsel %vm3192, %v3193, %v3191
    %v3195 = vrsqrt.pop %v3076
    %v3196 = vmul.f32 %v3195, %v3076
    %v3197 = vmul.f32 %v3196, %v3195
    %v3198 = vmul.f32 0.5, %v3197
    %v3199 = vsub.f32 1.5, %v3198
    %v3200 = vmul.f32 %v3195, %v3199
    %v3201 = vmul.f32 %v3076, %v3200
    %vm3202 = vcmp.eq.f32.partialorder %v3076, inf
    %v3203 = vsel %vm3202, %v3076, %v3201
    %vm3204 = vcmp.eq.f32.partialorder %v3076, 0.0
    %v3205 = vand.u32 %v3076, 2147483648
    %v3206 = vsel %vm3204, %v3205, %v3203
    %v3207 = vrsqrt.pop %v3077
    %v3208 = vmul.f32 %v3207, %v3077
    %v3209 = vmul.f32 %v3208, %v3207
    %v3210 = vmul.f32 0.5, %v3209
    %v3211 = vsub.f32 1.5, %v3210
    %v3212 = vmul.f32 %v3207, %v3211
    %v3213 = vmul.f32 %v3077, %v3212
    %vm3214 = vcmp.eq.f32.partialorder %v3077, inf
    %v3215 = vsel %vm3214, %v3077, %v3213
    %vm3216 = vcmp.eq.f32.partialorder %v3077, 0.0
    %v3217 = vand.u32 %v3077, 2147483648
    %v3218 = vsel %vm3216, %v3217, %v3215
    %v3219 = vrsqrt.pop %v3078
    %v3220 = vmul.f32 %v3219, %v3078
    %v3221 = vmul.f32 %v3220, %v3219
    %v3222 = vmul.f32 0.5, %v3221
    %v3223 = vsub.f32 1.5, %v3222
    %v3224 = vmul.f32 %v3219, %v3223
    %v3225 = vmul.f32 %v3078, %v3224
    %vm3226 = vcmp.eq.f32.partialorder %v3078, inf
    %v3227 = vsel %vm3226, %v3078, %v3225
    %vm3228 = vcmp.eq.f32.partialorder %v3078, 0.0
    %v3229 = vand.u32 %v3078, 2147483648
    %v3230 = vsel %vm3228, %v3229, %v3227
    %v3231 = vrsqrt.pop %v3079
    %v3232 = vmul.f32 %v3231, %v3079
    %v3233 = vmul.f32 %v3232, %v3231
    %v3234 = vmul.f32 0.5, %v3233
    %v3235 = vsub.f32 1.5, %v3234
    %v3236 = vmul.f32 %v3231, %v3235
    %v3237 = vmul.f32 %v3079, %v3236
    %vm3238 = vcmp.eq.f32.partialorder %v3079, inf
    %v3239 = vsel %vm3238, %v3079, %v3237
    %vm3240 = vcmp.eq.f32.partialorder %v3079, 0.0
    %v3241 = vand.u32 %v3079, 2147483648
    %v3242 = vsel %vm3240, %v3241, %v3239
    %v3243 = vrsqrt.pop %v3080
    %v3244 = vmul.f32 %v3243, %v3080
    %v3245 = vmul.f32 %v3244, %v3243
    %v3246 = vmul.f32 0.5, %v3245
    %v3247 = vsub.f32 1.5, %v3246
    %v3248 = vmul.f32 %v3243, %v3247
    %v3249 = vmul.f32 %v3080, %v3248
    %vm3250 = vcmp.eq.f32.partialorder %v3080, inf
    %v3251 = vsel %vm3250, %v3080, %v3249
    %vm3252 = vcmp.eq.f32.partialorder %v3080, 0.0
    %v3253 = vand.u32 %v3080, 2147483648
    %v3254 = vsel %vm3252, %v3253, %v3251
    %v3255 = vrsqrt.pop %v3081
    %v3256 = vmul.f32 %v3255, %v3081
    %v3257 = vmul.f32 %v3256, %v3255
    %v3258 = vmul.f32 0.5, %v3257
    %v3259 = vsub.f32 1.5, %v3258
    %v3260 = vmul.f32 %v3255, %v3259
    %v3261 = vmul.f32 %v3081, %v3260
    %vm3262 = vcmp.eq.f32.partialorder %v3081, inf
    %v3263 = vsel %vm3262, %v3081, %v3261
    %vm3264 = vcmp.eq.f32.partialorder %v3081, 0.0
    %v3265 = vand.u32 %v3081, 2147483648
    %v3266 = vsel %vm3264, %v3265, %v3263
    %v3267 = vrsqrt.pop %v3082
    %v3268 = vmul.f32 %v3267, %v3082
    %v3269 = vmul.f32 %v3268, %v3267
    %v3270 = vmul.f32 0.5, %v3269
    %v3271 = vsub.f32 1.5, %v3270
    %v3272 = vmul.f32 %v3267, %v3271
    %v3273 = vmul.f32 %v3082, %v3272
    %vm3274 = vcmp.eq.f32.partialorder %v3082, inf
    %v3275 = vsel %vm3274, %v3082, %v3273
    %vm3276 = vcmp.eq.f32.partialorder %v3082, 0.0
    %v3277 = vand.u32 %v3082, 2147483648
    %v3278 = vsel %vm3276, %v3277, %v3275
    %v3279 = vrsqrt.pop %v3083
    %v3280 = vmul.f32 %v3279, %v3083
    %v3281 = vmul.f32 %v3280, %v3279
    %v3282 = vmul.f32 0.5, %v3281
    %v3283 = vsub.f32 1.5, %v3282
    %v3284 = vmul.f32 %v3279, %v3283
    %v3285 = vmul.f32 %v3083, %v3284
    %vm3286 = vcmp.eq.f32.partialorder %v3083, inf
    %v3287 = vsel %vm3286, %v3083, %v3285
    %vm3288 = vcmp.eq.f32.partialorder %v3083, 0.0
    %v3289 = vand.u32 %v3083, 2147483648
    %v3290 = vsel %vm3288, %v3289, %v3287
    %v3291 = vrsqrt.pop %v3084
    %v3292 = vmul.f32 %v3291, %v3084
    %v3293 = vmul.f32 %v3292, %v3291
    %v3294 = vmul.f32 0.5, %v3293
    %v3295 = vsub.f32 1.5, %v3294
    %v3296 = vmul.f32 %v3291, %v3295
    %v3297 = vmul.f32 %v3084, %v3296
    %vm3298 = vcmp.eq.f32.partialorder %v3084, inf
    %v3299 = vsel %vm3298, %v3084, %v3297
    %vm3300 = vcmp.eq.f32.partialorder %v3084, 0.0
    %v3301 = vand.u32 %v3084, 2147483648
    %v3302 = vsel %vm3300, %v3301, %v3299
    %v3303 = vrsqrt.pop %v3085
    %v3304 = vmul.f32 %v3303, %v3085
    %v3305 = vmul.f32 %v3304, %v3303
    %v3306 = vmul.f32 0.5, %v3305
    %v3307 = vsub.f32 1.5, %v3306
    %v3308 = vmul.f32 %v3303, %v3307
    %v3309 = vmul.f32 %v3085, %v3308
    %vm3310 = vcmp.eq.f32.partialorder %v3085, inf
    %v3311 = vsel %vm3310, %v3085, %v3309
    %vm3312 = vcmp.eq.f32.partialorder %v3085, 0.0
    %v3313 = vand.u32 %v3085, 2147483648
    %v3314 = vsel %vm3312, %v3313, %v3311
    %v3315 = vrsqrt.pop %v3086
    %v3316 = vmul.f32 %v3315, %v3086
    %v3317 = vmul.f32 %v3316, %v3315
    %v3318 = vmul.f32 0.5, %v3317
    %v3319 = vsub.f32 1.5, %v3318
    %v3320 = vmul.f32 %v3315, %v3319
    %v3321 = vmul.f32 %v3086, %v3320
    %vm3322 = vcmp.eq.f32.partialorder %v3086, inf
    %v3323 = vsel %vm3322, %v3086, %v3321
    %vm3324 = vcmp.eq.f32.partialorder %v3086, 0.0
    %v3325 = vand.u32 %v3086, 2147483648
    %v3326 = vsel %vm3324, %v3325, %v3323
    %v3327 = vrsqrt.pop %v3087
    %v3328 = vmul.f32 %v3327, %v3087
    %v3329 = vmul.f32 %v3328, %v3327
    %v3330 = vmul.f32 0.5, %v3329
    %v3331 = vsub.f32 1.5, %v3330
    %v3332 = vmul.f32 %v3327, %v3331
    %v3333 = vmul.f32 %v3087, %v3332
    %vm3334 = vcmp.eq.f32.partialorder %v3087, inf
    %v3335 = vsel %vm3334, %v3087, %v3333
    %vm3336 = vcmp.eq.f32.partialorder %v3087, 0.0
    %v3337 = vand.u32 %v3087, 2147483648
    %v3338 = vsel %vm3336, %v3337, %v3335
    %v3339 = vrsqrt.pop %v3088
    %v3340 = vmul.f32 %v3339, %v3088
    %v3341 = vmul.f32 %v3340, %v3339
    %v3342 = vmul.f32 0.5, %v3341
    %v3343 = vsub.f32 1.5, %v3342
    %v3344 = vmul.f32 %v3339, %v3343
    %v3345 = vmul.f32 %v3088, %v3344
    %vm3346 = vcmp.eq.f32.partialorder %v3088, inf
    %v3347 = vsel %vm3346, %v3088, %v3345
    %vm3348 = vcmp.eq.f32.partialorder %v3088, 0.0
    %v3349 = vand.u32 %v3088, 2147483648
    %v3350 = vsel %vm3348, %v3349, %v3347
    %v3351 = vrsqrt.pop %v3089
    %v3352 = vmul.f32 %v3351, %v3089
    %v3353 = vmul.f32 %v3352, %v3351
    %v3354 = vmul.f32 0.5, %v3353
    %v3355 = vsub.f32 1.5, %v3354
    %v3356 = vmul.f32 %v3351, %v3355
    %v3357 = vmul.f32 %v3089, %v3356
    %vm3358 = vcmp.eq.f32.partialorder %v3089, inf
    %v3359 = vsel %vm3358, %v3089, %v3357
    %vm3360 = vcmp.eq.f32.partialorder %v3089, 0.0
    %v3361 = vand.u32 %v3089, 2147483648
    %v3362 = vsel %vm3360, %v3361, %v3359
    %v3363 = vrsqrt.pop %v3090
    %v3364 = vmul.f32 %v3363, %v3090
    %v3365 = vmul.f32 %v3364, %v3363
    %v3366 = vmul.f32 0.5, %v3365
    %v3367 = vsub.f32 1.5, %v3366
    %v3368 = vmul.f32 %v3363, %v3367
    %v3369 = vmul.f32 %v3090, %v3368
    %vm3370 = vcmp.eq.f32.partialorder %v3090, inf
    %v3371 = vsel %vm3370, %v3090, %v3369
    %vm3372 = vcmp.eq.f32.partialorder %v3090, 0.0
    %v3373 = vand.u32 %v3090, 2147483648
    %v3374 = vsel %vm3372, %v3373, %v3371
    %v3375 = vrsqrt.pop %v3091
    %v3376 = vmul.f32 %v3375, %v3091
    %v3377 = vmul.f32 %v3376, %v3375
    %v3378 = vmul.f32 0.5, %v3377
    %v3379 = vsub.f32 1.5, %v3378
    %v3380 = vmul.f32 %v3375, %v3379
    %v3381 = vmul.f32 %v3091, %v3380
    %vm3382 = vcmp.eq.f32.partialorder %v3091, inf
    %v3383 = vsel %vm3382, %v3091, %v3381
    %vm3384 = vcmp.eq.f32.partialorder %v3091, 0.0
    %v3385 = vand.u32 %v3091, 2147483648
    %v3386 = vsel %vm3384, %v3385, %v3383
    %v3387 = vrsqrt.pop %v3092
    %v3388 = vmul.f32 %v3387, %v3092
    %v3389 = vmul.f32 %v3388, %v3387
    %v3390 = vmul.f32 0.5, %v3389
    %v3391 = vsub.f32 1.5, %v3390
    %v3392 = vmul.f32 %v3387, %v3391
    %v3393 = vmul.f32 %v3092, %v3392
    %vm3394 = vcmp.eq.f32.partialorder %v3092, inf
    %v3395 = vsel %vm3394, %v3092, %v3393
    %vm3396 = vcmp.eq.f32.partialorder %v3092, 0.0
    %v3397 = vand.u32 %v3092, 2147483648
    %v3398 = vsel %vm3396, %v3397, %v3395
    %v3399 = vrsqrt.pop %v3093
    %v3400 = vmul.f32 %v3399, %v3093
    %v3401 = vmul.f32 %v3400, %v3399
    %v3402 = vmul.f32 0.5, %v3401
    %v3403 = vsub.f32 1.5, %v3402
    %v3404 = vmul.f32 %v3399, %v3403
    %v3405 = vmul.f32 %v3093, %v3404
    %vm3406 = vcmp.eq.f32.partialorder %v3093, inf
    %v3407 = vsel %vm3406, %v3093, %v3405
    %vm3408 = vcmp.eq.f32.partialorder %v3093, 0.0
    %v3409 = vand.u32 %v3093, 2147483648
    %v3410 = vsel %vm3408, %v3409, %v3407
    %v3411 = vrsqrt.pop %v3094
    %v3412 = vmul.f32 %v3411, %v3094
    %v3413 = vmul.f32 %v3412, %v3411
    %v3414 = vmul.f32 0.5, %v3413
    %v3415 = vsub.f32 1.5, %v3414
    %v3416 = vmul.f32 %v3411, %v3415
    %v3417 = vmul.f32 %v3094, %v3416
    %vm3418 = vcmp.eq.f32.partialorder %v3094, inf
    %v3419 = vsel %vm3418, %v3094, %v3417
    %vm3420 = vcmp.eq.f32.partialorder %v3094, 0.0
    %v3421 = vand.u32 %v3094, 2147483648
    %v3422 = vsel %vm3420, %v3421, %v3419
    %v3423 = vrsqrt.pop %v3095
    %v3424 = vmul.f32 %v3423, %v3095
    %v3425 = vmul.f32 %v3424, %v3423
    %v3426 = vmul.f32 0.5, %v3425
    %v3427 = vsub.f32 1.5, %v3426
    %v3428 = vmul.f32 %v3423, %v3427
    %v3429 = vmul.f32 %v3095, %v3428
    %vm3430 = vcmp.eq.f32.partialorder %v3095, inf
    %v3431 = vsel %vm3430, %v3095, %v3429
    %vm3432 = vcmp.eq.f32.partialorder %v3095, 0.0
    %v3433 = vand.u32 %v3095, 2147483648
    %v3434 = vsel %vm3432, %v3433, %v3431
    %v3435 = vrsqrt.pop %v3096
    %v3436 = vmul.f32 %v3435, %v3096
    %v3437 = vmul.f32 %v3436, %v3435
    %v3438 = vmul.f32 0.5, %v3437
    %v3439 = vsub.f32 1.5, %v3438
    %v3440 = vmul.f32 %v3435, %v3439
    %v3441 = vmul.f32 %v3096, %v3440
    %vm3442 = vcmp.eq.f32.partialorder %v3096, inf
    %v3443 = vsel %vm3442, %v3096, %v3441
    %vm3444 = vcmp.eq.f32.partialorder %v3096, 0.0
    %v3445 = vand.u32 %v3096, 2147483648
    %v3446 = vsel %vm3444, %v3445, %v3443
    %v3447 = vrsqrt.pop %v3097
    %v3448 = vmul.f32 %v3447, %v3097
    %v3449 = vmul.f32 %v3448, %v3447
    %v3450 = vmul.f32 0.5, %v3449
    %v3451 = vsub.f32 1.5, %v3450
    %v3452 = vmul.f32 %v3447, %v3451
    %v3453 = vmul.f32 %v3097, %v3452
    %vm3454 = vcmp.eq.f32.partialorder %v3097, inf
    %v3455 = vsel %vm3454, %v3097, %v3453
    %vm3456 = vcmp.eq.f32.partialorder %v3097, 0.0
    %v3457 = vand.u32 %v3097, 2147483648
    %v3458 = vsel %vm3456, %v3457, %v3455
    %v3459 = vrsqrt.pop %v3098
    %v3460 = vmul.f32 %v3459, %v3098
    %v3461 = vmul.f32 %v3460, %v3459
    %v3462 = vmul.f32 0.5, %v3461
    %v3463 = vsub.f32 1.5, %v3462
    %v3464 = vmul.f32 %v3459, %v3463
    %v3465 = vmul.f32 %v3098, %v3464
    %vm3466 = vcmp.eq.f32.partialorder %v3098, inf
    %v3467 = vsel %vm3466, %v3098, %v3465
    %vm3468 = vcmp.eq.f32.partialorder %v3098, 0.0
    %v3469 = vand.u32 %v3098, 2147483648
    %v3470 = vsel %vm3468, %v3469, %v3467
    %v3471 = vrsqrt.pop %v3099
    %v3472 = vmul.f32 %v3471, %v3099
    %v3473 = vmul.f32 %v3472, %v3471
    %v3474 = vmul.f32 0.5, %v3473
    %v3475 = vsub.f32 1.5, %v3474
    %v3476 = vmul.f32 %v3471, %v3475
    %v3477 = vmul.f32 %v3099, %v3476
    %vm3478 = vcmp.eq.f32.partialorder %v3099, inf
    %v3479 = vsel %vm3478, %v3099, %v3477
    %vm3480 = vcmp.eq.f32.partialorder %v3099, 0.0
    %v3481 = vand.u32 %v3099, 2147483648
    %v3482 = vsel %vm3480, %v3481, %v3479
    %v3483 = vrsqrt.pop %v3100
    %v3484 = vmul.f32 %v3483, %v3100
    %v3485 = vmul.f32 %v3484, %v3483
    %v3486 = vmul.f32 0.5, %v3485
    %v3487 = vsub.f32 1.5, %v3486
    %v3488 = vmul.f32 %v3483, %v3487
    %v3489 = vmul.f32 %v3100, %v3488
    %vm3490 = vcmp.eq.f32.partialorder %v3100, inf
    %v3491 = vsel %vm3490, %v3100, %v3489
    %vm3492 = vcmp.eq.f32.partialorder %v3100, 0.0
    %v3493 = vand.u32 %v3100, 2147483648
    %v3494 = vsel %vm3492, %v3493, %v3491
    %v3495 = vrsqrt.pop %v3101
    %v3496 = vmul.f32 %v3495, %v3101
    %v3497 = vmul.f32 %v3496, %v3495
    %v3498 = vmul.f32 0.5, %v3497
    %v3499 = vsub.f32 1.5, %v3498
    %v3500 = vmul.f32 %v3495, %v3499
    %v3501 = vmul.f32 %v3101, %v3500
    %vm3502 = vcmp.eq.f32.partialorder %v3101, inf
    %v3503 = vsel %vm3502, %v3101, %v3501
    %vm3504 = vcmp.eq.f32.partialorder %v3101, 0.0
    %v3505 = vand.u32 %v3101, 2147483648
    %v3506 = vsel %vm3504, %v3505, %v3503
    %v3507 = vrsqrt.pop %v3102
    %v3508 = vmul.f32 %v3507, %v3102
    %v3509 = vmul.f32 %v3508, %v3507
    %v3510 = vmul.f32 0.5, %v3509
    %v3511 = vsub.f32 1.5, %v3510
    %v3512 = vmul.f32 %v3507, %v3511
    %v3513 = vmul.f32 %v3102, %v3512
    %vm3514 = vcmp.eq.f32.partialorder %v3102, inf
    %v3515 = vsel %vm3514, %v3102, %v3513
    %vm3516 = vcmp.eq.f32.partialorder %v3102, 0.0
    %v3517 = vand.u32 %v3102, 2147483648
    %v3518 = vsel %vm3516, %v3517, %v3515
    %v3519 = vrsqrt.pop %v3103
    %v3520 = vmul.f32 %v3519, %v3103
    %v3521 = vmul.f32 %v3520, %v3519
    %v3522 = vmul.f32 0.5, %v3521
    %v3523 = vsub.f32 1.5, %v3522
    %v3524 = vmul.f32 %v3519, %v3523
    %v3525 = vmul.f32 %v3103, %v3524
    %vm3526 = vcmp.eq.f32.partialorder %v3103, inf
    %v3527 = vsel %vm3526, %v3103, %v3525
    %vm3528 = vcmp.eq.f32.partialorder %v3103, 0.0
    %v3529 = vand.u32 %v3103, 2147483648
    %v3530 = vsel %vm3528, %v3529, %v3527
    %v3531 = vrsqrt.pop %v3104
    %v3532 = vmul.f32 %v3531, %v3104
    %v3533 = vmul.f32 %v3532, %v3531
    %v3534 = vmul.f32 0.5, %v3533
    %v3535 = vsub.f32 1.5, %v3534
    %v3536 = vmul.f32 %v3531, %v3535
    %v3537 = vmul.f32 %v3104, %v3536
    %vm3538 = vcmp.eq.f32.partialorder %v3104, inf
    %v3539 = vsel %vm3538, %v3104, %v3537
    %vm3540 = vcmp.eq.f32.partialorder %v3104, 0.0
    %v3541 = vand.u32 %v3104, 2147483648
    %v3542 = vsel %vm3540, %v3541, %v3539
    %v3543 = vrsqrt.pop %v3105
    %v3544 = vmul.f32 %v3543, %v3105
    %v3545 = vmul.f32 %v3544, %v3543
    %v3546 = vmul.f32 0.5, %v3545
    %v3547 = vsub.f32 1.5, %v3546
    %v3548 = vmul.f32 %v3543, %v3547
    %v3549 = vmul.f32 %v3105, %v3548
    %vm3550 = vcmp.eq.f32.partialorder %v3105, inf
    %v3551 = vsel %vm3550, %v3105, %v3549
    %vm3552 = vcmp.eq.f32.partialorder %v3105, 0.0
    %v3553 = vand.u32 %v3105, 2147483648
    %v3554 = vsel %vm3552, %v3553, %v3551
    %v3555 = vrsqrt.pop %v3106
    %v3556 = vmul.f32 %v3555, %v3106
    %v3557 = vmul.f32 %v3556, %v3555
    %v3558 = vmul.f32 0.5, %v3557
    %v3559 = vsub.f32 1.5, %v3558
    %v3560 = vmul.f32 %v3555, %v3559
    %v3561 = vmul.f32 %v3106, %v3560
    %vm3562 = vcmp.eq.f32.partialorder %v3106, inf
    %v3563 = vsel %vm3562, %v3106, %v3561
    %vm3564 = vcmp.eq.f32.partialorder %v3106, 0.0
    %v3565 = vand.u32 %v3106, 2147483648
    %v3566 = vsel %vm3564, %v3565, %v3563
    %v3567 = vrsqrt.pop %v3107
    %v3568 = vmul.f32 %v3567, %v3107
    %v3569 = vmul.f32 %v3568, %v3567
    %v3570 = vmul.f32 0.5, %v3569
    %v3571 = vsub.f32 1.5, %v3570
    %v3572 = vmul.f32 %v3567, %v3571
    %v3573 = vmul.f32 %v3107, %v3572
    %vm3574 = vcmp.eq.f32.partialorder %v3107, inf
    %v3575 = vsel %vm3574, %v3107, %v3573
    %vm3576 = vcmp.eq.f32.partialorder %v3107, 0.0
    %v3577 = vand.u32 %v3107, 2147483648
    %v3578 = vsel %vm3576, %v3577, %v3575
    %v3579 = vrsqrt.pop %v3108
    %v3580 = vmul.f32 %v3579, %v3108
    %v3581 = vmul.f32 %v3580, %v3579
    %v3582 = vmul.f32 0.5, %v3581
    %v3583 = vsub.f32 1.5, %v3582
    %v3584 = vmul.f32 %v3579, %v3583
    %v3585 = vmul.f32 %v3108, %v3584
    %vm3586 = vcmp.eq.f32.partialorder %v3108, inf
    %v3587 = vsel %vm3586, %v3108, %v3585
    %vm3588 = vcmp.eq.f32.partialorder %v3108, 0.0
    %v3589 = vand.u32 %v3108, 2147483648
    %v3590 = vsel %vm3588, %v3589, %v3587
    %v3591 = vrsqrt.pop %v3109
    %v3592 = vmul.f32 %v3591, %v3109
    %v3593 = vmul.f32 %v3592, %v3591
    %v3594 = vmul.f32 0.5, %v3593
    %v3595 = vsub.f32 1.5, %v3594
    %v3596 = vmul.f32 %v3591, %v3595
    %v3597 = vmul.f32 %v3109, %v3596
    %vm3598 = vcmp.eq.f32.partialorder %v3109, inf
    %v3599 = vsel %vm3598, %v3109, %v3597
    %vm3600 = vcmp.eq.f32.partialorder %v3109, 0.0
    %v3601 = vand.u32 %v3109, 2147483648
    %v3602 = vsel %vm3600, %v3601, %v3599
    %v3603 = vrsqrt.pop %v3110
    %v3604 = vmul.f32 %v3603, %v3110
    %v3605 = vmul.f32 %v3604, %v3603
    %v3606 = vmul.f32 0.5, %v3605
    %v3607 = vsub.f32 1.5, %v3606
    %v3608 = vmul.f32 %v3603, %v3607
    %v3609 = vmul.f32 %v3110, %v3608
    %vm3610 = vcmp.eq.f32.partialorder %v3110, inf
    %v3611 = vsel %vm3610, %v3110, %v3609
    %vm3612 = vcmp.eq.f32.partialorder %v3110, 0.0
    %v3613 = vand.u32 %v3110, 2147483648
    %v3614 = vsel %vm3612, %v3613, %v3611
    %v3615 = vrsqrt.pop %v3111
    %v3616 = vmul.f32 %v3615, %v3111
    %v3617 = vmul.f32 %v3616, %v3615
    %v3618 = vmul.f32 0.5, %v3617
    %v3619 = vsub.f32 1.5, %v3618
    %v3620 = vmul.f32 %v3615, %v3619
    %v3621 = vmul.f32 %v3111, %v3620
    %vm3622 = vcmp.eq.f32.partialorder %v3111, inf
    %v3623 = vsel %vm3622, %v3111, %v3621
    %vm3624 = vcmp.eq.f32.partialorder %v3111, 0.0
    %v3625 = vand.u32 %v3111, 2147483648
    %v3626 = vsel %vm3624, %v3625, %v3623
    %v3627 = vrsqrt.pop %v3112
    %v3628 = vmul.f32 %v3627, %v3112
    %v3629 = vmul.f32 %v3628, %v3627
    %v3630 = vmul.f32 0.5, %v3629
    %v3631 = vsub.f32 1.5, %v3630
    %v3632 = vmul.f32 %v3627, %v3631
    %v3633 = vmul.f32 %v3112, %v3632
    %vm3634 = vcmp.eq.f32.partialorder %v3112, inf
    %v3635 = vsel %vm3634, %v3112, %v3633
    %vm3636 = vcmp.eq.f32.partialorder %v3112, 0.0
    %v3637 = vand.u32 %v3112, 2147483648
    %v3638 = vsel %vm3636, %v3637, %v3635
    %v3639 = vrsqrt.pop %v3113
    %v3640 = vmul.f32 %v3639, %v3113
    %v3641 = vmul.f32 %v3640, %v3639
    %v3642 = vmul.f32 0.5, %v3641
    %v3643 = vsub.f32 1.5, %v3642
    %v3644 = vmul.f32 %v3639, %v3643
    %v3645 = vmul.f32 %v3113, %v3644
    %vm3646 = vcmp.eq.f32.partialorder %v3113, inf
    %v3647 = vsel %vm3646, %v3113, %v3645
    %vm3648 = vcmp.eq.f32.partialorder %v3113, 0.0
    %v3649 = vand.u32 %v3113, 2147483648
    %v3650 = vsel %vm3648, %v3649, %v3647
    %v3651 = vrsqrt.pop %v3114
    %v3652 = vmul.f32 %v3651, %v3114
    %v3653 = vmul.f32 %v3652, %v3651
    %v3654 = vmul.f32 0.5, %v3653
    %v3655 = vsub.f32 1.5, %v3654
    %v3656 = vmul.f32 %v3651, %v3655
    %v3657 = vmul.f32 %v3114, %v3656
    %vm3658 = vcmp.eq.f32.partialorder %v3114, inf
    %v3659 = vsel %vm3658, %v3114, %v3657
    %vm3660 = vcmp.eq.f32.partialorder %v3114, 0.0
    %v3661 = vand.u32 %v3114, 2147483648
    %v3662 = vsel %vm3660, %v3661, %v3659
    %v3663 = vrsqrt.pop %v3115
    %v3664 = vmul.f32 %v3663, %v3115
    %v3665 = vmul.f32 %v3664, %v3663
    %v3666 = vmul.f32 0.5, %v3665
    %v3667 = vsub.f32 1.5, %v3666
    %v3668 = vmul.f32 %v3663, %v3667
    %v3669 = vmul.f32 %v3115, %v3668
    %vm3670 = vcmp.eq.f32.partialorder %v3115, inf
    %v3671 = vsel %vm3670, %v3115, %v3669
    %vm3672 = vcmp.eq.f32.partialorder %v3115, 0.0
    %v3673 = vand.u32 %v3115, 2147483648
    %v3674 = vsel %vm3672, %v3673, %v3671
    %v3675 = vrsqrt.pop %v3116
    %v3676 = vmul.f32 %v3675, %v3116
    %v3677 = vmul.f32 %v3676, %v3675
    %v3678 = vmul.f32 0.5, %v3677
    %v3679 = vsub.f32 1.5, %v3678
    %v3680 = vmul.f32 %v3675, %v3679
    %v3681 = vmul.f32 %v3116, %v3680
    %vm3682 = vcmp.eq.f32.partialorder %v3116, inf
    %v3683 = vsel %vm3682, %v3116, %v3681
    %vm3684 = vcmp.eq.f32.partialorder %v3116, 0.0
    %v3685 = vand.u32 %v3116, 2147483648
    %v3686 = vsel %vm3684, %v3685, %v3683
    %v3687 = vrsqrt.pop %v3117
    %v3688 = vmul.f32 %v3687, %v3117
    %v3689 = vmul.f32 %v3688, %v3687
    %v3690 = vmul.f32 0.5, %v3689
    %v3691 = vsub.f32 1.5, %v3690
    %v3692 = vmul.f32 %v3687, %v3691
    %v3693 = vmul.f32 %v3117, %v3692
    %vm3694 = vcmp.eq.f32.partialorder %v3117, inf
    %v3695 = vsel %vm3694, %v3117, %v3693
    %vm3696 = vcmp.eq.f32.partialorder %v3117, 0.0
    %v3697 = vand.u32 %v3117, 2147483648
    %v3698 = vsel %vm3696, %v3697, %v3695
    %v3699 = vrsqrt.pop %v3118
    %v3700 = vmul.f32 %v3699, %v3118
    %v3701 = vmul.f32 %v3700, %v3699
    %v3702 = vmul.f32 0.5, %v3701
    %v3703 = vsub.f32 1.5, %v3702
    %v3704 = vmul.f32 %v3699, %v3703
    %v3705 = vmul.f32 %v3118, %v3704
    %vm3706 = vcmp.eq.f32.partialorder %v3118, inf
    %v3707 = vsel %vm3706, %v3118, %v3705
    %vm3708 = vcmp.eq.f32.partialorder %v3118, 0.0
    %v3709 = vand.u32 %v3118, 2147483648
    %v3710 = vsel %vm3708, %v3709, %v3707
    %v3711 = vrsqrt.pop %v3119
    %v3712 = vmul.f32 %v3711, %v3119
    %v3713 = vmul.f32 %v3712, %v3711
    %v3714 = vmul.f32 0.5, %v3713
    %v3715 = vsub.f32 1.5, %v3714
    %v3716 = vmul.f32 %v3711, %v3715
    %v3717 = vmul.f32 %v3119, %v3716
    %vm3718 = vcmp.eq.f32.partialorder %v3119, inf
    %v3719 = vsel %vm3718, %v3119, %v3717
    %vm3720 = vcmp.eq.f32.partialorder %v3119, 0.0
    %v3721 = vand.u32 %v3119, 2147483648
    %v3722 = vsel %vm3720, %v3721, %v3719
    %v3723 = vrsqrt.pop %v3120
    %v3724 = vmul.f32 %v3723, %v3120
    %v3725 = vmul.f32 %v3724, %v3723
    %v3726 = vmul.f32 0.5, %v3725
    %v3727 = vsub.f32 1.5, %v3726
    %v3728 = vmul.f32 %v3723, %v3727
    %v3729 = vmul.f32 %v3120, %v3728
    %vm3730 = vcmp.eq.f32.partialorder %v3120, inf
    %v3731 = vsel %vm3730, %v3120, %v3729
    %vm3732 = vcmp.eq.f32.partialorder %v3120, 0.0
    %v3733 = vand.u32 %v3120, 2147483648
    %v3734 = vsel %vm3732, %v3733, %v3731
    %v3735 = vrsqrt.pop %v3121
    %v3736 = vmul.f32 %v3735, %v3121
    %v3737 = vmul.f32 %v3736, %v3735
    %v3738 = vmul.f32 0.5, %v3737
    %v3739 = vsub.f32 1.5, %v3738
    %v3740 = vmul.f32 %v3735, %v3739
    %v3741 = vmul.f32 %v3121, %v3740
    %vm3742 = vcmp.eq.f32.partialorder %v3121, inf
    %v3743 = vsel %vm3742, %v3121, %v3741
    %vm3744 = vcmp.eq.f32.partialorder %v3121, 0.0
    %v3745 = vand.u32 %v3121, 2147483648
    %v3746 = vsel %vm3744, %v3745, %v3743
    %v3747 = vrsqrt.pop %v3122
    %v3748 = vmul.f32 %v3747, %v3122
    %v3749 = vmul.f32 %v3748, %v3747
    %v3750 = vmul.f32 0.5, %v3749
    %v3751 = vsub.f32 1.5, %v3750
    %v3752 = vmul.f32 %v3747, %v3751
    %v3753 = vmul.f32 %v3122, %v3752
    %vm3754 = vcmp.eq.f32.partialorder %v3122, inf
    %v3755 = vsel %vm3754, %v3122, %v3753
    %vm3756 = vcmp.eq.f32.partialorder %v3122, 0.0
    %v3757 = vand.u32 %v3122, 2147483648
    %v3758 = vsel %vm3756, %v3757, %v3755
    %v3759 = vrsqrt.pop %v3123
    %v3760 = vmul.f32 %v3759, %v3123
    %v3761 = vmul.f32 %v3760, %v3759
    %v3762 = vmul.f32 0.5, %v3761
    %v3763 = vsub.f32 1.5, %v3762
    %v3764 = vmul.f32 %v3759, %v3763
    %v3765 = vmul.f32 %v3123, %v3764
    %vm3766 = vcmp.eq.f32.partialorder %v3123, inf
    %v3767 = vsel %vm3766, %v3123, %v3765
    %vm3768 = vcmp.eq.f32.partialorder %v3123, 0.0
    %v3769 = vand.u32 %v3123, 2147483648
    %v3770 = vsel %vm3768, %v3769, %v3767
    %v3771 = vrsqrt.pop %v3124
    %v3772 = vmul.f32 %v3771, %v3124
    %v3773 = vmul.f32 %v3772, %v3771
    %v3774 = vmul.f32 0.5, %v3773
    %v3775 = vsub.f32 1.5, %v3774
    %v3776 = vmul.f32 %v3771, %v3775
    %v3777 = vmul.f32 %v3124, %v3776
    %vm3778 = vcmp.eq.f32.partialorder %v3124, inf
    %v3779 = vsel %vm3778, %v3124, %v3777
    %vm3780 = vcmp.eq.f32.partialorder %v3124, 0.0
    %v3781 = vand.u32 %v3124, 2147483648
    %v3782 = vsel %vm3780, %v3781, %v3779
    %v3783 = vrsqrt.pop %v3125
    %v3784 = vmul.f32 %v3783, %v3125
    %v3785 = vmul.f32 %v3784, %v3783
    %v3786 = vmul.f32 0.5, %v3785
    %v3787 = vsub.f32 1.5, %v3786
    %v3788 = vmul.f32 %v3783, %v3787
    %v3789 = vmul.f32 %v3125, %v3788
    %vm3790 = vcmp.eq.f32.partialorder %v3125, inf
    %v3791 = vsel %vm3790, %v3125, %v3789
    %vm3792 = vcmp.eq.f32.partialorder %v3125, 0.0
    %v3793 = vand.u32 %v3125, 2147483648
    %v3794 = vsel %vm3792, %v3793, %v3791
    %v3795 = vrsqrt.pop %v3126
    %v3796 = vmul.f32 %v3795, %v3126
    %v3797 = vmul.f32 %v3796, %v3795
    %v3798 = vmul.f32 0.5, %v3797
    %v3799 = vsub.f32 1.5, %v3798
    %v3800 = vmul.f32 %v3795, %v3799
    %v3801 = vmul.f32 %v3126, %v3800
    %vm3802 = vcmp.eq.f32.partialorder %v3126, inf
    %v3803 = vsel %vm3802, %v3126, %v3801
    %vm3804 = vcmp.eq.f32.partialorder %v3126, 0.0
    %v3805 = vand.u32 %v3126, 2147483648
    %v3806 = vsel %vm3804, %v3805, %v3803
    %v3807 = vrsqrt.pop %v3127
    %v3808 = vmul.f32 %v3807, %v3127
    %v3809 = vmul.f32 %v3808, %v3807
    %v3810 = vmul.f32 0.5, %v3809
    %v3811 = vsub.f32 1.5, %v3810
    %v3812 = vmul.f32 %v3807, %v3811
    %v3813 = vmul.f32 %v3127, %v3812
    %vm3814 = vcmp.eq.f32.partialorder %v3127, inf
    %v3815 = vsel %vm3814, %v3127, %v3813
    %vm3816 = vcmp.eq.f32.partialorder %v3127, 0.0
    %v3817 = vand.u32 %v3127, 2147483648
    %v3818 = vsel %vm3816, %v3817, %v3815
    %v3819 = vrsqrt.pop %v3128
    %v3820 = vmul.f32 %v3819, %v3128
    %v3821 = vmul.f32 %v3820, %v3819
    %v3822 = vmul.f32 0.5, %v3821
    %v3823 = vsub.f32 1.5, %v3822
    %v3824 = vmul.f32 %v3819, %v3823
    %v3825 = vmul.f32 %v3128, %v3824
    %vm3826 = vcmp.eq.f32.partialorder %v3128, inf
    %v3827 = vsel %vm3826, %v3128, %v3825
    %vm3828 = vcmp.eq.f32.partialorder %v3128, 0.0
    %v3829 = vand.u32 %v3128, 2147483648
    %v3830 = vsel %vm3828, %v3829, %v3827
    %v3831 = vrsqrt.pop %v3129
    %v3832 = vmul.f32 %v3831, %v3129
    %v3833 = vmul.f32 %v3832, %v3831
    %v3834 = vmul.f32 0.5, %v3833
    %v3835 = vsub.f32 1.5, %v3834
    %v3836 = vmul.f32 %v3831, %v3835
    %v3837 = vmul.f32 %v3129, %v3836
    %vm3838 = vcmp.eq.f32.partialorder %v3129, inf
    %v3839 = vsel %vm3838, %v3129, %v3837
    %vm3840 = vcmp.eq.f32.partialorder %v3129, 0.0
    %v3841 = vand.u32 %v3129, 2147483648
    %v3842 = vsel %vm3840, %v3841, %v3839
    %v3843 = vrsqrt.pop %v3130
    %v3844 = vmul.f32 %v3843, %v3130
    %v3845 = vmul.f32 %v3844, %v3843
    %v3846 = vmul.f32 0.5, %v3845
    %v3847 = vsub.f32 1.5, %v3846
    %v3848 = vmul.f32 %v3843, %v3847
    %v3849 = vmul.f32 %v3130, %v3848
    %vm3850 = vcmp.eq.f32.partialorder %v3130, inf
    %v3851 = vsel %vm3850, %v3130, %v3849
    %vm3852 = vcmp.eq.f32.partialorder %v3130, 0.0
    %v3853 = vand.u32 %v3130, 2147483648
    %v3854 = vsel %vm3852, %v3853, %v3851
    %v3855 = vrsqrt.pop %v3131
    %v3856 = vmul.f32 %v3855, %v3131
    %v3857 = vmul.f32 %v3856, %v3855
    %v3858 = vmul.f32 0.5, %v3857
    %v3859 = vsub.f32 1.5, %v3858
    %v3860 = vmul.f32 %v3855, %v3859
    %v3861 = vmul.f32 %v3131, %v3860
    %vm3862 = vcmp.eq.f32.partialorder %v3131, inf
    %v3863 = vsel %vm3862, %v3131, %v3861
    %vm3864 = vcmp.eq.f32.partialorder %v3131, 0.0
    %v3865 = vand.u32 %v3131, 2147483648
    %v3866 = vsel %vm3864, %v3865, %v3863
    %v3867 = vrsqrt.pop %v3132
    %v3868 = vmul.f32 %v3867, %v3132
    %v3869 = vmul.f32 %v3868, %v3867
    %v3870 = vmul.f32 0.5, %v3869
    %v3871 = vsub.f32 1.5, %v3870
    %v3872 = vmul.f32 %v3867, %v3871
    %v3873 = vmul.f32 %v3132, %v3872
    %vm3874 = vcmp.eq.f32.partialorder %v3132, inf
    %v3875 = vsel %vm3874, %v3132, %v3873
    %vm3876 = vcmp.eq.f32.partialorder %v3132, 0.0
    %v3877 = vand.u32 %v3132, 2147483648
    %v3878 = vsel %vm3876, %v3877, %v3875
    %v3879 = vrsqrt.pop %v3133
    %v3880 = vmul.f32 %v3879, %v3133
    %v3881 = vmul.f32 %v3880, %v3879
    %v3882 = vmul.f32 0.5, %v3881
    %v3883 = vsub.f32 1.5, %v3882
    %v3884 = vmul.f32 %v3879, %v3883
    %v3885 = vmul.f32 %v3133, %v3884
    %vm3886 = vcmp.eq.f32.partialorder %v3133, inf
    %v3887 = vsel %vm3886, %v3133, %v3885
    %vm3888 = vcmp.eq.f32.partialorder %v3133, 0.0
    %v3889 = vand.u32 %v3133, 2147483648
    %v3890 = vsel %vm3888, %v3889, %v3887
    %v3891 = vrsqrt.pop %v3134
    %v3892 = vmul.f32 %v3891, %v3134
    %v3893 = vmul.f32 %v3892, %v3891
    %v3894 = vmul.f32 0.5, %v3893
    %v3895 = vsub.f32 1.5, %v3894
    %v3896 = vmul.f32 %v3891, %v3895
    %v3897 = vmul.f32 %v3134, %v3896
    %vm3898 = vcmp.eq.f32.partialorder %v3134, inf
    %v3899 = vsel %vm3898, %v3134, %v3897
    %vm3900 = vcmp.eq.f32.partialorder %v3134, 0.0
    %v3901 = vand.u32 %v3134, 2147483648
    %v3902 = vsel %vm3900, %v3901, %v3899
    %v3903 = vld [vmem:[#allocation13] sm:$0xff]
    %v3904 = vld [vmem:[#allocation13 + $0x8] sm:$0xff]
    %v3905 = vld [vmem:[#allocation13 + $0x10] sm:$0xff]
    %v3906 = vld [vmem:[#allocation13 + $0x18] sm:$0xff]
    %v3907 = vperm.slane %v164, 3
    %v3909 = vsel %vm223, %v3146, 0
    %v3912 = vsel %vm223, %v3158, 0
    %v3915 = vsel %vm223, %v3170, 0
    %v3918 = vsel %vm223, %v3182, 0
    %v3921 = vsel %vm223, %v3194, 0
    %v3924 = vsel %vm223, %v3206, 0
    %v3927 = vsel %vm223, %v3218, 0
    %v3930 = vsel %vm223, %v3230, 0
    %v3933 = vsel %vm223, %v3242, 0
    %v3936 = vsel %vm223, %v3254, 0
    %v3939 = vsel %vm223, %v3266, 0
    %v3942 = vsel %vm223, %v3278, 0
    %v3945 = vsel %vm223, %v3290, 0
    %v3948 = vsel %vm223, %v3302, 0
    %v3951 = vsel %vm223, %v3314, 0
    %v3954 = vsel %vm223, %v3326, 0
    %v3957 = vsel %vm223, %v3338, 0
    %v3960 = vsel %vm223, %v3350, 0
    %v3963 = vsel %vm223, %v3362, 0
    %v3966 = vsel %vm223, %v3374, 0
    %v3969 = vsel %vm223, %v3386, 0
    %v3972 = vsel %vm223, %v3398, 0
    %v3975 = vsel %vm223, %v3410, 0
    %v3978 = vsel %vm223, %v3422, 0
    %v3981 = vsel %vm223, %v3434, 0
    %v3984 = vsel %vm223, %v3446, 0
    %v3987 = vsel %vm223, %v3458, 0
    %v3990 = vsel %vm223, %v3470, 0
    %v3993 = vsel %vm223, %v3482, 0
    %v3996 = vsel %vm223, %v3494, 0
    %v3999 = vsel %vm223, %v3506, 0
    %v4002 = vsel %vm223, %v3518, 0
    %v4005 = vsel %vm223, %v3530, 0
    %v4008 = vsel %vm223, %v3542, 0
    %v4011 = vsel %vm223, %v3554, 0
    %v4014 = vsel %vm223, %v3566, 0
    %v4017 = vsel %vm223, %v3578, 0
    %v4020 = vsel %vm223, %v3590, 0
    %v4023 = vsel %vm223, %v3602, 0
    %v4026 = vsel %vm223, %v3614, 0
    %v4029 = vsel %vm223, %v3626, 0
    %v4032 = vsel %vm223, %v3638, 0
    %v4035 = vsel %vm223, %v3650, 0
    %v4038 = vsel %vm223, %v3662, 0
    %v4041 = vsel %vm223, %v3674, 0
    %v4044 = vsel %vm223, %v3686, 0
    %v4047 = vsel %vm223, %v3698, 0
    %v4050 = vsel %vm223, %v3710, 0
    %v4053 = vsel %vm223, %v3722, 0
    %v4056 = vsel %vm223, %v3734, 0
    %v4059 = vsel %vm223, %v3746, 0
    %v4062 = vsel %vm223, %v3758, 0
    %v4065 = vsel %vm223, %v3770, 0
    %v4068 = vsel %vm223, %v3782, 0
    %v4071 = vsel %vm223, %v3794, 0
    %v4074 = vsel %vm223, %v3806, 0
    %v4077 = vsel %vm223, %v3818, 0
    %v4080 = vsel %vm223, %v3830, 0
    %v4083 = vsel %vm223, %v3842, 0
    %v4086 = vsel %vm223, %v3854, 0
    %v4089 = vsel %vm223, %v3866, 0
    %v4092 = vsel %vm223, %v3878, 0
    %v4095 = vsel %vm223, %v3890, 0
    %v4098 = vsel %vm223, %v3902, 0
    %4100 = vmatpush.msra.mxu0 0.0
    %4101 = vmatpush.msra.mxu0 0.0
    %4102 = vmatpush.msra.mxu0 0.0
    %4103 = vmatpush.msra.mxu0 0.0
    %4104 = vmatpush.msra.mxu0 0.0
    %4105 = vmatpush.msra.mxu0 0.0
    %4106 = vmatpush.msra.mxu0 0.0
    %4107 = vmatpush.msra.mxu0 0.0
    %4108 = vmatpush.msra.mxu0 0.0
    %4109 = vmatpush.msra.mxu0 0.0
    %4110 = vmatpush.msra.mxu0 0.0
    %4111 = vmatpush.msra.mxu0 0.0
    %4112 = vmatpush.msra.mxu0 %v3906
    %4113 = vmatpush.msra.mxu0 %v3905
    %4114 = vmatpush.msra.mxu0 %v3904
    %4115 = vmatpush.msra.mxu0 %v3903
    %4116 = vmatmul.f32.gmra.mxu0 %v3909
    %v4117 = vpop.f32.mrf.mxu0
    %v4118 = vadd.f32 %v3907, %v4117
    %4119 = vmatmul.f32.gmra.mxu0 %v3912
    %v4120 = vpop.f32.mrf.mxu0
    %v4121 = vadd.f32 %v3907, %v4120
    %4122 = vmatmul.f32.gmra.mxu0 %v3915
    %v4123 = vpop.f32.mrf.mxu0
    %v4124 = vadd.f32 %v3907, %v4123
    %4125 = vmatmul.f32.gmra.mxu0 %v3918
    %v4126 = vpop.f32.mrf.mxu0
    %v4127 = vadd.f32 %v3907, %v4126
    %4128 = vmatmul.f32.gmra.mxu0 %v3921
    %v4129 = vpop.f32.mrf.mxu0
    %v4130 = vadd.f32 %v3907, %v4129
    %4131 = vmatmul.f32.gmra.mxu0 %v3924
    %v4132 = vpop.f32.mrf.mxu0
    %v4133 = vadd.f32 %v3907, %v4132
    %4134 = vmatmul.f32.gmra.mxu0 %v3927
    %v4135 = vpop.f32.mrf.mxu0
    %v4136 = vadd.f32 %v3907, %v4135
    %4137 = vmatmul.f32.gmra.mxu0 %v3930
    %v4138 = vpop.f32.mrf.mxu0
    %v4139 = vadd.f32 %v3907, %v4138
    %4140 = vmatmul.f32.gmra.mxu0 %v3933
    %v4141 = vpop.f32.mrf.mxu0
    %v4142 = vadd.f32 %v3907, %v4141
    %4143 = vmatmul.f32.gmra.mxu0 %v3936
    %v4144 = vpop.f32.mrf.mxu0
    %v4145 = vadd.f32 %v3907, %v4144
    %4146 = vmatmul.f32.gmra.mxu0 %v3939
    %v4147 = vpop.f32.mrf.mxu0
    %v4148 = vadd.f32 %v3907, %v4147
    %4149 = vmatmul.f32.gmra.mxu0 %v3942
    %v4150 = vpop.f32.mrf.mxu0
    %v4151 = vadd.f32 %v3907, %v4150
    %4152 = vmatmul.f32.gmra.mxu0 %v3945
    %v4153 = vpop.f32.mrf.mxu0
    %v4154 = vadd.f32 %v3907, %v4153
    %4155 = vmatmul.f32.gmra.mxu0 %v3948
    %v4156 = vpop.f32.mrf.mxu0
    %v4157 = vadd.f32 %v3907, %v4156
    %4158 = vmatmul.f32.gmra.mxu0 %v3951
    %v4159 = vpop.f32.mrf.mxu0
    %v4160 = vadd.f32 %v3907, %v4159
    %4161 = vmatmul.f32.gmra.mxu0 %v3954
    %v4162 = vpop.f32.mrf.mxu0
    %v4163 = vadd.f32 %v3907, %v4162
    %4164 = vmatmul.f32.gmra.mxu0 %v3957
    %v4165 = vpop.f32.mrf.mxu0
    %v4166 = vadd.f32 %v3907, %v4165
    %4167 = vmatmul.f32.gmra.mxu0 %v3960
    %v4168 = vpop.f32.mrf.mxu0
    %v4169 = vadd.f32 %v3907, %v4168
    %4170 = vmatmul.f32.gmra.mxu0 %v3963
    %v4171 = vpop.f32.mrf.mxu0
    %v4172 = vadd.f32 %v3907, %v4171
    %4173 = vmatmul.f32.gmra.mxu0 %v3966
    %v4174 = vpop.f32.mrf.mxu0
    %v4175 = vadd.f32 %v3907, %v4174
    %4176 = vmatmul.f32.gmra.mxu0 %v3969
    %v4177 = vpop.f32.mrf.mxu0
    %v4178 = vadd.f32 %v3907, %v4177
    %4179 = vmatmul.f32.gmra.mxu0 %v3972
    %v4180 = vpop.f32.mrf.mxu0
    %v4181 = vadd.f32 %v3907, %v4180
    %4182 = vmatmul.f32.gmra.mxu0 %v3975
    %v4183 = vpop.f32.mrf.mxu0
    %v4184 = vadd.f32 %v3907, %v4183
    %4185 = vmatmul.f32.gmra.mxu0 %v3978
    %v4186 = vpop.f32.mrf.mxu0
    %v4187 = vadd.f32 %v3907, %v4186
    %4188 = vmatmul.f32.gmra.mxu0 %v3981
    %v4189 = vpop.f32.mrf.mxu0
    %v4190 = vadd.f32 %v3907, %v4189
    %4191 = vmatmul.f32.gmra.mxu0 %v3984
    %v4192 = vpop.f32.mrf.mxu0
    %v4193 = vadd.f32 %v3907, %v4192
    %4194 = vmatmul.f32.gmra.mxu0 %v3987
    %v4195 = vpop.f32.mrf.mxu0
    %v4196 = vadd.f32 %v3907, %v4195
    %4197 = vmatmul.f32.gmra.mxu0 %v3990
    %v4198 = vpop.f32.mrf.mxu0
    %v4199 = vadd.f32 %v3907, %v4198
    %4200 = vmatmul.f32.gmra.mxu0 %v3993
    %v4201 = vpop.f32.mrf.mxu0
    %v4202 = vadd.f32 %v3907, %v4201
    %4203 = vmatmul.f32.gmra.mxu0 %v3996
    %v4204 = vpop.f32.mrf.mxu0
    %v4205 = vadd.f32 %v3907, %v4204
    %4206 = vmatmul.f32.gmra.mxu0 %v3999
    %v4207 = vpop.f32.mrf.mxu0
    %v4208 = vadd.f32 %v3907, %v4207
    %4209 = vmatmul.f32.gmra.mxu0 %v4002
    %v4210 = vpop.f32.mrf.mxu0
    %v4211 = vadd.f32 %v3907, %v4210
    %4212 = vmatmul.f32.gmra.mxu0 %v4005
    %v4213 = vpop.f32.mrf.mxu0
    %v4214 = vadd.f32 %v3907, %v4213
    %4215 = vmatmul.f32.gmra.mxu0 %v4008
    %v4216 = vpop.f32.mrf.mxu0
    %v4217 = vadd.f32 %v3907, %v4216
    %4218 = vmatmul.f32.gmra.mxu0 %v4011
    %v4219 = vpop.f32.mrf.mxu0
    %v4220 = vadd.f32 %v3907, %v4219
    %4221 = vmatmul.f32.gmra.mxu0 %v4014
    %v4222 = vpop.f32.mrf.mxu0
    %v4223 = vadd.f32 %v3907, %v4222
    %4224 = vmatmul.f32.gmra.mxu0 %v4017
    %v4225 = vpop.f32.mrf.mxu0
    %v4226 = vadd.f32 %v3907, %v4225
    %4227 = vmatmul.f32.gmra.mxu0 %v4020
    %v4228 = vpop.f32.mrf.mxu0
    %v4229 = vadd.f32 %v3907, %v4228
    %4230 = vmatmul.f32.gmra.mxu0 %v4023
    %v4231 = vpop.f32.mrf.mxu0
    %v4232 = vadd.f32 %v3907, %v4231
    %4233 = vmatmul.f32.gmra.mxu0 %v4026
    %v4234 = vpop.f32.mrf.mxu0
    %v4235 = vadd.f32 %v3907, %v4234
    %4236 = vmatmul.f32.gmra.mxu0 %v4029
    %v4237 = vpop.f32.mrf.mxu0
    %v4238 = vadd.f32 %v3907, %v4237
    %4239 = vmatmul.f32.gmra.mxu0 %v4032
    %v4240 = vpop.f32.mrf.mxu0
    %v4241 = vadd.f32 %v3907, %v4240
    %4242 = vmatmul.f32.gmra.mxu0 %v4035
    %v4243 = vpop.f32.mrf.mxu0
    %v4244 = vadd.f32 %v3907, %v4243
    %4245 = vmatmul.f32.gmra.mxu0 %v4038
    %v4246 = vpop.f32.mrf.mxu0
    %v4247 = vadd.f32 %v3907, %v4246
    %4248 = vmatmul.f32.gmra.mxu0 %v4041
    %v4249 = vpop.f32.mrf.mxu0
    %v4250 = vadd.f32 %v3907, %v4249
    %4251 = vmatmul.f32.gmra.mxu0 %v4044
    %v4252 = vpop.f32.mrf.mxu0
    %v4253 = vadd.f32 %v3907, %v4252
    %4254 = vmatmul.f32.gmra.mxu0 %v4047
    %v4255 = vpop.f32.mrf.mxu0
    %v4256 = vadd.f32 %v3907, %v4255
    %4257 = vmatmul.f32.gmra.mxu0 %v4050
    %v4258 = vpop.f32.mrf.mxu0
    %v4259 = vadd.f32 %v3907, %v4258
    %4260 = vmatmul.f32.gmra.mxu0 %v4053
    %v4261 = vpop.f32.mrf.mxu0
    %v4262 = vadd.f32 %v3907, %v4261
    %4263 = vmatmul.f32.gmra.mxu0 %v4056
    %v4264 = vpop.f32.mrf.mxu0
    %v4265 = vadd.f32 %v3907, %v4264
    %4266 = vmatmul.f32.gmra.mxu0 %v4059
    %v4267 = vpop.f32.mrf.mxu0
    %v4268 = vadd.f32 %v3907, %v4267
    %4269 = vmatmul.f32.gmra.mxu0 %v4062
    %v4270 = vpop.f32.mrf.mxu0
    %v4271 = vadd.f32 %v3907, %v4270
    %4272 = vmatmul.f32.gmra.mxu0 %v4065
    %v4273 = vpop.f32.mrf.mxu0
    %v4274 = vadd.f32 %v3907, %v4273
    %4275 = vmatmul.f32.gmra.mxu0 %v4068
    %v4276 = vpop.f32.mrf.mxu0
    %v4277 = vadd.f32 %v3907, %v4276
    %4278 = vmatmul.f32.gmra.mxu0 %v4071
    %v4279 = vpop.f32.mrf.mxu0
    %v4280 = vadd.f32 %v3907, %v4279
    %4281 = vmatmul.f32.gmra.mxu0 %v4074
    %v4282 = vpop.f32.mrf.mxu0
    %v4283 = vadd.f32 %v3907, %v4282
    %4284 = vmatmul.f32.gmra.mxu0 %v4077
    %v4285 = vpop.f32.mrf.mxu0
    %v4286 = vadd.f32 %v3907, %v4285
    %4287 = vmatmul.f32.gmra.mxu0 %v4080
    %v4288 = vpop.f32.mrf.mxu0
    %v4289 = vadd.f32 %v3907, %v4288
    %4290 = vmatmul.f32.gmra.mxu0 %v4083
    %v4291 = vpop.f32.mrf.mxu0
    %v4292 = vadd.f32 %v3907, %v4291
    %4293 = vmatmul.f32.gmra.mxu0 %v4086
    %v4294 = vpop.f32.mrf.mxu0
    %v4295 = vadd.f32 %v3907, %v4294
    %4296 = vmatmul.f32.gmra.mxu0 %v4089
    %v4297 = vpop.f32.mrf.mxu0
    %v4298 = vadd.f32 %v3907, %v4297
    %4299 = vmatmul.f32.gmra.mxu0 %v4092
    %v4300 = vpop.f32.mrf.mxu0
    %v4301 = vadd.f32 %v3907, %v4300
    %4302 = vmatmul.f32.gmra.mxu0 %v4095
    %v4303 = vpop.f32.mrf.mxu0
    %v4304 = vadd.f32 %v3907, %v4303
    %4305 = vmatmul.f32.gmra.mxu0 %v4098
    %v4306 = vpop.f32.mrf.mxu0
    %v4307 = vadd.f32 %v3907, %v4306
    %4308 = vdwg.mxu0
    %v4309 = vmax.f32 %v4118, 0.0
    %v4310 = vmax.f32 %v4121, 0.0
    %v4311 = vmax.f32 %v4124, 0.0
    %v4312 = vmax.f32 %v4127, 0.0
    %v4313 = vmax.f32 %v4130, 0.0
    %v4314 = vmax.f32 %v4133, 0.0
    %v4315 = vmax.f32 %v4136, 0.0
    %v4316 = vmax.f32 %v4139, 0.0
    %v4317 = vmax.f32 %v4142, 0.0
    %v4318 = vmax.f32 %v4145, 0.0
    %v4319 = vmax.f32 %v4148, 0.0
    %v4320 = vmax.f32 %v4151, 0.0
    %v4321 = vmax.f32 %v4154, 0.0
    %v4322 = vmax.f32 %v4157, 0.0
    %v4323 = vmax.f32 %v4160, 0.0
    %v4324 = vmax.f32 %v4163, 0.0
    %v4325 = vmax.f32 %v4166, 0.0
    %v4326 = vmax.f32 %v4169, 0.0
    %v4327 = vmax.f32 %v4172, 0.0
    %v4328 = vmax.f32 %v4175, 0.0
    %v4329 = vmax.f32 %v4178, 0.0
    %v4330 = vmax.f32 %v4181, 0.0
    %v4331 = vmax.f32 %v4184, 0.0
    %v4332 = vmax.f32 %v4187, 0.0
    %v4333 = vmax.f32 %v4190, 0.0
    %v4334 = vmax.f32 %v4193, 0.0
    %v4335 = vmax.f32 %v4196, 0.0
    %v4336 = vmax.f32 %v4199, 0.0
    %v4337 = vmax.f32 %v4202, 0.0
    %v4338 = vmax.f32 %v4205, 0.0
    %v4339 = vmax.f32 %v4208, 0.0
    %v4340 = vmax.f32 %v4211, 0.0
    %v4341 = vmax.f32 %v4214, 0.0
    %v4342 = vmax.f32 %v4217, 0.0
    %v4343 = vmax.f32 %v4220, 0.0
    %v4344 = vmax.f32 %v4223, 0.0
    %v4345 = vmax.f32 %v4226, 0.0
    %v4346 = vmax.f32 %v4229, 0.0
    %v4347 = vmax.f32 %v4232, 0.0
    %v4348 = vmax.f32 %v4235, 0.0
    %v4349 = vmax.f32 %v4238, 0.0
    %v4350 = vmax.f32 %v4241, 0.0
    %v4351 = vmax.f32 %v4244, 0.0
    %v4352 = vmax.f32 %v4247, 0.0
    %v4353 = vmax.f32 %v4250, 0.0
    %v4354 = vmax.f32 %v4253, 0.0
    %v4355 = vmax.f32 %v4256, 0.0
    %v4356 = vmax.f32 %v4259, 0.0
    %v4357 = vmax.f32 %v4262, 0.0
    %v4358 = vmax.f32 %v4265, 0.0
    %v4359 = vmax.f32 %v4268, 0.0
    %v4360 = vmax.f32 %v4271, 0.0
    %v4361 = vmax.f32 %v4274, 0.0
    %v4362 = vmax.f32 %v4277, 0.0
    %v4363 = vmax.f32 %v4280, 0.0
    %v4364 = vmax.f32 %v4283, 0.0
    %v4365 = vmax.f32 %v4286, 0.0
    %v4366 = vmax.f32 %v4289, 0.0
    %v4367 = vmax.f32 %v4292, 0.0
    %v4368 = vmax.f32 %v4295, 0.0
    %v4369 = vmax.f32 %v4298, 0.0
    %v4370 = vmax.f32 %v4301, 0.0
    %v4371 = vmax.f32 %v4304, 0.0
    %v4372 = vmax.f32 %v4307, 0.0
    %v4373 = vperm.slane %v164, 4
    %v4374 = vmul.f32 %v4309, %v4373
    %v4375 = vmul.f32 %v4310, %v4373
    %v4376 = vmul.f32 %v4311, %v4373
    %v4377 = vmul.f32 %v4312, %v4373
    %v4378 = vmul.f32 %v4313, %v4373
    %v4379 = vmul.f32 %v4314, %v4373
    %v4380 = vmul.f32 %v4315, %v4373
    %v4381 = vmul.f32 %v4316, %v4373
    %v4382 = vmul.f32 %v4317, %v4373
    %v4383 = vmul.f32 %v4318, %v4373
    %v4384 = vmul.f32 %v4319, %v4373
    %v4385 = vmul.f32 %v4320, %v4373
    %v4386 = vmul.f32 %v4321, %v4373
    %v4387 = vmul.f32 %v4322, %v4373
    %v4388 = vmul.f32 %v4323, %v4373
    %v4389 = vmul.f32 %v4324, %v4373
    %v4390 = vmul.f32 %v4325, %v4373
    %v4391 = vmul.f32 %v4326, %v4373
    %v4392 = vmul.f32 %v4327, %v4373
    %v4393 = vmul.f32 %v4328, %v4373
    %v4394 = vmul.f32 %v4329, %v4373
    %v4395 = vmul.f32 %v4330, %v4373
    %v4396 = vmul.f32 %v4331, %v4373
    %v4397 = vmul.f32 %v4332, %v4373
    %v4398 = vmul.f32 %v4333, %v4373
    %v4399 = vmul.f32 %v4334, %v4373
    %v4400 = vmul.f32 %v4335, %v4373
    %v4401 = vmul.f32 %v4336, %v4373
    %v4402 = vmul.f32 %v4337, %v4373
    %v4403 = vmul.f32 %v4338, %v4373
    %v4404 = vmul.f32 %v4339, %v4373
    %v4405 = vmul.f32 %v4340, %v4373
    %v4406 = vmul.f32 %v4341, %v4373
    %v4407 = vmul.f32 %v4342, %v4373
    %v4408 = vmul.f32 %v4343, %v4373
    %v4409 = vmul.f32 %v4344, %v4373
    %v4410 = vmul.f32 %v4345, %v4373
    %v4411 = vmul.f32 %v4346, %v4373
    %v4412 = vmul.f32 %v4347, %v4373
    %v4413 = vmul.f32 %v4348, %v4373
    %v4414 = vmul.f32 %v4349, %v4373
    %v4415 = vmul.f32 %v4350, %v4373
    %v4416 = vmul.f32 %v4351, %v4373
    %v4417 = vmul.f32 %v4352, %v4373
    %v4418 = vmul.f32 %v4353, %v4373
    %v4419 = vmul.f32 %v4354, %v4373
    %v4420 = vmul.f32 %v4355, %v4373
    %v4421 = vmul.f32 %v4356, %v4373
    %v4422 = vmul.f32 %v4357, %v4373
    %v4423 = vmul.f32 %v4358, %v4373
    %v4424 = vmul.f32 %v4359, %v4373
    %v4425 = vmul.f32 %v4360, %v4373
    %v4426 = vmul.f32 %v4361, %v4373
    %v4427 = vmul.f32 %v4362, %v4373
    %v4428 = vmul.f32 %v4363, %v4373
    %v4429 = vmul.f32 %v4364, %v4373
    %v4430 = vmul.f32 %v4365, %v4373
    %v4431 = vmul.f32 %v4366, %v4373
    %v4432 = vmul.f32 %v4367, %v4373
    %v4433 = vmul.f32 %v4368, %v4373
    %v4434 = vmul.f32 %v4369, %v4373
    %v4435 = vmul.f32 %v4370, %v4373
    %v4436 = vmul.f32 %v4371, %v4373
    %v4437 = vmul.f32 %v4372, %v4373
    %v4438 = vsel %vm223, %v4374, 0.0
    %4439 = vadd.xlane.f32.xlu0 %v4438
    %v4440 = vpop.xlane.xlu0 %4439
    %v4441 = vsel %vm223, %v4375, 0.0
    %4442 = vadd.xlane.f32.xlu0 %v4441
    %v4443 = vpop.xlane.xlu0 %4442
    %v4444 = vsel %vm223, %v4376, 0.0
    %4445 = vadd.xlane.f32.xlu0 %v4444
    %v4446 = vpop.xlane.xlu0 %4445
    %v4447 = vsel %vm223, %v4377, 0.0
    %4448 = vadd.xlane.f32.xlu0 %v4447
    %v4449 = vpop.xlane.xlu0 %4448
    %v4450 = vsel %vm223, %v4378, 0.0
    %4451 = vadd.xlane.f32.xlu0 %v4450
    %v4452 = vpop.xlane.xlu0 %4451
    %v4453 = vsel %vm223, %v4379, 0.0
    %4454 = vadd.xlane.f32.xlu0 %v4453
    %v4455 = vpop.xlane.xlu0 %4454
    %v4456 = vsel %vm223, %v4380, 0.0
    %4457 = vadd.xlane.f32.xlu0 %v4456
    %v4458 = vpop.xlane.xlu0 %4457
    %v4459 = vsel %vm223, %v4381, 0.0
    %4460 = vadd.xlane.f32.xlu0 %v4459
    %v4461 = vpop.xlane.xlu0 %4460
    %v4462 = vsel %vm223, %v4382, 0.0
    %4463 = vadd.xlane.f32.xlu0 %v4462
    %v4464 = vpop.xlane.xlu0 %4463
    %v4465 = vsel %vm223, %v4383, 0.0
    %4466 = vadd.xlane.f32.xlu0 %v4465
    %v4467 = vpop.xlane.xlu0 %4466
    %v4468 = vsel %vm223, %v4384, 0.0
    %4469 = vadd.xlane.f32.xlu0 %v4468
    %v4470 = vpop.xlane.xlu0 %4469
    %v4471 = vsel %vm223, %v4385, 0.0
    %4472 = vadd.xlane.f32.xlu0 %v4471
    %v4473 = vpop.xlane.xlu0 %4472
    %v4474 = vsel %vm223, %v4386, 0.0
    %4475 = vadd.xlane.f32.xlu0 %v4474
    %v4476 = vpop.xlane.xlu0 %4475
    %v4477 = vsel %vm223, %v4387, 0.0
    %4478 = vadd.xlane.f32.xlu0 %v4477
    %v4479 = vpop.xlane.xlu0 %4478
    %v4480 = vsel %vm223, %v4388, 0.0
    %4481 = vadd.xlane.f32.xlu0 %v4480
    %v4482 = vpop.xlane.xlu0 %4481
    %v4483 = vsel %vm223, %v4389, 0.0
    %4484 = vadd.xlane.f32.xlu0 %v4483
    %v4485 = vpop.xlane.xlu0 %4484
    %v4486 = vsel %vm223, %v4390, 0.0
    %4487 = vadd.xlane.f32.xlu0 %v4486
    %v4488 = vpop.xlane.xlu0 %4487
    %v4489 = vsel %vm223, %v4391, 0.0
    %4490 = vadd.xlane.f32.xlu0 %v4489
    %v4491 = vpop.xlane.xlu0 %4490
    %v4492 = vsel %vm223, %v4392, 0.0
    %4493 = vadd.xlane.f32.xlu0 %v4492
    %v4494 = vpop.xlane.xlu0 %4493
    %v4495 = vsel %vm223, %v4393, 0.0
    %4496 = vadd.xlane.f32.xlu0 %v4495
    %v4497 = vpop.xlane.xlu0 %4496
    %v4498 = vsel %vm223, %v4394, 0.0
    %4499 = vadd.xlane.f32.xlu0 %v4498
    %v4500 = vpop.xlane.xlu0 %4499
    %v4501 = vsel %vm223, %v4395, 0.0
    %4502 = vadd.xlane.f32.xlu0 %v4501
    %v4503 = vpop.xlane.xlu0 %4502
    %v4504 = vsel %vm223, %v4396, 0.0
    %4505 = vadd.xlane.f32.xlu0 %v4504
    %v4506 = vpop.xlane.xlu0 %4505
    %v4507 = vsel %vm223, %v4397, 0.0
    %4508 = vadd.xlane.f32.xlu0 %v4507
    %v4509 = vpop.xlane.xlu0 %4508
    %v4510 = vsel %vm223, %v4398, 0.0
    %4511 = vadd.xlane.f32.xlu0 %v4510
    %v4512 = vpop.xlane.xlu0 %4511
    %v4513 = vsel %vm223, %v4399, 0.0
    %4514 = vadd.xlane.f32.xlu0 %v4513
    %v4515 = vpop.xlane.xlu0 %4514
    %v4516 = vsel %vm223, %v4400, 0.0
    %4517 = vadd.xlane.f32.xlu0 %v4516
    %v4518 = vpop.xlane.xlu0 %4517
    %v4519 = vsel %vm223, %v4401, 0.0
    %4520 = vadd.xlane.f32.xlu0 %v4519
    %v4521 = vpop.xlane.xlu0 %4520
    %v4522 = vsel %vm223, %v4402, 0.0
    %4523 = vadd.xlane.f32.xlu0 %v4522
    %v4524 = vpop.xlane.xlu0 %4523
    %v4525 = vsel %vm223, %v4403, 0.0
    %4526 = vadd.xlane.f32.xlu0 %v4525
    %v4527 = vpop.xlane.xlu0 %4526
    %v4528 = vsel %vm223, %v4404, 0.0
    %4529 = vadd.xlane.f32.xlu0 %v4528
    %v4530 = vpop.xlane.xlu0 %4529
    %v4531 = vsel %vm223, %v4405, 0.0
    %4532 = vadd.xlane.f32.xlu0 %v4531
    %v4533 = vpop.xlane.xlu0 %4532
    %v4534 = vsel %vm223, %v4406, 0.0
    %4535 = vadd.xlane.f32.xlu0 %v4534
    %v4536 = vpop.xlane.xlu0 %4535
    %v4537 = vsel %vm223, %v4407, 0.0
    %4538 = vadd.xlane.f32.xlu0 %v4537
    %v4539 = vpop.xlane.xlu0 %4538
    %v4540 = vsel %vm223, %v4408, 0.0
    %4541 = vadd.xlane.f32.xlu0 %v4540
    %v4542 = vpop.xlane.xlu0 %4541
    %v4543 = vsel %vm223, %v4409, 0.0
    %4544 = vadd.xlane.f32.xlu0 %v4543
    %v4545 = vpop.xlane.xlu0 %4544
    %v4546 = vsel %vm223, %v4410, 0.0
    %4547 = vadd.xlane.f32.xlu0 %v4546
    %v4548 = vpop.xlane.xlu0 %4547
    %v4549 = vsel %vm223, %v4411, 0.0
    %4550 = vadd.xlane.f32.xlu0 %v4549
    %v4551 = vpop.xlane.xlu0 %4550
    %v4552 = vsel %vm223, %v4412, 0.0
    %4553 = vadd.xlane.f32.xlu0 %v4552
    %v4554 = vpop.xlane.xlu0 %4553
    %v4555 = vsel %vm223, %v4413, 0.0
    %4556 = vadd.xlane.f32.xlu0 %v4555
    %v4557 = vpop.xlane.xlu0 %4556
    %v4558 = vsel %vm223, %v4414, 0.0
    %4559 = vadd.xlane.f32.xlu0 %v4558
    %v4560 = vpop.xlane.xlu0 %4559
    %v4561 = vsel %vm223, %v4415, 0.0
    %4562 = vadd.xlane.f32.xlu0 %v4561
    %v4563 = vpop.xlane.xlu0 %4562
    %v4564 = vsel %vm223, %v4416, 0.0
    %4565 = vadd.xlane.f32.xlu0 %v4564
    %v4566 = vpop.xlane.xlu0 %4565
    %v4567 = vsel %vm223, %v4417, 0.0
    %4568 = vadd.xlane.f32.xlu0 %v4567
    %v4569 = vpop.xlane.xlu0 %4568
    %v4570 = vsel %vm223, %v4418, 0.0
    %4571 = vadd.xlane.f32.xlu0 %v4570
    %v4572 = vpop.xlane.xlu0 %4571
    %v4573 = vsel %vm223, %v4419, 0.0
    %4574 = vadd.xlane.f32.xlu0 %v4573
    %v4575 = vpop.xlane.xlu0 %4574
    %v4576 = vsel %vm223, %v4420, 0.0
    %4577 = vadd.xlane.f32.xlu0 %v4576
    %v4578 = vpop.xlane.xlu0 %4577
    %v4579 = vsel %vm223, %v4421, 0.0
    %4580 = vadd.xlane.f32.xlu0 %v4579
    %v4581 = vpop.xlane.xlu0 %4580
    %v4582 = vsel %vm223, %v4422, 0.0
    %4583 = vadd.xlane.f32.xlu0 %v4582
    %v4584 = vpop.xlane.xlu0 %4583
    %v4585 = vsel %vm223, %v4423, 0.0
    %4586 = vadd.xlane.f32.xlu0 %v4585
    %v4587 = vpop.xlane.xlu0 %4586
    %v4588 = vsel %vm223, %v4424, 0.0
    %4589 = vadd.xlane.f32.xlu0 %v4588
    %v4590 = vpop.xlane.xlu0 %4589
    %v4591 = vsel %vm223, %v4425, 0.0
    %4592 = vadd.xlane.f32.xlu0 %v4591
    %v4593 = vpop.xlane.xlu0 %4592
    %v4594 = vsel %vm223, %v4426, 0.0
    %4595 = vadd.xlane.f32.xlu0 %v4594
    %v4596 = vpop.xlane.xlu0 %4595
    %v4597 = vsel %vm223, %v4427, 0.0
    %4598 = vadd.xlane.f32.xlu0 %v4597
    %v4599 = vpop.xlane.xlu0 %4598
    %v4600 = vsel %vm223, %v4428, 0.0
    %4601 = vadd.xlane.f32.xlu0 %v4600
    %v4602 = vpop.xlane.xlu0 %4601
    %v4603 = vsel %vm223, %v4429, 0.0
    %4604 = vadd.xlane.f32.xlu0 %v4603
    %v4605 = vpop.xlane.xlu0 %4604
    %v4606 = vsel %vm223, %v4430, 0.0
    %4607 = vadd.xlane.f32.xlu0 %v4606
    %v4608 = vpop.xlane.xlu0 %4607
    %v4609 = vsel %vm223, %v4431, 0.0
    %4610 = vadd.xlane.f32.xlu0 %v4609
    %v4611 = vpop.xlane.xlu0 %4610
    %v4612 = vsel %vm223, %v4432, 0.0
    %4613 = vadd.xlane.f32.xlu0 %v4612
    %v4614 = vpop.xlane.xlu0 %4613
    %v4615 = vsel %vm223, %v4433, 0.0
    %4616 = vadd.xlane.f32.xlu0 %v4615
    %v4617 = vpop.xlane.xlu0 %4616
    %v4618 = vsel %vm223, %v4434, 0.0
    %4619 = vadd.xlane.f32.xlu0 %v4618
    %v4620 = vpop.xlane.xlu0 %4619
    %v4621 = vsel %vm223, %v4435, 0.0
    %4622 = vadd.xlane.f32.xlu0 %v4621
    %v4623 = vpop.xlane.xlu0 %4622
    %v4624 = vsel %vm223, %v4436, 0.0
    %4625 = vadd.xlane.f32.xlu0 %v4624
    %v4626 = vpop.xlane.xlu0 %4625
    %v4627 = vsel %vm223, %v4437, 0.0
    %4628 = vadd.xlane.f32.xlu0 %v4627
    %v4629 = vpop.xlane.xlu0 %4628
    %v4631 = vrot.slane %v164, 5
    %s4632 = vtos %v4631
    %v4633 = vstv %s4632
    %v4635 = vadd.f32 %v4440, %v4633
    %v4636 = vadd.f32 %v4443, %v4633
    %v4637 = vadd.f32 %v4446, %v4633
    %v4638 = vadd.f32 %v4449, %v4633
    %v4639 = vadd.f32 %v4452, %v4633
    %v4640 = vadd.f32 %v4455, %v4633
    %v4641 = vadd.f32 %v4458, %v4633
    %v4642 = vadd.f32 %v4461, %v4633
    %v4643 = vadd.f32 %v4464, %v4633
    %v4644 = vadd.f32 %v4467, %v4633
    %v4645 = vadd.f32 %v4470, %v4633
    %v4646 = vadd.f32 %v4473, %v4633
    %v4647 = vadd.f32 %v4476, %v4633
    %v4648 = vadd.f32 %v4479, %v4633
    %v4649 = vadd.f32 %v4482, %v4633
    %v4650 = vadd.f32 %v4485, %v4633
    %v4651 = vadd.f32 %v4488, %v4633
    %v4652 = vadd.f32 %v4491, %v4633
    %v4653 = vadd.f32 %v4494, %v4633
    %v4654 = vadd.f32 %v4497, %v4633
    %v4655 = vadd.f32 %v4500, %v4633
    %v4656 = vadd.f32 %v4503, %v4633
    %v4657 = vadd.f32 %v4506, %v4633
    %v4658 = vadd.f32 %v4509, %v4633
    %v4659 = vadd.f32 %v4512, %v4633
    %v4660 = vadd.f32 %v4515, %v4633
    %v4661 = vadd.f32 %v4518, %v4633
    %v4662 = vadd.f32 %v4521, %v4633
    %v4663 = vadd.f32 %v4524, %v4633
    %v4664 = vadd.f32 %v4527, %v4633
    %v4665 = vadd.f32 %v4530, %v4633
    %v4666 = vadd.f32 %v4533, %v4633
    %v4667 = vadd.f32 %v4536, %v4633
    %v4668 = vadd.f32 %v4539, %v4633
    %v4669 = vadd.f32 %v4542, %v4633
    %v4670 = vadd.f32 %v4545, %v4633
    %v4671 = vadd.f32 %v4548, %v4633
    %v4672 = vadd.f32 %v4551, %v4633
    %v4673 = vadd.f32 %v4554, %v4633
    %v4674 = vadd.f32 %v4557, %v4633
    %v4675 = vadd.f32 %v4560, %v4633
    %v4676 = vadd.f32 %v4563, %v4633
    %v4677 = vadd.f32 %v4566, %v4633
    %v4678 = vadd.f32 %v4569, %v4633
    %v4679 = vadd.f32 %v4572, %v4633
    %v4680 = vadd.f32 %v4575, %v4633
    %v4681 = vadd.f32 %v4578, %v4633
    %v4682 = vadd.f32 %v4581, %v4633
    %v4683 = vadd.f32 %v4584, %v4633
    %v4684 = vadd.f32 %v4587, %v4633
    %v4685 = vadd.f32 %v4590, %v4633
    %v4686 = vadd.f32 %v4593, %v4633
    %v4687 = vadd.f32 %v4596, %v4633
    %v4688 = vadd.f32 %v4599, %v4633
    %v4689 = vadd.f32 %v4602, %v4633
    %v4690 = vadd.f32 %v4605, %v4633
    %v4691 = vadd.f32 %v4608, %v4633
    %v4692 = vadd.f32 %v4611, %v4633
    %v4693 = vadd.f32 %v4614, %v4633
    %v4694 = vadd.f32 %v4617, %v4633
    %v4695 = vadd.f32 %v4620, %v4633
    %v4696 = vadd.f32 %v4623, %v4633
    %v4697 = vadd.f32 %v4626, %v4633
    %v4698 = vadd.f32 %v4629, %v4633
    %v4699 = vxor.u32 %v4635, 2147483648
    %v4700 = vxor.u32 %v4636, 2147483648
    %v4701 = vxor.u32 %v4637, 2147483648
    %v4702 = vxor.u32 %v4638, 2147483648
    %v4703 = vxor.u32 %v4639, 2147483648
    %v4704 = vxor.u32 %v4640, 2147483648
    %v4705 = vxor.u32 %v4641, 2147483648
    %v4706 = vxor.u32 %v4642, 2147483648
    %v4707 = vxor.u32 %v4643, 2147483648
    %v4708 = vxor.u32 %v4644, 2147483648
    %v4709 = vxor.u32 %v4645, 2147483648
    %v4710 = vxor.u32 %v4646, 2147483648
    %v4711 = vxor.u32 %v4647, 2147483648
    %v4712 = vxor.u32 %v4648, 2147483648
    %v4713 = vxor.u32 %v4649, 2147483648
    %v4714 = vxor.u32 %v4650, 2147483648
    %v4715 = vxor.u32 %v4651, 2147483648
    %v4716 = vxor.u32 %v4652, 2147483648
    %v4717 = vxor.u32 %v4653, 2147483648
    %v4718 = vxor.u32 %v4654, 2147483648
    %v4719 = vxor.u32 %v4655, 2147483648
    %v4720 = vxor.u32 %v4656, 2147483648
    %v4721 = vxor.u32 %v4657, 2147483648
    %v4722 = vxor.u32 %v4658, 2147483648
    %v4723 = vxor.u32 %v4659, 2147483648
    %v4724 = vxor.u32 %v4660, 2147483648
    %v4725 = vxor.u32 %v4661, 2147483648
    %v4726 = vxor.u32 %v4662, 2147483648
    %v4727 = vxor.u32 %v4663, 2147483648
    %v4728 = vxor.u32 %v4664, 2147483648
    %v4729 = vxor.u32 %v4665, 2147483648
    %v4730 = vxor.u32 %v4666, 2147483648
    %v4731 = vxor.u32 %v4667, 2147483648
    %v4732 = vxor.u32 %v4668, 2147483648
    %v4733 = vxor.u32 %v4669, 2147483648
    %v4734 = vxor.u32 %v4670, 2147483648
    %v4735 = vxor.u32 %v4671, 2147483648
    %v4736 = vxor.u32 %v4672, 2147483648
    %v4737 = vxor.u32 %v4673, 2147483648
    %v4738 = vxor.u32 %v4674, 2147483648
    %v4739 = vxor.u32 %v4675, 2147483648
    %v4740 = vxor.u32 %v4676, 2147483648
    %v4741 = vxor.u32 %v4677, 2147483648
    %v4742 = vxor.u32 %v4678, 2147483648
    %v4743 = vxor.u32 %v4679, 2147483648
    %v4744 = vxor.u32 %v4680, 2147483648
    %v4745 = vxor.u32 %v4681, 2147483648
    %v4746 = vxor.u32 %v4682, 2147483648
    %v4747 = vxor.u32 %v4683, 2147483648
    %v4748 = vxor.u32 %v4684, 2147483648
    %v4749 = vxor.u32 %v4685, 2147483648
    %v4750 = vxor.u32 %v4686, 2147483648
    %v4751 = vxor.u32 %v4687, 2147483648
    %v4752 = vxor.u32 %v4688, 2147483648
    %v4753 = vxor.u32 %v4689, 2147483648
    %v4754 = vxor.u32 %v4690, 2147483648
    %v4755 = vxor.u32 %v4691, 2147483648
    %v4756 = vxor.u32 %v4692, 2147483648
    %v4757 = vxor.u32 %v4693, 2147483648
    %v4758 = vxor.u32 %v4694, 2147483648
    %v4759 = vxor.u32 %v4695, 2147483648
    %v4760 = vxor.u32 %v4696, 2147483648
    %v4761 = vxor.u32 %v4697, 2147483648
    %v4762 = vxor.u32 %v4698, 2147483648
    %v4763 = vmul.f32 %v4699, 1.442695
    %v4764 = vpow.pop %v4763
    %v4765 = vmul.f32 %v4700, 1.442695
    %v4766 = vpow.pop %v4765
    %v4767 = vmul.f32 %v4701, 1.442695
    %v4768 = vpow.pop %v4767
    %v4769 = vmul.f32 %v4702, 1.442695
    %v4770 = vpow.pop %v4769
    %v4771 = vmul.f32 %v4703, 1.442695
    %v4772 = vpow.pop %v4771
    %v4773 = vmul.f32 %v4704, 1.442695
    %v4774 = vpow.pop %v4773
    %v4775 = vmul.f32 %v4705, 1.442695
    %v4776 = vpow.pop %v4775
    %v4777 = vmul.f32 %v4706, 1.442695
    %v4778 = vpow.pop %v4777
    %v4779 = vmul.f32 %v4707, 1.442695
    %v4780 = vpow.pop %v4779
    %v4781 = vmul.f32 %v4708, 1.442695
    %v4782 = vpow.pop %v4781
    %v4783 = vmul.f32 %v4709, 1.442695
    %v4784 = vpow.pop %v4783
    %v4785 = vmul.f32 %v4710, 1.442695
    %v4786 = vpow.pop %v4785
    %v4787 = vmul.f32 %v4711, 1.442695
    %v4788 = vpow.pop %v4787
    %v4789 = vmul.f32 %v4712, 1.442695
    %v4790 = vpow.pop %v4789
    %v4791 = vmul.f32 %v4713, 1.442695
    %v4792 = vpow.pop %v4791
    %v4793 = vmul.f32 %v4714, 1.442695
    %v4794 = vpow.pop %v4793
    %v4795 = vmul.f32 %v4715, 1.442695
    %v4796 = vpow.pop %v4795
    %v4797 = vmul.f32 %v4716, 1.442695
    %v4798 = vpow.pop %v4797
    %v4799 = vmul.f32 %v4717, 1.442695
    %v4800 = vpow.pop %v4799
    %v4801 = vmul.f32 %v4718, 1.442695
    %v4802 = vpow.pop %v4801
    %v4803 = vmul.f32 %v4719, 1.442695
    %v4804 = vpow.pop %v4803
    %v4805 = vmul.f32 %v4720, 1.442695
    %v4806 = vpow.pop %v4805
    %v4807 = vmul.f32 %v4721, 1.442695
    %v4808 = vpow.pop %v4807
    %v4809 = vmul.f32 %v4722, 1.442695
    %v4810 = vpow.pop %v4809
    %v4811 = vmul.f32 %v4723, 1.442695
    %v4812 = vpow.pop %v4811
    %v4813 = vmul.f32 %v4724, 1.442695
    %v4814 = vpow.pop %v4813
    %v4815 = vmul.f32 %v4725, 1.442695
    %v4816 = vpow.pop %v4815
    %v4817 = vmul.f32 %v4726, 1.442695
    %v4818 = vpow.pop %v4817
    %v4819 = vmul.f32 %v4727, 1.442695
    %v4820 = vpow.pop %v4819
    %v4821 = vmul.f32 %v4728, 1.442695
    %v4822 = vpow.pop %v4821
    %v4823 = vmul.f32 %v4729, 1.442695
    %v4824 = vpow.pop %v4823
    %v4825 = vmul.f32 %v4730, 1.442695
    %v4826 = vpow.pop %v4825
    %v4827 = vmul.f32 %v4731, 1.442695
    %v4828 = vpow.pop %v4827
    %v4829 = vmul.f32 %v4732, 1.442695
    %v4830 = vpow.pop %v4829
    %v4831 = vmul.f32 %v4733, 1.442695
    %v4832 = vpow.pop %v4831
    %v4833 = vmul.f32 %v4734, 1.442695
    %v4834 = vpow.pop %v4833
    %v4835 = vmul.f32 %v4735, 1.442695
    %v4836 = vpow.pop %v4835
    %v4837 = vmul.f32 %v4736, 1.442695
    %v4838 = vpow.pop %v4837
    %v4839 = vmul.f32 %v4737, 1.442695
    %v4840 = vpow.pop %v4839
    %v4841 = vmul.f32 %v4738, 1.442695
    %v4842 = vpow.pop %v4841
    %v4843 = vmul.f32 %v4739, 1.442695
    %v4844 = vpow.pop %v4843
    %v4845 = vmul.f32 %v4740, 1.442695
    %v4846 = vpow.pop %v4845
    %v4847 = vmul.f32 %v4741, 1.442695
    %v4848 = vpow.pop %v4847
    %v4849 = vmul.f32 %v4742, 1.442695
    %v4850 = vpow.pop %v4849
    %v4851 = vmul.f32 %v4743, 1.442695
    %v4852 = vpow.pop %v4851
    %v4853 = vmul.f32 %v4744, 1.442695
    %v4854 = vpow.pop %v4853
    %v4855 = vmul.f32 %v4745, 1.442695
    %v4856 = vpow.pop %v4855
    %v4857 = vmul.f32 %v4746, 1.442695
    %v4858 = vpow.pop %v4857
    %v4859 = vmul.f32 %v4747, 1.442695
    %v4860 = vpow.pop %v4859
    %v4861 = vmul.f32 %v4748, 1.442695
    %v4862 = vpow.pop %v4861
    %v4863 = vmul.f32 %v4749, 1.442695
    %v4864 = vpow.pop %v4863
    %v4865 = vmul.f32 %v4750, 1.442695
    %v4866 = vpow.pop %v4865
    %v4867 = vmul.f32 %v4751, 1.442695
    %v4868 = vpow.pop %v4867
    %v4869 = vmul.f32 %v4752, 1.442695
    %v4870 = vpow.pop %v4869
    %v4871 = vmul.f32 %v4753, 1.442695
    %v4872 = vpow.pop %v4871
    %v4873 = vmul.f32 %v4754, 1.442695
    %v4874 = vpow.pop %v4873
    %v4875 = vmul.f32 %v4755, 1.442695
    %v4876 = vpow.pop %v4875
    %v4877 = vmul.f32 %v4756, 1.442695
    %v4878 = vpow.pop %v4877
    %v4879 = vmul.f32 %v4757, 1.442695
    %v4880 = vpow.pop %v4879
    %v4881 = vmul.f32 %v4758, 1.442695
    %v4882 = vpow.pop %v4881
    %v4883 = vmul.f32 %v4759, 1.442695
    %v4884 = vpow.pop %v4883
    %v4885 = vmul.f32 %v4760, 1.442695
    %v4886 = vpow.pop %v4885
    %v4887 = vmul.f32 %v4761, 1.442695
    %v4888 = vpow.pop %v4887
    %v4889 = vmul.f32 %v4762, 1.442695
    %v4890 = vpow.pop %v4889
    %v4891 = vadd.f32 %v4764, 1.0
    %v4892 = vadd.f32 %v4766, 1.0
    %v4893 = vadd.f32 %v4768, 1.0
    %v4894 = vadd.f32 %v4770, 1.0
    %v4895 = vadd.f32 %v4772, 1.0
    %v4896 = vadd.f32 %v4774, 1.0
    %v4897 = vadd.f32 %v4776, 1.0
    %v4898 = vadd.f32 %v4778, 1.0
    %v4899 = vadd.f32 %v4780, 1.0
    %v4900 = vadd.f32 %v4782, 1.0
    %v4901 = vadd.f32 %v4784, 1.0
    %v4902 = vadd.f32 %v4786, 1.0
    %v4903 = vadd.f32 %v4788, 1.0
    %v4904 = vadd.f32 %v4790, 1.0
    %v4905 = vadd.f32 %v4792, 1.0
    %v4906 = vadd.f32 %v4794, 1.0
    %v4907 = vadd.f32 %v4796, 1.0
    %v4908 = vadd.f32 %v4798, 1.0
    %v4909 = vadd.f32 %v4800, 1.0
    %v4910 = vadd.f32 %v4802, 1.0
    %v4911 = vadd.f32 %v4804, 1.0
    %v4912 = vadd.f32 %v4806, 1.0
    %v4913 = vadd.f32 %v4808, 1.0
    %v4914 = vadd.f32 %v4810, 1.0
    %v4915 = vadd.f32 %v4812, 1.0
    %v4916 = vadd.f32 %v4814, 1.0
    %v4917 = vadd.f32 %v4816, 1.0
    %v4918 = vadd.f32 %v4818, 1.0
    %v4919 = vadd.f32 %v4820, 1.0
    %v4920 = vadd.f32 %v4822, 1.0
    %v4921 = vadd.f32 %v4824, 1.0
    %v4922 = vadd.f32 %v4826, 1.0
    %v4923 = vadd.f32 %v4828, 1.0
    %v4924 = vadd.f32 %v4830, 1.0
    %v4925 = vadd.f32 %v4832, 1.0
    %v4926 = vadd.f32 %v4834, 1.0
    %v4927 = vadd.f32 %v4836, 1.0
    %v4928 = vadd.f32 %v4838, 1.0
    %v4929 = vadd.f32 %v4840, 1.0
    %v4930 = vadd.f32 %v4842, 1.0
    %v4931 = vadd.f32 %v4844, 1.0
    %v4932 = vadd.f32 %v4846, 1.0
    %v4933 = vadd.f32 %v4848, 1.0
    %v4934 = vadd.f32 %v4850, 1.0
    %v4935 = vadd.f32 %v4852, 1.0
    %v4936 = vadd.f32 %v4854, 1.0
    %v4937 = vadd.f32 %v4856, 1.0
    %v4938 = vadd.f32 %v4858, 1.0
    %v4939 = vadd.f32 %v4860, 1.0
    %v4940 = vadd.f32 %v4862, 1.0
    %v4941 = vadd.f32 %v4864, 1.0
    %v4942 = vadd.f32 %v4866, 1.0
    %v4943 = vadd.f32 %v4868, 1.0
    %v4944 = vadd.f32 %v4870, 1.0
    %v4945 = vadd.f32 %v4872, 1.0
    %v4946 = vadd.f32 %v4874, 1.0
    %v4947 = vadd.f32 %v4876, 1.0
    %v4948 = vadd.f32 %v4878, 1.0
    %v4949 = vadd.f32 %v4880, 1.0
    %v4950 = vadd.f32 %v4882, 1.0
    %v4951 = vadd.f32 %v4884, 1.0
    %v4952 = vadd.f32 %v4886, 1.0
    %v4953 = vadd.f32 %v4888, 1.0
    %v4954 = vadd.f32 %v4890, 1.0
    %v4955 = vrcp.pop %v4891
    %v4956 = vmul.f32 %v4891, %v4955
    %v4957 = vsub.f32 1.0, %v4956
    %v4958 = vmul.f32 %v4955, %v4957
    %v4959 = vadd.f32 %v4955, %v4958
    %vm4960 = vweird.f32 %v4891
    %vm4961 = vweird.f32 %v4955
    %vm4962 = vmor %vm4960, %vm4961
    %v4963 = vsel %vm4962, %v4955, %v4959
    %v4964 = vand.u32 2147483647, %v4891
    %vm4965 = vcmp.eq.f32.partialorder %v4964, 8.507059e+37
    %v4966 = vand.u32 %v4891, 2147483648
    %v4967 = vor.u32 1.1754944e-38, %v4966
    %v4968 = vsel %vm4965, %v4967, %v4963
    %v4969 = vmul.f32 1.0, %v4968
    %v4970 = vrcp.pop %v4892
    %v4971 = vmul.f32 %v4892, %v4970
    %v4972 = vsub.f32 1.0, %v4971
    %v4973 = vmul.f32 %v4970, %v4972
    %v4974 = vadd.f32 %v4970, %v4973
    %vm4975 = vweird.f32 %v4892
    %vm4976 = vweird.f32 %v4970
    %vm4977 = vmor %vm4975, %vm4976
    %v4978 = vsel %vm4977, %v4970, %v4974
    %v4979 = vand.u32 2147483647, %v4892
    %vm4980 = vcmp.eq.f32.partialorder %v4979, 8.507059e+37
    %v4981 = vand.u32 %v4892, 2147483648
    %v4982 = vor.u32 1.1754944e-38, %v4981
    %v4983 = vsel %vm4980, %v4982, %v4978
    %v4984 = vmul.f32 1.0, %v4983
    %v4985 = vrcp.pop %v4893
    %v4986 = vmul.f32 %v4893, %v4985
    %v4987 = vsub.f32 1.0, %v4986
    %v4988 = vmul.f32 %v4985, %v4987
    %v4989 = vadd.f32 %v4985, %v4988
    %vm4990 = vweird.f32 %v4893
    %vm4991 = vweird.f32 %v4985
    %vm4992 = vmor %vm4990, %vm4991
    %v4993 = vsel %vm4992, %v4985, %v4989
    %v4994 = vand.u32 2147483647, %v4893
    %vm4995 = vcmp.eq.f32.partialorder %v4994, 8.507059e+37
    %v4996 = vand.u32 %v4893, 2147483648
    %v4997 = vor.u32 1.1754944e-38, %v4996
    %v4998 = vsel %vm4995, %v4997, %v4993
    %v4999 = vmul.f32 1.0, %v4998
    %v5000 = vrcp.pop %v4894
    %v5001 = vmul.f32 %v4894, %v5000
    %v5002 = vsub.f32 1.0, %v5001
    %v5003 = vmul.f32 %v5000, %v5002
    %v5004 = vadd.f32 %v5000, %v5003
    %vm5005 = vweird.f32 %v4894
    %vm5006 = vweird.f32 %v5000
    %vm5007 = vmor %vm5005, %vm5006
    %v5008 = vsel %vm5007, %v5000, %v5004
    %v5009 = vand.u32 2147483647, %v4894
    %vm5010 = vcmp.eq.f32.partialorder %v5009, 8.507059e+37
    %v5011 = vand.u32 %v4894, 2147483648
    %v5012 = vor.u32 1.1754944e-38, %v5011
    %v5013 = vsel %vm5010, %v5012, %v5008
    %v5014 = vmul.f32 1.0, %v5013
    %v5015 = vrcp.pop %v4895
    %v5016 = vmul.f32 %v4895, %v5015
    %v5017 = vsub.f32 1.0, %v5016
    %v5018 = vmul.f32 %v5015, %v5017
    %v5019 = vadd.f32 %v5015, %v5018
    %vm5020 = vweird.f32 %v4895
    %vm5021 = vweird.f32 %v5015
    %vm5022 = vmor %vm5020, %vm5021
    %v5023 = vsel %vm5022, %v5015, %v5019
    %v5024 = vand.u32 2147483647, %v4895
    %vm5025 = vcmp.eq.f32.partialorder %v5024, 8.507059e+37
    %v5026 = vand.u32 %v4895, 2147483648
    %v5027 = vor.u32 1.1754944e-38, %v5026
    %v5028 = vsel %vm5025, %v5027, %v5023
    %v5029 = vmul.f32 1.0, %v5028
    %v5030 = vrcp.pop %v4896
    %v5031 = vmul.f32 %v4896, %v5030
    %v5032 = vsub.f32 1.0, %v5031
    %v5033 = vmul.f32 %v5030, %v5032
    %v5034 = vadd.f32 %v5030, %v5033
    %vm5035 = vweird.f32 %v4896
    %vm5036 = vweird.f32 %v5030
    %vm5037 = vmor %vm5035, %vm5036
    %v5038 = vsel %vm5037, %v5030, %v5034
    %v5039 = vand.u32 2147483647, %v4896
    %vm5040 = vcmp.eq.f32.partialorder %v5039, 8.507059e+37
    %v5041 = vand.u32 %v4896, 2147483648
    %v5042 = vor.u32 1.1754944e-38, %v5041
    %v5043 = vsel %vm5040, %v5042, %v5038
    %v5044 = vmul.f32 1.0, %v5043
    %v5045 = vrcp.pop %v4897
    %v5046 = vmul.f32 %v4897, %v5045
    %v5047 = vsub.f32 1.0, %v5046
    %v5048 = vmul.f32 %v5045, %v5047
    %v5049 = vadd.f32 %v5045, %v5048
    %vm5050 = vweird.f32 %v4897
    %vm5051 = vweird.f32 %v5045
    %vm5052 = vmor %vm5050, %vm5051
    %v5053 = vsel %vm5052, %v5045, %v5049
    %v5054 = vand.u32 2147483647, %v4897
    %vm5055 = vcmp.eq.f32.partialorder %v5054, 8.507059e+37
    %v5056 = vand.u32 %v4897, 2147483648
    %v5057 = vor.u32 1.1754944e-38, %v5056
    %v5058 = vsel %vm5055, %v5057, %v5053
    %v5059 = vmul.f32 1.0, %v5058
    %v5060 = vrcp.pop %v4898
    %v5061 = vmul.f32 %v4898, %v5060
    %v5062 = vsub.f32 1.0, %v5061
    %v5063 = vmul.f32 %v5060, %v5062
    %v5064 = vadd.f32 %v5060, %v5063
    %vm5065 = vweird.f32 %v4898
    %vm5066 = vweird.f32 %v5060
    %vm5067 = vmor %vm5065, %vm5066
    %v5068 = vsel %vm5067, %v5060, %v5064
    %v5069 = vand.u32 2147483647, %v4898
    %vm5070 = vcmp.eq.f32.partialorder %v5069, 8.507059e+37
    %v5071 = vand.u32 %v4898, 2147483648
    %v5072 = vor.u32 1.1754944e-38, %v5071
    %v5073 = vsel %vm5070, %v5072, %v5068
    %v5074 = vmul.f32 1.0, %v5073
    %v5075 = vrcp.pop %v4899
    %v5076 = vmul.f32 %v4899, %v5075
    %v5077 = vsub.f32 1.0, %v5076
    %v5078 = vmul.f32 %v5075, %v5077
    %v5079 = vadd.f32 %v5075, %v5078
    %vm5080 = vweird.f32 %v4899
    %vm5081 = vweird.f32 %v5075
    %vm5082 = vmor %vm5080, %vm5081
    %v5083 = vsel %vm5082, %v5075, %v5079
    %v5084 = vand.u32 2147483647, %v4899
    %vm5085 = vcmp.eq.f32.partialorder %v5084, 8.507059e+37
    %v5086 = vand.u32 %v4899, 2147483648
    %v5087 = vor.u32 1.1754944e-38, %v5086
    %v5088 = vsel %vm5085, %v5087, %v5083
    %v5089 = vmul.f32 1.0, %v5088
    %v5090 = vrcp.pop %v4900
    %v5091 = vmul.f32 %v4900, %v5090
    %v5092 = vsub.f32 1.0, %v5091
    %v5093 = vmul.f32 %v5090, %v5092
    %v5094 = vadd.f32 %v5090, %v5093
    %vm5095 = vweird.f32 %v4900
    %vm5096 = vweird.f32 %v5090
    %vm5097 = vmor %vm5095, %vm5096
    %v5098 = vsel %vm5097, %v5090, %v5094
    %v5099 = vand.u32 2147483647, %v4900
    %vm5100 = vcmp.eq.f32.partialorder %v5099, 8.507059e+37
    %v5101 = vand.u32 %v4900, 2147483648
    %v5102 = vor.u32 1.1754944e-38, %v5101
    %v5103 = vsel %vm5100, %v5102, %v5098
    %v5104 = vmul.f32 1.0, %v5103
    %v5105 = vrcp.pop %v4901
    %v5106 = vmul.f32 %v4901, %v5105
    %v5107 = vsub.f32 1.0, %v5106
    %v5108 = vmul.f32 %v5105, %v5107
    %v5109 = vadd.f32 %v5105, %v5108
    %vm5110 = vweird.f32 %v4901
    %vm5111 = vweird.f32 %v5105
    %vm5112 = vmor %vm5110, %vm5111
    %v5113 = vsel %vm5112, %v5105, %v5109
    %v5114 = vand.u32 2147483647, %v4901
    %vm5115 = vcmp.eq.f32.partialorder %v5114, 8.507059e+37
    %v5116 = vand.u32 %v4901, 2147483648
    %v5117 = vor.u32 1.1754944e-38, %v5116
    %v5118 = vsel %vm5115, %v5117, %v5113
    %v5119 = vmul.f32 1.0, %v5118
    %v5120 = vrcp.pop %v4902
    %v5121 = vmul.f32 %v4902, %v5120
    %v5122 = vsub.f32 1.0, %v5121
    %v5123 = vmul.f32 %v5120, %v5122
    %v5124 = vadd.f32 %v5120, %v5123
    %vm5125 = vweird.f32 %v4902
    %vm5126 = vweird.f32 %v5120
    %vm5127 = vmor %vm5125, %vm5126
    %v5128 = vsel %vm5127, %v5120, %v5124
    %v5129 = vand.u32 2147483647, %v4902
    %vm5130 = vcmp.eq.f32.partialorder %v5129, 8.507059e+37
    %v5131 = vand.u32 %v4902, 2147483648
    %v5132 = vor.u32 1.1754944e-38, %v5131
    %v5133 = vsel %vm5130, %v5132, %v5128
    %v5134 = vmul.f32 1.0, %v5133
    %v5135 = vrcp.pop %v4903
    %v5136 = vmul.f32 %v4903, %v5135
    %v5137 = vsub.f32 1.0, %v5136
    %v5138 = vmul.f32 %v5135, %v5137
    %v5139 = vadd.f32 %v5135, %v5138
    %vm5140 = vweird.f32 %v4903
    %vm5141 = vweird.f32 %v5135
    %vm5142 = vmor %vm5140, %vm5141
    %v5143 = vsel %vm5142, %v5135, %v5139
    %v5144 = vand.u32 2147483647, %v4903
    %vm5145 = vcmp.eq.f32.partialorder %v5144, 8.507059e+37
    %v5146 = vand.u32 %v4903, 2147483648
    %v5147 = vor.u32 1.1754944e-38, %v5146
    %v5148 = vsel %vm5145, %v5147, %v5143
    %v5149 = vmul.f32 1.0, %v5148
    %v5150 = vrcp.pop %v4904
    %v5151 = vmul.f32 %v4904, %v5150
    %v5152 = vsub.f32 1.0, %v5151
    %v5153 = vmul.f32 %v5150, %v5152
    %v5154 = vadd.f32 %v5150, %v5153
    %vm5155 = vweird.f32 %v4904
    %vm5156 = vweird.f32 %v5150
    %vm5157 = vmor %vm5155, %vm5156
    %v5158 = vsel %vm5157, %v5150, %v5154
    %v5159 = vand.u32 2147483647, %v4904
    %vm5160 = vcmp.eq.f32.partialorder %v5159, 8.507059e+37
    %v5161 = vand.u32 %v4904, 2147483648
    %v5162 = vor.u32 1.1754944e-38, %v5161
    %v5163 = vsel %vm5160, %v5162, %v5158
    %v5164 = vmul.f32 1.0, %v5163
    %v5165 = vrcp.pop %v4905
    %v5166 = vmul.f32 %v4905, %v5165
    %v5167 = vsub.f32 1.0, %v5166
    %v5168 = vmul.f32 %v5165, %v5167
    %v5169 = vadd.f32 %v5165, %v5168
    %vm5170 = vweird.f32 %v4905
    %vm5171 = vweird.f32 %v5165
    %vm5172 = vmor %vm5170, %vm5171
    %v5173 = vsel %vm5172, %v5165, %v5169
    %v5174 = vand.u32 2147483647, %v4905
    %vm5175 = vcmp.eq.f32.partialorder %v5174, 8.507059e+37
    %v5176 = vand.u32 %v4905, 2147483648
    %v5177 = vor.u32 1.1754944e-38, %v5176
    %v5178 = vsel %vm5175, %v5177, %v5173
    %v5179 = vmul.f32 1.0, %v5178
    %v5180 = vrcp.pop %v4906
    %v5181 = vmul.f32 %v4906, %v5180
    %v5182 = vsub.f32 1.0, %v5181
    %v5183 = vmul.f32 %v5180, %v5182
    %v5184 = vadd.f32 %v5180, %v5183
    %vm5185 = vweird.f32 %v4906
    %vm5186 = vweird.f32 %v5180
    %vm5187 = vmor %vm5185, %vm5186
    %v5188 = vsel %vm5187, %v5180, %v5184
    %v5189 = vand.u32 2147483647, %v4906
    %vm5190 = vcmp.eq.f32.partialorder %v5189, 8.507059e+37
    %v5191 = vand.u32 %v4906, 2147483648
    %v5192 = vor.u32 1.1754944e-38, %v5191
    %v5193 = vsel %vm5190, %v5192, %v5188
    %v5194 = vmul.f32 1.0, %v5193
    %v5195 = vrcp.pop %v4907
    %v5196 = vmul.f32 %v4907, %v5195
    %v5197 = vsub.f32 1.0, %v5196
    %v5198 = vmul.f32 %v5195, %v5197
    %v5199 = vadd.f32 %v5195, %v5198
    %vm5200 = vweird.f32 %v4907
    %vm5201 = vweird.f32 %v5195
    %vm5202 = vmor %vm5200, %vm5201
    %v5203 = vsel %vm5202, %v5195, %v5199
    %v5204 = vand.u32 2147483647, %v4907
    %vm5205 = vcmp.eq.f32.partialorder %v5204, 8.507059e+37
    %v5206 = vand.u32 %v4907, 2147483648
    %v5207 = vor.u32 1.1754944e-38, %v5206
    %v5208 = vsel %vm5205, %v5207, %v5203
    %v5209 = vmul.f32 1.0, %v5208
    %v5210 = vrcp.pop %v4908
    %v5211 = vmul.f32 %v4908, %v5210
    %v5212 = vsub.f32 1.0, %v5211
    %v5213 = vmul.f32 %v5210, %v5212
    %v5214 = vadd.f32 %v5210, %v5213
    %vm5215 = vweird.f32 %v4908
    %vm5216 = vweird.f32 %v5210
    %vm5217 = vmor %vm5215, %vm5216
    %v5218 = vsel %vm5217, %v5210, %v5214
    %v5219 = vand.u32 2147483647, %v4908
    %vm5220 = vcmp.eq.f32.partialorder %v5219, 8.507059e+37
    %v5221 = vand.u32 %v4908, 2147483648
    %v5222 = vor.u32 1.1754944e-38, %v5221
    %v5223 = vsel %vm5220, %v5222, %v5218
    %v5224 = vmul.f32 1.0, %v5223
    %v5225 = vrcp.pop %v4909
    %v5226 = vmul.f32 %v4909, %v5225
    %v5227 = vsub.f32 1.0, %v5226
    %v5228 = vmul.f32 %v5225, %v5227
    %v5229 = vadd.f32 %v5225, %v5228
    %vm5230 = vweird.f32 %v4909
    %vm5231 = vweird.f32 %v5225
    %vm5232 = vmor %vm5230, %vm5231
    %v5233 = vsel %vm5232, %v5225, %v5229
    %v5234 = vand.u32 2147483647, %v4909
    %vm5235 = vcmp.eq.f32.partialorder %v5234, 8.507059e+37
    %v5236 = vand.u32 %v4909, 2147483648
    %v5237 = vor.u32 1.1754944e-38, %v5236
    %v5238 = vsel %vm5235, %v5237, %v5233
    %v5239 = vmul.f32 1.0, %v5238
    %v5240 = vrcp.pop %v4910
    %v5241 = vmul.f32 %v4910, %v5240
    %v5242 = vsub.f32 1.0, %v5241
    %v5243 = vmul.f32 %v5240, %v5242
    %v5244 = vadd.f32 %v5240, %v5243
    %vm5245 = vweird.f32 %v4910
    %vm5246 = vweird.f32 %v5240
    %vm5247 = vmor %vm5245, %vm5246
    %v5248 = vsel %vm5247, %v5240, %v5244
    %v5249 = vand.u32 2147483647, %v4910
    %vm5250 = vcmp.eq.f32.partialorder %v5249, 8.507059e+37
    %v5251 = vand.u32 %v4910, 2147483648
    %v5252 = vor.u32 1.1754944e-38, %v5251
    %v5253 = vsel %vm5250, %v5252, %v5248
    %v5254 = vmul.f32 1.0, %v5253
    %v5255 = vrcp.pop %v4911
    %v5256 = vmul.f32 %v4911, %v5255
    %v5257 = vsub.f32 1.0, %v5256
    %v5258 = vmul.f32 %v5255, %v5257
    %v5259 = vadd.f32 %v5255, %v5258
    %vm5260 = vweird.f32 %v4911
    %vm5261 = vweird.f32 %v5255
    %vm5262 = vmor %vm5260, %vm5261
    %v5263 = vsel %vm5262, %v5255, %v5259
    %v5264 = vand.u32 2147483647, %v4911
    %vm5265 = vcmp.eq.f32.partialorder %v5264, 8.507059e+37
    %v5266 = vand.u32 %v4911, 2147483648
    %v5267 = vor.u32 1.1754944e-38, %v5266
    %v5268 = vsel %vm5265, %v5267, %v5263
    %v5269 = vmul.f32 1.0, %v5268
    %v5270 = vrcp.pop %v4912
    %v5271 = vmul.f32 %v4912, %v5270
    %v5272 = vsub.f32 1.0, %v5271
    %v5273 = vmul.f32 %v5270, %v5272
    %v5274 = vadd.f32 %v5270, %v5273
    %vm5275 = vweird.f32 %v4912
    %vm5276 = vweird.f32 %v5270
    %vm5277 = vmor %vm5275, %vm5276
    %v5278 = vsel %vm5277, %v5270, %v5274
    %v5279 = vand.u32 2147483647, %v4912
    %vm5280 = vcmp.eq.f32.partialorder %v5279, 8.507059e+37
    %v5281 = vand.u32 %v4912, 2147483648
    %v5282 = vor.u32 1.1754944e-38, %v5281
    %v5283 = vsel %vm5280, %v5282, %v5278
    %v5284 = vmul.f32 1.0, %v5283
    %v5285 = vrcp.pop %v4913
    %v5286 = vmul.f32 %v4913, %v5285
    %v5287 = vsub.f32 1.0, %v5286
    %v5288 = vmul.f32 %v5285, %v5287
    %v5289 = vadd.f32 %v5285, %v5288
    %vm5290 = vweird.f32 %v4913
    %vm5291 = vweird.f32 %v5285
    %vm5292 = vmor %vm5290, %vm5291
    %v5293 = vsel %vm5292, %v5285, %v5289
    %v5294 = vand.u32 2147483647, %v4913
    %vm5295 = vcmp.eq.f32.partialorder %v5294, 8.507059e+37
    %v5296 = vand.u32 %v4913, 2147483648
    %v5297 = vor.u32 1.1754944e-38, %v5296
    %v5298 = vsel %vm5295, %v5297, %v5293
    %v5299 = vmul.f32 1.0, %v5298
    %v5300 = vrcp.pop %v4914
    %v5301 = vmul.f32 %v4914, %v5300
    %v5302 = vsub.f32 1.0, %v5301
    %v5303 = vmul.f32 %v5300, %v5302
    %v5304 = vadd.f32 %v5300, %v5303
    %vm5305 = vweird.f32 %v4914
    %vm5306 = vweird.f32 %v5300
    %vm5307 = vmor %vm5305, %vm5306
    %v5308 = vsel %vm5307, %v5300, %v5304
    %v5309 = vand.u32 2147483647, %v4914
    %vm5310 = vcmp.eq.f32.partialorder %v5309, 8.507059e+37
    %v5311 = vand.u32 %v4914, 2147483648
    %v5312 = vor.u32 1.1754944e-38, %v5311
    %v5313 = vsel %vm5310, %v5312, %v5308
    %v5314 = vmul.f32 1.0, %v5313
    %v5315 = vrcp.pop %v4915
    %v5316 = vmul.f32 %v4915, %v5315
    %v5317 = vsub.f32 1.0, %v5316
    %v5318 = vmul.f32 %v5315, %v5317
    %v5319 = vadd.f32 %v5315, %v5318
    %vm5320 = vweird.f32 %v4915
    %vm5321 = vweird.f32 %v5315
    %vm5322 = vmor %vm5320, %vm5321
    %v5323 = vsel %vm5322, %v5315, %v5319
    %v5324 = vand.u32 2147483647, %v4915
    %vm5325 = vcmp.eq.f32.partialorder %v5324, 8.507059e+37
    %v5326 = vand.u32 %v4915, 2147483648
    %v5327 = vor.u32 1.1754944e-38, %v5326
    %v5328 = vsel %vm5325, %v5327, %v5323
    %v5329 = vmul.f32 1.0, %v5328
    %v5330 = vrcp.pop %v4916
    %v5331 = vmul.f32 %v4916, %v5330
    %v5332 = vsub.f32 1.0, %v5331
    %v5333 = vmul.f32 %v5330, %v5332
    %v5334 = vadd.f32 %v5330, %v5333
    %vm5335 = vweird.f32 %v4916
    %vm5336 = vweird.f32 %v5330
    %vm5337 = vmor %vm5335, %vm5336
    %v5338 = vsel %vm5337, %v5330, %v5334
    %v5339 = vand.u32 2147483647, %v4916
    %vm5340 = vcmp.eq.f32.partialorder %v5339, 8.507059e+37
    %v5341 = vand.u32 %v4916, 2147483648
    %v5342 = vor.u32 1.1754944e-38, %v5341
    %v5343 = vsel %vm5340, %v5342, %v5338
    %v5344 = vmul.f32 1.0, %v5343
    %v5345 = vrcp.pop %v4917
    %v5346 = vmul.f32 %v4917, %v5345
    %v5347 = vsub.f32 1.0, %v5346
    %v5348 = vmul.f32 %v5345, %v5347
    %v5349 = vadd.f32 %v5345, %v5348
    %vm5350 = vweird.f32 %v4917
    %vm5351 = vweird.f32 %v5345
    %vm5352 = vmor %vm5350, %vm5351
    %v5353 = vsel %vm5352, %v5345, %v5349
    %v5354 = vand.u32 2147483647, %v4917
    %vm5355 = vcmp.eq.f32.partialorder %v5354, 8.507059e+37
    %v5356 = vand.u32 %v4917, 2147483648
    %v5357 = vor.u32 1.1754944e-38, %v5356
    %v5358 = vsel %vm5355, %v5357, %v5353
    %v5359 = vmul.f32 1.0, %v5358
    %v5360 = vrcp.pop %v4918
    %v5361 = vmul.f32 %v4918, %v5360
    %v5362 = vsub.f32 1.0, %v5361
    %v5363 = vmul.f32 %v5360, %v5362
    %v5364 = vadd.f32 %v5360, %v5363
    %vm5365 = vweird.f32 %v4918
    %vm5366 = vweird.f32 %v5360
    %vm5367 = vmor %vm5365, %vm5366
    %v5368 = vsel %vm5367, %v5360, %v5364
    %v5369 = vand.u32 2147483647, %v4918
    %vm5370 = vcmp.eq.f32.partialorder %v5369, 8.507059e+37
    %v5371 = vand.u32 %v4918, 2147483648
    %v5372 = vor.u32 1.1754944e-38, %v5371
    %v5373 = vsel %vm5370, %v5372, %v5368
    %v5374 = vmul.f32 1.0, %v5373
    %v5375 = vrcp.pop %v4919
    %v5376 = vmul.f32 %v4919, %v5375
    %v5377 = vsub.f32 1.0, %v5376
    %v5378 = vmul.f32 %v5375, %v5377
    %v5379 = vadd.f32 %v5375, %v5378
    %vm5380 = vweird.f32 %v4919
    %vm5381 = vweird.f32 %v5375
    %vm5382 = vmor %vm5380, %vm5381
    %v5383 = vsel %vm5382, %v5375, %v5379
    %v5384 = vand.u32 2147483647, %v4919
    %vm5385 = vcmp.eq.f32.partialorder %v5384, 8.507059e+37
    %v5386 = vand.u32 %v4919, 2147483648
    %v5387 = vor.u32 1.1754944e-38, %v5386
    %v5388 = vsel %vm5385, %v5387, %v5383
    %v5389 = vmul.f32 1.0, %v5388
    %v5390 = vrcp.pop %v4920
    %v5391 = vmul.f32 %v4920, %v5390
    %v5392 = vsub.f32 1.0, %v5391
    %v5393 = vmul.f32 %v5390, %v5392
    %v5394 = vadd.f32 %v5390, %v5393
    %vm5395 = vweird.f32 %v4920
    %vm5396 = vweird.f32 %v5390
    %vm5397 = vmor %vm5395, %vm5396
    %v5398 = vsel %vm5397, %v5390, %v5394
    %v5399 = vand.u32 2147483647, %v4920
    %vm5400 = vcmp.eq.f32.partialorder %v5399, 8.507059e+37
    %v5401 = vand.u32 %v4920, 2147483648
    %v5402 = vor.u32 1.1754944e-38, %v5401
    %v5403 = vsel %vm5400, %v5402, %v5398
    %v5404 = vmul.f32 1.0, %v5403
    %v5405 = vrcp.pop %v4921
    %v5406 = vmul.f32 %v4921, %v5405
    %v5407 = vsub.f32 1.0, %v5406
    %v5408 = vmul.f32 %v5405, %v5407
    %v5409 = vadd.f32 %v5405, %v5408
    %vm5410 = vweird.f32 %v4921
    %vm5411 = vweird.f32 %v5405
    %vm5412 = vmor %vm5410, %vm5411
    %v5413 = vsel %vm5412, %v5405, %v5409
    %v5414 = vand.u32 2147483647, %v4921
    %vm5415 = vcmp.eq.f32.partialorder %v5414, 8.507059e+37
    %v5416 = vand.u32 %v4921, 2147483648
    %v5417 = vor.u32 1.1754944e-38, %v5416
    %v5418 = vsel %vm5415, %v5417, %v5413
    %v5419 = vmul.f32 1.0, %v5418
    %v5420 = vrcp.pop %v4922
    %v5421 = vmul.f32 %v4922, %v5420
    %v5422 = vsub.f32 1.0, %v5421
    %v5423 = vmul.f32 %v5420, %v5422
    %v5424 = vadd.f32 %v5420, %v5423
    %vm5425 = vweird.f32 %v4922
    %vm5426 = vweird.f32 %v5420
    %vm5427 = vmor %vm5425, %vm5426
    %v5428 = vsel %vm5427, %v5420, %v5424
    %v5429 = vand.u32 2147483647, %v4922
    %vm5430 = vcmp.eq.f32.partialorder %v5429, 8.507059e+37
    %v5431 = vand.u32 %v4922, 2147483648
    %v5432 = vor.u32 1.1754944e-38, %v5431
    %v5433 = vsel %vm5430, %v5432, %v5428
    %v5434 = vmul.f32 1.0, %v5433
    %v5435 = vrcp.pop %v4923
    %v5436 = vmul.f32 %v4923, %v5435
    %v5437 = vsub.f32 1.0, %v5436
    %v5438 = vmul.f32 %v5435, %v5437
    %v5439 = vadd.f32 %v5435, %v5438
    %vm5440 = vweird.f32 %v4923
    %vm5441 = vweird.f32 %v5435
    %vm5442 = vmor %vm5440, %vm5441
    %v5443 = vsel %vm5442, %v5435, %v5439
    %v5444 = vand.u32 2147483647, %v4923
    %vm5445 = vcmp.eq.f32.partialorder %v5444, 8.507059e+37
    %v5446 = vand.u32 %v4923, 2147483648
    %v5447 = vor.u32 1.1754944e-38, %v5446
    %v5448 = vsel %vm5445, %v5447, %v5443
    %v5449 = vmul.f32 1.0, %v5448
    %v5450 = vrcp.pop %v4924
    %v5451 = vmul.f32 %v4924, %v5450
    %v5452 = vsub.f32 1.0, %v5451
    %v5453 = vmul.f32 %v5450, %v5452
    %v5454 = vadd.f32 %v5450, %v5453
    %vm5455 = vweird.f32 %v4924
    %vm5456 = vweird.f32 %v5450
    %vm5457 = vmor %vm5455, %vm5456
    %v5458 = vsel %vm5457, %v5450, %v5454
    %v5459 = vand.u32 2147483647, %v4924
    %vm5460 = vcmp.eq.f32.partialorder %v5459, 8.507059e+37
    %v5461 = vand.u32 %v4924, 2147483648
    %v5462 = vor.u32 1.1754944e-38, %v5461
    %v5463 = vsel %vm5460, %v5462, %v5458
    %v5464 = vmul.f32 1.0, %v5463
    %v5465 = vrcp.pop %v4925
    %v5466 = vmul.f32 %v4925, %v5465
    %v5467 = vsub.f32 1.0, %v5466
    %v5468 = vmul.f32 %v5465, %v5467
    %v5469 = vadd.f32 %v5465, %v5468
    %vm5470 = vweird.f32 %v4925
    %vm5471 = vweird.f32 %v5465
    %vm5472 = vmor %vm5470, %vm5471
    %v5473 = vsel %vm5472, %v5465, %v5469
    %v5474 = vand.u32 2147483647, %v4925
    %vm5475 = vcmp.eq.f32.partialorder %v5474, 8.507059e+37
    %v5476 = vand.u32 %v4925, 2147483648
    %v5477 = vor.u32 1.1754944e-38, %v5476
    %v5478 = vsel %vm5475, %v5477, %v5473
    %v5479 = vmul.f32 1.0, %v5478
    %v5480 = vrcp.pop %v4926
    %v5481 = vmul.f32 %v4926, %v5480
    %v5482 = vsub.f32 1.0, %v5481
    %v5483 = vmul.f32 %v5480, %v5482
    %v5484 = vadd.f32 %v5480, %v5483
    %vm5485 = vweird.f32 %v4926
    %vm5486 = vweird.f32 %v5480
    %vm5487 = vmor %vm5485, %vm5486
    %v5488 = vsel %vm5487, %v5480, %v5484
    %v5489 = vand.u32 2147483647, %v4926
    %vm5490 = vcmp.eq.f32.partialorder %v5489, 8.507059e+37
    %v5491 = vand.u32 %v4926, 2147483648
    %v5492 = vor.u32 1.1754944e-38, %v5491
    %v5493 = vsel %vm5490, %v5492, %v5488
    %v5494 = vmul.f32 1.0, %v5493
    %v5495 = vrcp.pop %v4927
    %v5496 = vmul.f32 %v4927, %v5495
    %v5497 = vsub.f32 1.0, %v5496
    %v5498 = vmul.f32 %v5495, %v5497
    %v5499 = vadd.f32 %v5495, %v5498
    %vm5500 = vweird.f32 %v4927
    %vm5501 = vweird.f32 %v5495
    %vm5502 = vmor %vm5500, %vm5501
    %v5503 = vsel %vm5502, %v5495, %v5499
    %v5504 = vand.u32 2147483647, %v4927
    %vm5505 = vcmp.eq.f32.partialorder %v5504, 8.507059e+37
    %v5506 = vand.u32 %v4927, 2147483648
    %v5507 = vor.u32 1.1754944e-38, %v5506
    %v5508 = vsel %vm5505, %v5507, %v5503
    %v5509 = vmul.f32 1.0, %v5508
    %v5510 = vrcp.pop %v4928
    %v5511 = vmul.f32 %v4928, %v5510
    %v5512 = vsub.f32 1.0, %v5511
    %v5513 = vmul.f32 %v5510, %v5512
    %v5514 = vadd.f32 %v5510, %v5513
    %vm5515 = vweird.f32 %v4928
    %vm5516 = vweird.f32 %v5510
    %vm5517 = vmor %vm5515, %vm5516
    %v5518 = vsel %vm5517, %v5510, %v5514
    %v5519 = vand.u32 2147483647, %v4928
    %vm5520 = vcmp.eq.f32.partialorder %v5519, 8.507059e+37
    %v5521 = vand.u32 %v4928, 2147483648
    %v5522 = vor.u32 1.1754944e-38, %v5521
    %v5523 = vsel %vm5520, %v5522, %v5518
    %v5524 = vmul.f32 1.0, %v5523
    %v5525 = vrcp.pop %v4929
    %v5526 = vmul.f32 %v4929, %v5525
    %v5527 = vsub.f32 1.0, %v5526
    %v5528 = vmul.f32 %v5525, %v5527
    %v5529 = vadd.f32 %v5525, %v5528
    %vm5530 = vweird.f32 %v4929
    %vm5531 = vweird.f32 %v5525
    %vm5532 = vmor %vm5530, %vm5531
    %v5533 = vsel %vm5532, %v5525, %v5529
    %v5534 = vand.u32 2147483647, %v4929
    %vm5535 = vcmp.eq.f32.partialorder %v5534, 8.507059e+37
    %v5536 = vand.u32 %v4929, 2147483648
    %v5537 = vor.u32 1.1754944e-38, %v5536
    %v5538 = vsel %vm5535, %v5537, %v5533
    %v5539 = vmul.f32 1.0, %v5538
    %v5540 = vrcp.pop %v4930
    %v5541 = vmul.f32 %v4930, %v5540
    %v5542 = vsub.f32 1.0, %v5541
    %v5543 = vmul.f32 %v5540, %v5542
    %v5544 = vadd.f32 %v5540, %v5543
    %vm5545 = vweird.f32 %v4930
    %vm5546 = vweird.f32 %v5540
    %vm5547 = vmor %vm5545, %vm5546
    %v5548 = vsel %vm5547, %v5540, %v5544
    %v5549 = vand.u32 2147483647, %v4930
    %vm5550 = vcmp.eq.f32.partialorder %v5549, 8.507059e+37
    %v5551 = vand.u32 %v4930, 2147483648
    %v5552 = vor.u32 1.1754944e-38, %v5551
    %v5553 = vsel %vm5550, %v5552, %v5548
    %v5554 = vmul.f32 1.0, %v5553
    %v5555 = vrcp.pop %v4931
    %v5556 = vmul.f32 %v4931, %v5555
    %v5557 = vsub.f32 1.0, %v5556
    %v5558 = vmul.f32 %v5555, %v5557
    %v5559 = vadd.f32 %v5555, %v5558
    %vm5560 = vweird.f32 %v4931
    %vm5561 = vweird.f32 %v5555
    %vm5562 = vmor %vm5560, %vm5561
    %v5563 = vsel %vm5562, %v5555, %v5559
    %v5564 = vand.u32 2147483647, %v4931
    %vm5565 = vcmp.eq.f32.partialorder %v5564, 8.507059e+37
    %v5566 = vand.u32 %v4931, 2147483648
    %v5567 = vor.u32 1.1754944e-38, %v5566
    %v5568 = vsel %vm5565, %v5567, %v5563
    %v5569 = vmul.f32 1.0, %v5568
    %v5570 = vrcp.pop %v4932
    %v5571 = vmul.f32 %v4932, %v5570
    %v5572 = vsub.f32 1.0, %v5571
    %v5573 = vmul.f32 %v5570, %v5572
    %v5574 = vadd.f32 %v5570, %v5573
    %vm5575 = vweird.f32 %v4932
    %vm5576 = vweird.f32 %v5570
    %vm5577 = vmor %vm5575, %vm5576
    %v5578 = vsel %vm5577, %v5570, %v5574
    %v5579 = vand.u32 2147483647, %v4932
    %vm5580 = vcmp.eq.f32.partialorder %v5579, 8.507059e+37
    %v5581 = vand.u32 %v4932, 2147483648
    %v5582 = vor.u32 1.1754944e-38, %v5581
    %v5583 = vsel %vm5580, %v5582, %v5578
    %v5584 = vmul.f32 1.0, %v5583
    %v5585 = vrcp.pop %v4933
    %v5586 = vmul.f32 %v4933, %v5585
    %v5587 = vsub.f32 1.0, %v5586
    %v5588 = vmul.f32 %v5585, %v5587
    %v5589 = vadd.f32 %v5585, %v5588
    %vm5590 = vweird.f32 %v4933
    %vm5591 = vweird.f32 %v5585
    %vm5592 = vmor %vm5590, %vm5591
    %v5593 = vsel %vm5592, %v5585, %v5589
    %v5594 = vand.u32 2147483647, %v4933
    %vm5595 = vcmp.eq.f32.partialorder %v5594, 8.507059e+37
    %v5596 = vand.u32 %v4933, 2147483648
    %v5597 = vor.u32 1.1754944e-38, %v5596
    %v5598 = vsel %vm5595, %v5597, %v5593
    %v5599 = vmul.f32 1.0, %v5598
    %v5600 = vrcp.pop %v4934
    %v5601 = vmul.f32 %v4934, %v5600
    %v5602 = vsub.f32 1.0, %v5601
    %v5603 = vmul.f32 %v5600, %v5602
    %v5604 = vadd.f32 %v5600, %v5603
    %vm5605 = vweird.f32 %v4934
    %vm5606 = vweird.f32 %v5600
    %vm5607 = vmor %vm5605, %vm5606
    %v5608 = vsel %vm5607, %v5600, %v5604
    %v5609 = vand.u32 2147483647, %v4934
    %vm5610 = vcmp.eq.f32.partialorder %v5609, 8.507059e+37
    %v5611 = vand.u32 %v4934, 2147483648
    %v5612 = vor.u32 1.1754944e-38, %v5611
    %v5613 = vsel %vm5610, %v5612, %v5608
    %v5614 = vmul.f32 1.0, %v5613
    %v5615 = vrcp.pop %v4935
    %v5616 = vmul.f32 %v4935, %v5615
    %v5617 = vsub.f32 1.0, %v5616
    %v5618 = vmul.f32 %v5615, %v5617
    %v5619 = vadd.f32 %v5615, %v5618
    %vm5620 = vweird.f32 %v4935
    %vm5621 = vweird.f32 %v5615
    %vm5622 = vmor %vm5620, %vm5621
    %v5623 = vsel %vm5622, %v5615, %v5619
    %v5624 = vand.u32 2147483647, %v4935
    %vm5625 = vcmp.eq.f32.partialorder %v5624, 8.507059e+37
    %v5626 = vand.u32 %v4935, 2147483648
    %v5627 = vor.u32 1.1754944e-38, %v5626
    %v5628 = vsel %vm5625, %v5627, %v5623
    %v5629 = vmul.f32 1.0, %v5628
    %v5630 = vrcp.pop %v4936
    %v5631 = vmul.f32 %v4936, %v5630
    %v5632 = vsub.f32 1.0, %v5631
    %v5633 = vmul.f32 %v5630, %v5632
    %v5634 = vadd.f32 %v5630, %v5633
    %vm5635 = vweird.f32 %v4936
    %vm5636 = vweird.f32 %v5630
    %vm5637 = vmor %vm5635, %vm5636
    %v5638 = vsel %vm5637, %v5630, %v5634
    %v5639 = vand.u32 2147483647, %v4936
    %vm5640 = vcmp.eq.f32.partialorder %v5639, 8.507059e+37
    %v5641 = vand.u32 %v4936, 2147483648
    %v5642 = vor.u32 1.1754944e-38, %v5641
    %v5643 = vsel %vm5640, %v5642, %v5638
    %v5644 = vmul.f32 1.0, %v5643
    %v5645 = vrcp.pop %v4937
    %v5646 = vmul.f32 %v4937, %v5645
    %v5647 = vsub.f32 1.0, %v5646
    %v5648 = vmul.f32 %v5645, %v5647
    %v5649 = vadd.f32 %v5645, %v5648
    %vm5650 = vweird.f32 %v4937
    %vm5651 = vweird.f32 %v5645
    %vm5652 = vmor %vm5650, %vm5651
    %v5653 = vsel %vm5652, %v5645, %v5649
    %v5654 = vand.u32 2147483647, %v4937
    %vm5655 = vcmp.eq.f32.partialorder %v5654, 8.507059e+37
    %v5656 = vand.u32 %v4937, 2147483648
    %v5657 = vor.u32 1.1754944e-38, %v5656
    %v5658 = vsel %vm5655, %v5657, %v5653
    %v5659 = vmul.f32 1.0, %v5658
    %v5660 = vrcp.pop %v4938
    %v5661 = vmul.f32 %v4938, %v5660
    %v5662 = vsub.f32 1.0, %v5661
    %v5663 = vmul.f32 %v5660, %v5662
    %v5664 = vadd.f32 %v5660, %v5663
    %vm5665 = vweird.f32 %v4938
    %vm5666 = vweird.f32 %v5660
    %vm5667 = vmor %vm5665, %vm5666
    %v5668 = vsel %vm5667, %v5660, %v5664
    %v5669 = vand.u32 2147483647, %v4938
    %vm5670 = vcmp.eq.f32.partialorder %v5669, 8.507059e+37
    %v5671 = vand.u32 %v4938, 2147483648
    %v5672 = vor.u32 1.1754944e-38, %v5671
    %v5673 = vsel %vm5670, %v5672, %v5668
    %v5674 = vmul.f32 1.0, %v5673
    %v5675 = vrcp.pop %v4939
    %v5676 = vmul.f32 %v4939, %v5675
    %v5677 = vsub.f32 1.0, %v5676
    %v5678 = vmul.f32 %v5675, %v5677
    %v5679 = vadd.f32 %v5675, %v5678
    %vm5680 = vweird.f32 %v4939
    %vm5681 = vweird.f32 %v5675
    %vm5682 = vmor %vm5680, %vm5681
    %v5683 = vsel %vm5682, %v5675, %v5679
    %v5684 = vand.u32 2147483647, %v4939
    %vm5685 = vcmp.eq.f32.partialorder %v5684, 8.507059e+37
    %v5686 = vand.u32 %v4939, 2147483648
    %v5687 = vor.u32 1.1754944e-38, %v5686
    %v5688 = vsel %vm5685, %v5687, %v5683
    %v5689 = vmul.f32 1.0, %v5688
    %v5690 = vrcp.pop %v4940
    %v5691 = vmul.f32 %v4940, %v5690
    %v5692 = vsub.f32 1.0, %v5691
    %v5693 = vmul.f32 %v5690, %v5692
    %v5694 = vadd.f32 %v5690, %v5693
    %vm5695 = vweird.f32 %v4940
    %vm5696 = vweird.f32 %v5690
    %vm5697 = vmor %vm5695, %vm5696
    %v5698 = vsel %vm5697, %v5690, %v5694
    %v5699 = vand.u32 2147483647, %v4940
    %vm5700 = vcmp.eq.f32.partialorder %v5699, 8.507059e+37
    %v5701 = vand.u32 %v4940, 2147483648
    %v5702 = vor.u32 1.1754944e-38, %v5701
    %v5703 = vsel %vm5700, %v5702, %v5698
    %v5704 = vmul.f32 1.0, %v5703
    %v5705 = vrcp.pop %v4941
    %v5706 = vmul.f32 %v4941, %v5705
    %v5707 = vsub.f32 1.0, %v5706
    %v5708 = vmul.f32 %v5705, %v5707
    %v5709 = vadd.f32 %v5705, %v5708
    %vm5710 = vweird.f32 %v4941
    %vm5711 = vweird.f32 %v5705
    %vm5712 = vmor %vm5710, %vm5711
    %v5713 = vsel %vm5712, %v5705, %v5709
    %v5714 = vand.u32 2147483647, %v4941
    %vm5715 = vcmp.eq.f32.partialorder %v5714, 8.507059e+37
    %v5716 = vand.u32 %v4941, 2147483648
    %v5717 = vor.u32 1.1754944e-38, %v5716
    %v5718 = vsel %vm5715, %v5717, %v5713
    %v5719 = vmul.f32 1.0, %v5718
    %v5720 = vrcp.pop %v4942
    %v5721 = vmul.f32 %v4942, %v5720
    %v5722 = vsub.f32 1.0, %v5721
    %v5723 = vmul.f32 %v5720, %v5722
    %v5724 = vadd.f32 %v5720, %v5723
    %vm5725 = vweird.f32 %v4942
    %vm5726 = vweird.f32 %v5720
    %vm5727 = vmor %vm5725, %vm5726
    %v5728 = vsel %vm5727, %v5720, %v5724
    %v5729 = vand.u32 2147483647, %v4942
    %vm5730 = vcmp.eq.f32.partialorder %v5729, 8.507059e+37
    %v5731 = vand.u32 %v4942, 2147483648
    %v5732 = vor.u32 1.1754944e-38, %v5731
    %v5733 = vsel %vm5730, %v5732, %v5728
    %v5734 = vmul.f32 1.0, %v5733
    %v5735 = vrcp.pop %v4943
    %v5736 = vmul.f32 %v4943, %v5735
    %v5737 = vsub.f32 1.0, %v5736
    %v5738 = vmul.f32 %v5735, %v5737
    %v5739 = vadd.f32 %v5735, %v5738
    %vm5740 = vweird.f32 %v4943
    %vm5741 = vweird.f32 %v5735
    %vm5742 = vmor %vm5740, %vm5741
    %v5743 = vsel %vm5742, %v5735, %v5739
    %v5744 = vand.u32 2147483647, %v4943
    %vm5745 = vcmp.eq.f32.partialorder %v5744, 8.507059e+37
    %v5746 = vand.u32 %v4943, 2147483648
    %v5747 = vor.u32 1.1754944e-38, %v5746
    %v5748 = vsel %vm5745, %v5747, %v5743
    %v5749 = vmul.f32 1.0, %v5748
    %v5750 = vrcp.pop %v4944
    %v5751 = vmul.f32 %v4944, %v5750
    %v5752 = vsub.f32 1.0, %v5751
    %v5753 = vmul.f32 %v5750, %v5752
    %v5754 = vadd.f32 %v5750, %v5753
    %vm5755 = vweird.f32 %v4944
    %vm5756 = vweird.f32 %v5750
    %vm5757 = vmor %vm5755, %vm5756
    %v5758 = vsel %vm5757, %v5750, %v5754
    %v5759 = vand.u32 2147483647, %v4944
    %vm5760 = vcmp.eq.f32.partialorder %v5759, 8.507059e+37
    %v5761 = vand.u32 %v4944, 2147483648
    %v5762 = vor.u32 1.1754944e-38, %v5761
    %v5763 = vsel %vm5760, %v5762, %v5758
    %v5764 = vmul.f32 1.0, %v5763
    %v5765 = vrcp.pop %v4945
    %v5766 = vmul.f32 %v4945, %v5765
    %v5767 = vsub.f32 1.0, %v5766
    %v5768 = vmul.f32 %v5765, %v5767
    %v5769 = vadd.f32 %v5765, %v5768
    %vm5770 = vweird.f32 %v4945
    %vm5771 = vweird.f32 %v5765
    %vm5772 = vmor %vm5770, %vm5771
    %v5773 = vsel %vm5772, %v5765, %v5769
    %v5774 = vand.u32 2147483647, %v4945
    %vm5775 = vcmp.eq.f32.partialorder %v5774, 8.507059e+37
    %v5776 = vand.u32 %v4945, 2147483648
    %v5777 = vor.u32 1.1754944e-38, %v5776
    %v5778 = vsel %vm5775, %v5777, %v5773
    %v5779 = vmul.f32 1.0, %v5778
    %v5780 = vrcp.pop %v4946
    %v5781 = vmul.f32 %v4946, %v5780
    %v5782 = vsub.f32 1.0, %v5781
    %v5783 = vmul.f32 %v5780, %v5782
    %v5784 = vadd.f32 %v5780, %v5783
    %vm5785 = vweird.f32 %v4946
    %vm5786 = vweird.f32 %v5780
    %vm5787 = vmor %vm5785, %vm5786
    %v5788 = vsel %vm5787, %v5780, %v5784
    %v5789 = vand.u32 2147483647, %v4946
    %vm5790 = vcmp.eq.f32.partialorder %v5789, 8.507059e+37
    %v5791 = vand.u32 %v4946, 2147483648
    %v5792 = vor.u32 1.1754944e-38, %v5791
    %v5793 = vsel %vm5790, %v5792, %v5788
    %v5794 = vmul.f32 1.0, %v5793
    %v5795 = vrcp.pop %v4947
    %v5796 = vmul.f32 %v4947, %v5795
    %v5797 = vsub.f32 1.0, %v5796
    %v5798 = vmul.f32 %v5795, %v5797
    %v5799 = vadd.f32 %v5795, %v5798
    %vm5800 = vweird.f32 %v4947
    %vm5801 = vweird.f32 %v5795
    %vm5802 = vmor %vm5800, %vm5801
    %v5803 = vsel %vm5802, %v5795, %v5799
    %v5804 = vand.u32 2147483647, %v4947
    %vm5805 = vcmp.eq.f32.partialorder %v5804, 8.507059e+37
    %v5806 = vand.u32 %v4947, 2147483648
    %v5807 = vor.u32 1.1754944e-38, %v5806
    %v5808 = vsel %vm5805, %v5807, %v5803
    %v5809 = vmul.f32 1.0, %v5808
    %v5810 = vrcp.pop %v4948
    %v5811 = vmul.f32 %v4948, %v5810
    %v5812 = vsub.f32 1.0, %v5811
    %v5813 = vmul.f32 %v5810, %v5812
    %v5814 = vadd.f32 %v5810, %v5813
    %vm5815 = vweird.f32 %v4948
    %vm5816 = vweird.f32 %v5810
    %vm5817 = vmor %vm5815, %vm5816
    %v5818 = vsel %vm5817, %v5810, %v5814
    %v5819 = vand.u32 2147483647, %v4948
    %vm5820 = vcmp.eq.f32.partialorder %v5819, 8.507059e+37
    %v5821 = vand.u32 %v4948, 2147483648
    %v5822 = vor.u32 1.1754944e-38, %v5821
    %v5823 = vsel %vm5820, %v5822, %v5818
    %v5824 = vmul.f32 1.0, %v5823
    %v5825 = vrcp.pop %v4949
    %v5826 = vmul.f32 %v4949, %v5825
    %v5827 = vsub.f32 1.0, %v5826
    %v5828 = vmul.f32 %v5825, %v5827
    %v5829 = vadd.f32 %v5825, %v5828
    %vm5830 = vweird.f32 %v4949
    %vm5831 = vweird.f32 %v5825
    %vm5832 = vmor %vm5830, %vm5831
    %v5833 = vsel %vm5832, %v5825, %v5829
    %v5834 = vand.u32 2147483647, %v4949
    %vm5835 = vcmp.eq.f32.partialorder %v5834, 8.507059e+37
    %v5836 = vand.u32 %v4949, 2147483648
    %v5837 = vor.u32 1.1754944e-38, %v5836
    %v5838 = vsel %vm5835, %v5837, %v5833
    %v5839 = vmul.f32 1.0, %v5838
    %v5840 = vrcp.pop %v4950
    %v5841 = vmul.f32 %v4950, %v5840
    %v5842 = vsub.f32 1.0, %v5841
    %v5843 = vmul.f32 %v5840, %v5842
    %v5844 = vadd.f32 %v5840, %v5843
    %vm5845 = vweird.f32 %v4950
    %vm5846 = vweird.f32 %v5840
    %vm5847 = vmor %vm5845, %vm5846
    %v5848 = vsel %vm5847, %v5840, %v5844
    %v5849 = vand.u32 2147483647, %v4950
    %vm5850 = vcmp.eq.f32.partialorder %v5849, 8.507059e+37
    %v5851 = vand.u32 %v4950, 2147483648
    %v5852 = vor.u32 1.1754944e-38, %v5851
    %v5853 = vsel %vm5850, %v5852, %v5848
    %v5854 = vmul.f32 1.0, %v5853
    %v5855 = vrcp.pop %v4951
    %v5856 = vmul.f32 %v4951, %v5855
    %v5857 = vsub.f32 1.0, %v5856
    %v5858 = vmul.f32 %v5855, %v5857
    %v5859 = vadd.f32 %v5855, %v5858
    %vm5860 = vweird.f32 %v4951
    %vm5861 = vweird.f32 %v5855
    %vm5862 = vmor %vm5860, %vm5861
    %v5863 = vsel %vm5862, %v5855, %v5859
    %v5864 = vand.u32 2147483647, %v4951
    %vm5865 = vcmp.eq.f32.partialorder %v5864, 8.507059e+37
    %v5866 = vand.u32 %v4951, 2147483648
    %v5867 = vor.u32 1.1754944e-38, %v5866
    %v5868 = vsel %vm5865, %v5867, %v5863
    %v5869 = vmul.f32 1.0, %v5868
    %v5870 = vrcp.pop %v4952
    %v5871 = vmul.f32 %v4952, %v5870
    %v5872 = vsub.f32 1.0, %v5871
    %v5873 = vmul.f32 %v5870, %v5872
    %v5874 = vadd.f32 %v5870, %v5873
    %vm5875 = vweird.f32 %v4952
    %vm5876 = vweird.f32 %v5870
    %vm5877 = vmor %vm5875, %vm5876
    %v5878 = vsel %vm5877, %v5870, %v5874
    %v5879 = vand.u32 2147483647, %v4952
    %vm5880 = vcmp.eq.f32.partialorder %v5879, 8.507059e+37
    %v5881 = vand.u32 %v4952, 2147483648
    %v5882 = vor.u32 1.1754944e-38, %v5881
    %v5883 = vsel %vm5880, %v5882, %v5878
    %v5884 = vmul.f32 1.0, %v5883
    %v5885 = vrcp.pop %v4953
    %v5886 = vmul.f32 %v4953, %v5885
    %v5887 = vsub.f32 1.0, %v5886
    %v5888 = vmul.f32 %v5885, %v5887
    %v5889 = vadd.f32 %v5885, %v5888
    %vm5890 = vweird.f32 %v4953
    %vm5891 = vweird.f32 %v5885
    %vm5892 = vmor %vm5890, %vm5891
    %v5893 = vsel %vm5892, %v5885, %v5889
    %v5894 = vand.u32 2147483647, %v4953
    %vm5895 = vcmp.eq.f32.partialorder %v5894, 8.507059e+37
    %v5896 = vand.u32 %v4953, 2147483648
    %v5897 = vor.u32 1.1754944e-38, %v5896
    %v5898 = vsel %vm5895, %v5897, %v5893
    %v5899 = vmul.f32 1.0, %v5898
    %v5900 = vrcp.pop %v4954
    %v5901 = vmul.f32 %v4954, %v5900
    %v5902 = vsub.f32 1.0, %v5901
    %v5903 = vmul.f32 %v5900, %v5902
    %v5904 = vadd.f32 %v5900, %v5903
    %vm5905 = vweird.f32 %v4954
    %vm5906 = vweird.f32 %v5900
    %vm5907 = vmor %vm5905, %vm5906
    %v5908 = vsel %vm5907, %v5900, %v5904
    %v5909 = vand.u32 2147483647, %v4954
    %vm5910 = vcmp.eq.f32.partialorder %v5909, 8.507059e+37
    %v5911 = vand.u32 %v4954, 2147483648
    %v5912 = vor.u32 1.1754944e-38, %v5911
    %v5913 = vsel %vm5910, %v5912, %v5908
    %v5914 = vmul.f32 1.0, %v5913
    %v5979 = vlaneseq
    %v5980 = vand.u32 %v5979, 127
    %v5981 = vperm.slane %v4969, %v5980
    %v5982 = vadd.s32 %v5980, 4294967288
    %v5983 = vperm.slane %v4984, %v5982
    %vm5984 = vcmask 130112
    %v5985 = vsel %vm5984, %v5983, %v5981
    %v5986 = vperm.slane %v4999, %v5980
    %v5987 = vperm.slane %v5014, %v5982
    %v5988 = vsel %vm5984, %v5987, %v5986
    %v5989 = vperm.slane %v5029, %v5980
    %v5990 = vperm.slane %v5044, %v5982
    %v5991 = vsel %vm5984, %v5990, %v5989
    %v5992 = vperm.slane %v5059, %v5980
    %v5993 = vperm.slane %v5074, %v5982
    %v5994 = vsel %vm5984, %v5993, %v5992
    %v5995 = vperm.slane %v5089, %v5980
    %v5996 = vperm.slane %v5104, %v5982
    %v5997 = vsel %vm5984, %v5996, %v5995
    %v5998 = vperm.slane %v5119, %v5980
    %v5999 = vperm.slane %v5134, %v5982
    %v6000 = vsel %vm5984, %v5999, %v5998
    %v6001 = vperm.slane %v5149, %v5980
    %v6002 = vperm.slane %v5164, %v5982
    %v6003 = vsel %vm5984, %v6002, %v6001
    %v6004 = vperm.slane %v5179, %v5980
    %v6005 = vperm.slane %v5194, %v5982
    %v6006 = vsel %vm5984, %v6005, %v6004
    %v6007 = vperm.slane %v5209, %v5980
    %v6008 = vperm.slane %v5224, %v5982
    %v6009 = vsel %vm5984, %v6008, %v6007
    %v6010 = vperm.slane %v5239, %v5980
    %v6011 = vperm.slane %v5254, %v5982
    %v6012 = vsel %vm5984, %v6011, %v6010
    %v6013 = vperm.slane %v5269, %v5980
    %v6014 = vperm.slane %v5284, %v5982
    %v6015 = vsel %vm5984, %v6014, %v6013
    %v6016 = vperm.slane %v5299, %v5980
    %v6017 = vperm.slane %v5314, %v5982
    %v6018 = vsel %vm5984, %v6017, %v6016
    %v6019 = vperm.slane %v5329, %v5980
    %v6020 = vperm.slane %v5344, %v5982
    %v6021 = vsel %vm5984, %v6020, %v6019
    %v6022 = vperm.slane %v5359, %v5980
    %v6023 = vperm.slane %v5374, %v5982
    %v6024 = vsel %vm5984, %v6023, %v6022
    %v6025 = vperm.slane %v5389, %v5980
    %v6026 = vperm.slane %v5404, %v5982
    %v6027 = vsel %vm5984, %v6026, %v6025
    %v6028 = vperm.slane %v5419, %v5980
    %v6029 = vperm.slane %v5434, %v5982
    %v6030 = vsel %vm5984, %v6029, %v6028
    %v6031 = vperm.slane %v5449, %v5980
    %v6032 = vperm.slane %v5464, %v5982
    %v6033 = vsel %vm5984, %v6032, %v6031
    %v6034 = vperm.slane %v5479, %v5980
    %v6035 = vperm.slane %v5494, %v5982
    %v6036 = vsel %vm5984, %v6035, %v6034
    %v6037 = vperm.slane %v5509, %v5980
    %v6038 = vperm.slane %v5524, %v5982
    %v6039 = vsel %vm5984, %v6038, %v6037
    %v6040 = vperm.slane %v5539, %v5980
    %v6041 = vperm.slane %v5554, %v5982
    %v6042 = vsel %vm5984, %v6041, %v6040
    %v6043 = vperm.slane %v5569, %v5980
    %v6044 = vperm.slane %v5584, %v5982
    %v6045 = vsel %vm5984, %v6044, %v6043
    %v6046 = vperm.slane %v5599, %v5980
    %v6047 = vperm.slane %v5614, %v5982
    %v6048 = vsel %vm5984, %v6047, %v6046
    %v6049 = vperm.slane %v5629, %v5980
    %v6050 = vperm.slane %v5644, %v5982
    %v6051 = vsel %vm5984, %v6050, %v6049
    %v6052 = vperm.slane %v5659, %v5980
    %v6053 = vperm.slane %v5674, %v5982
    %v6054 = vsel %vm5984, %v6053, %v6052
    %v6055 = vperm.slane %v5689, %v5980
    %v6056 = vperm.slane %v5704, %v5982
    %v6057 = vsel %vm5984, %v6056, %v6055
    %v6058 = vperm.slane %v5719, %v5980
    %v6059 = vperm.slane %v5734, %v5982
    %v6060 = vsel %vm5984, %v6059, %v6058
    %v6061 = vperm.slane %v5749, %v5980
    %v6062 = vperm.slane %v5764, %v5982
    %v6063 = vsel %vm5984, %v6062, %v6061
    %v6064 = vperm.slane %v5779, %v5980
    %v6065 = vperm.slane %v5794, %v5982
    %v6066 = vsel %vm5984, %v6065, %v6064
    %v6067 = vperm.slane %v5809, %v5980
    %v6068 = vperm.slane %v5824, %v5982
    %v6069 = vsel %vm5984, %v6068, %v6067
    %v6070 = vperm.slane %v5839, %v5980
    %v6071 = vperm.slane %v5854, %v5982
    %v6072 = vsel %vm5984, %v6071, %v6070
    %v6073 = vperm.slane %v5869, %v5980
    %v6074 = vperm.slane %v5884, %v5982
    %v6075 = vsel %vm5984, %v6074, %v6073
    %v6076 = vperm.slane %v5899, %v5980
    %v6077 = vperm.slane %v5914, %v5982
    %v6078 = vsel %vm5984, %v6077, %v6076
    %v6079 = vsel %vm425, %v5988, %v5985
    %vm6080 = vcmask 1042434
    %v6081 = vsel %vm6080, %v5991, %v6079
    %vm6082 = vcmask 1043459
    %v6083 = vsel %vm6082, %v5994, %v6081
    %vm6084 = vcmask 1044484
    %v6085 = vsel %vm6084, %v5997, %v6083
    %vm6086 = vcmask 1045509
    %v6087 = vsel %vm6086, %v6000, %v6085
    %vm6088 = vcmask 1046534
    %v6089 = vsel %vm6088, %v6003, %v6087
    %vm6090 = vcmask 1047559
    %v6091 = vsel %vm6090, %v6006, %v6089
    %v6092 = vsel %vm425, %v6012, %v6009
    %v6093 = vsel %vm6080, %v6015, %v6092
    %v6094 = vsel %vm6082, %v6018, %v6093
    %v6095 = vsel %vm6084, %v6021, %v6094
    %v6096 = vsel %vm6086, %v6024, %v6095
    %v6097 = vsel %vm6088, %v6027, %v6096
    %v6098 = vsel %vm6090, %v6030, %v6097
    %v6099 = vsel %vm425, %v6036, %v6033
    %v6100 = vsel %vm6080, %v6039, %v6099
    %v6101 = vsel %vm6082, %v6042, %v6100
    %v6102 = vsel %vm6084, %v6045, %v6101
    %v6103 = vsel %vm6086, %v6048, %v6102
    %v6104 = vsel %vm6088, %v6051, %v6103
    %v6105 = vsel %vm6090, %v6054, %v6104
    %v6106 = vsel %vm425, %v6060, %v6057
    %v6107 = vsel %vm6080, %v6063, %v6106
    %v6108 = vsel %vm6082, %v6066, %v6107
    %v6109 = vsel %vm6084, %v6069, %v6108
    %v6110 = vsel %vm6086, %v6072, %v6109
    %v6111 = vsel %vm6088, %v6075, %v6110
    %v6112 = vsel %vm6090, %v6078, %v6111
    %6117 = vst.msk [vmem:[%s11] sm:$0xff] %vm172, %v6091
    %6118 = vst.msk [vmem:[%s11 + $0x8] sm:$0xff] %vm172, %v6098
    %6119 = vst.msk [vmem:[%s11 + $0x10] sm:$0xff] %vm172, %v6105
    %6120 = vst.msk [vmem:[%s11 + $0x18] sm:$0xff] %vm172, %v6112
    // Predicated region
    $region78: #{forward.1} parent=1 // pred_check
      _
    $region79: #{forward.1} parent=1 // pred_check_branch
      %6122 = sbr.rel (0) target = $region81
    $region80: #{forward.1} parent=1 // pred_region
      _
    $region81: #{forward.1} parent=1 // pred_fallthru
      _
    // Predicated region
    $region82: #{forward.1} parent=1 // pred_check
      _
    $region83: #{forward.1} parent=1 // pred_check_branch
      %6124 = sbr.rel (0) target = $region85
    $region84: #{forward.1} parent=1 // pred_region
      _
    $region85: #{forward.1} parent=1 // pred_fallthru
      _
    %6125 = vsyncpa [#allocation3], 1
    %6126 = vsyncpa [#allocation5], 1
    %6127 = vsyncpa [#allocation8], 1
    %6128 = vsyncpa [#allocation11], 1
    %6129 = vsyncpa [#allocation14], 1

</llo_original>
